<compile_context>
chip_gen: v5e
topology: v5e:2x2
jax: 0.10.0
libtpu: 0.0.40
codegen_flags: <defaults>
</compile_context>

<pallas_src>
import functools
import math

import numpy as np
import jax
import jax.numpy as jnp
from jax import lax
from jax.experimental import pallas as pl
from jax.experimental.pallas import tpu as pltpu

LANE = 128  # channel padding target (TPU lane width)


# ----------------------------------------------------------------------------
# In-kernel helpers
# ----------------------------------------------------------------------------
def _silu(x):
    return x * jax.nn.sigmoid(x)


def _group_norm(xf, gamma, beta, a_n, at, eps=1e-6):
    """GroupNorm on a (H*W, Cp) tile, channels on lanes.

    a_n: (Cp, G) group-selector / n_per_group, at: (G, Cp) group-selector.
    Padded channels have zero selector rows/cols and zero gamma/beta, so they
    neither pollute the statistics nor produce nonzero output.
    Two-pass (center first) variance for accuracy; scale/shift folded.
    """
    s = jnp.sum(xf, axis=0, keepdims=True)                                 # (1, Cp)
    mean_c = jnp.dot(jnp.dot(s, a_n, preferred_element_type=jnp.float32),
                     at, preferred_element_type=jnp.float32)               # (1, Cp)
    xc = xf - mean_c
    ss = jnp.sum(xc * xc, axis=0, keepdims=True)
    var_c = jnp.dot(jnp.dot(ss, a_n, preferred_element_type=jnp.float32),
                    at, preferred_element_type=jnp.float32)
    scale = lax.rsqrt(var_c + eps) * gamma
    return xc * scale + beta


# ----------------------------------------------------------------------------
# Fused kernel: GN->SiLU->Conv3x3 -> +proj_t -> GN->SiLU->Conv3x3 -> +shortcut
#               -> AttentionBlock            (one grid step = one image)
# ----------------------------------------------------------------------------
def resnet_block_kernel(x_ref, t_ref,
                        g1_ref, b1_ref, a1_ref, a1t_ref, w1_ref, cb1_ref,
                        wt_ref, bt_ref,
                        g2_ref, b2_ref, a2_ref, a2t_ref, w2_ref, cb2_ref,
                        wsc_ref, bsc_ref,
                        ga_ref, ba_ref,
                        wqkv_ref, bqkv_ref, wo_ref, bo_ref,
                        sl_ref, sr_ref,
                        out_ref,
                        *, H, W, c_attn):
    HW = H * W
    Cp = x_ref.shape[-1]

    sl = sl_ref[...]          # ((H+2)*W, H*W) left-neighbour shift + boundary mask
    sr = sr_ref[...]          # ((H+2)*W, H*W) right-neighbour shift + boundary mask

    def conv3x3(act, w_ref, bias):
        # act: (H*W, Cp) activation, channels on lanes.
        zpad = jnp.zeros((W, Cp), jnp.float32)
        hp = jnp.concatenate([zpad, act, zpad], axis=0)          # ((H+2)*W, Cp)
        hl = jnp.dot(sl, act, preferred_element_type=jnp.float32)  # x-1 taps
        hr = jnp.dot(sr, act, preferred_element_type=jnp.float32)  # x+1 taps
        big = jnp.concatenate([hl, hp, hr], axis=1)              # ((H+2)*W, 3*Cp)
        out = jnp.dot(big[0:HW, :], w_ref[0],
                      preferred_element_type=jnp.float32)          # ky = 0
        out = out + jnp.dot(big[W:W + HW, :], w_ref[1],
                            preferred_element_type=jnp.float32)    # ky = 1
        out = out + jnp.dot(big[2 * W:2 * W + HW, :], w_ref[2],
                            preferred_element_type=jnp.float32)    # ky = 2
        return out + bias

    xf = x_ref[...]                                              # (H*W, Cp)

    # ---- net1: GroupNorm -> SiLU -> Conv3x3 ----
    h = _silu(_group_norm(xf, g1_ref[...], b1_ref[...], a1_ref[...], a1t_ref[...]))
    h1 = conv3x3(h, w1_ref, cb1_ref[...])

    # ---- + proj_t(t_embd): SiLU -> Linear, broadcast over spatial ----
    tproj = jnp.dot(_silu(t_ref[...]), wt_ref[...],
                    preferred_element_type=jnp.float32) + bt_ref[...]   # (1, Cp)
    h1 = h1 + tproj

    # ---- net2: GroupNorm -> SiLU -> Dropout -> Conv3x3 ----
    # TODO(synk): nn.Dropout is identity (eval-mode); training would need pltpu.prng_* masking.
    h = _silu(_group_norm(h1, g2_ref[...], b2_ref[...], a2_ref[...], a2t_ref[...]))
    h2 = conv3x3(h, w2_ref, cb2_ref[...])

    # ---- shortcut: 1x1 conv on the original input ----
    h2 = h2 + jnp.dot(xf, wsc_ref[...],
                      preferred_element_type=jnp.float32) + bsc_ref[...]

    # ---- AttentionBlock: GN -> fused q/k/v -> softmax attention -> out proj -> +res ----
    hn = _group_norm(h2, ga_ref[...], ba_ref[...], a2_ref[...], a2t_ref[...])
    qkv = jnp.dot(hn, wqkv_ref[...],
                  preferred_element_type=jnp.float32) + bqkv_ref[...]   # (HW, 3*Cp)
    q = qkv[:, 0:Cp]
    k = qkv[:, Cp:2 * Cp]
    v = qkv[:, 2 * Cp:3 * Cp]

    scores = lax.dot_general(q, k, (((1,), (1,)), ((), ())),
                             preferred_element_type=jnp.float32)
    scores = scores * (1.0 / math.sqrt(c_attn))
    scores = scores - jnp.max(scores, axis=-1, keepdims=True)
    p = jnp.exp(scores)
    p = p * pl.reciprocal(jnp.sum(p, axis=-1, keepdims=True), approx=True)

    attn = jnp.dot(p, v, preferred_element_type=jnp.float32)
    o = jnp.dot(attn, wo_ref[...], preferred_element_type=jnp.float32) + bo_ref[...]
    out_ref[...] = o + h2


# ----------------------------------------------------------------------------
# pallas_call wrapper (NCHW in / NCHW out, like the PyTorch module)
# ----------------------------------------------------------------------------
def _const_spec(shape):
    zero = (0,) * len(shape)
    return pl.BlockSpec(shape, lambda b: zero)


_WEIGHT_NAMES = ['g1', 'b1', 'a1', 'a1t', 'w1', 'cb1', 'wt', 'bt',
                 'g2', 'b2', 'a2', 'a2t', 'w2', 'cb2', 'wsc', 'bsc',
                 'ga', 'ba', 'wqkv', 'bqkv', 'wo', 'bo', 'sl', 'sr']


def resnet_block_forward(x_nchw, t_embd, kparams, *, c_out):
    B, Cin, H, W = x_nchw.shape
    Cp = LANE
    HW = H * W
    Tc = t_embd.shape[-1]

    # NCHW -> (B, H*W, Cp) channels-last, zero-padded to 128 lanes.
    x = jnp.transpose(x_nchw, (0, 2, 3, 1)).reshape(B, HW, Cin)
    x = jnp.pad(x, ((0, 0), (0, 0), (0, Cp - Cin)))
    t = t_embd.reshape(B, 1, Tc)

    weights = [kparams[n] for n in _WEIGHT_NAMES]
    in_specs = ([pl.BlockSpec((None, HW, Cp), lambda b: (b, 0, 0)),
                 pl.BlockSpec((None, 1, Tc), lambda b: (b, 0, 0))]
                + [_const_spec(w.shape) for w in weights])

    kernel = functools.partial(resnet_block_kernel, H=H, W=W, c_attn=c_out)
    out = pl.pallas_call(
        kernel,
        out_shape=jax.ShapeDtypeStruct((B, HW, Cp), jnp.float32),
        grid=(B,),
        in_specs=in_specs,
        out_specs=pl.BlockSpec((None, HW, Cp), lambda b: (b, 0, 0)),
        compiler_params=pltpu.CompilerParams(
            dimension_semantics=("parallel",),
            vmem_limit_bytes=40 * 1024 * 1024),
    )(x, t, *weights)

    out = out[:, :, :c_out].reshape(B, H, W, c_out)
    return jnp.transpose(out, (0, 3, 1, 2))


# ----------------------------------------------------------------------------
# Deterministic "natural" parameters (synthetic; no checkpoint loading)
# ----------------------------------------------------------------------------
def init_params(key, Cin, Cout, Tc):
    ks = jax.random.split(key, 24)

    def nrm(k, shape, scale):
        return jax.random.normal(k, shape, jnp.float32) * scale

    p = {}
    p['gn1_g'] = 1.0 + 0.1 * jax.random.normal(ks[0], (1, Cin), jnp.float32)
    p['gn1_b'] = 0.1 * jax.random.normal(ks[1], (1, Cin), jnp.float32)
    p['conv1_w'] = nrm(ks[2], (3, 3, Cin, Cout), 1.0 / math.sqrt(9 * Cin))   # HWIO
    p['conv1_b'] = nrm(ks[3], (1, Cout), 0.02)
    p['wt'] = nrm(ks[4], (Tc, Cout), 1.0 / math.sqrt(Tc))
    p['bt'] = nrm(ks[5], (1, Cout), 0.02)
    p['gn2_g'] = 1.0 + 0.1 * jax.random.normal(ks[6], (1, Cout), jnp.float32)
    p['gn2_b'] = 0.1 * jax.random.normal(ks[7], (1, Cout), jnp.float32)
    p['conv2_w'] = nrm(ks[8], (3, 3, Cout, Cout), 1.0 / math.sqrt(9 * Cout))
    p['conv2_b'] = nrm(ks[9], (1, Cout), 0.02)
    p['wsc'] = nrm(ks[10], (Cin, Cout), 1.0 / math.sqrt(Cin))
    p['bsc'] = nrm(ks[11], (1, Cout), 0.02)
    p['agn_g'] = 1.0 + 0.1 * jax.random.normal(ks[12], (1, Cout), jnp.float32)
    p['agn_b'] = 0.1 * jax.random.normal(ks[13], (1, Cout), jnp.float32)
    for i, name in enumerate(['q', 'k', 'v', 'o']):
        p['w' + name] = nrm(ks[14 + 2 * i], (Cout, Cout), 1.0 / math.sqrt(Cout))
        p['b' + name] = nrm(ks[15 + 2 * i], (1, Cout), 0.02)
    return p


# ----------------------------------------------------------------------------
# Pack natural params into the lane-padded / fused kernel operands
# ----------------------------------------------------------------------------
def pack_params(p, Cin, Cout, Tc, G, H, W):
    Cp = LANE
    f32 = np.float32

    def pad_last(a, target=Cp):
        a = np.asarray(a, f32)
        pad = [(0, 0)] * (a.ndim - 1) + [(0, target - a.shape[-1])]
        return np.pad(a, pad)

    def selector(C):
        cpg = C // G
        sel = (np.arange(Cp)[:, None] // cpg == np.arange(G)[None, :])
        sel &= (np.arange(Cp) < C)[:, None]
        return sel.astype(f32)

    kp = {}
    # GroupNorm params (selector / n folds the 1/N into the stats matmul)
    n1 = float(H * W * (Cin // G))
    n2 = float(H * W * (Cout // G))
    sel1, sel2 = selector(Cin), selector(Cout)
    kp['g1'], kp['b1'] = pad_last(p['gn1_g']), pad_last(p['gn1_b'])
    kp['a1'], kp['a1t'] = sel1 / n1, sel1.T.copy()
    kp['g2'], kp['b2'] = pad_last(p['gn2_g']), pad_last(p['gn2_b'])
    kp['a2'], kp['a2t'] = sel2 / n2, sel2.T.copy()
    kp['ga'], kp['ba'] = pad_last(p['agn_g']), pad_last(p['agn_b'])

    # 3x3 conv weights: (ky, 3*Cp, Cp) with K ordered [kx=0 | kx=1 | kx=2]
    def pack_conv(w_hwio, cin, cout):
        w_hwio = np.asarray(w_hwio, f32)
        w = np.zeros((3, 3 * Cp, Cp), f32)
        for kx in range(3):
            w[:, kx * Cp:kx * Cp + cin, :cout] = w_hwio[:, kx, :, :]
        return w

    kp['w1'], kp['cb1'] = pack_conv(p['conv1_w'], Cin, Cout), pad_last(p['conv1_b'])
    kp['w2'], kp['cb2'] = pack_conv(p['conv2_w'], Cout, Cout), pad_last(p['conv2_b'])

    wt = np.zeros((Tc, Cp), f32); wt[:, :Cout] = np.asarray(p['wt'], f32)
    kp['wt'], kp['bt'] = wt, pad_last(p['bt'])

    wsc = np.zeros((Cp, Cp), f32); wsc[:Cin, :Cout] = np.asarray(p['wsc'], f32)
    kp['wsc'], kp['bsc'] = wsc, pad_last(p['bsc'])

    wqkv = np.zeros((Cp, 3 * Cp), f32)
    bqkv = np.zeros((1, 3 * Cp), f32)
    for i, nm in enumerate(['q', 'k', 'v']):
        wqkv[:Cout, i * Cp:i * Cp + Cout] = np.asarray(p['w' + nm], f32)
        bqkv[0, i * Cp:i * Cp + Cout] = np.asarray(p['b' + nm], f32)[0]
    kp['wqkv'], kp['bqkv'] = wqkv, bqkv
    wo = np.zeros((Cp, Cp), f32); wo[:Cout, :Cout] = np.asarray(p['wo'], f32)
    kp['wo'], kp['bo'] = wo, pad_last(p['bo'])

    # Horizontal-shift selection matrices: act (H*W rows) -> left/right
    # neighbour rows of the H-padded buffer, zero at the x==0 / x==W-1 border.
    HW, HpW = H * W, (H + 2) * W
    SL = np.zeros((HpW, HW), f32)
    SR = np.zeros((HpW, HW), f32)
    for q in range(HpW):
        x = q % W
        if x != 0 and W <= q - 1 < W + HW:
            SL[q, q - 1 - W] = 1.0
        if x != W - 1 and W <= q + 1 < W + HW:
            SR[q, q + 1 - W] = 1.0
    kp['sl'], kp['sr'] = SL, SR

    return {k: jnp.asarray(v, jnp.float32) for k, v in kp.items()}


# ----------------------------------------------------------------------------
# Pure-JAX reference (faithful transcription of the PyTorch module)
# ----------------------------------------------------------------------------
def ref_forward(x_nchw, t_embd, p, G):
    P = lax.Precision.HIGHEST
    x = jnp.transpose(x_nchw, (0, 2, 3, 1))

    def gn(h, gamma, beta):
        B, H, W, C = h.shape
        cg = C // G
        hg = h.reshape(B, H, W, G, cg)
        mean = jnp.mean(hg, axis=(1, 2, 4), keepdims=True)
        var = jnp.mean((hg - mean) ** 2, axis=(1, 2, 4), keepdims=True)
        hn = ((hg - mean) / jnp.sqrt(var + 1e-6)).reshape(B, H, W, C)
        return hn * gamma.reshape(1, 1, 1, C) + beta.reshape(1, 1, 1, C)

    silu = lambda v: v * jax.nn.sigmoid(v)

    def conv3(h, w, b):
        return lax.conv_general_dilated(
            h, w, (1, 1), 'SAME',
            dimension_numbers=('NHWC', 'HWIO', 'NHWC'),
            precision=P) + b.reshape(1, 1, 1, -1)

    h1 = conv3(silu(gn(x, p['gn1_g'], p['gn1_b'])), p['conv1_w'], p['conv1_b'])
    tproj = jnp.dot(silu(t_embd), p['wt'], precision=P) + p['bt']
    h = h1 + tproj[:, None, None, :]
    h2 = conv3(silu(gn(h, p['gn2_g'], p['gn2_b'])), p['conv2_w'], p['conv2_b'])
    sc = jnp.einsum('bhwc,cd->bhwd', x, p['wsc'],
                    precision=P) + p['bsc'].reshape(1, 1, 1, -1)
    res = h2 + sc

    B, H, W, C = res.shape
    hn = gn(res, p['agn_g'], p['agn_b']).reshape(B, H * W, C)
    q = jnp.einsum('bic,cd->bid', hn, p['wq'], precision=P) + p['bq']
    k = jnp.einsum('bic,cd->bid', hn, p['wk'], precision=P) + p['bk']
    v = jnp.einsum('bic,cd->bid', hn, p['wv'], precision=P) + p['bv']
    alpha = jnp.einsum('bic,bjc->bij', q, k, precision=P) / np.sqrt(C)
    alpha = jax.nn.softmax(alpha, axis=-1)
    o = jnp.einsum('bij,bjc->bic', alpha, v, precision=P)
    o = jnp.einsum('bic,cd->bid', o, p['wo'], precision=P) + p['bo']
    out = o.reshape(B, H, W, C) + res
    return jnp.transpose(out, (0, 3, 1, 2))


# ----------------------------------------------------------------------------
if __name__ == "__main__":
    B, Cin, Cout, H, W, Tc, G = 2, 32, 64, 16, 16, 32, 16
    key = jax.random.PRNGKey(0)
    kx_, kt_, kp_ = jax.random.split(key, 3)
    x = jax.random.normal(kx_, (B, Cin, H, W), jnp.float32)       # NCHW like PyTorch
    t_embd = jax.random.normal(kt_, (B, Tc), jnp.float32)

    params = init_params(kp_, Cin, Cout, Tc)
    kparams = pack_params(params, Cin, Cout, Tc, G, H, W)

    out = resnet_block_forward(x, t_embd, kparams, c_out=Cout)
    out = jax.block_until_ready(out)

    ref = ref_forward(x, t_embd, params, G)
    np.testing.assert_allclose(np.asarray(out), np.asarray(ref),
                               atol=2e-2, rtol=2e-2)
    print("KERNEL_OK")
</pallas_src>

<mosaic_0001>
module attributes {stable_mosaic.version = 11 : i64} {
  func.func @resnet_block_kernel(%arg0: i32, %arg1: memref<1x256x128xf32, #tpu.memory_space<vmem>>, %arg2: memref<1x1x32xf32, #tpu.memory_space<vmem>>, %arg3: memref<1x128xf32, #tpu.memory_space<vmem>>, %arg4: memref<1x128xf32, #tpu.memory_space<vmem>>, %arg5: memref<128x16xf32, #tpu.memory_space<vmem>>, %arg6: memref<16x128xf32, #tpu.memory_space<vmem>>, %arg7: memref<3x384x128xf32, #tpu.memory_space<vmem>>, %arg8: memref<1x128xf32, #tpu.memory_space<vmem>>, %arg9: memref<32x128xf32, #tpu.memory_space<vmem>>, %arg10: memref<1x128xf32, #tpu.memory_space<vmem>>, %arg11: memref<1x128xf32, #tpu.memory_space<vmem>>, %arg12: memref<1x128xf32, #tpu.memory_space<vmem>>, %arg13: memref<128x16xf32, #tpu.memory_space<vmem>>, %arg14: memref<16x128xf32, #tpu.memory_space<vmem>>, %arg15: memref<3x384x128xf32, #tpu.memory_space<vmem>>, %arg16: memref<1x128xf32, #tpu.memory_space<vmem>>, %arg17: memref<128x128xf32, #tpu.memory_space<vmem>>, %arg18: memref<1x128xf32, #tpu.memory_space<vmem>>, %arg19: memref<1x128xf32, #tpu.memory_space<vmem>>, %arg20: memref<1x128xf32, #tpu.memory_space<vmem>>, %arg21: memref<128x384xf32, #tpu.memory_space<vmem>>, %arg22: memref<1x384xf32, #tpu.memory_space<vmem>>, %arg23: memref<128x128xf32, #tpu.memory_space<vmem>>, %arg24: memref<1x128xf32, #tpu.memory_space<vmem>>, %arg25: memref<288x256xf32, #tpu.memory_space<vmem>>, %arg26: memref<288x256xf32, #tpu.memory_space<vmem>>, %arg27: memref<1x256x128xf32, #tpu.memory_space<vmem>>) attributes {dimension_semantics = [#tpu.dimension_semantics<parallel>], iteration_bounds = array<i64: 2>, scalar_prefetch = 0 : i64, scratch_operands = 0 : i64, tpu.core_type = #tpu.core_type<tc>, window_params = [{transform_indices = @transform_0, window_bounds = array<i64: 1, 256, 128>}, {transform_indices = @transform_1, window_bounds = array<i64: 1, 1, 32>}, {pipeline_mode = #tpu.pipeline_mode<synchronous>, transform_indices = @transform_2, window_bounds = array<i64: 1, 128>}, {pipeline_mode = #tpu.pipeline_mode<synchronous>, transform_indices = @transform_3, window_bounds = array<i64: 1, 128>}, {pipeline_mode = #tpu.pipeline_mode<synchronous>, transform_indices = @transform_4, window_bounds = array<i64: 128, 16>}, {pipeline_mode = #tpu.pipeline_mode<synchronous>, transform_indices = @transform_5, window_bounds = array<i64: 16, 128>}, {pipeline_mode = #tpu.pipeline_mode<synchronous>, transform_indices = @transform_6, window_bounds = array<i64: 3, 384, 128>}, {pipeline_mode = #tpu.pipeline_mode<synchronous>, transform_indices = @transform_7, window_bounds = array<i64: 1, 128>}, {pipeline_mode = #tpu.pipeline_mode<synchronous>, transform_indices = @transform_8, window_bounds = array<i64: 32, 128>}, {pipeline_mode = #tpu.pipeline_mode<synchronous>, transform_indices = @transform_9, window_bounds = array<i64: 1, 128>}, {pipeline_mode = #tpu.pipeline_mode<synchronous>, transform_indices = @transform_10, window_bounds = array<i64: 1, 128>}, {pipeline_mode = #tpu.pipeline_mode<synchronous>, transform_indices = @transform_11, window_bounds = array<i64: 1, 128>}, {pipeline_mode = #tpu.pipeline_mode<synchronous>, transform_indices = @transform_12, window_bounds = array<i64: 128, 16>}, {pipeline_mode = #tpu.pipeline_mode<synchronous>, transform_indices = @transform_13, window_bounds = array<i64: 16, 128>}, {pipeline_mode = #tpu.pipeline_mode<synchronous>, transform_indices = @transform_14, window_bounds = array<i64: 3, 384, 128>}, {pipeline_mode = #tpu.pipeline_mode<synchronous>, transform_indices = @transform_15, window_bounds = array<i64: 1, 128>}, {pipeline_mode = #tpu.pipeline_mode<synchronous>, transform_indices = @transform_16, window_bounds = array<i64: 128, 128>}, {pipeline_mode = #tpu.pipeline_mode<synchronous>, transform_indices = @transform_17, window_bounds = array<i64: 1, 128>}, {pipeline_mode = #tpu.pipeline_mode<synchronous>, transform_indices = @transform_18, window_bounds = array<i64: 1, 128>}, {pipeline_mode = #tpu.pipeline_mode<synchronous>, transform_indices = @transform_19, window_bounds = array<i64: 1, 128>}, {pipeline_mode = #tpu.pipeline_mode<synchronous>, transform_indices = @transform_20, window_bounds = array<i64: 128, 384>}, {pipeline_mode = #tpu.pipeline_mode<synchronous>, transform_indices = @transform_21, window_bounds = array<i64: 1, 384>}, {pipeline_mode = #tpu.pipeline_mode<synchronous>, transform_indices = @transform_22, window_bounds = array<i64: 128, 128>}, {pipeline_mode = #tpu.pipeline_mode<synchronous>, transform_indices = @transform_23, window_bounds = array<i64: 1, 128>}, {pipeline_mode = #tpu.pipeline_mode<synchronous>, transform_indices = @transform_24, window_bounds = array<i64: 288, 256>}, {pipeline_mode = #tpu.pipeline_mode<synchronous>, transform_indices = @transform_25, window_bounds = array<i64: 288, 256>}, {transform_indices = @transform_26, window_bounds = array<i64: 1, 256, 128>}]} {
    %c0 = arith.constant 0 : index
    %c0_0 = arith.constant 0 : index
    %0 = vector.load %arg25[%c0, %c0_0] : memref<288x256xf32, #tpu.memory_space<vmem>>, vector<288x256xf32>
    %c0_1 = arith.constant 0 : index
    %c0_2 = arith.constant 0 : index
    %1 = vector.load %arg26[%c0_1, %c0_2] : memref<288x256xf32, #tpu.memory_space<vmem>>, vector<288x256xf32>
    %c0_3 = arith.constant 0 : index
    %c0_4 = arith.constant 0 : index
    %c0_5 = arith.constant 0 : index
    %2 = vector.load %arg1[%c0_3, %c0_4, %c0_5] : memref<1x256x128xf32, #tpu.memory_space<vmem>>, vector<1x256x128xf32>
    %3 = vector.shape_cast %2 : vector<1x256x128xf32> to vector<256x128xf32>
    %c0_6 = arith.constant 0 : index
    %c0_7 = arith.constant 0 : index
    %4 = vector.load %arg3[%c0_6, %c0_7] : memref<1x128xf32, #tpu.memory_space<vmem>>, vector<1x128xf32>
    %c0_8 = arith.constant 0 : index
    %c0_9 = arith.constant 0 : index
    %5 = vector.load %arg4[%c0_8, %c0_9] : memref<1x128xf32, #tpu.memory_space<vmem>>, vector<1x128xf32>
    %c0_10 = arith.constant 0 : index
    %c0_11 = arith.constant 0 : index
    %6 = vector.load %arg5[%c0_10, %c0_11] : memref<128x16xf32, #tpu.memory_space<vmem>>, vector<128x16xf32>
    %c0_12 = arith.constant 0 : index
    %c0_13 = arith.constant 0 : index
    %7 = vector.load %arg6[%c0_12, %c0_13] : memref<16x128xf32, #tpu.memory_space<vmem>>, vector<16x128xf32>
    %cst = arith.constant dense<0.000000e+00> : vector<128xf32>
    %8 = vector.multi_reduction <add>, %3, %cst [0] : vector<256x128xf32> to vector<128xf32>
    %9 = vector.shape_cast %8 : vector<128xf32> to vector<1x128xf32>
    %cst_14 = arith.constant dense<0.000000e+00> : vector<1x16xf32>
    %10 = tpu.matmul %9, %6, %cst_14 {dimension_numbers = #tpu.dot_dimension_numbers<[1], [0], [0], [1], [0, 0, 1, 1], [], []>} : vector<1x128xf32>, vector<128x16xf32>, vector<1x16xf32> -> vector<1x16xf32>
    %cst_15 = arith.constant dense<0.000000e+00> : vector<1x128xf32>
    %11 = tpu.matmul %10, %7, %cst_15 {dimension_numbers = #tpu.dot_dimension_numbers<[1], [0], [0], [1], [0, 0, 1, 1], [], []>} : vector<1x16xf32>, vector<16x128xf32>, vector<1x128xf32> -> vector<1x128xf32>
    %12 = vector.broadcast %11 : vector<1x128xf32> to vector<256x128xf32>
    %13 = arith.subf %3, %12 : vector<256x128xf32>
    %14 = arith.mulf %13, %13 : vector<256x128xf32>
    %cst_16 = arith.constant dense<0.000000e+00> : vector<128xf32>
    %15 = vector.multi_reduction <add>, %14, %cst_16 [0] : vector<256x128xf32> to vector<128xf32>
    %16 = vector.shape_cast %15 : vector<128xf32> to vector<1x128xf32>
    %cst_17 = arith.constant dense<0.000000e+00> : vector<1x16xf32>
    %17 = tpu.matmul %16, %6, %cst_17 {dimension_numbers = #tpu.dot_dimension_numbers<[1], [0], [0], [1], [0, 0, 1, 1], [], []>} : vector<1x128xf32>, vector<128x16xf32>, vector<1x16xf32> -> vector<1x16xf32>
    %cst_18 = arith.constant dense<0.000000e+00> : vector<1x128xf32>
    %18 = tpu.matmul %17, %7, %cst_18 {dimension_numbers = #tpu.dot_dimension_numbers<[1], [0], [0], [1], [0, 0, 1, 1], [], []>} : vector<1x16xf32>, vector<16x128xf32>, vector<1x128xf32> -> vector<1x128xf32>
    %cst_19 = arith.constant 9.99999997E-7 : f32
    %19 = vector.broadcast %cst_19 : f32 to vector<1x128xf32>
    %20 = arith.addf %18, %19 : vector<1x128xf32>
    %21 = math.rsqrt %20 : vector<1x128xf32>
    %22 = arith.mulf %21, %4 : vector<1x128xf32>
    %23 = vector.broadcast %22 : vector<1x128xf32> to vector<256x128xf32>
    %24 = arith.mulf %13, %23 : vector<256x128xf32>
    %25 = vector.broadcast %5 : vector<1x128xf32> to vector<256x128xf32>
    %26 = arith.addf %24, %25 : vector<256x128xf32>
    %27 = arith.negf %26 : vector<256x128xf32>
    %28 = math.exp %27 : vector<256x128xf32>
    %cst_20 = arith.constant 1.000000e+00 : f32
    %29 = vector.broadcast %cst_20 : f32 to vector<256x128xf32>
    %30 = arith.addf %29, %28 : vector<256x128xf32>
    %31 = arith.divf %29, %30 : vector<256x128xf32>
    %32 = arith.mulf %26, %31 : vector<256x128xf32>
    %c0_21 = arith.constant 0 : index
    %c0_22 = arith.constant 0 : index
    %33 = vector.load %arg8[%c0_21, %c0_22] : memref<1x128xf32, #tpu.memory_space<vmem>>, vector<1x128xf32>
    %cst_23 = arith.constant 0.000000e+00 : f32
    %34 = vector.broadcast %cst_23 : f32 to vector<16x128xf32>
    %35 = tpu.concatenate %34, %32, %34 in 0 : vector<16x128xf32>, vector<256x128xf32>, vector<16x128xf32> -> vector<288x128xf32>
    %cst_24 = arith.constant dense<0.000000e+00> : vector<288x128xf32>
    %36 = tpu.matmul %0, %32, %cst_24 {dimension_numbers = #tpu.dot_dimension_numbers<[1], [0], [0], [1], [0, 0, 1, 1], [], []>} : vector<288x256xf32>, vector<256x128xf32>, vector<288x128xf32> -> vector<288x128xf32>
    %cst_25 = arith.constant dense<0.000000e+00> : vector<288x128xf32>
    %37 = tpu.matmul %1, %32, %cst_25 {dimension_numbers = #tpu.dot_dimension_numbers<[1], [0], [0], [1], [0, 0, 1, 1], [], []>} : vector<288x256xf32>, vector<256x128xf32>, vector<288x128xf32> -> vector<288x128xf32>
    %38 = tpu.concatenate %36, %35, %37 in 1 : vector<288x128xf32>, vector<288x128xf32>, vector<288x128xf32> -> vector<288x384xf32>
    %39 = vector.extract_strided_slice %38 {offsets = [0, 0], sizes = [256, 384], strides = [1, 1]} : vector<288x384xf32> to vector<256x384xf32>
    %c0_26 = arith.constant 0 : index
    %c0_27 = arith.constant 0 : index
    %c0_28 = arith.constant 0 : index
    %40 = vector.load %arg7[%c0_26, %c0_27, %c0_28] : memref<3x384x128xf32, #tpu.memory_space<vmem>>, vector<1x384x128xf32>
    %41 = vector.shape_cast %40 : vector<1x384x128xf32> to vector<384x128xf32>
    %cst_29 = arith.constant dense<0.000000e+00> : vector<256x128xf32>
    %42 = tpu.matmul %39, %41, %cst_29 {dimension_numbers = #tpu.dot_dimension_numbers<[1], [0], [0], [1], [0, 0, 1, 1], [], []>} : vector<256x384xf32>, vector<384x128xf32>, vector<256x128xf32> -> vector<256x128xf32>
    %43 = vector.extract_strided_slice %38 {offsets = [16, 0], sizes = [256, 384], strides = [1, 1]} : vector<288x384xf32> to vector<256x384xf32>
    %c1 = arith.constant 1 : index
    %c0_30 = arith.constant 0 : index
    %c0_31 = arith.constant 0 : index
    %44 = vector.load %arg7[%c1, %c0_30, %c0_31] : memref<3x384x128xf32, #tpu.memory_space<vmem>>, vector<1x384x128xf32>
    %45 = vector.shape_cast %44 : vector<1x384x128xf32> to vector<384x128xf32>
    %cst_32 = arith.constant dense<0.000000e+00> : vector<256x128xf32>
    %46 = tpu.matmul %43, %45, %cst_32 {dimension_numbers = #tpu.dot_dimension_numbers<[1], [0], [0], [1], [0, 0, 1, 1], [], []>} : vector<256x384xf32>, vector<384x128xf32>, vector<256x128xf32> -> vector<256x128xf32>
    %47 = arith.addf %42, %46 : vector<256x128xf32>
    %48 = vector.extract_strided_slice %38 {offsets = [32, 0], sizes = [256, 384], strides = [1, 1]} : vector<288x384xf32> to vector<256x384xf32>
    %c2 = arith.constant 2 : index
    %c0_33 = arith.constant 0 : index
    %c0_34 = arith.constant 0 : index
    %49 = vector.load %arg7[%c2, %c0_33, %c0_34] : memref<3x384x128xf32, #tpu.memory_space<vmem>>, vector<1x384x128xf32>
    %50 = vector.shape_cast %49 : vector<1x384x128xf32> to vector<384x128xf32>
    %cst_35 = arith.constant dense<0.000000e+00> : vector<256x128xf32>
    %51 = tpu.matmul %48, %50, %cst_35 {dimension_numbers = #tpu.dot_dimension_numbers<[1], [0], [0], [1], [0, 0, 1, 1], [], []>} : vector<256x384xf32>, vector<384x128xf32>, vector<256x128xf32> -> vector<256x128xf32>
    %52 = arith.addf %47, %51 : vector<256x128xf32>
    %53 = vector.broadcast %33 : vector<1x128xf32> to vector<256x128xf32>
    %54 = arith.addf %52, %53 : vector<256x128xf32>
    %c0_36 = arith.constant 0 : index
    %c0_37 = arith.constant 0 : index
    %c0_38 = arith.constant 0 : index
    %55 = vector.load %arg2[%c0_36, %c0_37, %c0_38] : memref<1x1x32xf32, #tpu.memory_space<vmem>>, vector<1x1x32xf32>
    %56 = vector.shape_cast %55 : vector<1x1x32xf32> to vector<1x32xf32>
    %57 = arith.negf %56 : vector<1x32xf32>
    %58 = math.exp %57 : vector<1x32xf32>
    %cst_39 = arith.constant 1.000000e+00 : f32
    %59 = vector.broadcast %cst_39 : f32 to vector<1x32xf32>
    %60 = arith.addf %59, %58 : vector<1x32xf32>
    %61 = arith.divf %59, %60 : vector<1x32xf32>
    %62 = arith.mulf %56, %61 : vector<1x32xf32>
    %c0_40 = arith.constant 0 : index
    %c0_41 = arith.constant 0 : index
    %63 = vector.load %arg9[%c0_40, %c0_41] : memref<32x128xf32, #tpu.memory_space<vmem>>, vector<32x128xf32>
    %cst_42 = arith.constant dense<0.000000e+00> : vector<1x128xf32>
    %64 = tpu.matmul %62, %63, %cst_42 {dimension_numbers = #tpu.dot_dimension_numbers<[1], [0], [0], [1], [0, 0, 1, 1], [], []>} : vector<1x32xf32>, vector<32x128xf32>, vector<1x128xf32> -> vector<1x128xf32>
    %c0_43 = arith.constant 0 : index
    %c0_44 = arith.constant 0 : index
    %65 = vector.load %arg10[%c0_43, %c0_44] : memref<1x128xf32, #tpu.memory_space<vmem>>, vector<1x128xf32>
    %66 = arith.addf %64, %65 : vector<1x128xf32>
    %67 = vector.broadcast %66 : vector<1x128xf32> to vector<256x128xf32>
    %68 = arith.addf %54, %67 : vector<256x128xf32>
    %c0_45 = arith.constant 0 : index
    %c0_46 = arith.constant 0 : index
    %69 = vector.load %arg11[%c0_45, %c0_46] : memref<1x128xf32, #tpu.memory_space<vmem>>, vector<1x128xf32>
    %c0_47 = arith.constant 0 : index
    %c0_48 = arith.constant 0 : index
    %70 = vector.load %arg12[%c0_47, %c0_48] : memref<1x128xf32, #tpu.memory_space<vmem>>, vector<1x128xf32>
    %c0_49 = arith.constant 0 : index
    %c0_50 = arith.constant 0 : index
    %71 = vector.load %arg13[%c0_49, %c0_50] : memref<128x16xf32, #tpu.memory_space<vmem>>, vector<128x16xf32>
    %c0_51 = arith.constant 0 : index
    %c0_52 = arith.constant 0 : index
    %72 = vector.load %arg14[%c0_51, %c0_52] : memref<16x128xf32, #tpu.memory_space<vmem>>, vector<16x128xf32>
    %cst_53 = arith.constant dense<0.000000e+00> : vector<128xf32>
    %73 = vector.multi_reduction <add>, %68, %cst_53 [0] : vector<256x128xf32> to vector<128xf32>
    %74 = vector.shape_cast %73 : vector<128xf32> to vector<1x128xf32>
    %cst_54 = arith.constant dense<0.000000e+00> : vector<1x16xf32>
    %75 = tpu.matmul %74, %71, %cst_54 {dimension_numbers = #tpu.dot_dimension_numbers<[1], [0], [0], [1], [0, 0, 1, 1], [], []>} : vector<1x128xf32>, vector<128x16xf32>, vector<1x16xf32> -> vector<1x16xf32>
    %cst_55 = arith.constant dense<0.000000e+00> : vector<1x128xf32>
    %76 = tpu.matmul %75, %72, %cst_55 {dimension_numbers = #tpu.dot_dimension_numbers<[1], [0], [0], [1], [0, 0, 1, 1], [], []>} : vector<1x16xf32>, vector<16x128xf32>, vector<1x128xf32> -> vector<1x128xf32>
    %77 = vector.broadcast %76 : vector<1x128xf32> to vector<256x128xf32>
    %78 = arith.subf %68, %77 : vector<256x128xf32>
    %79 = arith.mulf %78, %78 : vector<256x128xf32>
    %cst_56 = arith.constant dense<0.000000e+00> : vector<128xf32>
    %80 = vector.multi_reduction <add>, %79, %cst_56 [0] : vector<256x128xf32> to vector<128xf32>
    %81 = vector.shape_cast %80 : vector<128xf32> to vector<1x128xf32>
    %cst_57 = arith.constant dense<0.000000e+00> : vector<1x16xf32>
    %82 = tpu.matmul %81, %71, %cst_57 {dimension_numbers = #tpu.dot_dimension_numbers<[1], [0], [0], [1], [0, 0, 1, 1], [], []>} : vector<1x128xf32>, vector<128x16xf32>, vector<1x16xf32> -> vector<1x16xf32>
    %cst_58 = arith.constant dense<0.000000e+00> : vector<1x128xf32>
    %83 = tpu.matmul %82, %72, %cst_58 {dimension_numbers = #tpu.dot_dimension_numbers<[1], [0], [0], [1], [0, 0, 1, 1], [], []>} : vector<1x16xf32>, vector<16x128xf32>, vector<1x128xf32> -> vector<1x128xf32>
    %cst_59 = arith.constant 9.99999997E-7 : f32
    %84 = vector.broadcast %cst_59 : f32 to vector<1x128xf32>
    %85 = arith.addf %83, %84 : vector<1x128xf32>
    %86 = math.rsqrt %85 : vector<1x128xf32>
    %87 = arith.mulf %86, %69 : vector<1x128xf32>
    %88 = vector.broadcast %87 : vector<1x128xf32> to vector<256x128xf32>
    %89 = arith.mulf %78, %88 : vector<256x128xf32>
    %90 = vector.broadcast %70 : vector<1x128xf32> to vector<256x128xf32>
    %91 = arith.addf %89, %90 : vector<256x128xf32>
    %92 = arith.negf %91 : vector<256x128xf32>
    %93 = math.exp %92 : vector<256x128xf32>
    %cst_60 = arith.constant 1.000000e+00 : f32
    %94 = vector.broadcast %cst_60 : f32 to vector<256x128xf32>
    %95 = arith.addf %94, %93 : vector<256x128xf32>
    %96 = arith.divf %94, %95 : vector<256x128xf32>
    %97 = arith.mulf %91, %96 : vector<256x128xf32>
    %c0_61 = arith.constant 0 : index
    %c0_62 = arith.constant 0 : index
    %98 = vector.load %arg16[%c0_61, %c0_62] : memref<1x128xf32, #tpu.memory_space<vmem>>, vector<1x128xf32>
    %cst_63 = arith.constant 0.000000e+00 : f32
    %99 = vector.broadcast %cst_63 : f32 to vector<16x128xf32>
    %100 = tpu.concatenate %99, %97, %99 in 0 : vector<16x128xf32>, vector<256x128xf32>, vector<16x128xf32> -> vector<288x128xf32>
    %cst_64 = arith.constant dense<0.000000e+00> : vector<288x128xf32>
    %101 = tpu.matmul %0, %97, %cst_64 {dimension_numbers = #tpu.dot_dimension_numbers<[1], [0], [0], [1], [0, 0, 1, 1], [], []>} : vector<288x256xf32>, vector<256x128xf32>, vector<288x128xf32> -> vector<288x128xf32>
    %cst_65 = arith.constant dense<0.000000e+00> : vector<288x128xf32>
    %102 = tpu.matmul %1, %97, %cst_65 {dimension_numbers = #tpu.dot_dimension_numbers<[1], [0], [0], [1], [0, 0, 1, 1], [], []>} : vector<288x256xf32>, vector<256x128xf32>, vector<288x128xf32> -> vector<288x128xf32>
    %103 = tpu.concatenate %101, %100, %102 in 1 : vector<288x128xf32>, vector<288x128xf32>, vector<288x128xf32> -> vector<288x384xf32>
    %104 = vector.extract_strided_slice %103 {offsets = [0, 0], sizes = [256, 384], strides = [1, 1]} : vector<288x384xf32> to vector<256x384xf32>
    %c0_66 = arith.constant 0 : index
    %c0_67 = arith.constant 0 : index
    %c0_68 = arith.constant 0 : index
    %105 = vector.load %arg15[%c0_66, %c0_67, %c0_68] : memref<3x384x128xf32, #tpu.memory_space<vmem>>, vector<1x384x128xf32>
    %106 = vector.shape_cast %105 : vector<1x384x128xf32> to vector<384x128xf32>
    %cst_69 = arith.constant dense<0.000000e+00> : vector<256x128xf32>
    %107 = tpu.matmul %104, %106, %cst_69 {dimension_numbers = #tpu.dot_dimension_numbers<[1], [0], [0], [1], [0, 0, 1, 1], [], []>} : vector<256x384xf32>, vector<384x128xf32>, vector<256x128xf32> -> vector<256x128xf32>
    %108 = vector.extract_strided_slice %103 {offsets = [16, 0], sizes = [256, 384], strides = [1, 1]} : vector<288x384xf32> to vector<256x384xf32>
    %c1_70 = arith.constant 1 : index
    %c0_71 = arith.constant 0 : index
    %c0_72 = arith.constant 0 : index
    %109 = vector.load %arg15[%c1_70, %c0_71, %c0_72] : memref<3x384x128xf32, #tpu.memory_space<vmem>>, vector<1x384x128xf32>
    %110 = vector.shape_cast %109 : vector<1x384x128xf32> to vector<384x128xf32>
    %cst_73 = arith.constant dense<0.000000e+00> : vector<256x128xf32>
    %111 = tpu.matmul %108, %110, %cst_73 {dimension_numbers = #tpu.dot_dimension_numbers<[1], [0], [0], [1], [0, 0, 1, 1], [], []>} : vector<256x384xf32>, vector<384x128xf32>, vector<256x128xf32> -> vector<256x128xf32>
    %112 = arith.addf %107, %111 : vector<256x128xf32>
    %113 = vector.extract_strided_slice %103 {offsets = [32, 0], sizes = [256, 384], strides = [1, 1]} : vector<288x384xf32> to vector<256x384xf32>
    %c2_74 = arith.constant 2 : index
    %c0_75 = arith.constant 0 : index
    %c0_76 = arith.constant 0 : index
    %114 = vector.load %arg15[%c2_74, %c0_75, %c0_76] : memref<3x384x128xf32, #tpu.memory_space<vmem>>, vector<1x384x128xf32>
    %115 = vector.shape_cast %114 : vector<1x384x128xf32> to vector<384x128xf32>
    %cst_77 = arith.constant dense<0.000000e+00> : vector<256x128xf32>
    %116 = tpu.matmul %113, %115, %cst_77 {dimension_numbers = #tpu.dot_dimension_numbers<[1], [0], [0], [1], [0, 0, 1, 1], [], []>} : vector<256x384xf32>, vector<384x128xf32>, vector<256x128xf32> -> vector<256x128xf32>
    %117 = arith.addf %112, %116 : vector<256x128xf32>
    %118 = vector.broadcast %98 : vector<1x128xf32> to vector<256x128xf32>
    %119 = arith.addf %117, %118 : vector<256x128xf32>
    %c0_78 = arith.constant 0 : index
    %c0_79 = arith.constant 0 : index
    %120 = vector.load %arg17[%c0_78, %c0_79] : memref<128x128xf32, #tpu.memory_space<vmem>>, vector<128x128xf32>
    %cst_80 = arith.constant dense<0.000000e+00> : vector<256x128xf32>
    %121 = tpu.matmul %3, %120, %cst_80 {dimension_numbers = #tpu.dot_dimension_numbers<[1], [0], [0], [1], [0, 0, 1, 1], [], []>} : vector<256x128xf32>, vector<128x128xf32>, vector<256x128xf32> -> vector<256x128xf32>
    %122 = arith.addf %119, %121 : vector<256x128xf32>
    %c0_81 = arith.constant 0 : index
    %c0_82 = arith.constant 0 : index
    %123 = vector.load %arg18[%c0_81, %c0_82] : memref<1x128xf32, #tpu.memory_space<vmem>>, vector<1x128xf32>
    %124 = vector.broadcast %123 : vector<1x128xf32> to vector<256x128xf32>
    %125 = arith.addf %122, %124 : vector<256x128xf32>
    %c0_83 = arith.constant 0 : index
    %c0_84 = arith.constant 0 : index
    %126 = vector.load %arg19[%c0_83, %c0_84] : memref<1x128xf32, #tpu.memory_space<vmem>>, vector<1x128xf32>
    %c0_85 = arith.constant 0 : index
    %c0_86 = arith.constant 0 : index
    %127 = vector.load %arg20[%c0_85, %c0_86] : memref<1x128xf32, #tpu.memory_space<vmem>>, vector<1x128xf32>
    %c0_87 = arith.constant 0 : index
    %c0_88 = arith.constant 0 : index
    %128 = vector.load %arg13[%c0_87, %c0_88] : memref<128x16xf32, #tpu.memory_space<vmem>>, vector<128x16xf32>
    %c0_89 = arith.constant 0 : index
    %c0_90 = arith.constant 0 : index
    %129 = vector.load %arg14[%c0_89, %c0_90] : memref<16x128xf32, #tpu.memory_space<vmem>>, vector<16x128xf32>
    %cst_91 = arith.constant dense<0.000000e+00> : vector<128xf32>
    %130 = vector.multi_reduction <add>, %125, %cst_91 [0] : vector<256x128xf32> to vector<128xf32>
    %131 = vector.shape_cast %130 : vector<128xf32> to vector<1x128xf32>
    %cst_92 = arith.constant dense<0.000000e+00> : vector<1x16xf32>
    %132 = tpu.matmul %131, %128, %cst_92 {dimension_numbers = #tpu.dot_dimension_numbers<[1], [0], [0], [1], [0, 0, 1, 1], [], []>} : vector<1x128xf32>, vector<128x16xf32>, vector<1x16xf32> -> vector<1x16xf32>
    %cst_93 = arith.constant dense<0.000000e+00> : vector<1x128xf32>
    %133 = tpu.matmul %132, %129, %cst_93 {dimension_numbers = #tpu.dot_dimension_numbers<[1], [0], [0], [1], [0, 0, 1, 1], [], []>} : vector<1x16xf32>, vector<16x128xf32>, vector<1x128xf32> -> vector<1x128xf32>
    %134 = vector.broadcast %133 : vector<1x128xf32> to vector<256x128xf32>
    %135 = arith.subf %125, %134 : vector<256x128xf32>
    %136 = arith.mulf %135, %135 : vector<256x128xf32>
    %cst_94 = arith.constant dense<0.000000e+00> : vector<128xf32>
    %137 = vector.multi_reduction <add>, %136, %cst_94 [0] : vector<256x128xf32> to vector<128xf32>
    %138 = vector.shape_cast %137 : vector<128xf32> to vector<1x128xf32>
    %cst_95 = arith.constant dense<0.000000e+00> : vector<1x16xf32>
    %139 = tpu.matmul %138, %128, %cst_95 {dimension_numbers = #tpu.dot_dimension_numbers<[1], [0], [0], [1], [0, 0, 1, 1], [], []>} : vector<1x128xf32>, vector<128x16xf32>, vector<1x16xf32> -> vector<1x16xf32>
    %cst_96 = arith.constant dense<0.000000e+00> : vector<1x128xf32>
    %140 = tpu.matmul %139, %129, %cst_96 {dimension_numbers = #tpu.dot_dimension_numbers<[1], [0], [0], [1], [0, 0, 1, 1], [], []>} : vector<1x16xf32>, vector<16x128xf32>, vector<1x128xf32> -> vector<1x128xf32>
    %cst_97 = arith.constant 9.99999997E-7 : f32
    %141 = vector.broadcast %cst_97 : f32 to vector<1x128xf32>
    %142 = arith.addf %140, %141 : vector<1x128xf32>
    %143 = math.rsqrt %142 : vector<1x128xf32>
    %144 = arith.mulf %143, %126 : vector<1x128xf32>
    %145 = vector.broadcast %144 : vector<1x128xf32> to vector<256x128xf32>
    %146 = arith.mulf %135, %145 : vector<256x128xf32>
    %147 = vector.broadcast %127 : vector<1x128xf32> to vector<256x128xf32>
    %148 = arith.addf %146, %147 : vector<256x128xf32>
    %c0_98 = arith.constant 0 : index
    %c0_99 = arith.constant 0 : index
    %149 = vector.load %arg21[%c0_98, %c0_99] : memref<128x384xf32, #tpu.memory_space<vmem>>, vector<128x384xf32>
    %cst_100 = arith.constant dense<0.000000e+00> : vector<256x384xf32>
    %150 = tpu.matmul %148, %149, %cst_100 {dimension_numbers = #tpu.dot_dimension_numbers<[1], [0], [0], [1], [0, 0, 1, 1], [], []>} : vector<256x128xf32>, vector<128x384xf32>, vector<256x384xf32> -> vector<256x384xf32>
    %c0_101 = arith.constant 0 : index
    %c0_102 = arith.constant 0 : index
    %151 = vector.load %arg22[%c0_101, %c0_102] : memref<1x384xf32, #tpu.memory_space<vmem>>, vector<1x384xf32>
    %152 = vector.broadcast %151 : vector<1x384xf32> to vector<256x384xf32>
    %153 = arith.addf %150, %152 : vector<256x384xf32>
    %154 = vector.extract_strided_slice %153 {offsets = [0, 0], sizes = [256, 128], strides = [1, 1]} : vector<256x384xf32> to vector<256x128xf32>
    %155 = vector.extract_strided_slice %153 {offsets = [0, 128], sizes = [256, 128], strides = [1, 1]} : vector<256x384xf32> to vector<256x128xf32>
    %156 = vector.extract_strided_slice %153 {offsets = [0, 256], sizes = [256, 128], strides = [1, 1]} : vector<256x384xf32> to vector<256x128xf32>
    %cst_103 = arith.constant dense<0.000000e+00> : vector<256x256xf32>
    %157 = tpu.matmul %154, %155, %cst_103 {dimension_numbers = #tpu.dot_dimension_numbers<[1], [1], [0], [0], [0, 0, 1, 0], [], []>} : vector<256x128xf32>, vector<256x128xf32>, vector<256x256xf32> -> vector<256x256xf32>
    %cst_104 = arith.constant 1.250000e-01 : f32
    %158 = vector.broadcast %cst_104 : f32 to vector<256x256xf32>
    %159 = arith.mulf %157, %158 : vector<256x256xf32>
    %cst_105 = arith.constant dense<0xFF800000> : vector<256xf32>
    %160 = vector.multi_reduction <maximumf>, %159, %cst_105 [1] : vector<256x256xf32> to vector<256xf32>
    %161 = vector.shape_cast %160 : vector<256xf32> to vector<256x1xf32>
    %162 = vector.broadcast %161 : vector<256x1xf32> to vector<256x256xf32>
    %163 = arith.subf %159, %162 : vector<256x256xf32>
    %164 = math.exp %163 : vector<256x256xf32>
    %cst_106 = arith.constant dense<0.000000e+00> : vector<256xf32>
    %165 = vector.multi_reduction <add>, %164, %cst_106 [1] : vector<256x256xf32> to vector<256xf32>
    %166 = vector.shape_cast %165 : vector<256xf32> to vector<256x1xf32>
    %167 = tpu.reciprocal %166 {approx = true} : vector<256x1xf32> -> vector<256x1xf32>
    %168 = vector.broadcast %167 : vector<256x1xf32> to vector<256x256xf32>
    %169 = arith.mulf %164, %168 : vector<256x256xf32>
    %cst_107 = arith.constant dense<0.000000e+00> : vector<256x128xf32>
    %170 = tpu.matmul %169, %156, %cst_107 {dimension_numbers = #tpu.dot_dimension_numbers<[1], [0], [0], [1], [0, 0, 1, 1], [], []>} : vector<256x256xf32>, vector<256x128xf32>, vector<256x128xf32> -> vector<256x128xf32>
    %c0_108 = arith.constant 0 : index
    %c0_109 = arith.constant 0 : index
    %171 = vector.load %arg23[%c0_108, %c0_109] : memref<128x128xf32, #tpu.memory_space<vmem>>, vector<128x128xf32>
    %cst_110 = arith.constant dense<0.000000e+00> : vector<256x128xf32>
    %172 = tpu.matmul %170, %171, %cst_110 {dimension_numbers = #tpu.dot_dimension_numbers<[1], [0], [0], [1], [0, 0, 1, 1], [], []>} : vector<256x128xf32>, vector<128x128xf32>, vector<256x128xf32> -> vector<256x128xf32>
    %c0_111 = arith.constant 0 : index
    %c0_112 = arith.constant 0 : index
    %173 = vector.load %arg24[%c0_111, %c0_112] : memref<1x128xf32, #tpu.memory_space<vmem>>, vector<1x128xf32>
    %174 = vector.broadcast %173 : vector<1x128xf32> to vector<256x128xf32>
    %175 = arith.addf %172, %174 : vector<256x128xf32>
    %176 = arith.addf %175, %125 : vector<256x128xf32>
    %c0_113 = arith.constant 0 : index
    %c0_114 = arith.constant 0 : index
    %c0_115 = arith.constant 0 : index
    %177 = vector.load %arg27[%c0_113, %c0_114, %c0_115] : memref<1x256x128xf32, #tpu.memory_space<vmem>>, vector<1x256x128xf32>
    %178 = vector.shape_cast %177 : vector<1x256x128xf32> to vector<256x128xf32>
    %179 = vector.shape_cast %176 : vector<256x128xf32> to vector<1x256x128xf32>
    tpu.vector_store %arg27[%c0_113, %c0_114, %c0_115], %179 {strides = array<i32>} : memref<1x256x128xf32, #tpu.memory_space<vmem>>, vector<1x256x128xf32>,
    return
  }
  func.func @transform_0(%arg0: i32) -> (i32, i32, i32) {
    %c0_i32 = arith.constant 0 : i32
    %c0_i32_0 = arith.constant 0 : i32
    %c0_i32_1 = arith.constant 0 : i32
    return %arg0, %c0_i32, %c0_i32_0 : i32, i32, i32
  }
  func.func @transform_1(%arg0: i32) -> (i32, i32, i32) {
    %c0_i32 = arith.constant 0 : i32
    %c0_i32_0 = arith.constant 0 : i32
    %c0_i32_1 = arith.constant 0 : i32
    return %arg0, %c0_i32, %c0_i32_0 : i32, i32, i32
  }
  func.func @transform_2(%arg0: i32) -> (i32, i32) {
    %c0_i32 = arith.constant 0 : i32
    %c0_i32_0 = arith.constant 0 : i32
    %c0_i32_1 = arith.constant 0 : i32
    return %c0_i32, %c0_i32_0 : i32, i32
  }
  func.func @transform_3(%arg0: i32) -> (i32, i32) {
    %c0_i32 = arith.constant 0 : i32
    %c0_i32_0 = arith.constant 0 : i32
    %c0_i32_1 = arith.constant 0 : i32
    return %c0_i32, %c0_i32_0 : i32, i32
  }
  func.func @transform_4(%arg0: i32) -> (i32, i32) {
    %c0_i32 = arith.constant 0 : i32
    %c0_i32_0 = arith.constant 0 : i32
    %c0_i32_1 = arith.constant 0 : i32
    return %c0_i32, %c0_i32_0 : i32, i32
  }
  func.func @transform_5(%arg0: i32) -> (i32, i32) {
    %c0_i32 = arith.constant 0 : i32
    %c0_i32_0 = arith.constant 0 : i32
    %c0_i32_1 = arith.constant 0 : i32
    return %c0_i32, %c0_i32_0 : i32, i32
  }
  func.func @transform_6(%arg0: i32) -> (i32, i32, i32) {
    %c0_i32 = arith.constant 0 : i32
    %c0_i32_0 = arith.constant 0 : i32
    %c0_i32_1 = arith.constant 0 : i32
    %c0_i32_2 = arith.constant 0 : i32
    return %c0_i32, %c0_i32_0, %c0_i32_1 : i32, i32, i32
  }
  func.func @transform_7(%arg0: i32) -> (i32, i32) {
    %c0_i32 = arith.constant 0 : i32
    %c0_i32_0 = arith.constant 0 : i32
    %c0_i32_1 = arith.constant 0 : i32
    return %c0_i32, %c0_i32_0 : i32, i32
  }
  func.func @transform_8(%arg0: i32) -> (i32, i32) {
    %c0_i32 = arith.constant 0 : i32
    %c0_i32_0 = arith.constant 0 : i32
    %c0_i32_1 = arith.constant 0 : i32
    return %c0_i32, %c0_i32_0 : i32, i32
  }
  func.func @transform_9(%arg0: i32) -> (i32, i32) {
    %c0_i32 = arith.constant 0 : i32
    %c0_i32_0 = arith.constant 0 : i32
    %c0_i32_1 = arith.constant 0 : i32
    return %c0_i32, %c0_i32_0 : i32, i32
  }
  func.func @transform_10(%arg0: i32) -> (i32, i32) {
    %c0_i32 = arith.constant 0 : i32
    %c0_i32_0 = arith.constant 0 : i32
    %c0_i32_1 = arith.constant 0 : i32
    return %c0_i32, %c0_i32_0 : i32, i32
  }
  func.func @transform_11(%arg0: i32) -> (i32, i32) {
    %c0_i32 = arith.constant 0 : i32
    %c0_i32_0 = arith.constant 0 : i32
    %c0_i32_1 = arith.constant 0 : i32
    return %c0_i32, %c0_i32_0 : i32, i32
  }
  func.func @transform_12(%arg0: i32) -> (i32, i32) {
    %c0_i32 = arith.constant 0 : i32
    %c0_i32_0 = arith.constant 0 : i32
    %c0_i32_1 = arith.constant 0 : i32
    return %c0_i32, %c0_i32_0 : i32, i32
  }
  func.func @transform_13(%arg0: i32) -> (i32, i32) {
    %c0_i32 = arith.constant 0 : i32
    %c0_i32_0 = arith.constant 0 : i32
    %c0_i32_1 = arith.constant 0 : i32
    return %c0_i32, %c0_i32_0 : i32, i32
  }
  func.func @transform_14(%arg0: i32) -> (i32, i32, i32) {
    %c0_i32 = arith.constant 0 : i32
    %c0_i32_0 = arith.constant 0 : i32
    %c0_i32_1 = arith.constant 0 : i32
    %c0_i32_2 = arith.constant 0 : i32
    return %c0_i32, %c0_i32_0, %c0_i32_1 : i32, i32, i32
  }
  func.func @transform_15(%arg0: i32) -> (i32, i32) {
    %c0_i32 = arith.constant 0 : i32
    %c0_i32_0 = arith.constant 0 : i32
    %c0_i32_1 = arith.constant 0 : i32
    return %c0_i32, %c0_i32_0 : i32, i32
  }
  func.func @transform_16(%arg0: i32) -> (i32, i32) {
    %c0_i32 = arith.constant 0 : i32
    %c0_i32_0 = arith.constant 0 : i32
    %c0_i32_1 = arith.constant 0 : i32
    return %c0_i32, %c0_i32_0 : i32, i32
  }
  func.func @transform_17(%arg0: i32) -> (i32, i32) {
    %c0_i32 = arith.constant 0 : i32
    %c0_i32_0 = arith.constant 0 : i32
    %c0_i32_1 = arith.constant 0 : i32
    return %c0_i32, %c0_i32_0 : i32, i32
  }
  func.func @transform_18(%arg0: i32) -> (i32, i32) {
    %c0_i32 = arith.constant 0 : i32
    %c0_i32_0 = arith.constant 0 : i32
    %c0_i32_1 = arith.constant 0 : i32
    return %c0_i32, %c0_i32_0 : i32, i32
  }
  func.func @transform_19(%arg0: i32) -> (i32, i32) {
    %c0_i32 = arith.constant 0 : i32
    %c0_i32_0 = arith.constant 0 : i32
    %c0_i32_1 = arith.constant 0 : i32
    return %c0_i32, %c0_i32_0 : i32, i32
  }
  func.func @transform_20(%arg0: i32) -> (i32, i32) {
    %c0_i32 = arith.constant 0 : i32
    %c0_i32_0 = arith.constant 0 : i32
    %c0_i32_1 = arith.constant 0 : i32
    return %c0_i32, %c0_i32_0 : i32, i32
  }
  func.func @transform_21(%arg0: i32) -> (i32, i32) {
    %c0_i32 = arith.constant 0 : i32
    %c0_i32_0 = arith.constant 0 : i32
    %c0_i32_1 = arith.constant 0 : i32
    return %c0_i32, %c0_i32_0 : i32, i32
  }
  func.func @transform_22(%arg0: i32) -> (i32, i32) {
    %c0_i32 = arith.constant 0 : i32
    %c0_i32_0 = arith.constant 0 : i32
    %c0_i32_1 = arith.constant 0 : i32
    return %c0_i32, %c0_i32_0 : i32, i32
  }
  func.func @transform_23(%arg0: i32) -> (i32, i32) {
    %c0_i32 = arith.constant 0 : i32
    %c0_i32_0 = arith.constant 0 : i32
    %c0_i32_1 = arith.constant 0 : i32
    return %c0_i32, %c0_i32_0 : i32, i32
  }
  func.func @transform_24(%arg0: i32) -> (i32, i32) {
    %c0_i32 = arith.constant 0 : i32
    %c0_i32_0 = arith.constant 0 : i32
    %c0_i32_1 = arith.constant 0 : i32
    return %c0_i32, %c0_i32_0 : i32, i32
  }
  func.func @transform_25(%arg0: i32) -> (i32, i32) {
    %c0_i32 = arith.constant 0 : i32
    %c0_i32_0 = arith.constant 0 : i32
    %c0_i32_1 = arith.constant 0 : i32
    return %c0_i32, %c0_i32_0 : i32, i32
  }
  func.func @transform_26(%arg0: i32) -> (i32, i32, i32) {
    %c0_i32 = arith.constant 0 : i32
    %c0_i32_0 = arith.constant 0 : i32
    %c0_i32_1 = arith.constant 0 : i32
    return %arg0, %c0_i32, %c0_i32_0 : i32, i32, i32
  }
}

</mosaic_0001>

<llo_original>
// kernel: tpu_custom_call.1
$region0: #{tpu_custom_call.1}
  #allocation0 [shape = 'u32[]', space=smem, size = 0x4, offset = 0x4, fixed_abs, tag = 'smem constant byte address 0x4 - core index']
  #allocation1 [shape = 'u32[72,128]{1,0:T(1,128)}', space=vmem, size = 0x9000, scoped, tag = 'internal scratch']
  %s0 = inlined_call_operand.hbm [shape: f32[2,256,128], index: 0, kind: input, shape index: {}]
  %s1 = inlined_call_operand.hbm [shape: f32[2,1,32], index: 1, kind: input, shape index: {}]
  %s2 = inlined_call_operand.hbm [shape: f32[1,128], index: 2, kind: input, shape index: {}]
  %s3 = inlined_call_operand.hbm [shape: f32[1,128], index: 3, kind: input, shape index: {}]
  %s4 = inlined_call_operand.vmem [shape: f32[128,16], index: 4, kind: input, shape index: {}]
  %s5 = inlined_call_operand.vmem [shape: f32[16,128], index: 5, kind: input, shape index: {}]
  %s6 = inlined_call_operand.hbm [shape: f32[3,384,128], index: 6, kind: input, shape index: {}]
  %s7 = inlined_call_operand.hbm [shape: f32[1,128], index: 7, kind: input, shape index: {}]
  %s8 = inlined_call_operand.hbm [shape: f32[32,128], index: 8, kind: input, shape index: {}]
  %s9 = inlined_call_operand.vmem [shape: f32[1,128], index: 9, kind: input, shape index: {}]
  %s10 = inlined_call_operand.vmem [shape: f32[1,128], index: 10, kind: input, shape index: {}]
  %s11 = inlined_call_operand.vmem [shape: f32[1,128], index: 11, kind: input, shape index: {}]
  %s12 = inlined_call_operand.vmem [shape: f32[128,16], index: 12, kind: input, shape index: {}]
  %s13 = inlined_call_operand.hbm [shape: f32[16,128], index: 13, kind: input, shape index: {}]
  %s14 = inlined_call_operand.hbm [shape: f32[3,384,128], index: 14, kind: input, shape index: {}]
  %s15 = inlined_call_operand.vmem [shape: f32[1,128], index: 15, kind: input, shape index: {}]
  %s16 = inlined_call_operand.vmem [shape: f32[128,128], index: 16, kind: input, shape index: {}]
  %s17 = inlined_call_operand.vmem [shape: f32[1,128], index: 17, kind: input, shape index: {}]
  %s18 = inlined_call_operand.vmem [shape: f32[1,128], index: 18, kind: input, shape index: {}]
  %s19 = inlined_call_operand.vmem [shape: f32[1,128], index: 19, kind: input, shape index: {}]
  %s20 = inlined_call_operand.hbm [shape: f32[128,384], index: 20, kind: input, shape index: {}]
  %s21 = inlined_call_operand.vmem [shape: f32[1,384], index: 21, kind: input, shape index: {}]
  %s22 = inlined_call_operand.vmem [shape: f32[128,128], index: 22, kind: input, shape index: {}]
  %s23 = inlined_call_operand.vmem [shape: f32[1,128], index: 23, kind: input, shape index: {}]
  %s24 = inlined_call_operand.hbm [shape: f32[288,256], index: 24, kind: input, shape index: {}]
  %s25 = inlined_call_operand.hbm [shape: f32[288,256], index: 25, kind: input, shape index: {}]
  %s26 = inlined_call_operand.hbm [shape: f32[2,256,128], index: 26, kind: output, shape index: {}]
  %s27 = sld [smem:[#allocation0]]
  $region185: #{tpu_custom_call.1} parent=0
    _
  %s29 = ssub.s32 1, %s27
  %s30 = scalar_select 0, %s29, %s27
  $region1: #{tpu_custom_call.1} parent=0
    #allocation2 [shape = 'u8[262144]{0}', space=vmem, size = 0x40000, scoped, tag = 'input window, operand 0']
    #allocation3 [shape = 's32[2]{0}', space=sflag, size = 0x8, scoped, tag = 'scoped memory for tpu_custom_call.1']
    #allocation4 [shape = 's32[2]{0}', space=sflag, size = 0x8, scoped, tag = 'scoped memory for tpu_custom_call.1']
    #allocation5 [shape = 'u8[1024]{0}', space=vmem, size = 0x400, scoped, tag = 'input window, operand 1']
    #allocation6 [shape = 's32[2]{0}', space=sflag, size = 0x8, scoped, tag = 'scoped memory for tpu_custom_call.1']
    #allocation7 [shape = 'u8[512]{0}', space=vmem, size = 0x400, scoped, tag = 'input window, operand 2, single buffered']
    #allocation8 [shape = 'u8[512]{0}', space=vmem, size = 0x400, scoped, tag = 'input window, operand 3, single buffered']
    #allocation9 [shape = 's32[1]{0}', space=sflag, size = 0x4, scoped, tag = 'scoped memory for tpu_custom_call.1']
    #allocation10 [shape = 'u8[589824]{0}', space=vmem, size = 0x90000, scoped, tag = 'input window, operand 6, single buffered']
    #allocation11 [shape = 'u8[512]{0}', space=vmem, size = 0x400, scoped, tag = 'input window, operand 7, single buffered']
    #allocation12 [shape = 's32[1]{0}', space=sflag, size = 0x4, scoped, tag = 'scoped memory for tpu_custom_call.1']
    #allocation13 [shape = 'u8[16384]{0}', space=vmem, size = 0x4000, scoped, tag = 'input window, operand 8, single buffered']
    #allocation14 [shape = 'u8[8192]{0}', space=vmem, size = 0x2000, scoped, tag = 'input window, operand 13, single buffered']
    #allocation15 [shape = 's32[1]{0}', space=sflag, size = 0x4, scoped, tag = 'scoped memory for tpu_custom_call.1']
    #allocation16 [shape = 'u8[589824]{0}', space=vmem, size = 0x90000, scoped, tag = 'input window, operand 14, single buffered']
    #allocation17 [shape = 'u8[196608]{0}', space=vmem, size = 0x30000, scoped, tag = 'input window, operand 20, single buffered']
    #allocation18 [shape = 's32[1]{0}', space=sflag, size = 0x4, scoped, tag = 'scoped memory for tpu_custom_call.1']
    #allocation19 [shape = 'u8[294912]{0}', space=vmem, size = 0x48000, scoped, tag = 'input window, operand 24, single buffered']
    #allocation20 [shape = 'u8[294912]{0}', space=vmem, size = 0x48000, scoped, tag = 'input window, operand 25, single buffered']
    #allocation21 [shape = 's32[1]{0}', space=sflag, size = 0x4, scoped, tag = 'scoped memory for tpu_custom_call.1']
    #allocation22 [shape = 'u8[262144]{0}', space=vmem, size = 0x40000, scoped, tag = 'output window, operand 0']
    %31 = vsyncpa [#allocation3], 0
    %s32 = scalar_lea.sflag [#allocation3], 1
    %33 = vsyncpa %s32, 0
    %34 = vsyncpa [#allocation6], 0
    %s35 = scalar_lea.sflag [#allocation6], 1
    %36 = vsyncpa %s35, 0
    %37 = vsyncpa [#allocation9], 0
    %38 = vsyncpa [#allocation12], 0
    %39 = vsyncpa [#allocation15], 0
    %40 = vsyncpa [#allocation18], 0
    %41 = vsyncpa [#allocation21], 0
    %42 = vsyncpa [#allocation4], 0
    %s43 = scalar_lea.sflag [#allocation4], 1
    %44 = vsyncpa %s43, 0
    loop: start=0, step=1, limit=4
    $region2: #{tpu_custom_call.1} parent=1 // loop_pre_header
      _
    $region3: #{tpu_custom_call.1} parent=1 // loop_header
      %s46 = sphi 0, %s50
      %p47 = scmp.ge.s32.totalorder %s46, 4
      %s56 = sphi 0, %s58
      %s59 = sphi 0, %s56
      %s60 = sphi 0, %s59
      %s76 = sphi 0, %s60
      %s82 = sphi 0, %s84
      %s85 = sphi 0, %s82
      %s86 = sphi 0, %s85
      %s102 = sphi 0, %s86
      %s106 = sphi 0, %s106
      %s108 = sphi 0, %s106
      %s109 = sphi 0, %s108
      %s123 = sphi 0, %s109
      %s127 = sphi 0, %s127
      %s129 = sphi 0, %s127
      %s130 = sphi 0, %s129
      %s144 = sphi 0, %s130
      %s148 = sphi 0, %s148
      %s150 = sphi 0, %s148
      %s151 = sphi 0, %s150
      %s165 = sphi 0, %s151
      %s169 = sphi 0, %s169
      %s171 = sphi 0, %s169
      %s172 = sphi 0, %s171
      %s186 = sphi 0, %s172
      %s190 = sphi 0, %s190
      %s192 = sphi 0, %s190
      %s193 = sphi 0, %s192
      %s207 = sphi 0, %s193
      %s211 = sphi 0, %s211
      %s213 = sphi 0, %s211
      %s214 = sphi 0, %s213
      %s228 = sphi 0, %s214
      %s232 = sphi 0, %s232
      %s234 = sphi 0, %s232
      %s235 = sphi 0, %s234
      %s249 = sphi 0, %s235
      %s253 = sphi 0, %s253
      %s255 = sphi 0, %s253
      %s256 = sphi 0, %s255
      %s270 = sphi 0, %s256
      %s274 = sphi 0, %s274
      %s276 = sphi 0, %s274
      %s277 = sphi 0, %s276
      %s291 = sphi 0, %s277
      %s295 = sphi 0, %s295
      %s297 = sphi 0, %s295
      %s298 = sphi 0, %s297
      %s312 = sphi 0, %s298
      %s316 = sphi 0, %s316
      %s318 = sphi 0, %s316
      %s319 = sphi 0, %s318
      %s333 = sphi 0, %s319
      %s337 = sphi 0, %s337
      %s339 = sphi 0, %s337
      %s340 = sphi 0, %s339
      %s354 = sphi 0, %s340
      %s358 = sphi 0, %s358
      %s360 = sphi 0, %s358
      %s361 = sphi 0, %s360
      %s375 = sphi 0, %s361
      %s379 = sphi 0, %s379
      %s381 = sphi 0, %s379
      %s382 = sphi 0, %s381
      %s396 = sphi 0, %s382
      %s400 = sphi 0, %s400
      %s402 = sphi 0, %s400
      %s403 = sphi 0, %s402
      %s417 = sphi 0, %s403
      %s421 = sphi 0, %s421
      %s423 = sphi 0, %s421
      %s424 = sphi 0, %s423
      %s438 = sphi 0, %s424
      %s442 = sphi 0, %s442
      %s444 = sphi 0, %s442
      %s445 = sphi 0, %s444
      %s459 = sphi 0, %s445
      %s463 = sphi 0, %s463
      %s465 = sphi 0, %s463
      %s466 = sphi 0, %s465
      %s480 = sphi 0, %s466
      %s484 = sphi 0, %s484
      %s486 = sphi 0, %s484
      %s487 = sphi 0, %s486
      %s501 = sphi 0, %s487
      %s505 = sphi 0, %s505
      %s507 = sphi 0, %s505
      %s508 = sphi 0, %s507
      %s522 = sphi 0, %s508
      %s526 = sphi 0, %s526
      %s528 = sphi 0, %s526
      %s529 = sphi 0, %s528
      %s543 = sphi 0, %s529
      %s547 = sphi 0, %s547
      %s549 = sphi 0, %s547
      %s550 = sphi 0, %s549
      %s564 = sphi 0, %s550
      %s568 = sphi 0, %s568
      %s570 = sphi 0, %s568
      %s571 = sphi 0, %s570
      %s585 = sphi 0, %s571
      %s589 = sphi 0, %s589
      %s591 = sphi 0, %s589
      %s592 = sphi 0, %s591
      %s606 = sphi 0, %s592
      %s612 = sphi 0, %s614
      %s615 = sphi 0, %s612
      %s616 = sphi 0, %s615
      %s632 = sphi 0, %s616
    $region4: #{tpu_custom_call.1} parent=1 // loop_header_branch
      %49 = sbr.rel (%p47) target = $region8
    $region5: #{tpu_custom_call.1} parent=1 // loop_body
      %s51 = ssub.s32 %s46, 1
      %s52 = ssub.s32 %s46, 2
      %s53 = sadd.s32 %s46, 1
      %s54 = ssub.s32 %s46, %s53
      %p55 = scmp.eq.s32.totalorder %s54, 0
      %s57 = sadd.s32 %s56, 1
      %s58 = scalar_select %p55, %s56, %s57
      %p61 = pneg %p55
      %p62 = scmp.eq.s32.totalorder %s46, 1
      %p63 = por %p61, %p62
      %p64 = scmp.ne.s32.totalorder %s56, %s59
      %p65 = scmp.eq.s32.totalorder %s46, 0
      %p66 = por %p64, %p65
      %p67 = scmp.ne.s32.totalorder %s56, %s59
      %p68 = scmp.eq.s32.totalorder %s51, 1
      %p69 = por %p67, %p68
      %p70 = scmp.ne.s32.totalorder %s59, %s60
      %p71 = scmp.eq.s32.totalorder %s51, 0
      %p72 = por %p70, %p71
      %p73 = scmp.ne.s32.totalorder %s59, %s60
      %p74 = scmp.eq.s32.totalorder %s52, 1
      %p75 = por %p73, %p74
      %p77 = scmp.ne.s32.totalorder %s60, %s76
      %p78 = scmp.eq.s32.totalorder %s52, 0
      %p79 = por %p77, %p78
      %s80 = ssub.s32 %s46, %s53
      %p81 = scmp.eq.s32.totalorder %s80, 0
      %s83 = sadd.s32 %s82, 1
      %s84 = scalar_select %p81, %s82, %s83
      %p87 = pneg %p81
      %p88 = scmp.eq.s32.totalorder %s46, 1
      %p89 = por %p87, %p88
      %p90 = scmp.ne.s32.totalorder %s82, %s85
      %p91 = scmp.eq.s32.totalorder %s46, 0
      %p92 = por %p90, %p91
      %p93 = scmp.ne.s32.totalorder %s82, %s85
      %p94 = scmp.eq.s32.totalorder %s51, 1
      %p95 = por %p93, %p94
      %p96 = scmp.ne.s32.totalorder %s85, %s86
      %p97 = scmp.eq.s32.totalorder %s51, 0
      %p98 = por %p96, %p97
      %p99 = scmp.ne.s32.totalorder %s85, %s86
      %p100 = scmp.eq.s32.totalorder %s52, 1
      %p101 = por %p99, %p100
      %p103 = scmp.ne.s32.totalorder %s86, %s102
      %p104 = scmp.eq.s32.totalorder %s52, 0
      %p105 = por %p103, %p104
      %s107 = sadd.s32 %s106, 1
      %p110 = scmp.eq.s32.totalorder %s46, 1
      %p111 = scmp.ne.s32.totalorder %s106, %s108
      %p112 = scmp.eq.s32.totalorder %s46, 0
      %p113 = por %p111, %p112
      %p114 = scmp.ne.s32.totalorder %s106, %s108
      %p115 = scmp.eq.s32.totalorder %s51, 1
      %p116 = por %p114, %p115
      %p117 = scmp.ne.s32.totalorder %s108, %s109
      %p118 = scmp.eq.s32.totalorder %s51, 0
      %p119 = por %p117, %p118
      %p120 = scmp.ne.s32.totalorder %s108, %s109
      %p121 = scmp.eq.s32.totalorder %s52, 1
      %p122 = por %p120, %p121
      %p124 = scmp.ne.s32.totalorder %s109, %s123
      %p125 = scmp.eq.s32.totalorder %s52, 0
      %p126 = por %p124, %p125
      %s128 = sadd.s32 %s127, 1
      %p131 = scmp.eq.s32.totalorder %s46, 1
      %p132 = scmp.ne.s32.totalorder %s127, %s129
      %p133 = scmp.eq.s32.totalorder %s46, 0
      %p134 = por %p132, %p133
      %p135 = scmp.ne.s32.totalorder %s127, %s129
      %p136 = scmp.eq.s32.totalorder %s51, 1
      %p137 = por %p135, %p136
      %p138 = scmp.ne.s32.totalorder %s129, %s130
      %p139 = scmp.eq.s32.totalorder %s51, 0
      %p140 = por %p138, %p139
      %p141 = scmp.ne.s32.totalorder %s129, %s130
      %p142 = scmp.eq.s32.totalorder %s52, 1
      %p143 = por %p141, %p142
      %p145 = scmp.ne.s32.totalorder %s130, %s144
      %p146 = scmp.eq.s32.totalorder %s52, 0
      %p147 = por %p145, %p146
      %s149 = sadd.s32 %s148, 1
      %p152 = scmp.eq.s32.totalorder %s46, 1
      %p153 = scmp.ne.s32.totalorder %s148, %s150
      %p154 = scmp.eq.s32.totalorder %s46, 0
      %p155 = por %p153, %p154
      %p156 = scmp.ne.s32.totalorder %s148, %s150
      %p157 = scmp.eq.s32.totalorder %s51, 1
      %p158 = por %p156, %p157
      %p159 = scmp.ne.s32.totalorder %s150, %s151
      %p160 = scmp.eq.s32.totalorder %s51, 0
      %p161 = por %p159, %p160
      %p162 = scmp.ne.s32.totalorder %s150, %s151
      %p163 = scmp.eq.s32.totalorder %s52, 1
      %p164 = por %p162, %p163
      %p166 = scmp.ne.s32.totalorder %s151, %s165
      %p167 = scmp.eq.s32.totalorder %s52, 0
      %p168 = por %p166, %p167
      %s170 = sadd.s32 %s169, 1
      %p173 = scmp.eq.s32.totalorder %s46, 1
      %p174 = scmp.ne.s32.totalorder %s169, %s171
      %p175 = scmp.eq.s32.totalorder %s46, 0
      %p176 = por %p174, %p175
      %p177 = scmp.ne.s32.totalorder %s169, %s171
      %p178 = scmp.eq.s32.totalorder %s51, 1
      %p179 = por %p177, %p178
      %p180 = scmp.ne.s32.totalorder %s171, %s172
      %p181 = scmp.eq.s32.totalorder %s51, 0
      %p182 = por %p180, %p181
      %p183 = scmp.ne.s32.totalorder %s171, %s172
      %p184 = scmp.eq.s32.totalorder %s52, 1
      %p185 = por %p183, %p184
      %p187 = scmp.ne.s32.totalorder %s172, %s186
      %p188 = scmp.eq.s32.totalorder %s52, 0
      %p189 = por %p187, %p188
      %s191 = sadd.s32 %s190, 1
      %p194 = scmp.eq.s32.totalorder %s46, 1
      %p195 = scmp.ne.s32.totalorder %s190, %s192
      %p196 = scmp.eq.s32.totalorder %s46, 0
      %p197 = por %p195, %p196
      %p198 = scmp.ne.s32.totalorder %s190, %s192
      %p199 = scmp.eq.s32.totalorder %s51, 1
      %p200 = por %p198, %p199
      %p201 = scmp.ne.s32.totalorder %s192, %s193
      %p202 = scmp.eq.s32.totalorder %s51, 0
      %p203 = por %p201, %p202
      %p204 = scmp.ne.s32.totalorder %s192, %s193
      %p205 = scmp.eq.s32.totalorder %s52, 1
      %p206 = por %p204, %p205
      %p208 = scmp.ne.s32.totalorder %s193, %s207
      %p209 = scmp.eq.s32.totalorder %s52, 0
      %p210 = por %p208, %p209
      %s212 = sadd.s32 %s211, 1
      %p215 = scmp.eq.s32.totalorder %s46, 1
      %p216 = scmp.ne.s32.totalorder %s211, %s213
      %p217 = scmp.eq.s32.totalorder %s46, 0
      %p218 = por %p216, %p217
      %p219 = scmp.ne.s32.totalorder %s211, %s213
      %p220 = scmp.eq.s32.totalorder %s51, 1
      %p221 = por %p219, %p220
      %p222 = scmp.ne.s32.totalorder %s213, %s214
      %p223 = scmp.eq.s32.totalorder %s51, 0
      %p224 = por %p222, %p223
      %p225 = scmp.ne.s32.totalorder %s213, %s214
      %p226 = scmp.eq.s32.totalorder %s52, 1
      %p227 = por %p225, %p226
      %p229 = scmp.ne.s32.totalorder %s214, %s228
      %p230 = scmp.eq.s32.totalorder %s52, 0
      %p231 = por %p229, %p230
      %s233 = sadd.s32 %s232, 1
      %p236 = scmp.eq.s32.totalorder %s46, 1
      %p237 = scmp.ne.s32.totalorder %s232, %s234
      %p238 = scmp.eq.s32.totalorder %s46, 0
      %p239 = por %p237, %p238
      %p240 = scmp.ne.s32.totalorder %s232, %s234
      %p241 = scmp.eq.s32.totalorder %s51, 1
      %p242 = por %p240, %p241
      %p243 = scmp.ne.s32.totalorder %s234, %s235
      %p244 = scmp.eq.s32.totalorder %s51, 0
      %p245 = por %p243, %p244
      %p246 = scmp.ne.s32.totalorder %s234, %s235
      %p247 = scmp.eq.s32.totalorder %s52, 1
      %p248 = por %p246, %p247
      %p250 = scmp.ne.s32.totalorder %s235, %s249
      %p251 = scmp.eq.s32.totalorder %s52, 0
      %p252 = por %p250, %p251
      %s254 = sadd.s32 %s253, 1
      %p257 = scmp.eq.s32.totalorder %s46, 1
      %p258 = scmp.ne.s32.totalorder %s253, %s255
      %p259 = scmp.eq.s32.totalorder %s46, 0
      %p260 = por %p258, %p259
      %p261 = scmp.ne.s32.totalorder %s253, %s255
      %p262 = scmp.eq.s32.totalorder %s51, 1
      %p263 = por %p261, %p262
      %p264 = scmp.ne.s32.totalorder %s255, %s256
      %p265 = scmp.eq.s32.totalorder %s51, 0
      %p266 = por %p264, %p265
      %p267 = scmp.ne.s32.totalorder %s255, %s256
      %p268 = scmp.eq.s32.totalorder %s52, 1
      %p269 = por %p267, %p268
      %p271 = scmp.ne.s32.totalorder %s256, %s270
      %p272 = scmp.eq.s32.totalorder %s52, 0
      %p273 = por %p271, %p272
      %s275 = sadd.s32 %s274, 1
      %p278 = scmp.eq.s32.totalorder %s46, 1
      %p279 = scmp.ne.s32.totalorder %s274, %s276
      %p280 = scmp.eq.s32.totalorder %s46, 0
      %p281 = por %p279, %p280
      %p282 = scmp.ne.s32.totalorder %s274, %s276
      %p283 = scmp.eq.s32.totalorder %s51, 1
      %p284 = por %p282, %p283
      %p285 = scmp.ne.s32.totalorder %s276, %s277
      %p286 = scmp.eq.s32.totalorder %s51, 0
      %p287 = por %p285, %p286
      %p288 = scmp.ne.s32.totalorder %s276, %s277
      %p289 = scmp.eq.s32.totalorder %s52, 1
      %p290 = por %p288, %p289
      %p292 = scmp.ne.s32.totalorder %s277, %s291
      %p293 = scmp.eq.s32.totalorder %s52, 0
      %p294 = por %p292, %p293
      %s296 = sadd.s32 %s295, 1
      %p299 = scmp.eq.s32.totalorder %s46, 1
      %p300 = scmp.ne.s32.totalorder %s295, %s297
      %p301 = scmp.eq.s32.totalorder %s46, 0
      %p302 = por %p300, %p301
      %p303 = scmp.ne.s32.totalorder %s295, %s297
      %p304 = scmp.eq.s32.totalorder %s51, 1
      %p305 = por %p303, %p304
      %p306 = scmp.ne.s32.totalorder %s297, %s298
      %p307 = scmp.eq.s32.totalorder %s51, 0
      %p308 = por %p306, %p307
      %p309 = scmp.ne.s32.totalorder %s297, %s298
      %p310 = scmp.eq.s32.totalorder %s52, 1
      %p311 = por %p309, %p310
      %p313 = scmp.ne.s32.totalorder %s298, %s312
      %p314 = scmp.eq.s32.totalorder %s52, 0
      %p315 = por %p313, %p314
      %s317 = sadd.s32 %s316, 1
      %p320 = scmp.eq.s32.totalorder %s46, 1
      %p321 = scmp.ne.s32.totalorder %s316, %s318
      %p322 = scmp.eq.s32.totalorder %s46, 0
      %p323 = por %p321, %p322
      %p324 = scmp.ne.s32.totalorder %s316, %s318
      %p325 = scmp.eq.s32.totalorder %s51, 1
      %p326 = por %p324, %p325
      %p327 = scmp.ne.s32.totalorder %s318, %s319
      %p328 = scmp.eq.s32.totalorder %s51, 0
      %p329 = por %p327, %p328
      %p330 = scmp.ne.s32.totalorder %s318, %s319
      %p331 = scmp.eq.s32.totalorder %s52, 1
      %p332 = por %p330, %p331
      %p334 = scmp.ne.s32.totalorder %s319, %s333
      %p335 = scmp.eq.s32.totalorder %s52, 0
      %p336 = por %p334, %p335
      %s338 = sadd.s32 %s337, 1
      %p341 = scmp.eq.s32.totalorder %s46, 1
      %p342 = scmp.ne.s32.totalorder %s337, %s339
      %p343 = scmp.eq.s32.totalorder %s46, 0
      %p344 = por %p342, %p343
      %p345 = scmp.ne.s32.totalorder %s337, %s339
      %p346 = scmp.eq.s32.totalorder %s51, 1
      %p347 = por %p345, %p346
      %p348 = scmp.ne.s32.totalorder %s339, %s340
      %p349 = scmp.eq.s32.totalorder %s51, 0
      %p350 = por %p348, %p349
      %p351 = scmp.ne.s32.totalorder %s339, %s340
      %p352 = scmp.eq.s32.totalorder %s52, 1
      %p353 = por %p351, %p352
      %p355 = scmp.ne.s32.totalorder %s340, %s354
      %p356 = scmp.eq.s32.totalorder %s52, 0
      %p357 = por %p355, %p356
      %s359 = sadd.s32 %s358, 1
      %p362 = scmp.eq.s32.totalorder %s46, 1
      %p363 = scmp.ne.s32.totalorder %s358, %s360
      %p364 = scmp.eq.s32.totalorder %s46, 0
      %p365 = por %p363, %p364
      %p366 = scmp.ne.s32.totalorder %s358, %s360
      %p367 = scmp.eq.s32.totalorder %s51, 1
      %p368 = por %p366, %p367
      %p369 = scmp.ne.s32.totalorder %s360, %s361
      %p370 = scmp.eq.s32.totalorder %s51, 0
      %p371 = por %p369, %p370
      %p372 = scmp.ne.s32.totalorder %s360, %s361
      %p373 = scmp.eq.s32.totalorder %s52, 1
      %p374 = por %p372, %p373
      %p376 = scmp.ne.s32.totalorder %s361, %s375
      %p377 = scmp.eq.s32.totalorder %s52, 0
      %p378 = por %p376, %p377
      %s380 = sadd.s32 %s379, 1
      %p383 = scmp.eq.s32.totalorder %s46, 1
      %p384 = scmp.ne.s32.totalorder %s379, %s381
      %p385 = scmp.eq.s32.totalorder %s46, 0
      %p386 = por %p384, %p385
      %p387 = scmp.ne.s32.totalorder %s379, %s381
      %p388 = scmp.eq.s32.totalorder %s51, 1
      %p389 = por %p387, %p388
      %p390 = scmp.ne.s32.totalorder %s381, %s382
      %p391 = scmp.eq.s32.totalorder %s51, 0
      %p392 = por %p390, %p391
      %p393 = scmp.ne.s32.totalorder %s381, %s382
      %p394 = scmp.eq.s32.totalorder %s52, 1
      %p395 = por %p393, %p394
      %p397 = scmp.ne.s32.totalorder %s382, %s396
      %p398 = scmp.eq.s32.totalorder %s52, 0
      %p399 = por %p397, %p398
      %s401 = sadd.s32 %s400, 1
      %p404 = scmp.eq.s32.totalorder %s46, 1
      %p405 = scmp.ne.s32.totalorder %s400, %s402
      %p406 = scmp.eq.s32.totalorder %s46, 0
      %p407 = por %p405, %p406
      %p408 = scmp.ne.s32.totalorder %s400, %s402
      %p409 = scmp.eq.s32.totalorder %s51, 1
      %p410 = por %p408, %p409
      %p411 = scmp.ne.s32.totalorder %s402, %s403
      %p412 = scmp.eq.s32.totalorder %s51, 0
      %p413 = por %p411, %p412
      %p414 = scmp.ne.s32.totalorder %s402, %s403
      %p415 = scmp.eq.s32.totalorder %s52, 1
      %p416 = por %p414, %p415
      %p418 = scmp.ne.s32.totalorder %s403, %s417
      %p419 = scmp.eq.s32.totalorder %s52, 0
      %p420 = por %p418, %p419
      %s422 = sadd.s32 %s421, 1
      %p425 = scmp.eq.s32.totalorder %s46, 1
      %p426 = scmp.ne.s32.totalorder %s421, %s423
      %p427 = scmp.eq.s32.totalorder %s46, 0
      %p428 = por %p426, %p427
      %p429 = scmp.ne.s32.totalorder %s421, %s423
      %p430 = scmp.eq.s32.totalorder %s51, 1
      %p431 = por %p429, %p430
      %p432 = scmp.ne.s32.totalorder %s423, %s424
      %p433 = scmp.eq.s32.totalorder %s51, 0
      %p434 = por %p432, %p433
      %p435 = scmp.ne.s32.totalorder %s423, %s424
      %p436 = scmp.eq.s32.totalorder %s52, 1
      %p437 = por %p435, %p436
      %p439 = scmp.ne.s32.totalorder %s424, %s438
      %p440 = scmp.eq.s32.totalorder %s52, 0
      %p441 = por %p439, %p440
      %s443 = sadd.s32 %s442, 1
      %p446 = scmp.eq.s32.totalorder %s46, 1
      %p447 = scmp.ne.s32.totalorder %s442, %s444
      %p448 = scmp.eq.s32.totalorder %s46, 0
      %p449 = por %p447, %p448
      %p450 = scmp.ne.s32.totalorder %s442, %s444
      %p451 = scmp.eq.s32.totalorder %s51, 1
      %p452 = por %p450, %p451
      %p453 = scmp.ne.s32.totalorder %s444, %s445
      %p454 = scmp.eq.s32.totalorder %s51, 0
      %p455 = por %p453, %p454
      %p456 = scmp.ne.s32.totalorder %s444, %s445
      %p457 = scmp.eq.s32.totalorder %s52, 1
      %p458 = por %p456, %p457
      %p460 = scmp.ne.s32.totalorder %s445, %s459
      %p461 = scmp.eq.s32.totalorder %s52, 0
      %p462 = por %p460, %p461
      %s464 = sadd.s32 %s463, 1
      %p467 = scmp.eq.s32.totalorder %s46, 1
      %p468 = scmp.ne.s32.totalorder %s463, %s465
      %p469 = scmp.eq.s32.totalorder %s46, 0
      %p470 = por %p468, %p469
      %p471 = scmp.ne.s32.totalorder %s463, %s465
      %p472 = scmp.eq.s32.totalorder %s51, 1
      %p473 = por %p471, %p472
      %p474 = scmp.ne.s32.totalorder %s465, %s466
      %p475 = scmp.eq.s32.totalorder %s51, 0
      %p476 = por %p474, %p475
      %p477 = scmp.ne.s32.totalorder %s465, %s466
      %p478 = scmp.eq.s32.totalorder %s52, 1
      %p479 = por %p477, %p478
      %p481 = scmp.ne.s32.totalorder %s466, %s480
      %p482 = scmp.eq.s32.totalorder %s52, 0
      %p483 = por %p481, %p482
      %s485 = sadd.s32 %s484, 1
      %p488 = scmp.eq.s32.totalorder %s46, 1
      %p489 = scmp.ne.s32.totalorder %s484, %s486
      %p490 = scmp.eq.s32.totalorder %s46, 0
      %p491 = por %p489, %p490
      %p492 = scmp.ne.s32.totalorder %s484, %s486
      %p493 = scmp.eq.s32.totalorder %s51, 1
      %p494 = por %p492, %p493
      %p495 = scmp.ne.s32.totalorder %s486, %s487
      %p496 = scmp.eq.s32.totalorder %s51, 0
      %p497 = por %p495, %p496
      %p498 = scmp.ne.s32.totalorder %s486, %s487
      %p499 = scmp.eq.s32.totalorder %s52, 1
      %p500 = por %p498, %p499
      %p502 = scmp.ne.s32.totalorder %s487, %s501
      %p503 = scmp.eq.s32.totalorder %s52, 0
      %p504 = por %p502, %p503
      %s506 = sadd.s32 %s505, 1
      %p509 = scmp.eq.s32.totalorder %s46, 1
      %p510 = scmp.ne.s32.totalorder %s505, %s507
      %p511 = scmp.eq.s32.totalorder %s46, 0
      %p512 = por %p510, %p511
      %p513 = scmp.ne.s32.totalorder %s505, %s507
      %p514 = scmp.eq.s32.totalorder %s51, 1
      %p515 = por %p513, %p514
      %p516 = scmp.ne.s32.totalorder %s507, %s508
      %p517 = scmp.eq.s32.totalorder %s51, 0
      %p518 = por %p516, %p517
      %p519 = scmp.ne.s32.totalorder %s507, %s508
      %p520 = scmp.eq.s32.totalorder %s52, 1
      %p521 = por %p519, %p520
      %p523 = scmp.ne.s32.totalorder %s508, %s522
      %p524 = scmp.eq.s32.totalorder %s52, 0
      %p525 = por %p523, %p524
      %s527 = sadd.s32 %s526, 1
      %p530 = scmp.eq.s32.totalorder %s46, 1
      %p531 = scmp.ne.s32.totalorder %s526, %s528
      %p532 = scmp.eq.s32.totalorder %s46, 0
      %p533 = por %p531, %p532
      %p534 = scmp.ne.s32.totalorder %s526, %s528
      %p535 = scmp.eq.s32.totalorder %s51, 1
      %p536 = por %p534, %p535
      %p537 = scmp.ne.s32.totalorder %s528, %s529
      %p538 = scmp.eq.s32.totalorder %s51, 0
      %p539 = por %p537, %p538
      %p540 = scmp.ne.s32.totalorder %s528, %s529
      %p541 = scmp.eq.s32.totalorder %s52, 1
      %p542 = por %p540, %p541
      %p544 = scmp.ne.s32.totalorder %s529, %s543
      %p545 = scmp.eq.s32.totalorder %s52, 0
      %p546 = por %p544, %p545
      %s548 = sadd.s32 %s547, 1
      %p551 = scmp.eq.s32.totalorder %s46, 1
      %p552 = scmp.ne.s32.totalorder %s547, %s549
      %p553 = scmp.eq.s32.totalorder %s46, 0
      %p554 = por %p552, %p553
      %p555 = scmp.ne.s32.totalorder %s547, %s549
      %p556 = scmp.eq.s32.totalorder %s51, 1
      %p557 = por %p555, %p556
      %p558 = scmp.ne.s32.totalorder %s549, %s550
      %p559 = scmp.eq.s32.totalorder %s51, 0
      %p560 = por %p558, %p559
      %p561 = scmp.ne.s32.totalorder %s549, %s550
      %p562 = scmp.eq.s32.totalorder %s52, 1
      %p563 = por %p561, %p562
      %p565 = scmp.ne.s32.totalorder %s550, %s564
      %p566 = scmp.eq.s32.totalorder %s52, 0
      %p567 = por %p565, %p566
      %s569 = sadd.s32 %s568, 1
      %p572 = scmp.eq.s32.totalorder %s46, 1
      %p573 = scmp.ne.s32.totalorder %s568, %s570
      %p574 = scmp.eq.s32.totalorder %s46, 0
      %p575 = por %p573, %p574
      %p576 = scmp.ne.s32.totalorder %s568, %s570
      %p577 = scmp.eq.s32.totalorder %s51, 1
      %p578 = por %p576, %p577
      %p579 = scmp.ne.s32.totalorder %s570, %s571
      %p580 = scmp.eq.s32.totalorder %s51, 0
      %p581 = por %p579, %p580
      %p582 = scmp.ne.s32.totalorder %s570, %s571
      %p583 = scmp.eq.s32.totalorder %s52, 1
      %p584 = por %p582, %p583
      %p586 = scmp.ne.s32.totalorder %s571, %s585
      %p587 = scmp.eq.s32.totalorder %s52, 0
      %p588 = por %p586, %p587
      %s590 = sadd.s32 %s589, 1
      %p593 = scmp.eq.s32.totalorder %s46, 1
      %p594 = scmp.ne.s32.totalorder %s589, %s591
      %p595 = scmp.eq.s32.totalorder %s46, 0
      %p596 = por %p594, %p595
      %p597 = scmp.ne.s32.totalorder %s589, %s591
      %p598 = scmp.eq.s32.totalorder %s51, 1
      %p599 = por %p597, %p598
      %p600 = scmp.ne.s32.totalorder %s591, %s592
      %p601 = scmp.eq.s32.totalorder %s51, 0
      %p602 = por %p600, %p601
      %p603 = scmp.ne.s32.totalorder %s591, %s592
      %p604 = scmp.eq.s32.totalorder %s52, 1
      %p605 = por %p603, %p604
      %p607 = scmp.ne.s32.totalorder %s592, %s606
      %p608 = scmp.eq.s32.totalorder %s52, 0
      %p609 = por %p607, %p608
      %s610 = ssub.s32 %s46, %s53
      %p611 = scmp.eq.s32.totalorder %s610, 0
      %s613 = sadd.s32 %s612, 1
      %s614 = scalar_select %p611, %s612, %s613
      %p617 = pneg %p611
      %p618 = scmp.eq.s32.totalorder %s46, 1
      %p619 = por %p617, %p618
      %p620 = scmp.ne.s32.totalorder %s612, %s615
      %p621 = scmp.eq.s32.totalorder %s46, 0
      %p622 = por %p620, %p621
      %p623 = scmp.ne.s32.totalorder %s612, %s615
      %p624 = scmp.eq.s32.totalorder %s51, 1
      %p625 = por %p623, %p624
      %p626 = scmp.ne.s32.totalorder %s615, %s616
      %p627 = scmp.eq.s32.totalorder %s51, 0
      %p628 = por %p626, %p627
      %p629 = scmp.ne.s32.totalorder %s615, %s616
      %p630 = scmp.eq.s32.totalorder %s52, 1
      %p631 = por %p629, %p630
      %p633 = scmp.ne.s32.totalorder %s616, %s632
      %p634 = scmp.eq.s32.totalorder %s52, 0
      %p635 = por %p633, %p634
      %p636 = scmp.le.s32.totalorder 1, %s46
      %p637 = scmp.lt.s32.totalorder %s46, 3
      %p638 = pnand %p636, %p637
      %p639 = pneg %p638
      // Predicated region
      $region9: #{tpu_custom_call.1} parent=5 // pred_check
        _
      $region10: #{tpu_custom_call.1} parent=5 // pred_check_branch
        %641 = sbr.rel (%p638) target = $region12
      $region11: #{tpu_custom_call.1} parent=5 // pred_region
        %s642 = ssub.s32 %s46, 1
        // Predicated region
        $region13: #{tpu_custom_call.1} parent=11 // pred_check
          %p643 = pneg %p119
        $region14: #{tpu_custom_call.1} parent=11 // pred_check_branch
          %645 = sbr.rel (%p643) target = $region16
        $region15: #{tpu_custom_call.1} parent=11 // pred_region
          %647 = vsyncadd [#allocation6], 0
          %s649 = sshll.u32 %s2, 4
          %s650 = int_to_ptr.hbm [resolvable:$true] %s649
          %s651 = sshll.u32 [#allocation7], 4
          %s652 = int_to_ptr.vmem [resolvable:$true] %s651
          %654 = dma.hbm_to_vmem [thread:$0]  %s650, 16, %s652, [#allocation6]
        $region16: #{tpu_custom_call.1} parent=11 // pred_fallthru
          _
        // Predicated region
        $region17: #{tpu_custom_call.1} parent=11 // pred_check
          %p655 = pneg %p140
        $region18: #{tpu_custom_call.1} parent=11 // pred_check_branch
          %657 = sbr.rel (%p655) target = $region20
        $region19: #{tpu_custom_call.1} parent=11 // pred_region
          %659 = vsyncadd [#allocation9], 0
          %s661 = sshll.u32 %s3, 4
          %s662 = int_to_ptr.hbm [resolvable:$true] %s661
          %s663 = sshll.u32 [#allocation8], 4
          %s664 = int_to_ptr.vmem [resolvable:$true] %s663
          %666 = dma.hbm_to_vmem [thread:$0]  %s662, 16, %s664, [#allocation9]
        $region20: #{tpu_custom_call.1} parent=11 // pred_fallthru
          _
        // Predicated region
        $region21: #{tpu_custom_call.1} parent=11 // pred_check
          %p667 = pneg %p161
        $region22: #{tpu_custom_call.1} parent=11 // pred_check_branch
          %669 = sbr.rel (%p667) target = $region24
        $region23: #{tpu_custom_call.1} parent=11 // pred_region
          _
        $region24: #{tpu_custom_call.1} parent=11 // pred_fallthru
          _
        // Predicated region
        $region25: #{tpu_custom_call.1} parent=11 // pred_check
          %p670 = pneg %p182
        $region26: #{tpu_custom_call.1} parent=11 // pred_check_branch
          %672 = sbr.rel (%p670) target = $region28
        $region27: #{tpu_custom_call.1} parent=11 // pred_region
          _
        $region28: #{tpu_custom_call.1} parent=11 // pred_fallthru
          _
        // Predicated region
        $region29: #{tpu_custom_call.1} parent=11 // pred_check
          %p673 = pneg %p203
        $region30: #{tpu_custom_call.1} parent=11 // pred_check_branch
          %675 = sbr.rel (%p673) target = $region32
        $region31: #{tpu_custom_call.1} parent=11 // pred_region
          %677 = vsyncadd [#allocation9], 0
          %s678 = sshll.u32 %s6, 4
          %s679 = int_to_ptr.hbm [resolvable:$true] %s678
          %s680 = sshll.u32 [#allocation10], 4
          %s681 = int_to_ptr.vmem [resolvable:$true] %s680
          %686 = dma.hbm_to_vmem [thread:$0]  %s679, 18432, %s681, [#allocation9], 128, 128, 8
        $region32: #{tpu_custom_call.1} parent=11 // pred_fallthru
          _
        // Predicated region
        $region33: #{tpu_custom_call.1} parent=11 // pred_check
          %p687 = pneg %p224
        $region34: #{tpu_custom_call.1} parent=11 // pred_check_branch
          %689 = sbr.rel (%p687) target = $region36
        $region35: #{tpu_custom_call.1} parent=11 // pred_region
          %691 = vsyncadd [#allocation12], 0
          %s693 = sshll.u32 %s7, 4
          %s694 = int_to_ptr.hbm [resolvable:$true] %s693
          %s695 = sshll.u32 [#allocation11], 4
          %s696 = int_to_ptr.vmem [resolvable:$true] %s695
          %698 = dma.hbm_to_vmem [thread:$0]  %s694, 16, %s696, [#allocation12]
        $region36: #{tpu_custom_call.1} parent=11 // pred_fallthru
          _
        // Predicated region
        $region37: #{tpu_custom_call.1} parent=11 // pred_check
          %p699 = pneg %p245
        $region38: #{tpu_custom_call.1} parent=11 // pred_check_branch
          %701 = sbr.rel (%p699) target = $region40
        $region39: #{tpu_custom_call.1} parent=11 // pred_region
          %703 = vsyncadd [#allocation12], 0
          %s704 = sshll.u32 %s8, 4
          %s705 = int_to_ptr.hbm [resolvable:$true] %s704
          %s706 = sshll.u32 [#allocation13], 4
          %s707 = int_to_ptr.vmem [resolvable:$true] %s706
          %712 = dma.hbm_to_vmem [thread:$0]  %s705, 512, %s707, [#allocation12], 128, 128, 8
        $region40: #{tpu_custom_call.1} parent=11 // pred_fallthru
          _
        // Predicated region
        $region41: #{tpu_custom_call.1} parent=11 // pred_check
          %p713 = pneg %p266
        $region42: #{tpu_custom_call.1} parent=11 // pred_check_branch
          %715 = sbr.rel (%p713) target = $region44
        $region43: #{tpu_custom_call.1} parent=11 // pred_region
          _
        $region44: #{tpu_custom_call.1} parent=11 // pred_fallthru
          _
        // Predicated region
        $region45: #{tpu_custom_call.1} parent=11 // pred_check
          %p716 = pneg %p287
        $region46: #{tpu_custom_call.1} parent=11 // pred_check_branch
          %718 = sbr.rel (%p716) target = $region48
        $region47: #{tpu_custom_call.1} parent=11 // pred_region
          _
        $region48: #{tpu_custom_call.1} parent=11 // pred_fallthru
          _
        // Predicated region
        $region49: #{tpu_custom_call.1} parent=11 // pred_check
          %p719 = pneg %p308
        $region50: #{tpu_custom_call.1} parent=11 // pred_check_branch
          %721 = sbr.rel (%p719) target = $region52
        $region51: #{tpu_custom_call.1} parent=11 // pred_region
          _
        $region52: #{tpu_custom_call.1} parent=11 // pred_fallthru
          _
        // Predicated region
        $region53: #{tpu_custom_call.1} parent=11 // pred_check
          %p722 = pneg %p329
        $region54: #{tpu_custom_call.1} parent=11 // pred_check_branch
          %724 = sbr.rel (%p722) target = $region56
        $region55: #{tpu_custom_call.1} parent=11 // pred_region
          _
        $region56: #{tpu_custom_call.1} parent=11 // pred_fallthru
          _
        // Predicated region
        $region57: #{tpu_custom_call.1} parent=11 // pred_check
          %p725 = pneg %p350
        $region58: #{tpu_custom_call.1} parent=11 // pred_check_branch
          %727 = sbr.rel (%p725) target = $region60
        $region59: #{tpu_custom_call.1} parent=11 // pred_region
          %729 = vsyncadd [#allocation15], 0
          %s730 = sshll.u32 %s13, 4
          %s731 = int_to_ptr.hbm [resolvable:$true] %s730
          %s732 = sshll.u32 [#allocation14], 4
          %s733 = int_to_ptr.vmem [resolvable:$true] %s732
          %738 = dma.hbm_to_vmem [thread:$0]  %s731, 256, %s733, [#allocation15], 128, 128, 8
        $region60: #{tpu_custom_call.1} parent=11 // pred_fallthru
          _
        // Predicated region
        $region61: #{tpu_custom_call.1} parent=11 // pred_check
          %p739 = pneg %p371
        $region62: #{tpu_custom_call.1} parent=11 // pred_check_branch
          %741 = sbr.rel (%p739) target = $region64
        $region63: #{tpu_custom_call.1} parent=11 // pred_region
          %743 = vsyncadd [#allocation15], 0
          %s744 = sshll.u32 %s14, 4
          %s745 = int_to_ptr.hbm [resolvable:$true] %s744
          %s746 = sshll.u32 [#allocation16], 4
          %s747 = int_to_ptr.vmem [resolvable:$true] %s746
          %752 = dma.hbm_to_vmem [thread:$0]  %s745, 18432, %s747, [#allocation15], 128, 128, 8
        $region64: #{tpu_custom_call.1} parent=11 // pred_fallthru
          _
        // Predicated region
        $region65: #{tpu_custom_call.1} parent=11 // pred_check
          %p753 = pneg %p392
        $region66: #{tpu_custom_call.1} parent=11 // pred_check_branch
          %755 = sbr.rel (%p753) target = $region68
        $region67: #{tpu_custom_call.1} parent=11 // pred_region
          _
        $region68: #{tpu_custom_call.1} parent=11 // pred_fallthru
          _
        // Predicated region
        $region69: #{tpu_custom_call.1} parent=11 // pred_check
          %p756 = pneg %p413
        $region70: #{tpu_custom_call.1} parent=11 // pred_check_branch
          %758 = sbr.rel (%p756) target = $region72
        $region71: #{tpu_custom_call.1} parent=11 // pred_region
          _
        $region72: #{tpu_custom_call.1} parent=11 // pred_fallthru
          _
        // Predicated region
        $region73: #{tpu_custom_call.1} parent=11 // pred_check
          %p759 = pneg %p434
        $region74: #{tpu_custom_call.1} parent=11 // pred_check_branch
          %761 = sbr.rel (%p759) target = $region76
        $region75: #{tpu_custom_call.1} parent=11 // pred_region
          _
        $region76: #{tpu_custom_call.1} parent=11 // pred_fallthru
          _
        // Predicated region
        $region77: #{tpu_custom_call.1} parent=11 // pred_check
          %p762 = pneg %p455
        $region78: #{tpu_custom_call.1} parent=11 // pred_check_branch
          %764 = sbr.rel (%p762) target = $region80
        $region79: #{tpu_custom_call.1} parent=11 // pred_region
          _
        $region80: #{tpu_custom_call.1} parent=11 // pred_fallthru
          _
        // Predicated region
        $region81: #{tpu_custom_call.1} parent=11 // pred_check
          %p765 = pneg %p476
        $region82: #{tpu_custom_call.1} parent=11 // pred_check_branch
          %767 = sbr.rel (%p765) target = $region84
        $region83: #{tpu_custom_call.1} parent=11 // pred_region
          _
        $region84: #{tpu_custom_call.1} parent=11 // pred_fallthru
          _
        // Predicated region
        $region85: #{tpu_custom_call.1} parent=11 // pred_check
          %p768 = pneg %p497
        $region86: #{tpu_custom_call.1} parent=11 // pred_check_branch
          %770 = sbr.rel (%p768) target = $region88
        $region87: #{tpu_custom_call.1} parent=11 // pred_region
          %772 = vsyncadd [#allocation18], 0
          %s773 = sshll.u32 %s20, 4
          %s774 = int_to_ptr.hbm [resolvable:$true] %s773
          %s775 = sshll.u32 [#allocation17], 4
          %s776 = int_to_ptr.vmem [resolvable:$true] %s775
          %781 = dma.hbm_to_vmem [thread:$0]  %s774, 6144, %s776, [#allocation18], 384, 384, 24
        $region88: #{tpu_custom_call.1} parent=11 // pred_fallthru
          _
        // Predicated region
        $region89: #{tpu_custom_call.1} parent=11 // pred_check
          %p782 = pneg %p518
        $region90: #{tpu_custom_call.1} parent=11 // pred_check_branch
          %784 = sbr.rel (%p782) target = $region92
        $region91: #{tpu_custom_call.1} parent=11 // pred_region
          _
        $region92: #{tpu_custom_call.1} parent=11 // pred_fallthru
          _
        // Predicated region
        $region93: #{tpu_custom_call.1} parent=11 // pred_check
          %p785 = pneg %p539
        $region94: #{tpu_custom_call.1} parent=11 // pred_check_branch
          %787 = sbr.rel (%p785) target = $region96
        $region95: #{tpu_custom_call.1} parent=11 // pred_region
          _
        $region96: #{tpu_custom_call.1} parent=11 // pred_fallthru
          _
        // Predicated region
        $region97: #{tpu_custom_call.1} parent=11 // pred_check
          %p788 = pneg %p560
        $region98: #{tpu_custom_call.1} parent=11 // pred_check_branch
          %790 = sbr.rel (%p788) target = $region100
        $region99: #{tpu_custom_call.1} parent=11 // pred_region
          _
        $region100: #{tpu_custom_call.1} parent=11 // pred_fallthru
          _
        // Predicated region
        $region101: #{tpu_custom_call.1} parent=11 // pred_check
          %p791 = pneg %p581
        $region102: #{tpu_custom_call.1} parent=11 // pred_check_branch
          %793 = sbr.rel (%p791) target = $region104
        $region103: #{tpu_custom_call.1} parent=11 // pred_region
          %795 = vsyncadd [#allocation18], 0
          %s796 = sshll.u32 %s24, 4
          %s797 = int_to_ptr.hbm [resolvable:$true] %s796
          %s798 = sshll.u32 [#allocation19], 4
          %s799 = int_to_ptr.vmem [resolvable:$true] %s798
          %804 = dma.hbm_to_vmem [thread:$0]  %s797, 9216, %s799, [#allocation18], 256, 256, 16
        $region104: #{tpu_custom_call.1} parent=11 // pred_fallthru
          _
        // Predicated region
        $region105: #{tpu_custom_call.1} parent=11 // pred_check
          %p805 = pneg %p602
        $region106: #{tpu_custom_call.1} parent=11 // pred_check_branch
          %807 = sbr.rel (%p805) target = $region108
        $region107: #{tpu_custom_call.1} parent=11 // pred_region
          %809 = vsyncadd [#allocation21], 0
          %s810 = sshll.u32 %s25, 4
          %s811 = int_to_ptr.hbm [resolvable:$true] %s810
          %s812 = sshll.u32 [#allocation20], 4
          %s813 = int_to_ptr.vmem [resolvable:$true] %s812
          %818 = dma.hbm_to_vmem [thread:$0]  %s811, 9216, %s813, [#allocation21], 256, 256, 16
        $region108: #{tpu_custom_call.1} parent=11 // pred_fallthru
          _
      $region12: #{tpu_custom_call.1} parent=5 // pred_fallthru
        _
      %p819 = scmp.lt.s32.totalorder %s46, 2
      // Predicated region
      $region109: #{tpu_custom_call.1} parent=5 // pred_check
        %p820 = pneg %p819
      $region110: #{tpu_custom_call.1} parent=5 // pred_check_branch
        %822 = sbr.rel (%p820) target = $region112
      $region111: #{tpu_custom_call.1} parent=5 // pred_region
        // Predicated region
        $region113: #{tpu_custom_call.1} parent=111 // pred_check
          %p823 = pneg %p66
        $region114: #{tpu_custom_call.1} parent=111 // pred_check_branch
          %825 = sbr.rel (%p823) target = $region116
        $region115: #{tpu_custom_call.1} parent=111 // pred_region
          %s826 = sand.u32 %s56, 1
          %s827 = scalar_lea.sflag [#allocation3], %s826
          %s828 = sand.u32 %s56, 1
          %s829 = smul.addr %s828, 256
          %s830 = scalar_lea.vmem [#allocation2], %s829
          %832 = vsyncadd %s827, 0
          %s833 = smul.addr %s46, 32
          %s834 = smul.addr %s833, 8
          %s835 = scalar_lea.hbm %s0, %s834
          %s836 = sshll.u32 %s835, 4
          %s837 = int_to_ptr.hbm [resolvable:$true] %s836
          %s838 = sshll.u32 %s830, 4
          %s839 = int_to_ptr.vmem [resolvable:$true] %s838
          %844 = dma.hbm_to_vmem [thread:$0]  %s837, 4096, %s839, %s827, 128, 128, 8
        $region116: #{tpu_custom_call.1} parent=111 // pred_fallthru
          _
        // Predicated region
        $region117: #{tpu_custom_call.1} parent=111 // pred_check
          %p845 = pneg %p92
        $region118: #{tpu_custom_call.1} parent=111 // pred_check_branch
          %847 = sbr.rel (%p845) target = $region120
        $region119: #{tpu_custom_call.1} parent=111 // pred_region
          %s848 = sand.u32 %s46, 1
          %s849 = scalar_lea.sflag [#allocation6], %s848
          %s850 = sand.u32 %s82, 1
          %s851 = scalar_lea.vmem [#allocation5], %s850
          %853 = vsyncadd %s849, 0
          %s854 = scalar_lea.hbm %s1, %s46
          %s856 = sshll.u32 %s854, 4
          %s857 = int_to_ptr.hbm [resolvable:$true] %s856
          %s858 = sshll.u32 %s851, 4
          %s859 = int_to_ptr.vmem [resolvable:$true] %s858
          %861 = dma.hbm_to_vmem [thread:$0]  %s857, 16, %s859, %s849
        $region120: #{tpu_custom_call.1} parent=111 // pred_fallthru
          _
      $region112: #{tpu_custom_call.1} parent=5 // pred_fallthru
        _
      %p862 = scmp.le.s32.totalorder 1, %s46
      %p863 = scmp.lt.s32.totalorder %s46, 3
      %p864 = pnand %p862, %p863
      %p865 = pneg %p864
      // Predicated region
      $region121: #{tpu_custom_call.1} parent=5 // pred_check
        _
      $region122: #{tpu_custom_call.1} parent=5 // pred_check_branch
        %867 = sbr.rel (%p864) target = $region124
      $region123: #{tpu_custom_call.1} parent=5 // pred_region
        %s868 = ssub.s32 %s46, 1
        %s869 = sand.u32 %s59, 1
        %s870 = scalar_lea.sflag [#allocation3], %s869
        %s871 = sand.u32 %s59, 1
        %s872 = smul.addr %s871, 256
        %s873 = scalar_lea.vmem [#allocation2], %s872
        // Predicated region
        $region125: #{tpu_custom_call.1} parent=123 // pred_check
          %p874 = pneg %p72
        $region126: #{tpu_custom_call.1} parent=123 // pred_check_branch
          %876 = sbr.rel (%p874) target = $region128
        $region127: #{tpu_custom_call.1} parent=123 // pred_region
          %878 = dma.done %s870, 4096
        $region128: #{tpu_custom_call.1} parent=123 // pred_fallthru
          _
        %s879 = sand.u32 %s51, 1
        %s880 = scalar_lea.sflag [#allocation6], %s879
        %s881 = sand.u32 %s85, 1
        %s882 = scalar_lea.vmem [#allocation5], %s881
        // Predicated region
        $region129: #{tpu_custom_call.1} parent=123 // pred_check
          %p883 = pneg %p98
        $region130: #{tpu_custom_call.1} parent=123 // pred_check_branch
          %885 = sbr.rel (%p883) target = $region132
        $region131: #{tpu_custom_call.1} parent=123 // pred_region
          %887 = dma.done %s880, 16
        $region132: #{tpu_custom_call.1} parent=123 // pred_fallthru
          _
        // Predicated region
        $region133: #{tpu_custom_call.1} parent=123 // pred_check
          %p888 = pneg %p119
        $region134: #{tpu_custom_call.1} parent=123 // pred_check_branch
          %890 = sbr.rel (%p888) target = $region136
        $region135: #{tpu_custom_call.1} parent=123 // pred_region
          %892 = dma.done [#allocation6], 16
        $region136: #{tpu_custom_call.1} parent=123 // pred_fallthru
          _
        // Predicated region
        $region137: #{tpu_custom_call.1} parent=123 // pred_check
          %p893 = pneg %p140
        $region138: #{tpu_custom_call.1} parent=123 // pred_check_branch
          %895 = sbr.rel (%p893) target = $region140
        $region139: #{tpu_custom_call.1} parent=123 // pred_region
          %897 = dma.done [#allocation9], 16
        $region140: #{tpu_custom_call.1} parent=123 // pred_fallthru
          _
        // Predicated region
        $region141: #{tpu_custom_call.1} parent=123 // pred_check
          %p898 = pneg %p203
        $region142: #{tpu_custom_call.1} parent=123 // pred_check_branch
          %900 = sbr.rel (%p898) target = $region144
        $region143: #{tpu_custom_call.1} parent=123 // pred_region
          %902 = dma.done [#allocation9], 18432
        $region144: #{tpu_custom_call.1} parent=123 // pred_fallthru
          _
        // Predicated region
        $region145: #{tpu_custom_call.1} parent=123 // pred_check
          %p903 = pneg %p224
        $region146: #{tpu_custom_call.1} parent=123 // pred_check_branch
          %905 = sbr.rel (%p903) target = $region148
        $region147: #{tpu_custom_call.1} parent=123 // pred_region
          %907 = dma.done [#allocation12], 16
        $region148: #{tpu_custom_call.1} parent=123 // pred_fallthru
          _
        // Predicated region
        $region149: #{tpu_custom_call.1} parent=123 // pred_check
          %p908 = pneg %p245
        $region150: #{tpu_custom_call.1} parent=123 // pred_check_branch
          %910 = sbr.rel (%p908) target = $region152
        $region151: #{tpu_custom_call.1} parent=123 // pred_region
          %912 = dma.done [#allocation12], 512
        $region152: #{tpu_custom_call.1} parent=123 // pred_fallthru
          _
        // Predicated region
        $region153: #{tpu_custom_call.1} parent=123 // pred_check
          %p913 = pneg %p350
        $region154: #{tpu_custom_call.1} parent=123 // pred_check_branch
          %915 = sbr.rel (%p913) target = $region156
        $region155: #{tpu_custom_call.1} parent=123 // pred_region
          %917 = dma.done [#allocation15], 256
        $region156: #{tpu_custom_call.1} parent=123 // pred_fallthru
          _
        // Predicated region
        $region157: #{tpu_custom_call.1} parent=123 // pred_check
          %p918 = pneg %p371
        $region158: #{tpu_custom_call.1} parent=123 // pred_check_branch
          %920 = sbr.rel (%p918) target = $region160
        $region159: #{tpu_custom_call.1} parent=123 // pred_region
          %922 = dma.done [#allocation15], 18432
        $region160: #{tpu_custom_call.1} parent=123 // pred_fallthru
          _
        // Predicated region
        $region161: #{tpu_custom_call.1} parent=123 // pred_check
          %p923 = pneg %p497
        $region162: #{tpu_custom_call.1} parent=123 // pred_check_branch
          %925 = sbr.rel (%p923) target = $region164
        $region163: #{tpu_custom_call.1} parent=123 // pred_region
          %927 = dma.done [#allocation18], 6144
        $region164: #{tpu_custom_call.1} parent=123 // pred_fallthru
          _
        // Predicated region
        $region165: #{tpu_custom_call.1} parent=123 // pred_check
          %p928 = pneg %p581
        $region166: #{tpu_custom_call.1} parent=123 // pred_check_branch
          %930 = sbr.rel (%p928) target = $region168
        $region167: #{tpu_custom_call.1} parent=123 // pred_region
          %932 = dma.done [#allocation18], 9216
        $region168: #{tpu_custom_call.1} parent=123 // pred_fallthru
          _
        // Predicated region
        $region169: #{tpu_custom_call.1} parent=123 // pred_check
          %p933 = pneg %p602
        $region170: #{tpu_custom_call.1} parent=123 // pred_check_branch
          %935 = sbr.rel (%p933) target = $region172
        $region171: #{tpu_custom_call.1} parent=123 // pred_region
          %937 = dma.done [#allocation21], 9216
        $region172: #{tpu_custom_call.1} parent=123 // pred_fallthru
          _
        %s938 = sand.u32 %s59, 1
        %s939 = scalar_lea.sflag [#allocation3], %s938
        %s940 = sand.u32 %s59, 1
        %s941 = smul.addr %s940, 256
        %s942 = scalar_lea.vmem [#allocation2], %s941
        %p943 = pneg %p72
        %p944 = pneg %p69
        %s945 = sand.u32 %s51, 1
        %s946 = scalar_lea.sflag [#allocation6], %s945
        %s947 = sand.u32 %s85, 1
        %s948 = scalar_lea.vmem [#allocation5], %s947
        %p949 = pneg %p98
        %p950 = pneg %p95
        %p951 = pneg %p119
        %p952 = pneg %p116
        %p953 = pneg %p140
        %p954 = pneg %p137
        %p955 = pneg %p161
        %p956 = pneg %p158
        %p957 = pneg %p182
        %p958 = pneg %p179
        %p959 = pneg %p203
        %p960 = pneg %p200
        %p961 = pneg %p224
        %p962 = pneg %p221
        %p963 = pneg %p245
        %p964 = pneg %p242
        %p965 = pneg %p266
        %p966 = pneg %p263
        %p967 = pneg %p287
        %p968 = pneg %p284
        %p969 = pneg %p308
        %p970 = pneg %p305
        %p971 = pneg %p329
        %p972 = pneg %p326
        %p973 = pneg %p350
        %p974 = pneg %p347
        %p975 = pneg %p371
        %p976 = pneg %p368
        %p977 = pneg %p392
        %p978 = pneg %p389
        %p979 = pneg %p413
        %p980 = pneg %p410
        %p981 = pneg %p434
        %p982 = pneg %p431
        %p983 = pneg %p455
        %p984 = pneg %p452
        %p985 = pneg %p476
        %p986 = pneg %p473
        %p987 = pneg %p497
        %p988 = pneg %p494
        %p989 = pneg %p518
        %p990 = pneg %p515
        %p991 = pneg %p539
        %p992 = pneg %p536
        %p993 = pneg %p560
        %p994 = pneg %p557
        %p995 = pneg %p581
        %p996 = pneg %p578
        %p997 = pneg %p602
        %p998 = pneg %p599
        %p999 = pneg %p628
        %p1000 = pneg %p625
        %s1001 = sand.u32 %s615, 1
        %s1002 = scalar_lea.sflag [#allocation4], %s1001
        %s1003 = sand.u32 %s615, 1
        %s1004 = smul.addr %s1003, 256
        %s1005 = scalar_lea.vmem [#allocation22], %s1004
        %v1006 = vld [vmem:[#allocation19] sm:$0xff]
        %v1007 = vld [vmem:[#allocation19 + $0x8] sm:$0xff]
        %v1008 = vld [vmem:[#allocation19 + $0x10] sm:$0xff]
        %v1009 = vld [vmem:[#allocation19 + $0x18] sm:$0xff]
        %v1010 = vld [vmem:[#allocation19 + $0x20] sm:$0xff]
        %v1011 = vld [vmem:[#allocation19 + $0x28] sm:$0xff]
        %v1012 = vld [vmem:[#allocation19 + $0x30] sm:$0xff]
        %v1013 = vld [vmem:[#allocation19 + $0x38] sm:$0xff]
        %v1014 = vld [vmem:[#allocation19 + $0x40] sm:$0xff]
        %v1015 = vld [vmem:[#allocation19 + $0x48] sm:$0xff]
        %v1016 = vld [vmem:[#allocation19 + $0x50] sm:$0xff]
        %v1017 = vld [vmem:[#allocation19 + $0x58] sm:$0xff]
        %v1018 = vld [vmem:[#allocation19 + $0x60] sm:$0xff]
        %v1019 = vld [vmem:[#allocation19 + $0x68] sm:$0xff]
        %v1020 = vld [vmem:[#allocation19 + $0x70] sm:$0xff]
        %v1021 = vld [vmem:[#allocation19 + $0x78] sm:$0xff]
        %v1022 = vld [vmem:[#allocation19 + $0x80] sm:$0xff]
        %v1023 = vld [vmem:[#allocation19 + $0x88] sm:$0xff]
        %v1024 = vld [vmem:[#allocation19 + $0x90] sm:$0xff]
        %v1025 = vld [vmem:[#allocation19 + $0x98] sm:$0xff]
        %v1026 = vld [vmem:[#allocation19 + $0xa0] sm:$0xff]
        %v1027 = vld [vmem:[#allocation19 + $0xa8] sm:$0xff]
        %v1028 = vld [vmem:[#allocation19 + $0xb0] sm:$0xff]
        %v1029 = vld [vmem:[#allocation19 + $0xb8] sm:$0xff]
        %v1030 = vld [vmem:[#allocation19 + $0xc0] sm:$0xff]
        %v1031 = vld [vmem:[#allocation19 + $0xc8] sm:$0xff]
        %v1032 = vld [vmem:[#allocation19 + $0xd0] sm:$0xff]
        %v1033 = vld [vmem:[#allocation19 + $0xd8] sm:$0xff]
        %v1034 = vld [vmem:[#allocation19 + $0xe0] sm:$0xff]
        %v1035 = vld [vmem:[#allocation19 + $0xe8] sm:$0xff]
        %v1036 = vld [vmem:[#allocation19 + $0xf0] sm:$0xff]
        %v1037 = vld [vmem:[#allocation19 + $0xf8] sm:$0xff]
        %v1038 = vld [vmem:[#allocation19 + $0x100] sm:$0xff]
        %v1039 = vld [vmem:[#allocation19 + $0x108] sm:$0xff]
        %v1040 = vld [vmem:[#allocation19 + $0x110] sm:$0xff]
        %v1041 = vld [vmem:[#allocation19 + $0x118] sm:$0xff]
        %v1042 = vld [vmem:[#allocation19 + $0x120] sm:$0xff]
        %v1043 = vld [vmem:[#allocation19 + $0x128] sm:$0xff]
        %v1044 = vld [vmem:[#allocation19 + $0x130] sm:$0xff]
        %v1045 = vld [vmem:[#allocation19 + $0x138] sm:$0xff]
        %v1046 = vld [vmem:[#allocation19 + $0x140] sm:$0xff]
        %v1047 = vld [vmem:[#allocation19 + $0x148] sm:$0xff]
        %v1048 = vld [vmem:[#allocation19 + $0x150] sm:$0xff]
        %v1049 = vld [vmem:[#allocation19 + $0x158] sm:$0xff]
        %v1050 = vld [vmem:[#allocation19 + $0x160] sm:$0xff]
        %v1051 = vld [vmem:[#allocation19 + $0x168] sm:$0xff]
        %v1052 = vld [vmem:[#allocation19 + $0x170] sm:$0xff]
        %v1053 = vld [vmem:[#allocation19 + $0x178] sm:$0xff]
        %v1054 = vld [vmem:[#allocation19 + $0x180] sm:$0xff]
        %v1055 = vld [vmem:[#allocation19 + $0x188] sm:$0xff]
        %v1056 = vld [vmem:[#allocation19 + $0x190] sm:$0xff]
        %v1057 = vld [vmem:[#allocation19 + $0x198] sm:$0xff]
        %v1058 = vld [vmem:[#allocation19 + $0x1a0] sm:$0xff]
        %v1059 = vld [vmem:[#allocation19 + $0x1a8] sm:$0xff]
        %v1060 = vld [vmem:[#allocation19 + $0x1b0] sm:$0xff]
        %v1061 = vld [vmem:[#allocation19 + $0x1b8] sm:$0xff]
        %v1062 = vld [vmem:[#allocation19 + $0x1c0] sm:$0xff]
        %v1063 = vld [vmem:[#allocation19 + $0x1c8] sm:$0xff]
        %v1064 = vld [vmem:[#allocation19 + $0x1d0] sm:$0xff]
        %v1065 = vld [vmem:[#allocation19 + $0x1d8] sm:$0xff]
        %v1066 = vld [vmem:[#allocation19 + $0x1e0] sm:$0xff]
        %v1067 = vld [vmem:[#allocation19 + $0x1e8] sm:$0xff]
        %v1068 = vld [vmem:[#allocation19 + $0x1f0] sm:$0xff]
        %v1069 = vld [vmem:[#allocation19 + $0x1f8] sm:$0xff]
        %v1070 = vld [vmem:[#allocation19 + $0x200] sm:$0xff]
        %v1071 = vld [vmem:[#allocation19 + $0x208] sm:$0xff]
        %v1072 = vld [vmem:[#allocation19 + $0x210] sm:$0xff]
        %v1073 = vld [vmem:[#allocation19 + $0x218] sm:$0xff]
        %v1074 = vld [vmem:[#allocation19 + $0x220] sm:$0xff]
        %v1075 = vld [vmem:[#allocation19 + $0x228] sm:$0xff]
        %v1076 = vld [vmem:[#allocation19 + $0x230] sm:$0xff]
        %v1077 = vld [vmem:[#allocation19 + $0x238] sm:$0xff]
        %v1078 = vld [vmem:[#allocation20] sm:$0xff]
        %v1079 = vld [vmem:[#allocation20 + $0x8] sm:$0xff]
        %v1080 = vld [vmem:[#allocation20 + $0x10] sm:$0xff]
        %v1081 = vld [vmem:[#allocation20 + $0x18] sm:$0xff]
        %v1082 = vld [vmem:[#allocation20 + $0x20] sm:$0xff]
        %v1083 = vld [vmem:[#allocation20 + $0x28] sm:$0xff]
        %v1084 = vld [vmem:[#allocation20 + $0x30] sm:$0xff]
        %v1085 = vld [vmem:[#allocation20 + $0x38] sm:$0xff]
        %v1086 = vld [vmem:[#allocation20 + $0x40] sm:$0xff]
        %v1087 = vld [vmem:[#allocation20 + $0x48] sm:$0xff]
        %v1088 = vld [vmem:[#allocation20 + $0x50] sm:$0xff]
        %v1089 = vld [vmem:[#allocation20 + $0x58] sm:$0xff]
        %v1090 = vld [vmem:[#allocation20 + $0x60] sm:$0xff]
        %v1091 = vld [vmem:[#allocation20 + $0x68] sm:$0xff]
        %v1092 = vld [vmem:[#allocation20 + $0x70] sm:$0xff]
        %v1093 = vld [vmem:[#allocation20 + $0x78] sm:$0xff]
        %v1094 = vld [vmem:[#allocation20 + $0x80] sm:$0xff]
        %v1095 = vld [vmem:[#allocation20 + $0x88] sm:$0xff]
        %v1096 = vld [vmem:[#allocation20 + $0x90] sm:$0xff]
        %v1097 = vld [vmem:[#allocation20 + $0x98] sm:$0xff]
        %v1098 = vld [vmem:[#allocation20 + $0xa0] sm:$0xff]
        %v1099 = vld [vmem:[#allocation20 + $0xa8] sm:$0xff]
        %v1100 = vld [vmem:[#allocation20 + $0xb0] sm:$0xff]
        %v1101 = vld [vmem:[#allocation20 + $0xb8] sm:$0xff]
        %v1102 = vld [vmem:[#allocation20 + $0xc0] sm:$0xff]
        %v1103 = vld [vmem:[#allocation20 + $0xc8] sm:$0xff]
        %v1104 = vld [vmem:[#allocation20 + $0xd0] sm:$0xff]
        %v1105 = vld [vmem:[#allocation20 + $0xd8] sm:$0xff]
        %v1106 = vld [vmem:[#allocation20 + $0xe0] sm:$0xff]
        %v1107 = vld [vmem:[#allocation20 + $0xe8] sm:$0xff]
        %v1108 = vld [vmem:[#allocation20 + $0xf0] sm:$0xff]
        %v1109 = vld [vmem:[#allocation20 + $0xf8] sm:$0xff]
        %v1110 = vld [vmem:[#allocation20 + $0x100] sm:$0xff]
        %v1111 = vld [vmem:[#allocation20 + $0x108] sm:$0xff]
        %v1112 = vld [vmem:[#allocation20 + $0x110] sm:$0xff]
        %v1113 = vld [vmem:[#allocation20 + $0x118] sm:$0xff]
        %v1114 = vld [vmem:[#allocation20 + $0x120] sm:$0xff]
        %v1115 = vld [vmem:[#allocation20 + $0x128] sm:$0xff]
        %v1116 = vld [vmem:[#allocation20 + $0x130] sm:$0xff]
        %v1117 = vld [vmem:[#allocation20 + $0x138] sm:$0xff]
        %v1118 = vld [vmem:[#allocation20 + $0x140] sm:$0xff]
        %v1119 = vld [vmem:[#allocation20 + $0x148] sm:$0xff]
        %v1120 = vld [vmem:[#allocation20 + $0x150] sm:$0xff]
        %v1121 = vld [vmem:[#allocation20 + $0x158] sm:$0xff]
        %v1122 = vld [vmem:[#allocation20 + $0x160] sm:$0xff]
        %v1123 = vld [vmem:[#allocation20 + $0x168] sm:$0xff]
        %v1124 = vld [vmem:[#allocation20 + $0x170] sm:$0xff]
        %v1125 = vld [vmem:[#allocation20 + $0x178] sm:$0xff]
        %v1126 = vld [vmem:[#allocation20 + $0x180] sm:$0xff]
        %v1127 = vld [vmem:[#allocation20 + $0x188] sm:$0xff]
        %v1128 = vld [vmem:[#allocation20 + $0x190] sm:$0xff]
        %v1129 = vld [vmem:[#allocation20 + $0x198] sm:$0xff]
        %v1130 = vld [vmem:[#allocation20 + $0x1a0] sm:$0xff]
        %v1131 = vld [vmem:[#allocation20 + $0x1a8] sm:$0xff]
        %v1132 = vld [vmem:[#allocation20 + $0x1b0] sm:$0xff]
        %v1133 = vld [vmem:[#allocation20 + $0x1b8] sm:$0xff]
        %v1134 = vld [vmem:[#allocation20 + $0x1c0] sm:$0xff]
        %v1135 = vld [vmem:[#allocation20 + $0x1c8] sm:$0xff]
        %v1136 = vld [vmem:[#allocation20 + $0x1d0] sm:$0xff]
        %v1137 = vld [vmem:[#allocation20 + $0x1d8] sm:$0xff]
        %v1138 = vld [vmem:[#allocation20 + $0x1e0] sm:$0xff]
        %v1139 = vld [vmem:[#allocation20 + $0x1e8] sm:$0xff]
        %v1140 = vld [vmem:[#allocation20 + $0x1f0] sm:$0xff]
        %v1141 = vld [vmem:[#allocation20 + $0x1f8] sm:$0xff]
        %v1142 = vld [vmem:[#allocation20 + $0x200] sm:$0xff]
        %v1143 = vld [vmem:[#allocation20 + $0x208] sm:$0xff]
        %v1144 = vld [vmem:[#allocation20 + $0x210] sm:$0xff]
        %v1145 = vld [vmem:[#allocation20 + $0x218] sm:$0xff]
        %v1146 = vld [vmem:[#allocation20 + $0x220] sm:$0xff]
        %v1147 = vld [vmem:[#allocation20 + $0x228] sm:$0xff]
        %v1148 = vld [vmem:[#allocation20 + $0x230] sm:$0xff]
        %v1149 = vld [vmem:[#allocation20 + $0x238] sm:$0xff]
        %v1150 = vld [vmem:[%s873] sm:$0xff]
        %v1151 = vld [vmem:[%s873 + $0x8] sm:$0xff]
        %v1152 = vld [vmem:[%s873 + $0x10] sm:$0xff]
        %v1153 = vld [vmem:[%s873 + $0x18] sm:$0xff]
        %v1154 = vld [vmem:[%s873 + $0x20] sm:$0xff]
        %v1155 = vld [vmem:[%s873 + $0x28] sm:$0xff]
        %v1156 = vld [vmem:[%s873 + $0x30] sm:$0xff]
        %v1157 = vld [vmem:[%s873 + $0x38] sm:$0xff]
        %v1158 = vld [vmem:[%s873 + $0x40] sm:$0xff]
        %v1159 = vld [vmem:[%s873 + $0x48] sm:$0xff]
        %v1160 = vld [vmem:[%s873 + $0x50] sm:$0xff]
        %v1161 = vld [vmem:[%s873 + $0x58] sm:$0xff]
        %v1162 = vld [vmem:[%s873 + $0x60] sm:$0xff]
        %v1163 = vld [vmem:[%s873 + $0x68] sm:$0xff]
        %v1164 = vld [vmem:[%s873 + $0x70] sm:$0xff]
        %v1165 = vld [vmem:[%s873 + $0x78] sm:$0xff]
        %v1166 = vld [vmem:[%s873 + $0x80] sm:$0xff]
        %v1167 = vld [vmem:[%s873 + $0x88] sm:$0xff]
        %v1168 = vld [vmem:[%s873 + $0x90] sm:$0xff]
        %v1169 = vld [vmem:[%s873 + $0x98] sm:$0xff]
        %v1170 = vld [vmem:[%s873 + $0xa0] sm:$0xff]
        %v1171 = vld [vmem:[%s873 + $0xa8] sm:$0xff]
        %v1172 = vld [vmem:[%s873 + $0xb0] sm:$0xff]
        %v1173 = vld [vmem:[%s873 + $0xb8] sm:$0xff]
        %v1174 = vld [vmem:[%s873 + $0xc0] sm:$0xff]
        %v1175 = vld [vmem:[%s873 + $0xc8] sm:$0xff]
        %v1176 = vld [vmem:[%s873 + $0xd0] sm:$0xff]
        %v1177 = vld [vmem:[%s873 + $0xd8] sm:$0xff]
        %v1178 = vld [vmem:[%s873 + $0xe0] sm:$0xff]
        %v1179 = vld [vmem:[%s873 + $0xe8] sm:$0xff]
        %v1180 = vld [vmem:[%s873 + $0xf0] sm:$0xff]
        %v1181 = vld [vmem:[%s873 + $0xf8] sm:$0xff]
        %v1182 = vld [vmem:[#allocation7] sm:$0x1]
        %v1183 = vld [vmem:[#allocation8] sm:$0x1]
        %v1184 = vld [vmem:[%s4] sm:$0xff]
        %v1185 = vld [vmem:[%s4 + $0x8] sm:$0xff]
        %v1186 = vld [vmem:[%s4 + $0x10] sm:$0xff]
        %v1187 = vld [vmem:[%s4 + $0x18] sm:$0xff]
        %v1188 = vld [vmem:[%s4 + $0x20] sm:$0xff]
        %v1189 = vld [vmem:[%s4 + $0x28] sm:$0xff]
        %v1190 = vld [vmem:[%s4 + $0x30] sm:$0xff]
        %v1191 = vld [vmem:[%s4 + $0x38] sm:$0xff]
        %v1192 = vld [vmem:[%s4 + $0x40] sm:$0xff]
        %v1193 = vld [vmem:[%s4 + $0x48] sm:$0xff]
        %v1194 = vld [vmem:[%s4 + $0x50] sm:$0xff]
        %v1195 = vld [vmem:[%s4 + $0x58] sm:$0xff]
        %v1196 = vld [vmem:[%s4 + $0x60] sm:$0xff]
        %v1197 = vld [vmem:[%s4 + $0x68] sm:$0xff]
        %v1198 = vld [vmem:[%s4 + $0x70] sm:$0xff]
        %v1199 = vld [vmem:[%s4 + $0x78] sm:$0xff]
        %v1200 = vld [vmem:[%s5] sm:$0xff]
        %v1201 = vld [vmem:[%s5 + $0x8] sm:$0xff]
        %v1202 = vadd.f32 %v1150, %v1151
        %v1203 = vadd.f32 %v1202, %v1152
        %v1204 = vadd.f32 %v1203, %v1153
        %v1205 = vadd.f32 %v1204, %v1154
        %v1206 = vadd.f32 %v1205, %v1155
        %v1207 = vadd.f32 %v1206, %v1156
        %v1208 = vadd.f32 %v1207, %v1157
        %v1209 = vadd.f32 %v1208, %v1158
        %v1210 = vadd.f32 %v1209, %v1159
        %v1211 = vadd.f32 %v1210, %v1160
        %v1212 = vadd.f32 %v1211, %v1161
        %v1213 = vadd.f32 %v1212, %v1162
        %v1214 = vadd.f32 %v1213, %v1163
        %v1215 = vadd.f32 %v1214, %v1164
        %v1216 = vadd.f32 %v1215, %v1165
        %v1217 = vadd.f32 %v1216, %v1166
        %v1218 = vadd.f32 %v1217, %v1167
        %v1219 = vadd.f32 %v1218, %v1168
        %v1220 = vadd.f32 %v1219, %v1169
        %v1221 = vadd.f32 %v1220, %v1170
        %v1222 = vadd.f32 %v1221, %v1171
        %v1223 = vadd.f32 %v1222, %v1172
        %v1224 = vadd.f32 %v1223, %v1173
        %v1225 = vadd.f32 %v1224, %v1174
        %v1226 = vadd.f32 %v1225, %v1175
        %v1227 = vadd.f32 %v1226, %v1176
        %v1228 = vadd.f32 %v1227, %v1177
        %v1229 = vadd.f32 %v1228, %v1178
        %v1230 = vadd.f32 %v1229, %v1179
        %v1231 = vadd.f32 %v1230, %v1180
        %v1232 = vadd.f32 %v1231, %v1181
        %v1233 = vrot.slane %v1232, 4
        %v1234 = vadd.f32 %v1232, %v1233
        %v1235 = vrot.slane %v1234, 2
        %v1236 = vadd.f32 %v1234, %v1235
        %v1237 = vrot.slane %v1236, 1
        %v1238 = vadd.f32 %v1236, %v1237
        %1239 = vmatpush.msra.mxu0 %v1199
        %1240 = vmatpush.msra.mxu0 %v1198
        %1241 = vmatpush.msra.mxu0 %v1197
        %1242 = vmatpush.msra.mxu0 %v1196
        %1243 = vmatpush.msra.mxu0 %v1195
        %1244 = vmatpush.msra.mxu0 %v1194
        %1245 = vmatpush.msra.mxu0 %v1193
        %1246 = vmatpush.msra.mxu0 %v1192
        %1247 = vmatpush.msra.mxu0 %v1191
        %1248 = vmatpush.msra.mxu0 %v1190
        %1249 = vmatpush.msra.mxu0 %v1189
        %1250 = vmatpush.msra.mxu0 %v1188
        %1251 = vmatpush.msra.mxu0 %v1187
        %1252 = vmatpush.msra.mxu0 %v1186
        %1253 = vmatpush.msra.mxu0 %v1185
        %1254 = vmatpush.msra.mxu0 %v1184
        %1255 = vmatmul.f32.gmra.mxu0 %v1238
        %v1256 = vpop.f32.mrf.mxu0
        %v1257 = vadd.f32 0.0, %v1256
        %1258 = vdwg.mxu0
        %vm1259 = vcmask 130048
        %v1261 = vsel %vm1259, %v1257, 0
        %1263 = vmatpush.msra.mxu0 0.0
        %1264 = vmatpush.msra.mxu0 0.0
        %1265 = vmatpush.msra.mxu0 0.0
        %1266 = vmatpush.msra.mxu0 0.0
        %1267 = vmatpush.msra.mxu0 0.0
        %1268 = vmatpush.msra.mxu0 0.0
        %1269 = vmatpush.msra.mxu0 0.0
        %1270 = vmatpush.msra.mxu0 0.0
        %1271 = vmatpush.msra.mxu0 0.0
        %1272 = vmatpush.msra.mxu0 0.0
        %1273 = vmatpush.msra.mxu0 0.0
        %1274 = vmatpush.msra.mxu0 0.0
        %1275 = vmatpush.msra.mxu0 0.0
        %1276 = vmatpush.msra.mxu0 0.0
        %1277 = vmatpush.msra.mxu0 %v1201
        %1278 = vmatpush.msra.mxu0 %v1200
        %1279 = vmatmul.f32.gmra.mxu0 %v1261
        %v1280 = vpop.f32.mrf.mxu0
        %v1281 = vadd.f32 0.0, %v1280
        %1282 = vdwg.mxu0
        %v1283 = vperm.slane %v1281, 0
        %v1284 = vsub.f32 %v1150, %v1283
        %v1285 = vsub.f32 %v1151, %v1283
        %v1286 = vsub.f32 %v1152, %v1283
        %v1287 = vsub.f32 %v1153, %v1283
        %v1288 = vsub.f32 %v1154, %v1283
        %v1289 = vsub.f32 %v1155, %v1283
        %v1290 = vsub.f32 %v1156, %v1283
        %v1291 = vsub.f32 %v1157, %v1283
        %v1292 = vsub.f32 %v1158, %v1283
        %v1293 = vsub.f32 %v1159, %v1283
        %v1294 = vsub.f32 %v1160, %v1283
        %v1295 = vsub.f32 %v1161, %v1283
        %v1296 = vsub.f32 %v1162, %v1283
        %v1297 = vsub.f32 %v1163, %v1283
        %v1298 = vsub.f32 %v1164, %v1283
        %v1299 = vsub.f32 %v1165, %v1283
        %v1300 = vsub.f32 %v1166, %v1283
        %v1301 = vsub.f32 %v1167, %v1283
        %v1302 = vsub.f32 %v1168, %v1283
        %v1303 = vsub.f32 %v1169, %v1283
        %v1304 = vsub.f32 %v1170, %v1283
        %v1305 = vsub.f32 %v1171, %v1283
        %v1306 = vsub.f32 %v1172, %v1283
        %v1307 = vsub.f32 %v1173, %v1283
        %v1308 = vsub.f32 %v1174, %v1283
        %v1309 = vsub.f32 %v1175, %v1283
        %v1310 = vsub.f32 %v1176, %v1283
        %v1311 = vsub.f32 %v1177, %v1283
        %v1312 = vsub.f32 %v1178, %v1283
        %v1313 = vsub.f32 %v1179, %v1283
        %v1314 = vsub.f32 %v1180, %v1283
        %v1315 = vsub.f32 %v1181, %v1283
        %v1316 = vmul.f32 %v1284, %v1284
        %v1317 = vmul.f32 %v1285, %v1285
        %v1318 = vmul.f32 %v1286, %v1286
        %v1319 = vmul.f32 %v1287, %v1287
        %v1320 = vmul.f32 %v1288, %v1288
        %v1321 = vmul.f32 %v1289, %v1289
        %v1322 = vmul.f32 %v1290, %v1290
        %v1323 = vmul.f32 %v1291, %v1291
        %v1324 = vmul.f32 %v1292, %v1292
        %v1325 = vmul.f32 %v1293, %v1293
        %v1326 = vmul.f32 %v1294, %v1294
        %v1327 = vmul.f32 %v1295, %v1295
        %v1328 = vmul.f32 %v1296, %v1296
        %v1329 = vmul.f32 %v1297, %v1297
        %v1330 = vmul.f32 %v1298, %v1298
        %v1331 = vmul.f32 %v1299, %v1299
        %v1332 = vmul.f32 %v1300, %v1300
        %v1333 = vmul.f32 %v1301, %v1301
        %v1334 = vmul.f32 %v1302, %v1302
        %v1335 = vmul.f32 %v1303, %v1303
        %v1336 = vmul.f32 %v1304, %v1304
        %v1337 = vmul.f32 %v1305, %v1305
        %v1338 = vmul.f32 %v1306, %v1306
        %v1339 = vmul.f32 %v1307, %v1307
        %v1340 = vmul.f32 %v1308, %v1308
        %v1341 = vmul.f32 %v1309, %v1309
        %v1342 = vmul.f32 %v1310, %v1310
        %v1343 = vmul.f32 %v1311, %v1311
        %v1344 = vmul.f32 %v1312, %v1312
        %v1345 = vmul.f32 %v1313, %v1313
        %v1346 = vmul.f32 %v1314, %v1314
        %v1347 = vmul.f32 %v1315, %v1315
        %v1348 = vadd.f32 %v1316, %v1317
        %v1349 = vadd.f32 %v1348, %v1318
        %v1350 = vadd.f32 %v1349, %v1319
        %v1351 = vadd.f32 %v1350, %v1320
        %v1352 = vadd.f32 %v1351, %v1321
        %v1353 = vadd.f32 %v1352, %v1322
        %v1354 = vadd.f32 %v1353, %v1323
        %v1355 = vadd.f32 %v1354, %v1324
        %v1356 = vadd.f32 %v1355, %v1325
        %v1357 = vadd.f32 %v1356, %v1326
        %v1358 = vadd.f32 %v1357, %v1327
        %v1359 = vadd.f32 %v1358, %v1328
        %v1360 = vadd.f32 %v1359, %v1329
        %v1361 = vadd.f32 %v1360, %v1330
        %v1362 = vadd.f32 %v1361, %v1331
        %v1363 = vadd.f32 %v1362, %v1332
        %v1364 = vadd.f32 %v1363, %v1333
        %v1365 = vadd.f32 %v1364, %v1334
        %v1366 = vadd.f32 %v1365, %v1335
        %v1367 = vadd.f32 %v1366, %v1336
        %v1368 = vadd.f32 %v1367, %v1337
        %v1369 = vadd.f32 %v1368, %v1338
        %v1370 = vadd.f32 %v1369, %v1339
        %v1371 = vadd.f32 %v1370, %v1340
        %v1372 = vadd.f32 %v1371, %v1341
        %v1373 = vadd.f32 %v1372, %v1342
        %v1374 = vadd.f32 %v1373, %v1343
        %v1375 = vadd.f32 %v1374, %v1344
        %v1376 = vadd.f32 %v1375, %v1345
        %v1377 = vadd.f32 %v1376, %v1346
        %v1378 = vadd.f32 %v1377, %v1347
        %v1379 = vrot.slane %v1378, 4
        %v1380 = vadd.f32 %v1378, %v1379
        %v1381 = vrot.slane %v1380, 2
        %v1382 = vadd.f32 %v1380, %v1381
        %v1383 = vrot.slane %v1382, 1
        %v1384 = vadd.f32 %v1382, %v1383
        %1385 = vmatpush.msra.mxu0 %v1199
        %1386 = vmatpush.msra.mxu0 %v1198
        %1387 = vmatpush.msra.mxu0 %v1197
        %1388 = vmatpush.msra.mxu0 %v1196
        %1389 = vmatpush.msra.mxu0 %v1195
        %1390 = vmatpush.msra.mxu0 %v1194
        %1391 = vmatpush.msra.mxu0 %v1193
        %1392 = vmatpush.msra.mxu0 %v1192
        %1393 = vmatpush.msra.mxu0 %v1191
        %1394 = vmatpush.msra.mxu0 %v1190
        %1395 = vmatpush.msra.mxu0 %v1189
        %1396 = vmatpush.msra.mxu0 %v1188
        %1397 = vmatpush.msra.mxu0 %v1187
        %1398 = vmatpush.msra.mxu0 %v1186
        %1399 = vmatpush.msra.mxu0 %v1185
        %1400 = vmatpush.msra.mxu0 %v1184
        %1401 = vmatmul.f32.gmra.mxu0 %v1384
        %v1402 = vpop.f32.mrf.mxu0
        %v1403 = vadd.f32 0.0, %v1402
        %1404 = vdwg.mxu0
        %v1406 = vsel %vm1259, %v1403, 0
        %1408 = vmatpush.msra.mxu0 0.0
        %1409 = vmatpush.msra.mxu0 0.0
        %1410 = vmatpush.msra.mxu0 0.0
        %1411 = vmatpush.msra.mxu0 0.0
        %1412 = vmatpush.msra.mxu0 0.0
        %1413 = vmatpush.msra.mxu0 0.0
        %1414 = vmatpush.msra.mxu0 0.0
        %1415 = vmatpush.msra.mxu0 0.0
        %1416 = vmatpush.msra.mxu0 0.0
        %1417 = vmatpush.msra.mxu0 0.0
        %1418 = vmatpush.msra.mxu0 0.0
        %1419 = vmatpush.msra.mxu0 0.0
        %1420 = vmatpush.msra.mxu0 0.0
        %1421 = vmatpush.msra.mxu0 0.0
        %1422 = vmatpush.msra.mxu0 %v1201
        %1423 = vmatpush.msra.mxu0 %v1200
        %1424 = vmatmul.f32.gmra.mxu0 %v1406
        %v1425 = vpop.f32.mrf.mxu0
        %v1426 = vadd.f32 1e-06, %v1425
        %1427 = vdwg.mxu0
        %v1428 = vrsqrt.pop %v1426
        %v1429 = vmul.f32 %v1428, %v1426
        %v1430 = vmul.f32 %v1429, %v1428
        %v1431 = vmul.f32 0.5, %v1430
        %v1432 = vsub.f32 1.5, %v1431
        %v1433 = vmul.f32 %v1428, %v1432
        %vm1434 = vweird.f32 %v1426
        %vm1435 = vweird.f32 %v1428
        %vm1436 = vmor %vm1434, %vm1435
        %v1437 = vsel %vm1436, %v1428, %v1433
        %v1438 = vmul.f32 %v1437, %v1182
        %v1439 = vperm.slane %v1438, 0
        %v1440 = vmul.f32 %v1284, %v1439
        %v1441 = vmul.f32 %v1285, %v1439
        %v1442 = vmul.f32 %v1286, %v1439
        %v1443 = vmul.f32 %v1287, %v1439
        %v1444 = vmul.f32 %v1288, %v1439
        %v1445 = vmul.f32 %v1289, %v1439
        %v1446 = vmul.f32 %v1290, %v1439
        %v1447 = vmul.f32 %v1291, %v1439
        %v1448 = vmul.f32 %v1292, %v1439
        %v1449 = vmul.f32 %v1293, %v1439
        %v1450 = vmul.f32 %v1294, %v1439
        %v1451 = vmul.f32 %v1295, %v1439
        %v1452 = vmul.f32 %v1296, %v1439
        %v1453 = vmul.f32 %v1297, %v1439
        %v1454 = vmul.f32 %v1298, %v1439
        %v1455 = vmul.f32 %v1299, %v1439
        %v1456 = vmul.f32 %v1300, %v1439
        %v1457 = vmul.f32 %v1301, %v1439
        %v1458 = vmul.f32 %v1302, %v1439
        %v1459 = vmul.f32 %v1303, %v1439
        %v1460 = vmul.f32 %v1304, %v1439
        %v1461 = vmul.f32 %v1305, %v1439
        %v1462 = vmul.f32 %v1306, %v1439
        %v1463 = vmul.f32 %v1307, %v1439
        %v1464 = vmul.f32 %v1308, %v1439
        %v1465 = vmul.f32 %v1309, %v1439
        %v1466 = vmul.f32 %v1310, %v1439
        %v1467 = vmul.f32 %v1311, %v1439
        %v1468 = vmul.f32 %v1312, %v1439
        %v1469 = vmul.f32 %v1313, %v1439
        %v1470 = vmul.f32 %v1314, %v1439
        %v1471 = vmul.f32 %v1315, %v1439
        %v1473 = vperm.slane %v1183, 0
        %v1475 = vadd.f32 %v1440, %v1473
        %v1476 = vadd.f32 %v1441, %v1473
        %v1477 = vadd.f32 %v1442, %v1473
        %v1478 = vadd.f32 %v1443, %v1473
        %v1479 = vadd.f32 %v1444, %v1473
        %v1480 = vadd.f32 %v1445, %v1473
        %v1481 = vadd.f32 %v1446, %v1473
        %v1482 = vadd.f32 %v1447, %v1473
        %v1483 = vadd.f32 %v1448, %v1473
        %v1484 = vadd.f32 %v1449, %v1473
        %v1485 = vadd.f32 %v1450, %v1473
        %v1486 = vadd.f32 %v1451, %v1473
        %v1487 = vadd.f32 %v1452, %v1473
        %v1488 = vadd.f32 %v1453, %v1473
        %v1489 = vadd.f32 %v1454, %v1473
        %v1490 = vadd.f32 %v1455, %v1473
        %v1491 = vadd.f32 %v1456, %v1473
        %v1492 = vadd.f32 %v1457, %v1473
        %v1493 = vadd.f32 %v1458, %v1473
        %v1494 = vadd.f32 %v1459, %v1473
        %v1495 = vadd.f32 %v1460, %v1473
        %v1496 = vadd.f32 %v1461, %v1473
        %v1497 = vadd.f32 %v1462, %v1473
        %v1498 = vadd.f32 %v1463, %v1473
        %v1499 = vadd.f32 %v1464, %v1473
        %v1500 = vadd.f32 %v1465, %v1473
        %v1501 = vadd.f32 %v1466, %v1473
        %v1502 = vadd.f32 %v1467, %v1473
        %v1503 = vadd.f32 %v1468, %v1473
        %v1504 = vadd.f32 %v1469, %v1473
        %v1505 = vadd.f32 %v1470, %v1473
        %v1506 = vadd.f32 %v1471, %v1473
        %v1507 = vxor.u32 %v1475, 2147483648
        %v1508 = vxor.u32 %v1476, 2147483648
        %v1509 = vxor.u32 %v1477, 2147483648
        %v1510 = vxor.u32 %v1478, 2147483648
        %v1511 = vxor.u32 %v1479, 2147483648
        %v1512 = vxor.u32 %v1480, 2147483648
        %v1513 = vxor.u32 %v1481, 2147483648
        %v1514 = vxor.u32 %v1482, 2147483648
        %v1515 = vxor.u32 %v1483, 2147483648
        %v1516 = vxor.u32 %v1484, 2147483648
        %v1517 = vxor.u32 %v1485, 2147483648
        %v1518 = vxor.u32 %v1486, 2147483648
        %v1519 = vxor.u32 %v1487, 2147483648
        %v1520 = vxor.u32 %v1488, 2147483648
        %v1521 = vxor.u32 %v1489, 2147483648
        %v1522 = vxor.u32 %v1490, 2147483648
        %v1523 = vxor.u32 %v1491, 2147483648
        %v1524 = vxor.u32 %v1492, 2147483648
        %v1525 = vxor.u32 %v1493, 2147483648
        %v1526 = vxor.u32 %v1494, 2147483648
        %v1527 = vxor.u32 %v1495, 2147483648
        %v1528 = vxor.u32 %v1496, 2147483648
        %v1529 = vxor.u32 %v1497, 2147483648
        %v1530 = vxor.u32 %v1498, 2147483648
        %v1531 = vxor.u32 %v1499, 2147483648
        %v1532 = vxor.u32 %v1500, 2147483648
        %v1533 = vxor.u32 %v1501, 2147483648
        %v1534 = vxor.u32 %v1502, 2147483648
        %v1535 = vxor.u32 %v1503, 2147483648
        %v1536 = vxor.u32 %v1504, 2147483648
        %v1537 = vxor.u32 %v1505, 2147483648
        %v1538 = vxor.u32 %v1506, 2147483648
        %v1539 = vmul.f32 %v1507, 1.442695
        %v1540 = vpow.pop %v1539
        %v1541 = vmul.f32 %v1508, 1.442695
        %v1542 = vpow.pop %v1541
        %v1543 = vmul.f32 %v1509, 1.442695
        %v1544 = vpow.pop %v1543
        %v1545 = vmul.f32 %v1510, 1.442695
        %v1546 = vpow.pop %v1545
        %v1547 = vmul.f32 %v1511, 1.442695
        %v1548 = vpow.pop %v1547
        %v1549 = vmul.f32 %v1512, 1.442695
        %v1550 = vpow.pop %v1549
        %v1551 = vmul.f32 %v1513, 1.442695
        %v1552 = vpow.pop %v1551
        %v1553 = vmul.f32 %v1514, 1.442695
        %v1554 = vpow.pop %v1553
        %v1555 = vmul.f32 %v1515, 1.442695
        %v1556 = vpow.pop %v1555
        %v1557 = vmul.f32 %v1516, 1.442695
        %v1558 = vpow.pop %v1557
        %v1559 = vmul.f32 %v1517, 1.442695
        %v1560 = vpow.pop %v1559
        %v1561 = vmul.f32 %v1518, 1.442695
        %v1562 = vpow.pop %v1561
        %v1563 = vmul.f32 %v1519, 1.442695
        %v1564 = vpow.pop %v1563
        %v1565 = vmul.f32 %v1520, 1.442695
        %v1566 = vpow.pop %v1565
        %v1567 = vmul.f32 %v1521, 1.442695
        %v1568 = vpow.pop %v1567
        %v1569 = vmul.f32 %v1522, 1.442695
        %v1570 = vpow.pop %v1569
        %v1571 = vmul.f32 %v1523, 1.442695
        %v1572 = vpow.pop %v1571
        %v1573 = vmul.f32 %v1524, 1.442695
        %v1574 = vpow.pop %v1573
        %v1575 = vmul.f32 %v1525, 1.442695
        %v1576 = vpow.pop %v1575
        %v1577 = vmul.f32 %v1526, 1.442695
        %v1578 = vpow.pop %v1577
        %v1579 = vmul.f32 %v1527, 1.442695
        %v1580 = vpow.pop %v1579
        %v1581 = vmul.f32 %v1528, 1.442695
        %v1582 = vpow.pop %v1581
        %v1583 = vmul.f32 %v1529, 1.442695
        %v1584 = vpow.pop %v1583
        %v1585 = vmul.f32 %v1530, 1.442695
        %v1586 = vpow.pop %v1585
        %v1587 = vmul.f32 %v1531, 1.442695
        %v1588 = vpow.pop %v1587
        %v1589 = vmul.f32 %v1532, 1.442695
        %v1590 = vpow.pop %v1589
        %v1591 = vmul.f32 %v1533, 1.442695
        %v1592 = vpow.pop %v1591
        %v1593 = vmul.f32 %v1534, 1.442695
        %v1594 = vpow.pop %v1593
        %v1595 = vmul.f32 %v1535, 1.442695
        %v1596 = vpow.pop %v1595
        %v1597 = vmul.f32 %v1536, 1.442695
        %v1598 = vpow.pop %v1597
        %v1599 = vmul.f32 %v1537, 1.442695
        %v1600 = vpow.pop %v1599
        %v1601 = vmul.f32 %v1538, 1.442695
        %v1602 = vpow.pop %v1601
        %v1603 = vadd.f32 %v1540, 1.0
        %v1604 = vadd.f32 %v1542, 1.0
        %v1605 = vadd.f32 %v1544, 1.0
        %v1606 = vadd.f32 %v1546, 1.0
        %v1607 = vadd.f32 %v1548, 1.0
        %v1608 = vadd.f32 %v1550, 1.0
        %v1609 = vadd.f32 %v1552, 1.0
        %v1610 = vadd.f32 %v1554, 1.0
        %v1611 = vadd.f32 %v1556, 1.0
        %v1612 = vadd.f32 %v1558, 1.0
        %v1613 = vadd.f32 %v1560, 1.0
        %v1614 = vadd.f32 %v1562, 1.0
        %v1615 = vadd.f32 %v1564, 1.0
        %v1616 = vadd.f32 %v1566, 1.0
        %v1617 = vadd.f32 %v1568, 1.0
        %v1618 = vadd.f32 %v1570, 1.0
        %v1619 = vadd.f32 %v1572, 1.0
        %v1620 = vadd.f32 %v1574, 1.0
        %v1621 = vadd.f32 %v1576, 1.0
        %v1622 = vadd.f32 %v1578, 1.0
        %v1623 = vadd.f32 %v1580, 1.0
        %v1624 = vadd.f32 %v1582, 1.0
        %v1625 = vadd.f32 %v1584, 1.0
        %v1626 = vadd.f32 %v1586, 1.0
        %v1627 = vadd.f32 %v1588, 1.0
        %v1628 = vadd.f32 %v1590, 1.0
        %v1629 = vadd.f32 %v1592, 1.0
        %v1630 = vadd.f32 %v1594, 1.0
        %v1631 = vadd.f32 %v1596, 1.0
        %v1632 = vadd.f32 %v1598, 1.0
        %v1633 = vadd.f32 %v1600, 1.0
        %v1634 = vadd.f32 %v1602, 1.0
        %v1635 = vrcp.pop %v1603
        %v1636 = vmul.f32 %v1603, %v1635
        %v1637 = vsub.f32 1.0, %v1636
        %v1638 = vmul.f32 %v1635, %v1637
        %v1639 = vadd.f32 %v1635, %v1638
        %vm1640 = vweird.f32 %v1603
        %vm1641 = vweird.f32 %v1635
        %vm1642 = vmor %vm1640, %vm1641
        %v1643 = vsel %vm1642, %v1635, %v1639
        %v1644 = vand.u32 2147483647, %v1603
        %vm1645 = vcmp.eq.f32.partialorder %v1644, 8.507059e+37
        %v1646 = vand.u32 %v1603, 2147483648
        %v1647 = vor.u32 1.1754944e-38, %v1646
        %v1648 = vsel %vm1645, %v1647, %v1643
        %v1649 = vmul.f32 1.0, %v1648
        %v1650 = vrcp.pop %v1604
        %v1651 = vmul.f32 %v1604, %v1650
        %v1652 = vsub.f32 1.0, %v1651
        %v1653 = vmul.f32 %v1650, %v1652
        %v1654 = vadd.f32 %v1650, %v1653
        %vm1655 = vweird.f32 %v1604
        %vm1656 = vweird.f32 %v1650
        %vm1657 = vmor %vm1655, %vm1656
        %v1658 = vsel %vm1657, %v1650, %v1654
        %v1659 = vand.u32 2147483647, %v1604
        %vm1660 = vcmp.eq.f32.partialorder %v1659, 8.507059e+37
        %v1661 = vand.u32 %v1604, 2147483648
        %v1662 = vor.u32 1.1754944e-38, %v1661
        %v1663 = vsel %vm1660, %v1662, %v1658
        %v1664 = vmul.f32 1.0, %v1663
        %v1665 = vrcp.pop %v1605
        %v1666 = vmul.f32 %v1605, %v1665
        %v1667 = vsub.f32 1.0, %v1666
        %v1668 = vmul.f32 %v1665, %v1667
        %v1669 = vadd.f32 %v1665, %v1668
        %vm1670 = vweird.f32 %v1605
        %vm1671 = vweird.f32 %v1665
        %vm1672 = vmor %vm1670, %vm1671
        %v1673 = vsel %vm1672, %v1665, %v1669
        %v1674 = vand.u32 2147483647, %v1605
        %vm1675 = vcmp.eq.f32.partialorder %v1674, 8.507059e+37
        %v1676 = vand.u32 %v1605, 2147483648
        %v1677 = vor.u32 1.1754944e-38, %v1676
        %v1678 = vsel %vm1675, %v1677, %v1673
        %v1679 = vmul.f32 1.0, %v1678
        %v1680 = vrcp.pop %v1606
        %v1681 = vmul.f32 %v1606, %v1680
        %v1682 = vsub.f32 1.0, %v1681
        %v1683 = vmul.f32 %v1680, %v1682
        %v1684 = vadd.f32 %v1680, %v1683
        %vm1685 = vweird.f32 %v1606
        %vm1686 = vweird.f32 %v1680
        %vm1687 = vmor %vm1685, %vm1686
        %v1688 = vsel %vm1687, %v1680, %v1684
        %v1689 = vand.u32 2147483647, %v1606
        %vm1690 = vcmp.eq.f32.partialorder %v1689, 8.507059e+37
        %v1691 = vand.u32 %v1606, 2147483648
        %v1692 = vor.u32 1.1754944e-38, %v1691
        %v1693 = vsel %vm1690, %v1692, %v1688
        %v1694 = vmul.f32 1.0, %v1693
        %v1695 = vrcp.pop %v1607
        %v1696 = vmul.f32 %v1607, %v1695
        %v1697 = vsub.f32 1.0, %v1696
        %v1698 = vmul.f32 %v1695, %v1697
        %v1699 = vadd.f32 %v1695, %v1698
        %vm1700 = vweird.f32 %v1607
        %vm1701 = vweird.f32 %v1695
        %vm1702 = vmor %vm1700, %vm1701
        %v1703 = vsel %vm1702, %v1695, %v1699
        %v1704 = vand.u32 2147483647, %v1607
        %vm1705 = vcmp.eq.f32.partialorder %v1704, 8.507059e+37
        %v1706 = vand.u32 %v1607, 2147483648
        %v1707 = vor.u32 1.1754944e-38, %v1706
        %v1708 = vsel %vm1705, %v1707, %v1703
        %v1709 = vmul.f32 1.0, %v1708
        %v1710 = vrcp.pop %v1608
        %v1711 = vmul.f32 %v1608, %v1710
        %v1712 = vsub.f32 1.0, %v1711
        %v1713 = vmul.f32 %v1710, %v1712
        %v1714 = vadd.f32 %v1710, %v1713
        %vm1715 = vweird.f32 %v1608
        %vm1716 = vweird.f32 %v1710
        %vm1717 = vmor %vm1715, %vm1716
        %v1718 = vsel %vm1717, %v1710, %v1714
        %v1719 = vand.u32 2147483647, %v1608
        %vm1720 = vcmp.eq.f32.partialorder %v1719, 8.507059e+37
        %v1721 = vand.u32 %v1608, 2147483648
        %v1722 = vor.u32 1.1754944e-38, %v1721
        %v1723 = vsel %vm1720, %v1722, %v1718
        %v1724 = vmul.f32 1.0, %v1723
        %v1725 = vrcp.pop %v1609
        %v1726 = vmul.f32 %v1609, %v1725
        %v1727 = vsub.f32 1.0, %v1726
        %v1728 = vmul.f32 %v1725, %v1727
        %v1729 = vadd.f32 %v1725, %v1728
        %vm1730 = vweird.f32 %v1609
        %vm1731 = vweird.f32 %v1725
        %vm1732 = vmor %vm1730, %vm1731
        %v1733 = vsel %vm1732, %v1725, %v1729
        %v1734 = vand.u32 2147483647, %v1609
        %vm1735 = vcmp.eq.f32.partialorder %v1734, 8.507059e+37
        %v1736 = vand.u32 %v1609, 2147483648
        %v1737 = vor.u32 1.1754944e-38, %v1736
        %v1738 = vsel %vm1735, %v1737, %v1733
        %v1739 = vmul.f32 1.0, %v1738
        %v1740 = vrcp.pop %v1610
        %v1741 = vmul.f32 %v1610, %v1740
        %v1742 = vsub.f32 1.0, %v1741
        %v1743 = vmul.f32 %v1740, %v1742
        %v1744 = vadd.f32 %v1740, %v1743
        %vm1745 = vweird.f32 %v1610
        %vm1746 = vweird.f32 %v1740
        %vm1747 = vmor %vm1745, %vm1746
        %v1748 = vsel %vm1747, %v1740, %v1744
        %v1749 = vand.u32 2147483647, %v1610
        %vm1750 = vcmp.eq.f32.partialorder %v1749, 8.507059e+37
        %v1751 = vand.u32 %v1610, 2147483648
        %v1752 = vor.u32 1.1754944e-38, %v1751
        %v1753 = vsel %vm1750, %v1752, %v1748
        %v1754 = vmul.f32 1.0, %v1753
        %v1755 = vrcp.pop %v1611
        %v1756 = vmul.f32 %v1611, %v1755
        %v1757 = vsub.f32 1.0, %v1756
        %v1758 = vmul.f32 %v1755, %v1757
        %v1759 = vadd.f32 %v1755, %v1758
        %vm1760 = vweird.f32 %v1611
        %vm1761 = vweird.f32 %v1755
        %vm1762 = vmor %vm1760, %vm1761
        %v1763 = vsel %vm1762, %v1755, %v1759
        %v1764 = vand.u32 2147483647, %v1611
        %vm1765 = vcmp.eq.f32.partialorder %v1764, 8.507059e+37
        %v1766 = vand.u32 %v1611, 2147483648
        %v1767 = vor.u32 1.1754944e-38, %v1766
        %v1768 = vsel %vm1765, %v1767, %v1763
        %v1769 = vmul.f32 1.0, %v1768
        %v1770 = vrcp.pop %v1612
        %v1771 = vmul.f32 %v1612, %v1770
        %v1772 = vsub.f32 1.0, %v1771
        %v1773 = vmul.f32 %v1770, %v1772
        %v1774 = vadd.f32 %v1770, %v1773
        %vm1775 = vweird.f32 %v1612
        %vm1776 = vweird.f32 %v1770
        %vm1777 = vmor %vm1775, %vm1776
        %v1778 = vsel %vm1777, %v1770, %v1774
        %v1779 = vand.u32 2147483647, %v1612
        %vm1780 = vcmp.eq.f32.partialorder %v1779, 8.507059e+37
        %v1781 = vand.u32 %v1612, 2147483648
        %v1782 = vor.u32 1.1754944e-38, %v1781
        %v1783 = vsel %vm1780, %v1782, %v1778
        %v1784 = vmul.f32 1.0, %v1783
        %v1785 = vrcp.pop %v1613
        %v1786 = vmul.f32 %v1613, %v1785
        %v1787 = vsub.f32 1.0, %v1786
        %v1788 = vmul.f32 %v1785, %v1787
        %v1789 = vadd.f32 %v1785, %v1788
        %vm1790 = vweird.f32 %v1613
        %vm1791 = vweird.f32 %v1785
        %vm1792 = vmor %vm1790, %vm1791
        %v1793 = vsel %vm1792, %v1785, %v1789
        %v1794 = vand.u32 2147483647, %v1613
        %vm1795 = vcmp.eq.f32.partialorder %v1794, 8.507059e+37
        %v1796 = vand.u32 %v1613, 2147483648
        %v1797 = vor.u32 1.1754944e-38, %v1796
        %v1798 = vsel %vm1795, %v1797, %v1793
        %v1799 = vmul.f32 1.0, %v1798
        %v1800 = vrcp.pop %v1614
        %v1801 = vmul.f32 %v1614, %v1800
        %v1802 = vsub.f32 1.0, %v1801
        %v1803 = vmul.f32 %v1800, %v1802
        %v1804 = vadd.f32 %v1800, %v1803
        %vm1805 = vweird.f32 %v1614
        %vm1806 = vweird.f32 %v1800
        %vm1807 = vmor %vm1805, %vm1806
        %v1808 = vsel %vm1807, %v1800, %v1804
        %v1809 = vand.u32 2147483647, %v1614
        %vm1810 = vcmp.eq.f32.partialorder %v1809, 8.507059e+37
        %v1811 = vand.u32 %v1614, 2147483648
        %v1812 = vor.u32 1.1754944e-38, %v1811
        %v1813 = vsel %vm1810, %v1812, %v1808
        %v1814 = vmul.f32 1.0, %v1813
        %v1815 = vrcp.pop %v1615
        %v1816 = vmul.f32 %v1615, %v1815
        %v1817 = vsub.f32 1.0, %v1816
        %v1818 = vmul.f32 %v1815, %v1817
        %v1819 = vadd.f32 %v1815, %v1818
        %vm1820 = vweird.f32 %v1615
        %vm1821 = vweird.f32 %v1815
        %vm1822 = vmor %vm1820, %vm1821
        %v1823 = vsel %vm1822, %v1815, %v1819
        %v1824 = vand.u32 2147483647, %v1615
        %vm1825 = vcmp.eq.f32.partialorder %v1824, 8.507059e+37
        %v1826 = vand.u32 %v1615, 2147483648
        %v1827 = vor.u32 1.1754944e-38, %v1826
        %v1828 = vsel %vm1825, %v1827, %v1823
        %v1829 = vmul.f32 1.0, %v1828
        %v1830 = vrcp.pop %v1616
        %v1831 = vmul.f32 %v1616, %v1830
        %v1832 = vsub.f32 1.0, %v1831
        %v1833 = vmul.f32 %v1830, %v1832
        %v1834 = vadd.f32 %v1830, %v1833
        %vm1835 = vweird.f32 %v1616
        %vm1836 = vweird.f32 %v1830
        %vm1837 = vmor %vm1835, %vm1836
        %v1838 = vsel %vm1837, %v1830, %v1834
        %v1839 = vand.u32 2147483647, %v1616
        %vm1840 = vcmp.eq.f32.partialorder %v1839, 8.507059e+37
        %v1841 = vand.u32 %v1616, 2147483648
        %v1842 = vor.u32 1.1754944e-38, %v1841
        %v1843 = vsel %vm1840, %v1842, %v1838
        %v1844 = vmul.f32 1.0, %v1843
        %v1845 = vrcp.pop %v1617
        %v1846 = vmul.f32 %v1617, %v1845
        %v1847 = vsub.f32 1.0, %v1846
        %v1848 = vmul.f32 %v1845, %v1847
        %v1849 = vadd.f32 %v1845, %v1848
        %vm1850 = vweird.f32 %v1617
        %vm1851 = vweird.f32 %v1845
        %vm1852 = vmor %vm1850, %vm1851
        %v1853 = vsel %vm1852, %v1845, %v1849
        %v1854 = vand.u32 2147483647, %v1617
        %vm1855 = vcmp.eq.f32.partialorder %v1854, 8.507059e+37
        %v1856 = vand.u32 %v1617, 2147483648
        %v1857 = vor.u32 1.1754944e-38, %v1856
        %v1858 = vsel %vm1855, %v1857, %v1853
        %v1859 = vmul.f32 1.0, %v1858
        %v1860 = vrcp.pop %v1618
        %v1861 = vmul.f32 %v1618, %v1860
        %v1862 = vsub.f32 1.0, %v1861
        %v1863 = vmul.f32 %v1860, %v1862
        %v1864 = vadd.f32 %v1860, %v1863
        %vm1865 = vweird.f32 %v1618
        %vm1866 = vweird.f32 %v1860
        %vm1867 = vmor %vm1865, %vm1866
        %v1868 = vsel %vm1867, %v1860, %v1864
        %v1869 = vand.u32 2147483647, %v1618
        %vm1870 = vcmp.eq.f32.partialorder %v1869, 8.507059e+37
        %v1871 = vand.u32 %v1618, 2147483648
        %v1872 = vor.u32 1.1754944e-38, %v1871
        %v1873 = vsel %vm1870, %v1872, %v1868
        %v1874 = vmul.f32 1.0, %v1873
        %v1875 = vrcp.pop %v1619
        %v1876 = vmul.f32 %v1619, %v1875
        %v1877 = vsub.f32 1.0, %v1876
        %v1878 = vmul.f32 %v1875, %v1877
        %v1879 = vadd.f32 %v1875, %v1878
        %vm1880 = vweird.f32 %v1619
        %vm1881 = vweird.f32 %v1875
        %vm1882 = vmor %vm1880, %vm1881
        %v1883 = vsel %vm1882, %v1875, %v1879
        %v1884 = vand.u32 2147483647, %v1619
        %vm1885 = vcmp.eq.f32.partialorder %v1884, 8.507059e+37
        %v1886 = vand.u32 %v1619, 2147483648
        %v1887 = vor.u32 1.1754944e-38, %v1886
        %v1888 = vsel %vm1885, %v1887, %v1883
        %v1889 = vmul.f32 1.0, %v1888
        %v1890 = vrcp.pop %v1620
        %v1891 = vmul.f32 %v1620, %v1890
        %v1892 = vsub.f32 1.0, %v1891
        %v1893 = vmul.f32 %v1890, %v1892
        %v1894 = vadd.f32 %v1890, %v1893
        %vm1895 = vweird.f32 %v1620
        %vm1896 = vweird.f32 %v1890
        %vm1897 = vmor %vm1895, %vm1896
        %v1898 = vsel %vm1897, %v1890, %v1894
        %v1899 = vand.u32 2147483647, %v1620
        %vm1900 = vcmp.eq.f32.partialorder %v1899, 8.507059e+37
        %v1901 = vand.u32 %v1620, 2147483648
        %v1902 = vor.u32 1.1754944e-38, %v1901
        %v1903 = vsel %vm1900, %v1902, %v1898
        %v1904 = vmul.f32 1.0, %v1903
        %v1905 = vrcp.pop %v1621
        %v1906 = vmul.f32 %v1621, %v1905
        %v1907 = vsub.f32 1.0, %v1906
        %v1908 = vmul.f32 %v1905, %v1907
        %v1909 = vadd.f32 %v1905, %v1908
        %vm1910 = vweird.f32 %v1621
        %vm1911 = vweird.f32 %v1905
        %vm1912 = vmor %vm1910, %vm1911
        %v1913 = vsel %vm1912, %v1905, %v1909
        %v1914 = vand.u32 2147483647, %v1621
        %vm1915 = vcmp.eq.f32.partialorder %v1914, 8.507059e+37
        %v1916 = vand.u32 %v1621, 2147483648
        %v1917 = vor.u32 1.1754944e-38, %v1916
        %v1918 = vsel %vm1915, %v1917, %v1913
        %v1919 = vmul.f32 1.0, %v1918
        %v1920 = vrcp.pop %v1622
        %v1921 = vmul.f32 %v1622, %v1920
        %v1922 = vsub.f32 1.0, %v1921
        %v1923 = vmul.f32 %v1920, %v1922
        %v1924 = vadd.f32 %v1920, %v1923
        %vm1925 = vweird.f32 %v1622
        %vm1926 = vweird.f32 %v1920
        %vm1927 = vmor %vm1925, %vm1926
        %v1928 = vsel %vm1927, %v1920, %v1924
        %v1929 = vand.u32 2147483647, %v1622
        %vm1930 = vcmp.eq.f32.partialorder %v1929, 8.507059e+37
        %v1931 = vand.u32 %v1622, 2147483648
        %v1932 = vor.u32 1.1754944e-38, %v1931
        %v1933 = vsel %vm1930, %v1932, %v1928
        %v1934 = vmul.f32 1.0, %v1933
        %v1935 = vrcp.pop %v1623
        %v1936 = vmul.f32 %v1623, %v1935
        %v1937 = vsub.f32 1.0, %v1936
        %v1938 = vmul.f32 %v1935, %v1937
        %v1939 = vadd.f32 %v1935, %v1938
        %vm1940 = vweird.f32 %v1623
        %vm1941 = vweird.f32 %v1935
        %vm1942 = vmor %vm1940, %vm1941
        %v1943 = vsel %vm1942, %v1935, %v1939
        %v1944 = vand.u32 2147483647, %v1623
        %vm1945 = vcmp.eq.f32.partialorder %v1944, 8.507059e+37
        %v1946 = vand.u32 %v1623, 2147483648
        %v1947 = vor.u32 1.1754944e-38, %v1946
        %v1948 = vsel %vm1945, %v1947, %v1943
        %v1949 = vmul.f32 1.0, %v1948
        %v1950 = vrcp.pop %v1624
        %v1951 = vmul.f32 %v1624, %v1950
        %v1952 = vsub.f32 1.0, %v1951
        %v1953 = vmul.f32 %v1950, %v1952
        %v1954 = vadd.f32 %v1950, %v1953
        %vm1955 = vweird.f32 %v1624
        %vm1956 = vweird.f32 %v1950
        %vm1957 = vmor %vm1955, %vm1956
        %v1958 = vsel %vm1957, %v1950, %v1954
        %v1959 = vand.u32 2147483647, %v1624
        %vm1960 = vcmp.eq.f32.partialorder %v1959, 8.507059e+37
        %v1961 = vand.u32 %v1624, 2147483648
        %v1962 = vor.u32 1.1754944e-38, %v1961
        %v1963 = vsel %vm1960, %v1962, %v1958
        %v1964 = vmul.f32 1.0, %v1963
        %v1965 = vrcp.pop %v1625
        %v1966 = vmul.f32 %v1625, %v1965
        %v1967 = vsub.f32 1.0, %v1966
        %v1968 = vmul.f32 %v1965, %v1967
        %v1969 = vadd.f32 %v1965, %v1968
        %vm1970 = vweird.f32 %v1625
        %vm1971 = vweird.f32 %v1965
        %vm1972 = vmor %vm1970, %vm1971
        %v1973 = vsel %vm1972, %v1965, %v1969
        %v1974 = vand.u32 2147483647, %v1625
        %vm1975 = vcmp.eq.f32.partialorder %v1974, 8.507059e+37
        %v1976 = vand.u32 %v1625, 2147483648
        %v1977 = vor.u32 1.1754944e-38, %v1976
        %v1978 = vsel %vm1975, %v1977, %v1973
        %v1979 = vmul.f32 1.0, %v1978
        %v1980 = vrcp.pop %v1626
        %v1981 = vmul.f32 %v1626, %v1980
        %v1982 = vsub.f32 1.0, %v1981
        %v1983 = vmul.f32 %v1980, %v1982
        %v1984 = vadd.f32 %v1980, %v1983
        %vm1985 = vweird.f32 %v1626
        %vm1986 = vweird.f32 %v1980
        %vm1987 = vmor %vm1985, %vm1986
        %v1988 = vsel %vm1987, %v1980, %v1984
        %v1989 = vand.u32 2147483647, %v1626
        %vm1990 = vcmp.eq.f32.partialorder %v1989, 8.507059e+37
        %v1991 = vand.u32 %v1626, 2147483648
        %v1992 = vor.u32 1.1754944e-38, %v1991
        %v1993 = vsel %vm1990, %v1992, %v1988
        %v1994 = vmul.f32 1.0, %v1993
        %v1995 = vrcp.pop %v1627
        %v1996 = vmul.f32 %v1627, %v1995
        %v1997 = vsub.f32 1.0, %v1996
        %v1998 = vmul.f32 %v1995, %v1997
        %v1999 = vadd.f32 %v1995, %v1998
        %vm2000 = vweird.f32 %v1627
        %vm2001 = vweird.f32 %v1995
        %vm2002 = vmor %vm2000, %vm2001
        %v2003 = vsel %vm2002, %v1995, %v1999
        %v2004 = vand.u32 2147483647, %v1627
        %vm2005 = vcmp.eq.f32.partialorder %v2004, 8.507059e+37
        %v2006 = vand.u32 %v1627, 2147483648
        %v2007 = vor.u32 1.1754944e-38, %v2006
        %v2008 = vsel %vm2005, %v2007, %v2003
        %v2009 = vmul.f32 1.0, %v2008
        %v2010 = vrcp.pop %v1628
        %v2011 = vmul.f32 %v1628, %v2010
        %v2012 = vsub.f32 1.0, %v2011
        %v2013 = vmul.f32 %v2010, %v2012
        %v2014 = vadd.f32 %v2010, %v2013
        %vm2015 = vweird.f32 %v1628
        %vm2016 = vweird.f32 %v2010
        %vm2017 = vmor %vm2015, %vm2016
        %v2018 = vsel %vm2017, %v2010, %v2014
        %v2019 = vand.u32 2147483647, %v1628
        %vm2020 = vcmp.eq.f32.partialorder %v2019, 8.507059e+37
        %v2021 = vand.u32 %v1628, 2147483648
        %v2022 = vor.u32 1.1754944e-38, %v2021
        %v2023 = vsel %vm2020, %v2022, %v2018
        %v2024 = vmul.f32 1.0, %v2023
        %v2025 = vrcp.pop %v1629
        %v2026 = vmul.f32 %v1629, %v2025
        %v2027 = vsub.f32 1.0, %v2026
        %v2028 = vmul.f32 %v2025, %v2027
        %v2029 = vadd.f32 %v2025, %v2028
        %vm2030 = vweird.f32 %v1629
        %vm2031 = vweird.f32 %v2025
        %vm2032 = vmor %vm2030, %vm2031
        %v2033 = vsel %vm2032, %v2025, %v2029
        %v2034 = vand.u32 2147483647, %v1629
        %vm2035 = vcmp.eq.f32.partialorder %v2034, 8.507059e+37
        %v2036 = vand.u32 %v1629, 2147483648
        %v2037 = vor.u32 1.1754944e-38, %v2036
        %v2038 = vsel %vm2035, %v2037, %v2033
        %v2039 = vmul.f32 1.0, %v2038
        %v2040 = vrcp.pop %v1630
        %v2041 = vmul.f32 %v1630, %v2040
        %v2042 = vsub.f32 1.0, %v2041
        %v2043 = vmul.f32 %v2040, %v2042
        %v2044 = vadd.f32 %v2040, %v2043
        %vm2045 = vweird.f32 %v1630
        %vm2046 = vweird.f32 %v2040
        %vm2047 = vmor %vm2045, %vm2046
        %v2048 = vsel %vm2047, %v2040, %v2044
        %v2049 = vand.u32 2147483647, %v1630
        %vm2050 = vcmp.eq.f32.partialorder %v2049, 8.507059e+37
        %v2051 = vand.u32 %v1630, 2147483648
        %v2052 = vor.u32 1.1754944e-38, %v2051
        %v2053 = vsel %vm2050, %v2052, %v2048
        %v2054 = vmul.f32 1.0, %v2053
        %v2055 = vrcp.pop %v1631
        %v2056 = vmul.f32 %v1631, %v2055
        %v2057 = vsub.f32 1.0, %v2056
        %v2058 = vmul.f32 %v2055, %v2057
        %v2059 = vadd.f32 %v2055, %v2058
        %vm2060 = vweird.f32 %v1631
        %vm2061 = vweird.f32 %v2055
        %vm2062 = vmor %vm2060, %vm2061
        %v2063 = vsel %vm2062, %v2055, %v2059
        %v2064 = vand.u32 2147483647, %v1631
        %vm2065 = vcmp.eq.f32.partialorder %v2064, 8.507059e+37
        %v2066 = vand.u32 %v1631, 2147483648
        %v2067 = vor.u32 1.1754944e-38, %v2066
        %v2068 = vsel %vm2065, %v2067, %v2063
        %v2069 = vmul.f32 1.0, %v2068
        %v2070 = vrcp.pop %v1632
        %v2071 = vmul.f32 %v1632, %v2070
        %v2072 = vsub.f32 1.0, %v2071
        %v2073 = vmul.f32 %v2070, %v2072
        %v2074 = vadd.f32 %v2070, %v2073
        %vm2075 = vweird.f32 %v1632
        %vm2076 = vweird.f32 %v2070
        %vm2077 = vmor %vm2075, %vm2076
        %v2078 = vsel %vm2077, %v2070, %v2074
        %v2079 = vand.u32 2147483647, %v1632
        %vm2080 = vcmp.eq.f32.partialorder %v2079, 8.507059e+37
        %v2081 = vand.u32 %v1632, 2147483648
        %v2082 = vor.u32 1.1754944e-38, %v2081
        %v2083 = vsel %vm2080, %v2082, %v2078
        %v2084 = vmul.f32 1.0, %v2083
        %v2085 = vrcp.pop %v1633
        %v2086 = vmul.f32 %v1633, %v2085
        %v2087 = vsub.f32 1.0, %v2086
        %v2088 = vmul.f32 %v2085, %v2087
        %v2089 = vadd.f32 %v2085, %v2088
        %vm2090 = vweird.f32 %v1633
        %vm2091 = vweird.f32 %v2085
        %vm2092 = vmor %vm2090, %vm2091
        %v2093 = vsel %vm2092, %v2085, %v2089
        %v2094 = vand.u32 2147483647, %v1633
        %vm2095 = vcmp.eq.f32.partialorder %v2094, 8.507059e+37
        %v2096 = vand.u32 %v1633, 2147483648
        %v2097 = vor.u32 1.1754944e-38, %v2096
        %v2098 = vsel %vm2095, %v2097, %v2093
        %v2099 = vmul.f32 1.0, %v2098
        %v2100 = vrcp.pop %v1634
        %v2101 = vmul.f32 %v1634, %v2100
        %v2102 = vsub.f32 1.0, %v2101
        %v2103 = vmul.f32 %v2100, %v2102
        %v2104 = vadd.f32 %v2100, %v2103
        %vm2105 = vweird.f32 %v1634
        %vm2106 = vweird.f32 %v2100
        %vm2107 = vmor %vm2105, %vm2106
        %v2108 = vsel %vm2107, %v2100, %v2104
        %v2109 = vand.u32 2147483647, %v1634
        %vm2110 = vcmp.eq.f32.partialorder %v2109, 8.507059e+37
        %v2111 = vand.u32 %v1634, 2147483648
        %v2112 = vor.u32 1.1754944e-38, %v2111
        %v2113 = vsel %vm2110, %v2112, %v2108
        %v2114 = vmul.f32 1.0, %v2113
        %v2115 = vmul.f32 %v1475, %v1649
        %v2116 = vmul.f32 %v1476, %v1664
        %v2117 = vmul.f32 %v1477, %v1679
        %v2118 = vmul.f32 %v1478, %v1694
        %v2119 = vmul.f32 %v1479, %v1709
        %v2120 = vmul.f32 %v1480, %v1724
        %v2121 = vmul.f32 %v1481, %v1739
        %v2122 = vmul.f32 %v1482, %v1754
        %v2123 = vmul.f32 %v1483, %v1769
        %v2124 = vmul.f32 %v1484, %v1784
        %v2125 = vmul.f32 %v1485, %v1799
        %v2126 = vmul.f32 %v1486, %v1814
        %v2127 = vmul.f32 %v1487, %v1829
        %v2128 = vmul.f32 %v1488, %v1844
        %v2129 = vmul.f32 %v1489, %v1859
        %v2130 = vmul.f32 %v1490, %v1874
        %v2131 = vmul.f32 %v1491, %v1889
        %v2132 = vmul.f32 %v1492, %v1904
        %v2133 = vmul.f32 %v1493, %v1919
        %v2134 = vmul.f32 %v1494, %v1934
        %v2135 = vmul.f32 %v1495, %v1949
        %v2136 = vmul.f32 %v1496, %v1964
        %v2137 = vmul.f32 %v1497, %v1979
        %v2138 = vmul.f32 %v1498, %v1994
        %v2139 = vmul.f32 %v1499, %v2009
        %v2140 = vmul.f32 %v1500, %v2024
        %v2141 = vmul.f32 %v1501, %v2039
        %v2142 = vmul.f32 %v1502, %v2054
        %v2143 = vmul.f32 %v1503, %v2069
        %v2144 = vmul.f32 %v1504, %v2084
        %v2145 = vmul.f32 %v1505, %v2099
        %v2146 = vmul.f32 %v1506, %v2114
        %v2147 = vld [vmem:[#allocation11] sm:$0x1]
        %2148 = vmatpush.msra.mxu0 %v2130
        %2149 = vmatpush.msra.mxu0 %v2129
        %2150 = vmatpush.msra.mxu0 %v2128
        %2151 = vmatpush.msra.mxu0 %v2127
        %2152 = vmatpush.msra.mxu0 %v2126
        %2153 = vmatpush.msra.mxu0 %v2125
        %2154 = vmatpush.msra.mxu0 %v2124
        %2155 = vmatpush.msra.mxu0 %v2123
        %2156 = vmatpush.msra.mxu0 %v2122
        %2157 = vmatpush.msra.mxu0 %v2121
        %2158 = vmatpush.msra.mxu0 %v2120
        %2159 = vmatpush.msra.mxu0 %v2119
        %2160 = vmatpush.msra.mxu0 %v2118
        %2161 = vmatpush.msra.mxu0 %v2117
        %2162 = vmatpush.msra.mxu0 %v2116
        %2163 = vmatpush.msra.mxu0 %v2115
        %2164 = vmatmul.f32.gmra.mxu0 %v1006
        %v2165 = vpop.f32.mrf.mxu0
        %v2166 = vadd.f32 0.0, %v2165
        %2167 = vmatmul.f32.gmra.mxu0 %v1008
        %v2168 = vpop.f32.mrf.mxu0
        %v2169 = vadd.f32 0.0, %v2168
        %2170 = vmatmul.f32.gmra.mxu0 %v1010
        %v2171 = vpop.f32.mrf.mxu0
        %v2172 = vadd.f32 0.0, %v2171
        %2173 = vmatmul.f32.gmra.mxu0 %v1012
        %v2174 = vpop.f32.mrf.mxu0
        %v2175 = vadd.f32 0.0, %v2174
        %2176 = vmatmul.f32.gmra.mxu0 %v1014
        %v2177 = vpop.f32.mrf.mxu0
        %v2178 = vadd.f32 0.0, %v2177
        %2179 = vmatmul.f32.gmra.mxu0 %v1016
        %v2180 = vpop.f32.mrf.mxu0
        %v2181 = vadd.f32 0.0, %v2180
        %2182 = vmatmul.f32.gmra.mxu0 %v1018
        %v2183 = vpop.f32.mrf.mxu0
        %v2184 = vadd.f32 0.0, %v2183
        %2185 = vmatmul.f32.gmra.mxu0 %v1020
        %v2186 = vpop.f32.mrf.mxu0
        %v2187 = vadd.f32 0.0, %v2186
        %2188 = vmatmul.f32.gmra.mxu0 %v1022
        %v2189 = vpop.f32.mrf.mxu0
        %v2190 = vadd.f32 0.0, %v2189
        %2191 = vmatmul.f32.gmra.mxu0 %v1024
        %v2192 = vpop.f32.mrf.mxu0
        %v2193 = vadd.f32 0.0, %v2192
        %2194 = vmatmul.f32.gmra.mxu0 %v1026
        %v2195 = vpop.f32.mrf.mxu0
        %v2196 = vadd.f32 0.0, %v2195
        %2197 = vmatmul.f32.gmra.mxu0 %v1028
        %v2198 = vpop.f32.mrf.mxu0
        %v2199 = vadd.f32 0.0, %v2198
        %2200 = vmatmul.f32.gmra.mxu0 %v1030
        %v2201 = vpop.f32.mrf.mxu0
        %v2202 = vadd.f32 0.0, %v2201
        %2203 = vmatmul.f32.gmra.mxu0 %v1032
        %v2204 = vpop.f32.mrf.mxu0
        %v2205 = vadd.f32 0.0, %v2204
        %2206 = vmatmul.f32.gmra.mxu0 %v1034
        %v2207 = vpop.f32.mrf.mxu0
        %v2208 = vadd.f32 0.0, %v2207
        %2209 = vmatmul.f32.gmra.mxu0 %v1036
        %v2210 = vpop.f32.mrf.mxu0
        %v2211 = vadd.f32 0.0, %v2210
        %2212 = vmatmul.f32.gmra.mxu0 %v1038
        %v2213 = vpop.f32.mrf.mxu0
        %v2214 = vadd.f32 0.0, %v2213
        %2215 = vmatmul.f32.gmra.mxu0 %v1040
        %v2216 = vpop.f32.mrf.mxu0
        %v2217 = vadd.f32 0.0, %v2216
        %2218 = vmatmul.f32.gmra.mxu0 %v1042
        %v2219 = vpop.f32.mrf.mxu0
        %v2220 = vadd.f32 0.0, %v2219
        %2221 = vmatmul.f32.gmra.mxu0 %v1044
        %v2222 = vpop.f32.mrf.mxu0
        %v2223 = vadd.f32 0.0, %v2222
        %2224 = vmatmul.f32.gmra.mxu0 %v1046
        %v2225 = vpop.f32.mrf.mxu0
        %v2226 = vadd.f32 0.0, %v2225
        %2227 = vmatmul.f32.gmra.mxu0 %v1048
        %v2228 = vpop.f32.mrf.mxu0
        %v2229 = vadd.f32 0.0, %v2228
        %2230 = vmatmul.f32.gmra.mxu0 %v1050
        %v2231 = vpop.f32.mrf.mxu0
        %v2232 = vadd.f32 0.0, %v2231
        %2233 = vmatmul.f32.gmra.mxu0 %v1052
        %v2234 = vpop.f32.mrf.mxu0
        %v2235 = vadd.f32 0.0, %v2234
        %2236 = vmatmul.f32.gmra.mxu0 %v1054
        %v2237 = vpop.f32.mrf.mxu0
        %v2238 = vadd.f32 0.0, %v2237
        %2239 = vmatmul.f32.gmra.mxu0 %v1056
        %v2240 = vpop.f32.mrf.mxu0
        %v2241 = vadd.f32 0.0, %v2240
        %2242 = vmatmul.f32.gmra.mxu0 %v1058
        %v2243 = vpop.f32.mrf.mxu0
        %v2244 = vadd.f32 0.0, %v2243
        %2245 = vmatmul.f32.gmra.mxu0 %v1060
        %v2246 = vpop.f32.mrf.mxu0
        %v2247 = vadd.f32 0.0, %v2246
        %2248 = vmatmul.f32.gmra.mxu0 %v1062
        %v2249 = vpop.f32.mrf.mxu0
        %v2250 = vadd.f32 0.0, %v2249
        %2251 = vmatmul.f32.gmra.mxu0 %v1064
        %v2252 = vpop.f32.mrf.mxu0
        %v2253 = vadd.f32 0.0, %v2252
        %2254 = vmatmul.f32.gmra.mxu0 %v1066
        %v2255 = vpop.f32.mrf.mxu0
        %v2256 = vadd.f32 0.0, %v2255
        %2257 = vmatmul.f32.gmra.mxu0 %v1068
        %v2258 = vpop.f32.mrf.mxu0
        %v2259 = vadd.f32 0.0, %v2258
        %2260 = vmatmul.f32.gmra.mxu0 %v1070
        %v2261 = vpop.f32.mrf.mxu0
        %v2262 = vadd.f32 0.0, %v2261
        %2263 = vmatmul.f32.gmra.mxu0 %v1072
        %v2264 = vpop.f32.mrf.mxu0
        %v2265 = vadd.f32 0.0, %v2264
        %2266 = vmatmul.f32.gmra.mxu0 %v1074
        %v2267 = vpop.f32.mrf.mxu0
        %v2268 = vadd.f32 0.0, %v2267
        %2269 = vmatmul.f32.gmra.mxu0 %v1076
        %v2270 = vpop.f32.mrf.mxu0
        %v2271 = vadd.f32 0.0, %v2270
        %2272 = vdwg.mxu0
        %2273 = vmatpush.msra.mxu0 %v2146
        %2274 = vmatpush.msra.mxu0 %v2145
        %2275 = vmatpush.msra.mxu0 %v2144
        %2276 = vmatpush.msra.mxu0 %v2143
        %2277 = vmatpush.msra.mxu0 %v2142
        %2278 = vmatpush.msra.mxu0 %v2141
        %2279 = vmatpush.msra.mxu0 %v2140
        %2280 = vmatpush.msra.mxu0 %v2139
        %2281 = vmatpush.msra.mxu0 %v2138
        %2282 = vmatpush.msra.mxu0 %v2137
        %2283 = vmatpush.msra.mxu0 %v2136
        %2284 = vmatpush.msra.mxu0 %v2135
        %2285 = vmatpush.msra.mxu0 %v2134
        %2286 = vmatpush.msra.mxu0 %v2133
        %2287 = vmatpush.msra.mxu0 %v2132
        %2288 = vmatpush.msra.mxu0 %v2131
        %2289 = vmatmul.f32.gmra.mxu0 %v1007
        %v2290 = vpop.f32.mrf.mxu0
        %v2291 = vadd.f32 %v2166, %v2290
        %2292 = vmatmul.f32.gmra.mxu0 %v1009
        %v2293 = vpop.f32.mrf.mxu0
        %v2294 = vadd.f32 %v2169, %v2293
        %2295 = vmatmul.f32.gmra.mxu0 %v1011
        %v2296 = vpop.f32.mrf.mxu0
        %v2297 = vadd.f32 %v2172, %v2296
        %2298 = vmatmul.f32.gmra.mxu0 %v1013
        %v2299 = vpop.f32.mrf.mxu0
        %v2300 = vadd.f32 %v2175, %v2299
        %2301 = vmatmul.f32.gmra.mxu0 %v1015
        %v2302 = vpop.f32.mrf.mxu0
        %v2303 = vadd.f32 %v2178, %v2302
        %2304 = vmatmul.f32.gmra.mxu0 %v1017
        %v2305 = vpop.f32.mrf.mxu0
        %v2306 = vadd.f32 %v2181, %v2305
        %2307 = vmatmul.f32.gmra.mxu0 %v1019
        %v2308 = vpop.f32.mrf.mxu0
        %v2309 = vadd.f32 %v2184, %v2308
        %2310 = vmatmul.f32.gmra.mxu0 %v1021
        %v2311 = vpop.f32.mrf.mxu0
        %v2312 = vadd.f32 %v2187, %v2311
        %2313 = vmatmul.f32.gmra.mxu0 %v1023
        %v2314 = vpop.f32.mrf.mxu0
        %v2315 = vadd.f32 %v2190, %v2314
        %2316 = vmatmul.f32.gmra.mxu0 %v1025
        %v2317 = vpop.f32.mrf.mxu0
        %v2318 = vadd.f32 %v2193, %v2317
        %2319 = vmatmul.f32.gmra.mxu0 %v1027
        %v2320 = vpop.f32.mrf.mxu0
        %v2321 = vadd.f32 %v2196, %v2320
        %2322 = vmatmul.f32.gmra.mxu0 %v1029
        %v2323 = vpop.f32.mrf.mxu0
        %v2324 = vadd.f32 %v2199, %v2323
        %2325 = vmatmul.f32.gmra.mxu0 %v1031
        %v2326 = vpop.f32.mrf.mxu0
        %v2327 = vadd.f32 %v2202, %v2326
        %2328 = vmatmul.f32.gmra.mxu0 %v1033
        %v2329 = vpop.f32.mrf.mxu0
        %v2330 = vadd.f32 %v2205, %v2329
        %2331 = vmatmul.f32.gmra.mxu0 %v1035
        %v2332 = vpop.f32.mrf.mxu0
        %v2333 = vadd.f32 %v2208, %v2332
        %2334 = vmatmul.f32.gmra.mxu0 %v1037
        %v2335 = vpop.f32.mrf.mxu0
        %v2336 = vadd.f32 %v2211, %v2335
        %2337 = vmatmul.f32.gmra.mxu0 %v1039
        %v2338 = vpop.f32.mrf.mxu0
        %v2339 = vadd.f32 %v2214, %v2338
        %2340 = vmatmul.f32.gmra.mxu0 %v1041
        %v2341 = vpop.f32.mrf.mxu0
        %v2342 = vadd.f32 %v2217, %v2341
        %2343 = vmatmul.f32.gmra.mxu0 %v1043
        %v2344 = vpop.f32.mrf.mxu0
        %v2345 = vadd.f32 %v2220, %v2344
        %2346 = vmatmul.f32.gmra.mxu0 %v1045
        %v2347 = vpop.f32.mrf.mxu0
        %v2348 = vadd.f32 %v2223, %v2347
        %2349 = vmatmul.f32.gmra.mxu0 %v1047
        %v2350 = vpop.f32.mrf.mxu0
        %v2351 = vadd.f32 %v2226, %v2350
        %2352 = vmatmul.f32.gmra.mxu0 %v1049
        %v2353 = vpop.f32.mrf.mxu0
        %v2354 = vadd.f32 %v2229, %v2353
        %2355 = vmatmul.f32.gmra.mxu0 %v1051
        %v2356 = vpop.f32.mrf.mxu0
        %v2357 = vadd.f32 %v2232, %v2356
        %2358 = vmatmul.f32.gmra.mxu0 %v1053
        %v2359 = vpop.f32.mrf.mxu0
        %v2360 = vadd.f32 %v2235, %v2359
        %2361 = vmatmul.f32.gmra.mxu0 %v1055
        %v2362 = vpop.f32.mrf.mxu0
        %v2363 = vadd.f32 %v2238, %v2362
        %2364 = vmatmul.f32.gmra.mxu0 %v1057
        %v2365 = vpop.f32.mrf.mxu0
        %v2366 = vadd.f32 %v2241, %v2365
        %2367 = vmatmul.f32.gmra.mxu0 %v1059
        %v2368 = vpop.f32.mrf.mxu0
        %v2369 = vadd.f32 %v2244, %v2368
        %2370 = vmatmul.f32.gmra.mxu0 %v1061
        %v2371 = vpop.f32.mrf.mxu0
        %v2372 = vadd.f32 %v2247, %v2371
        %2373 = vmatmul.f32.gmra.mxu0 %v1063
        %v2374 = vpop.f32.mrf.mxu0
        %v2375 = vadd.f32 %v2250, %v2374
        %2376 = vmatmul.f32.gmra.mxu0 %v1065
        %v2377 = vpop.f32.mrf.mxu0
        %v2378 = vadd.f32 %v2253, %v2377
        %2379 = vmatmul.f32.gmra.mxu0 %v1067
        %v2380 = vpop.f32.mrf.mxu0
        %v2381 = vadd.f32 %v2256, %v2380
        %2382 = vmatmul.f32.gmra.mxu0 %v1069
        %v2383 = vpop.f32.mrf.mxu0
        %v2384 = vadd.f32 %v2259, %v2383
        %2385 = vmatmul.f32.gmra.mxu0 %v1071
        %v2386 = vpop.f32.mrf.mxu0
        %v2387 = vadd.f32 %v2262, %v2386
        %2388 = vmatmul.f32.gmra.mxu0 %v1073
        %v2389 = vpop.f32.mrf.mxu0
        %v2390 = vadd.f32 %v2265, %v2389
        %2391 = vmatmul.f32.gmra.mxu0 %v1075
        %v2392 = vpop.f32.mrf.mxu0
        %v2393 = vadd.f32 %v2268, %v2392
        %2394 = vmatmul.f32.gmra.mxu0 %v1077
        %v2395 = vpop.f32.mrf.mxu0
        %v2396 = vadd.f32 %v2271, %v2395
        %2397 = vdwg.mxu0
        %2398 = vmatpush.msra.mxu0 %v2130
        %2399 = vmatpush.msra.mxu0 %v2129
        %2400 = vmatpush.msra.mxu0 %v2128
        %2401 = vmatpush.msra.mxu0 %v2127
        %2402 = vmatpush.msra.mxu0 %v2126
        %2403 = vmatpush.msra.mxu0 %v2125
        %2404 = vmatpush.msra.mxu0 %v2124
        %2405 = vmatpush.msra.mxu0 %v2123
        %2406 = vmatpush.msra.mxu0 %v2122
        %2407 = vmatpush.msra.mxu0 %v2121
        %2408 = vmatpush.msra.mxu0 %v2120
        %2409 = vmatpush.msra.mxu0 %v2119
        %2410 = vmatpush.msra.mxu0 %v2118
        %2411 = vmatpush.msra.mxu0 %v2117
        %2412 = vmatpush.msra.mxu0 %v2116
        %2413 = vmatpush.msra.mxu0 %v2115
        %2414 = vmatmul.f32.gmra.mxu0 %v1078
        %v2415 = vpop.f32.mrf.mxu0
        %v2416 = vadd.f32 0.0, %v2415
        %2417 = vmatmul.f32.gmra.mxu0 %v1080
        %v2418 = vpop.f32.mrf.mxu0
        %v2419 = vadd.f32 0.0, %v2418
        %2420 = vmatmul.f32.gmra.mxu0 %v1082
        %v2421 = vpop.f32.mrf.mxu0
        %v2422 = vadd.f32 0.0, %v2421
        %2423 = vmatmul.f32.gmra.mxu0 %v1084
        %v2424 = vpop.f32.mrf.mxu0
        %v2425 = vadd.f32 0.0, %v2424
        %2426 = vmatmul.f32.gmra.mxu0 %v1086
        %v2427 = vpop.f32.mrf.mxu0
        %v2428 = vadd.f32 0.0, %v2427
        %2429 = vmatmul.f32.gmra.mxu0 %v1088
        %v2430 = vpop.f32.mrf.mxu0
        %v2431 = vadd.f32 0.0, %v2430
        %2432 = vmatmul.f32.gmra.mxu0 %v1090
        %v2433 = vpop.f32.mrf.mxu0
        %v2434 = vadd.f32 0.0, %v2433
        %2435 = vmatmul.f32.gmra.mxu0 %v1092
        %v2436 = vpop.f32.mrf.mxu0
        %v2437 = vadd.f32 0.0, %v2436
        %2438 = vmatmul.f32.gmra.mxu0 %v1094
        %v2439 = vpop.f32.mrf.mxu0
        %v2440 = vadd.f32 0.0, %v2439
        %2441 = vmatmul.f32.gmra.mxu0 %v1096
        %v2442 = vpop.f32.mrf.mxu0
        %v2443 = vadd.f32 0.0, %v2442
        %2444 = vmatmul.f32.gmra.mxu0 %v1098
        %v2445 = vpop.f32.mrf.mxu0
        %v2446 = vadd.f32 0.0, %v2445
        %2447 = vmatmul.f32.gmra.mxu0 %v1100
        %v2448 = vpop.f32.mrf.mxu0
        %v2449 = vadd.f32 0.0, %v2448
        %2450 = vmatmul.f32.gmra.mxu0 %v1102
        %v2451 = vpop.f32.mrf.mxu0
        %v2452 = vadd.f32 0.0, %v2451
        %2453 = vmatmul.f32.gmra.mxu0 %v1104
        %v2454 = vpop.f32.mrf.mxu0
        %v2455 = vadd.f32 0.0, %v2454
        %2456 = vmatmul.f32.gmra.mxu0 %v1106
        %v2457 = vpop.f32.mrf.mxu0
        %v2458 = vadd.f32 0.0, %v2457
        %2459 = vmatmul.f32.gmra.mxu0 %v1108
        %v2460 = vpop.f32.mrf.mxu0
        %v2461 = vadd.f32 0.0, %v2460
        %2462 = vmatmul.f32.gmra.mxu0 %v1110
        %v2463 = vpop.f32.mrf.mxu0
        %v2464 = vadd.f32 0.0, %v2463
        %2465 = vmatmul.f32.gmra.mxu0 %v1112
        %v2466 = vpop.f32.mrf.mxu0
        %v2467 = vadd.f32 0.0, %v2466
        %2468 = vmatmul.f32.gmra.mxu0 %v1114
        %v2469 = vpop.f32.mrf.mxu0
        %v2470 = vadd.f32 0.0, %v2469
        %2471 = vmatmul.f32.gmra.mxu0 %v1116
        %v2472 = vpop.f32.mrf.mxu0
        %v2473 = vadd.f32 0.0, %v2472
        %2474 = vmatmul.f32.gmra.mxu0 %v1118
        %v2475 = vpop.f32.mrf.mxu0
        %v2476 = vadd.f32 0.0, %v2475
        %2477 = vmatmul.f32.gmra.mxu0 %v1120
        %v2478 = vpop.f32.mrf.mxu0
        %v2479 = vadd.f32 0.0, %v2478
        %2480 = vmatmul.f32.gmra.mxu0 %v1122
        %v2481 = vpop.f32.mrf.mxu0
        %v2482 = vadd.f32 0.0, %v2481
        %2483 = vmatmul.f32.gmra.mxu0 %v1124
        %v2484 = vpop.f32.mrf.mxu0
        %v2485 = vadd.f32 0.0, %v2484
        %2486 = vmatmul.f32.gmra.mxu0 %v1126
        %v2487 = vpop.f32.mrf.mxu0
        %v2488 = vadd.f32 0.0, %v2487
        %2489 = vmatmul.f32.gmra.mxu0 %v1128
        %v2490 = vpop.f32.mrf.mxu0
        %v2491 = vadd.f32 0.0, %v2490
        %2492 = vmatmul.f32.gmra.mxu0 %v1130
        %v2493 = vpop.f32.mrf.mxu0
        %v2494 = vadd.f32 0.0, %v2493
        %2495 = vmatmul.f32.gmra.mxu0 %v1132
        %v2496 = vpop.f32.mrf.mxu0
        %v2497 = vadd.f32 0.0, %v2496
        %2498 = vmatmul.f32.gmra.mxu0 %v1134
        %v2499 = vpop.f32.mrf.mxu0
        %v2500 = vadd.f32 0.0, %v2499
        %2501 = vmatmul.f32.gmra.mxu0 %v1136
        %v2502 = vpop.f32.mrf.mxu0
        %v2503 = vadd.f32 0.0, %v2502
        %2504 = vmatmul.f32.gmra.mxu0 %v1138
        %v2505 = vpop.f32.mrf.mxu0
        %v2506 = vadd.f32 0.0, %v2505
        %2507 = vmatmul.f32.gmra.mxu0 %v1140
        %v2508 = vpop.f32.mrf.mxu0
        %v2509 = vadd.f32 0.0, %v2508
        %2510 = vmatmul.f32.gmra.mxu0 %v1142
        %v2511 = vpop.f32.mrf.mxu0
        %v2512 = vadd.f32 0.0, %v2511
        %2513 = vmatmul.f32.gmra.mxu0 %v1144
        %v2514 = vpop.f32.mrf.mxu0
        %v2515 = vadd.f32 0.0, %v2514
        %2516 = vmatmul.f32.gmra.mxu0 %v1146
        %v2517 = vpop.f32.mrf.mxu0
        %v2518 = vadd.f32 0.0, %v2517
        %2519 = vmatmul.f32.gmra.mxu0 %v1148
        %v2520 = vpop.f32.mrf.mxu0
        %v2521 = vadd.f32 0.0, %v2520
        %2522 = vdwg.mxu0
        %2523 = vmatpush.msra.mxu0 %v2146
        %2524 = vmatpush.msra.mxu0 %v2145
        %2525 = vmatpush.msra.mxu0 %v2144
        %2526 = vmatpush.msra.mxu0 %v2143
        %2527 = vmatpush.msra.mxu0 %v2142
        %2528 = vmatpush.msra.mxu0 %v2141
        %2529 = vmatpush.msra.mxu0 %v2140
        %2530 = vmatpush.msra.mxu0 %v2139
        %2531 = vmatpush.msra.mxu0 %v2138
        %2532 = vmatpush.msra.mxu0 %v2137
        %2533 = vmatpush.msra.mxu0 %v2136
        %2534 = vmatpush.msra.mxu0 %v2135
        %2535 = vmatpush.msra.mxu0 %v2134
        %2536 = vmatpush.msra.mxu0 %v2133
        %2537 = vmatpush.msra.mxu0 %v2132
        %2538 = vmatpush.msra.mxu0 %v2131
        %2539 = vmatmul.f32.gmra.mxu0 %v1079
        %v2540 = vpop.f32.mrf.mxu0
        %v2541 = vadd.f32 %v2416, %v2540
        %2542 = vmatmul.f32.gmra.mxu0 %v1081
        %v2543 = vpop.f32.mrf.mxu0
        %v2544 = vadd.f32 %v2419, %v2543
        %2545 = vmatmul.f32.gmra.mxu0 %v1083
        %v2546 = vpop.f32.mrf.mxu0
        %v2547 = vadd.f32 %v2422, %v2546
        %2548 = vmatmul.f32.gmra.mxu0 %v1085
        %v2549 = vpop.f32.mrf.mxu0
        %v2550 = vadd.f32 %v2425, %v2549
        %2551 = vmatmul.f32.gmra.mxu0 %v1087
        %v2552 = vpop.f32.mrf.mxu0
        %v2553 = vadd.f32 %v2428, %v2552
        %2554 = vmatmul.f32.gmra.mxu0 %v1089
        %v2555 = vpop.f32.mrf.mxu0
        %v2556 = vadd.f32 %v2431, %v2555
        %2557 = vmatmul.f32.gmra.mxu0 %v1091
        %v2558 = vpop.f32.mrf.mxu0
        %v2559 = vadd.f32 %v2434, %v2558
        %2560 = vmatmul.f32.gmra.mxu0 %v1093
        %v2561 = vpop.f32.mrf.mxu0
        %v2562 = vadd.f32 %v2437, %v2561
        %2563 = vmatmul.f32.gmra.mxu0 %v1095
        %v2564 = vpop.f32.mrf.mxu0
        %v2565 = vadd.f32 %v2440, %v2564
        %2566 = vmatmul.f32.gmra.mxu0 %v1097
        %v2567 = vpop.f32.mrf.mxu0
        %v2568 = vadd.f32 %v2443, %v2567
        %2569 = vmatmul.f32.gmra.mxu0 %v1099
        %v2570 = vpop.f32.mrf.mxu0
        %v2571 = vadd.f32 %v2446, %v2570
        %2572 = vmatmul.f32.gmra.mxu0 %v1101
        %v2573 = vpop.f32.mrf.mxu0
        %v2574 = vadd.f32 %v2449, %v2573
        %2575 = vmatmul.f32.gmra.mxu0 %v1103
        %v2576 = vpop.f32.mrf.mxu0
        %v2577 = vadd.f32 %v2452, %v2576
        %2578 = vmatmul.f32.gmra.mxu0 %v1105
        %v2579 = vpop.f32.mrf.mxu0
        %v2580 = vadd.f32 %v2455, %v2579
        %2581 = vmatmul.f32.gmra.mxu0 %v1107
        %v2582 = vpop.f32.mrf.mxu0
        %v2583 = vadd.f32 %v2458, %v2582
        %2584 = vmatmul.f32.gmra.mxu0 %v1109
        %v2585 = vpop.f32.mrf.mxu0
        %v2586 = vadd.f32 %v2461, %v2585
        %2587 = vmatmul.f32.gmra.mxu0 %v1111
        %v2588 = vpop.f32.mrf.mxu0
        %v2589 = vadd.f32 %v2464, %v2588
        %2590 = vmatmul.f32.gmra.mxu0 %v1113
        %v2591 = vpop.f32.mrf.mxu0
        %v2592 = vadd.f32 %v2467, %v2591
        %2593 = vmatmul.f32.gmra.mxu0 %v1115
        %v2594 = vpop.f32.mrf.mxu0
        %v2595 = vadd.f32 %v2470, %v2594
        %2596 = vmatmul.f32.gmra.mxu0 %v1117
        %v2597 = vpop.f32.mrf.mxu0
        %v2598 = vadd.f32 %v2473, %v2597
        %2599 = vmatmul.f32.gmra.mxu0 %v1119
        %v2600 = vpop.f32.mrf.mxu0
        %v2601 = vadd.f32 %v2476, %v2600
        %2602 = vmatmul.f32.gmra.mxu0 %v1121
        %v2603 = vpop.f32.mrf.mxu0
        %v2604 = vadd.f32 %v2479, %v2603
        %2605 = vmatmul.f32.gmra.mxu0 %v1123
        %v2606 = vpop.f32.mrf.mxu0
        %v2607 = vadd.f32 %v2482, %v2606
        %2608 = vmatmul.f32.gmra.mxu0 %v1125
        %v2609 = vpop.f32.mrf.mxu0
        %v2610 = vadd.f32 %v2485, %v2609
        %2611 = vmatmul.f32.gmra.mxu0 %v1127
        %v2612 = vpop.f32.mrf.mxu0
        %v2613 = vadd.f32 %v2488, %v2612
        %2614 = vmatmul.f32.gmra.mxu0 %v1129
        %v2615 = vpop.f32.mrf.mxu0
        %v2616 = vadd.f32 %v2491, %v2615
        %2617 = vmatmul.f32.gmra.mxu0 %v1131
        %v2618 = vpop.f32.mrf.mxu0
        %v2619 = vadd.f32 %v2494, %v2618
        %2620 = vmatmul.f32.gmra.mxu0 %v1133
        %v2621 = vpop.f32.mrf.mxu0
        %v2622 = vadd.f32 %v2497, %v2621
        %2623 = vmatmul.f32.gmra.mxu0 %v1135
        %v2624 = vpop.f32.mrf.mxu0
        %v2625 = vadd.f32 %v2500, %v2624
        %2626 = vmatmul.f32.gmra.mxu0 %v1137
        %v2627 = vpop.f32.mrf.mxu0
        %v2628 = vadd.f32 %v2503, %v2627
        %2629 = vmatmul.f32.gmra.mxu0 %v1139
        %v2630 = vpop.f32.mrf.mxu0
        %v2631 = vadd.f32 %v2506, %v2630
        %2632 = vmatmul.f32.gmra.mxu0 %v1141
        %v2633 = vpop.f32.mrf.mxu0
        %v2634 = vadd.f32 %v2509, %v2633
        %2635 = vmatmul.f32.gmra.mxu0 %v1143
        %v2636 = vpop.f32.mrf.mxu0
        %v2637 = vadd.f32 %v2512, %v2636
        %2638 = vmatmul.f32.gmra.mxu0 %v1145
        %v2639 = vpop.f32.mrf.mxu0
        %v2640 = vadd.f32 %v2515, %v2639
        %2641 = vmatmul.f32.gmra.mxu0 %v1147
        %v2642 = vpop.f32.mrf.mxu0
        %v2643 = vadd.f32 %v2518, %v2642
        %2644 = vmatmul.f32.gmra.mxu0 %v1149
        %v2645 = vpop.f32.mrf.mxu0
        %v2646 = vadd.f32 %v2521, %v2645
        %2647 = vdwg.mxu0
        %v2648 = vld [vmem:[#allocation10] sm:$0xff]
        %v2649 = vld [vmem:[#allocation10 + $0x8] sm:$0xff]
        %v2650 = vld [vmem:[#allocation10 + $0x10] sm:$0xff]
        %v2651 = vld [vmem:[#allocation10 + $0x18] sm:$0xff]
        %v2652 = vld [vmem:[#allocation10 + $0x20] sm:$0xff]
        %v2653 = vld [vmem:[#allocation10 + $0x28] sm:$0xff]
        %v2654 = vld [vmem:[#allocation10 + $0x30] sm:$0xff]
        %v2655 = vld [vmem:[#allocation10 + $0x38] sm:$0xff]
        %v2656 = vld [vmem:[#allocation10 + $0x40] sm:$0xff]
        %v2657 = vld [vmem:[#allocation10 + $0x48] sm:$0xff]
        %v2658 = vld [vmem:[#allocation10 + $0x50] sm:$0xff]
        %v2659 = vld [vmem:[#allocation10 + $0x58] sm:$0xff]
        %v2660 = vld [vmem:[#allocation10 + $0x60] sm:$0xff]
        %v2661 = vld [vmem:[#allocation10 + $0x68] sm:$0xff]
        %v2662 = vld [vmem:[#allocation10 + $0x70] sm:$0xff]
        %v2663 = vld [vmem:[#allocation10 + $0x78] sm:$0xff]
        %v2664 = vld [vmem:[#allocation10 + $0x80] sm:$0xff]
        %v2665 = vld [vmem:[#allocation10 + $0x88] sm:$0xff]
        %v2666 = vld [vmem:[#allocation10 + $0x90] sm:$0xff]
        %v2667 = vld [vmem:[#allocation10 + $0x98] sm:$0xff]
        %v2668 = vld [vmem:[#allocation10 + $0xa0] sm:$0xff]
        %v2669 = vld [vmem:[#allocation10 + $0xa8] sm:$0xff]
        %v2670 = vld [vmem:[#allocation10 + $0xb0] sm:$0xff]
        %v2671 = vld [vmem:[#allocation10 + $0xb8] sm:$0xff]
        %v2672 = vld [vmem:[#allocation10 + $0xc0] sm:$0xff]
        %v2673 = vld [vmem:[#allocation10 + $0xc8] sm:$0xff]
        %v2674 = vld [vmem:[#allocation10 + $0xd0] sm:$0xff]
        %v2675 = vld [vmem:[#allocation10 + $0xd8] sm:$0xff]
        %v2676 = vld [vmem:[#allocation10 + $0xe0] sm:$0xff]
        %v2677 = vld [vmem:[#allocation10 + $0xe8] sm:$0xff]
        %v2678 = vld [vmem:[#allocation10 + $0xf0] sm:$0xff]
        %v2679 = vld [vmem:[#allocation10 + $0xf8] sm:$0xff]
        %v2680 = vld [vmem:[#allocation10 + $0x100] sm:$0xff]
        %v2681 = vld [vmem:[#allocation10 + $0x108] sm:$0xff]
        %v2682 = vld [vmem:[#allocation10 + $0x110] sm:$0xff]
        %v2683 = vld [vmem:[#allocation10 + $0x118] sm:$0xff]
        %v2684 = vld [vmem:[#allocation10 + $0x120] sm:$0xff]
        %v2685 = vld [vmem:[#allocation10 + $0x128] sm:$0xff]
        %v2686 = vld [vmem:[#allocation10 + $0x130] sm:$0xff]
        %v2687 = vld [vmem:[#allocation10 + $0x138] sm:$0xff]
        %v2688 = vld [vmem:[#allocation10 + $0x140] sm:$0xff]
        %v2689 = vld [vmem:[#allocation10 + $0x148] sm:$0xff]
        %v2690 = vld [vmem:[#allocation10 + $0x150] sm:$0xff]
        %v2691 = vld [vmem:[#allocation10 + $0x158] sm:$0xff]
        %v2692 = vld [vmem:[#allocation10 + $0x160] sm:$0xff]
        %v2693 = vld [vmem:[#allocation10 + $0x168] sm:$0xff]
        %v2694 = vld [vmem:[#allocation10 + $0x170] sm:$0xff]
        %v2695 = vld [vmem:[#allocation10 + $0x178] sm:$0xff]
        %s2696 = scalar_lea.vmem [#allocation10], 384
        %v2697 = vld [vmem:[%s2696] sm:$0xff]
        %v2698 = vld [vmem:[%s2696 + $0x8] sm:$0xff]
        %v2699 = vld [vmem:[%s2696 + $0x10] sm:$0xff]
        %v2700 = vld [vmem:[%s2696 + $0x18] sm:$0xff]
        %v2701 = vld [vmem:[%s2696 + $0x20] sm:$0xff]
        %v2702 = vld [vmem:[%s2696 + $0x28] sm:$0xff]
        %v2703 = vld [vmem:[%s2696 + $0x30] sm:$0xff]
        %v2704 = vld [vmem:[%s2696 + $0x38] sm:$0xff]
        %v2705 = vld [vmem:[%s2696 + $0x40] sm:$0xff]
        %v2706 = vld [vmem:[%s2696 + $0x48] sm:$0xff]
        %v2707 = vld [vmem:[%s2696 + $0x50] sm:$0xff]
        %v2708 = vld [vmem:[%s2696 + $0x58] sm:$0xff]
        %v2709 = vld [vmem:[%s2696 + $0x60] sm:$0xff]
        %v2710 = vld [vmem:[%s2696 + $0x68] sm:$0xff]
        %v2711 = vld [vmem:[%s2696 + $0x70] sm:$0xff]
        %v2712 = vld [vmem:[%s2696 + $0x78] sm:$0xff]
        %v2713 = vld [vmem:[%s2696 + $0x80] sm:$0xff]
        %v2714 = vld [vmem:[%s2696 + $0x88] sm:$0xff]
        %v2715 = vld [vmem:[%s2696 + $0x90] sm:$0xff]
        %v2716 = vld [vmem:[%s2696 + $0x98] sm:$0xff]
        %v2717 = vld [vmem:[%s2696 + $0xa0] sm:$0xff]
        %v2718 = vld [vmem:[%s2696 + $0xa8] sm:$0xff]
        %v2719 = vld [vmem:[%s2696 + $0xb0] sm:$0xff]
        %v2720 = vld [vmem:[%s2696 + $0xb8] sm:$0xff]
        %v2721 = vld [vmem:[%s2696 + $0xc0] sm:$0xff]
        %v2722 = vld [vmem:[%s2696 + $0xc8] sm:$0xff]
        %v2723 = vld [vmem:[%s2696 + $0xd0] sm:$0xff]
        %v2724 = vld [vmem:[%s2696 + $0xd8] sm:$0xff]
        %v2725 = vld [vmem:[%s2696 + $0xe0] sm:$0xff]
        %v2726 = vld [vmem:[%s2696 + $0xe8] sm:$0xff]
        %v2727 = vld [vmem:[%s2696 + $0xf0] sm:$0xff]
        %v2728 = vld [vmem:[%s2696 + $0xf8] sm:$0xff]
        %v2729 = vld [vmem:[%s2696 + $0x100] sm:$0xff]
        %v2730 = vld [vmem:[%s2696 + $0x108] sm:$0xff]
        %v2731 = vld [vmem:[%s2696 + $0x110] sm:$0xff]
        %v2732 = vld [vmem:[%s2696 + $0x118] sm:$0xff]
        %v2733 = vld [vmem:[%s2696 + $0x120] sm:$0xff]
        %v2734 = vld [vmem:[%s2696 + $0x128] sm:$0xff]
        %v2735 = vld [vmem:[%s2696 + $0x130] sm:$0xff]
        %v2736 = vld [vmem:[%s2696 + $0x138] sm:$0xff]
        %v2737 = vld [vmem:[%s2696 + $0x140] sm:$0xff]
        %v2738 = vld [vmem:[%s2696 + $0x148] sm:$0xff]
        %v2739 = vld [vmem:[%s2696 + $0x150] sm:$0xff]
        %v2740 = vld [vmem:[%s2696 + $0x158] sm:$0xff]
        %v2741 = vld [vmem:[%s2696 + $0x160] sm:$0xff]
        %v2742 = vld [vmem:[%s2696 + $0x168] sm:$0xff]
        %v2743 = vld [vmem:[%s2696 + $0x170] sm:$0xff]
        %v2744 = vld [vmem:[%s2696 + $0x178] sm:$0xff]
        %2745 = vmatpush.msra.mxu0 %v2712
        %2746 = vmatpush.msra.mxu0 %v2711
        %2747 = vmatpush.msra.mxu0 %v2710
        %2748 = vmatpush.msra.mxu0 %v2709
        %2749 = vmatpush.msra.mxu0 %v2708
        %2750 = vmatpush.msra.mxu0 %v2707
        %2751 = vmatpush.msra.mxu0 %v2706
        %2752 = vmatpush.msra.mxu0 %v2705
        %2753 = vmatpush.msra.mxu0 %v2704
        %2754 = vmatpush.msra.mxu0 %v2703
        %2755 = vmatpush.msra.mxu0 %v2702
        %2756 = vmatpush.msra.mxu0 %v2701
        %2757 = vmatpush.msra.mxu0 %v2700
        %2758 = vmatpush.msra.mxu0 %v2699
        %2759 = vmatpush.msra.mxu0 %v2698
        %2760 = vmatpush.msra.mxu0 %v2697
        %2761 = vmatmul.f32.gmra.mxu0 %v2297
        %v2762 = vpop.f32.mrf.mxu0
        %v2763 = vadd.f32 0.0, %v2762
        %2764 = vmatmul.f32.gmra.mxu0 %v2300
        %v2765 = vpop.f32.mrf.mxu0
        %v2766 = vadd.f32 0.0, %v2765
        %2767 = vmatmul.f32.gmra.mxu0 %v2303
        %v2768 = vpop.f32.mrf.mxu0
        %v2769 = vadd.f32 0.0, %v2768
        %2770 = vmatmul.f32.gmra.mxu0 %v2306
        %v2771 = vpop.f32.mrf.mxu0
        %v2772 = vadd.f32 0.0, %v2771
        %2773 = vmatmul.f32.gmra.mxu0 %v2309
        %v2774 = vpop.f32.mrf.mxu0
        %v2775 = vadd.f32 0.0, %v2774
        %2776 = vmatmul.f32.gmra.mxu0 %v2312
        %v2777 = vpop.f32.mrf.mxu0
        %v2778 = vadd.f32 0.0, %v2777
        %2779 = vmatmul.f32.gmra.mxu0 %v2315
        %v2780 = vpop.f32.mrf.mxu0
        %v2781 = vadd.f32 0.0, %v2780
        %2782 = vmatmul.f32.gmra.mxu0 %v2318
        %v2783 = vpop.f32.mrf.mxu0
        %v2784 = vadd.f32 0.0, %v2783
        %2785 = vmatmul.f32.gmra.mxu0 %v2321
        %v2786 = vpop.f32.mrf.mxu0
        %v2787 = vadd.f32 0.0, %v2786
        %2788 = vmatmul.f32.gmra.mxu0 %v2324
        %v2789 = vpop.f32.mrf.mxu0
        %v2790 = vadd.f32 0.0, %v2789
        %2791 = vmatmul.f32.gmra.mxu0 %v2327
        %v2792 = vpop.f32.mrf.mxu0
        %v2793 = vadd.f32 0.0, %v2792
        %2794 = vmatmul.f32.gmra.mxu0 %v2330
        %v2795 = vpop.f32.mrf.mxu0
        %v2796 = vadd.f32 0.0, %v2795
        %2797 = vmatmul.f32.gmra.mxu0 %v2333
        %v2798 = vpop.f32.mrf.mxu0
        %v2799 = vadd.f32 0.0, %v2798
        %2800 = vmatmul.f32.gmra.mxu0 %v2336
        %v2801 = vpop.f32.mrf.mxu0
        %v2802 = vadd.f32 0.0, %v2801
        %2803 = vmatmul.f32.gmra.mxu0 %v2339
        %v2804 = vpop.f32.mrf.mxu0
        %v2805 = vadd.f32 0.0, %v2804
        %2806 = vmatmul.f32.gmra.mxu0 %v2342
        %v2807 = vpop.f32.mrf.mxu0
        %v2808 = vadd.f32 0.0, %v2807
        %2809 = vmatmul.f32.gmra.mxu0 %v2345
        %v2810 = vpop.f32.mrf.mxu0
        %v2811 = vadd.f32 0.0, %v2810
        %2812 = vmatmul.f32.gmra.mxu0 %v2348
        %v2813 = vpop.f32.mrf.mxu0
        %v2814 = vadd.f32 0.0, %v2813
        %2815 = vmatmul.f32.gmra.mxu0 %v2351
        %v2816 = vpop.f32.mrf.mxu0
        %v2817 = vadd.f32 0.0, %v2816
        %2818 = vmatmul.f32.gmra.mxu0 %v2354
        %v2819 = vpop.f32.mrf.mxu0
        %v2820 = vadd.f32 0.0, %v2819
        %2821 = vmatmul.f32.gmra.mxu0 %v2357
        %v2822 = vpop.f32.mrf.mxu0
        %v2823 = vadd.f32 0.0, %v2822
        %2824 = vmatmul.f32.gmra.mxu0 %v2360
        %v2825 = vpop.f32.mrf.mxu0
        %v2826 = vadd.f32 0.0, %v2825
        %2827 = vmatmul.f32.gmra.mxu0 %v2363
        %v2828 = vpop.f32.mrf.mxu0
        %v2829 = vadd.f32 0.0, %v2828
        %2830 = vmatmul.f32.gmra.mxu0 %v2366
        %v2831 = vpop.f32.mrf.mxu0
        %v2832 = vadd.f32 0.0, %v2831
        %2833 = vmatmul.f32.gmra.mxu0 %v2369
        %v2834 = vpop.f32.mrf.mxu0
        %v2835 = vadd.f32 0.0, %v2834
        %2836 = vmatmul.f32.gmra.mxu0 %v2372
        %v2837 = vpop.f32.mrf.mxu0
        %v2838 = vadd.f32 0.0, %v2837
        %2839 = vmatmul.f32.gmra.mxu0 %v2375
        %v2840 = vpop.f32.mrf.mxu0
        %v2841 = vadd.f32 0.0, %v2840
        %2842 = vmatmul.f32.gmra.mxu0 %v2378
        %v2843 = vpop.f32.mrf.mxu0
        %v2844 = vadd.f32 0.0, %v2843
        %2845 = vmatmul.f32.gmra.mxu0 %v2381
        %v2846 = vpop.f32.mrf.mxu0
        %v2847 = vadd.f32 0.0, %v2846
        %2848 = vmatmul.f32.gmra.mxu0 %v2384
        %v2849 = vpop.f32.mrf.mxu0
        %v2850 = vadd.f32 0.0, %v2849
        %2851 = vmatmul.f32.gmra.mxu0 %v2387
        %v2852 = vpop.f32.mrf.mxu0
        %v2853 = vadd.f32 0.0, %v2852
        %2854 = vmatmul.f32.gmra.mxu0 %v2390
        %v2855 = vpop.f32.mrf.mxu0
        %v2856 = vadd.f32 0.0, %v2855
        %2857 = vdwg.mxu0
        %2858 = vmatpush.msra.mxu0 %v2728
        %2859 = vmatpush.msra.mxu0 %v2727
        %2860 = vmatpush.msra.mxu0 %v2726
        %2861 = vmatpush.msra.mxu0 %v2725
        %2862 = vmatpush.msra.mxu0 %v2724
        %2863 = vmatpush.msra.mxu0 %v2723
        %2864 = vmatpush.msra.mxu0 %v2722
        %2865 = vmatpush.msra.mxu0 %v2721
        %2866 = vmatpush.msra.mxu0 %v2720
        %2867 = vmatpush.msra.mxu0 %v2719
        %2868 = vmatpush.msra.mxu0 %v2718
        %2869 = vmatpush.msra.mxu0 %v2717
        %2870 = vmatpush.msra.mxu0 %v2716
        %2871 = vmatpush.msra.mxu0 %v2715
        %2872 = vmatpush.msra.mxu0 %v2714
        %2873 = vmatpush.msra.mxu0 %v2713
        %2874 = vmatmul.f32.gmra.mxu0 %v2115
        %v2875 = vpop.f32.mrf.mxu0
        %v2876 = vadd.f32 %v2763, %v2875
        %2877 = vmatmul.f32.gmra.mxu0 %v2116
        %v2878 = vpop.f32.mrf.mxu0
        %v2879 = vadd.f32 %v2766, %v2878
        %2880 = vmatmul.f32.gmra.mxu0 %v2117
        %v2881 = vpop.f32.mrf.mxu0
        %v2882 = vadd.f32 %v2769, %v2881
        %2883 = vmatmul.f32.gmra.mxu0 %v2118
        %v2884 = vpop.f32.mrf.mxu0
        %v2885 = vadd.f32 %v2772, %v2884
        %2886 = vmatmul.f32.gmra.mxu0 %v2119
        %v2887 = vpop.f32.mrf.mxu0
        %v2888 = vadd.f32 %v2775, %v2887
        %2889 = vmatmul.f32.gmra.mxu0 %v2120
        %v2890 = vpop.f32.mrf.mxu0
        %v2891 = vadd.f32 %v2778, %v2890
        %2892 = vmatmul.f32.gmra.mxu0 %v2121
        %v2893 = vpop.f32.mrf.mxu0
        %v2894 = vadd.f32 %v2781, %v2893
        %2895 = vmatmul.f32.gmra.mxu0 %v2122
        %v2896 = vpop.f32.mrf.mxu0
        %v2897 = vadd.f32 %v2784, %v2896
        %2898 = vmatmul.f32.gmra.mxu0 %v2123
        %v2899 = vpop.f32.mrf.mxu0
        %v2900 = vadd.f32 %v2787, %v2899
        %2901 = vmatmul.f32.gmra.mxu0 %v2124
        %v2902 = vpop.f32.mrf.mxu0
        %v2903 = vadd.f32 %v2790, %v2902
        %2904 = vmatmul.f32.gmra.mxu0 %v2125
        %v2905 = vpop.f32.mrf.mxu0
        %v2906 = vadd.f32 %v2793, %v2905
        %2907 = vmatmul.f32.gmra.mxu0 %v2126
        %v2908 = vpop.f32.mrf.mxu0
        %v2909 = vadd.f32 %v2796, %v2908
        %2910 = vmatmul.f32.gmra.mxu0 %v2127
        %v2911 = vpop.f32.mrf.mxu0
        %v2912 = vadd.f32 %v2799, %v2911
        %2913 = vmatmul.f32.gmra.mxu0 %v2128
        %v2914 = vpop.f32.mrf.mxu0
        %v2915 = vadd.f32 %v2802, %v2914
        %2916 = vmatmul.f32.gmra.mxu0 %v2129
        %v2917 = vpop.f32.mrf.mxu0
        %v2918 = vadd.f32 %v2805, %v2917
        %2919 = vmatmul.f32.gmra.mxu0 %v2130
        %v2920 = vpop.f32.mrf.mxu0
        %v2921 = vadd.f32 %v2808, %v2920
        %2922 = vmatmul.f32.gmra.mxu0 %v2131
        %v2923 = vpop.f32.mrf.mxu0
        %v2924 = vadd.f32 %v2811, %v2923
        %2925 = vmatmul.f32.gmra.mxu0 %v2132
        %v2926 = vpop.f32.mrf.mxu0
        %v2927 = vadd.f32 %v2814, %v2926
        %2928 = vmatmul.f32.gmra.mxu0 %v2133
        %v2929 = vpop.f32.mrf.mxu0
        %v2930 = vadd.f32 %v2817, %v2929
        %2931 = vmatmul.f32.gmra.mxu0 %v2134
        %v2932 = vpop.f32.mrf.mxu0
        %v2933 = vadd.f32 %v2820, %v2932
        %2934 = vmatmul.f32.gmra.mxu0 %v2135
        %v2935 = vpop.f32.mrf.mxu0
        %v2936 = vadd.f32 %v2823, %v2935
        %2937 = vmatmul.f32.gmra.mxu0 %v2136
        %v2938 = vpop.f32.mrf.mxu0
        %v2939 = vadd.f32 %v2826, %v2938
        %2940 = vmatmul.f32.gmra.mxu0 %v2137
        %v2941 = vpop.f32.mrf.mxu0
        %v2942 = vadd.f32 %v2829, %v2941
        %2943 = vmatmul.f32.gmra.mxu0 %v2138
        %v2944 = vpop.f32.mrf.mxu0
        %v2945 = vadd.f32 %v2832, %v2944
        %2946 = vmatmul.f32.gmra.mxu0 %v2139
        %v2947 = vpop.f32.mrf.mxu0
        %v2948 = vadd.f32 %v2835, %v2947
        %2949 = vmatmul.f32.gmra.mxu0 %v2140
        %v2950 = vpop.f32.mrf.mxu0
        %v2951 = vadd.f32 %v2838, %v2950
        %2952 = vmatmul.f32.gmra.mxu0 %v2141
        %v2953 = vpop.f32.mrf.mxu0
        %v2954 = vadd.f32 %v2841, %v2953
        %2955 = vmatmul.f32.gmra.mxu0 %v2142
        %v2956 = vpop.f32.mrf.mxu0
        %v2957 = vadd.f32 %v2844, %v2956
        %2958 = vmatmul.f32.gmra.mxu0 %v2143
        %v2959 = vpop.f32.mrf.mxu0
        %v2960 = vadd.f32 %v2847, %v2959
        %2961 = vmatmul.f32.gmra.mxu0 %v2144
        %v2962 = vpop.f32.mrf.mxu0
        %v2963 = vadd.f32 %v2850, %v2962
        %2964 = vmatmul.f32.gmra.mxu0 %v2145
        %v2965 = vpop.f32.mrf.mxu0
        %v2966 = vadd.f32 %v2853, %v2965
        %2967 = vmatmul.f32.gmra.mxu0 %v2146
        %v2968 = vpop.f32.mrf.mxu0
        %v2969 = vadd.f32 %v2856, %v2968
        %2970 = vdwg.mxu0
        %2971 = vmatpush.msra.mxu0 %v2744
        %2972 = vmatpush.msra.mxu0 %v2743
        %2973 = vmatpush.msra.mxu0 %v2742
        %2974 = vmatpush.msra.mxu0 %v2741
        %2975 = vmatpush.msra.mxu0 %v2740
        %2976 = vmatpush.msra.mxu0 %v2739
        %2977 = vmatpush.msra.mxu0 %v2738
        %2978 = vmatpush.msra.mxu0 %v2737
        %2979 = vmatpush.msra.mxu0 %v2736
        %2980 = vmatpush.msra.mxu0 %v2735
        %2981 = vmatpush.msra.mxu0 %v2734
        %2982 = vmatpush.msra.mxu0 %v2733
        %2983 = vmatpush.msra.mxu0 %v2732
        %2984 = vmatpush.msra.mxu0 %v2731
        %2985 = vmatpush.msra.mxu0 %v2730
        %2986 = vmatpush.msra.mxu0 %v2729
        %2987 = vmatmul.f32.gmra.mxu0 %v2547
        %v2988 = vpop.f32.mrf.mxu0
        %v2989 = vadd.f32 %v2876, %v2988
        %2990 = vmatmul.f32.gmra.mxu0 %v2550
        %v2991 = vpop.f32.mrf.mxu0
        %v2992 = vadd.f32 %v2879, %v2991
        %2993 = vmatmul.f32.gmra.mxu0 %v2553
        %v2994 = vpop.f32.mrf.mxu0
        %v2995 = vadd.f32 %v2882, %v2994
        %2996 = vmatmul.f32.gmra.mxu0 %v2556
        %v2997 = vpop.f32.mrf.mxu0
        %v2998 = vadd.f32 %v2885, %v2997
        %2999 = vmatmul.f32.gmra.mxu0 %v2559
        %v3000 = vpop.f32.mrf.mxu0
        %v3001 = vadd.f32 %v2888, %v3000
        %3002 = vmatmul.f32.gmra.mxu0 %v2562
        %v3003 = vpop.f32.mrf.mxu0
        %v3004 = vadd.f32 %v2891, %v3003
        %3005 = vmatmul.f32.gmra.mxu0 %v2565
        %v3006 = vpop.f32.mrf.mxu0
        %v3007 = vadd.f32 %v2894, %v3006
        %3008 = vmatmul.f32.gmra.mxu0 %v2568
        %v3009 = vpop.f32.mrf.mxu0
        %v3010 = vadd.f32 %v2897, %v3009
        %3011 = vmatmul.f32.gmra.mxu0 %v2571
        %v3012 = vpop.f32.mrf.mxu0
        %v3013 = vadd.f32 %v2900, %v3012
        %3014 = vmatmul.f32.gmra.mxu0 %v2574
        %v3015 = vpop.f32.mrf.mxu0
        %v3016 = vadd.f32 %v2903, %v3015
        %3017 = vmatmul.f32.gmra.mxu0 %v2577
        %v3018 = vpop.f32.mrf.mxu0
        %v3019 = vadd.f32 %v2906, %v3018
        %3020 = vmatmul.f32.gmra.mxu0 %v2580
        %v3021 = vpop.f32.mrf.mxu0
        %v3022 = vadd.f32 %v2909, %v3021
        %3023 = vmatmul.f32.gmra.mxu0 %v2583
        %v3024 = vpop.f32.mrf.mxu0
        %v3025 = vadd.f32 %v2912, %v3024
        %3026 = vmatmul.f32.gmra.mxu0 %v2586
        %v3027 = vpop.f32.mrf.mxu0
        %v3028 = vadd.f32 %v2915, %v3027
        %3029 = vmatmul.f32.gmra.mxu0 %v2589
        %v3030 = vpop.f32.mrf.mxu0
        %v3031 = vadd.f32 %v2918, %v3030
        %3032 = vmatmul.f32.gmra.mxu0 %v2592
        %v3033 = vpop.f32.mrf.mxu0
        %v3034 = vadd.f32 %v2921, %v3033
        %3035 = vmatmul.f32.gmra.mxu0 %v2595
        %v3036 = vpop.f32.mrf.mxu0
        %v3037 = vadd.f32 %v2924, %v3036
        %3038 = vmatmul.f32.gmra.mxu0 %v2598
        %v3039 = vpop.f32.mrf.mxu0
        %v3040 = vadd.f32 %v2927, %v3039
        %3041 = vmatmul.f32.gmra.mxu0 %v2601
        %v3042 = vpop.f32.mrf.mxu0
        %v3043 = vadd.f32 %v2930, %v3042
        %3044 = vmatmul.f32.gmra.mxu0 %v2604
        %v3045 = vpop.f32.mrf.mxu0
        %v3046 = vadd.f32 %v2933, %v3045
        %3047 = vmatmul.f32.gmra.mxu0 %v2607
        %v3048 = vpop.f32.mrf.mxu0
        %v3049 = vadd.f32 %v2936, %v3048
        %3050 = vmatmul.f32.gmra.mxu0 %v2610
        %v3051 = vpop.f32.mrf.mxu0
        %v3052 = vadd.f32 %v2939, %v3051
        %3053 = vmatmul.f32.gmra.mxu0 %v2613
        %v3054 = vpop.f32.mrf.mxu0
        %v3055 = vadd.f32 %v2942, %v3054
        %3056 = vmatmul.f32.gmra.mxu0 %v2616
        %v3057 = vpop.f32.mrf.mxu0
        %v3058 = vadd.f32 %v2945, %v3057
        %3059 = vmatmul.f32.gmra.mxu0 %v2619
        %v3060 = vpop.f32.mrf.mxu0
        %v3061 = vadd.f32 %v2948, %v3060
        %3062 = vmatmul.f32.gmra.mxu0 %v2622
        %v3063 = vpop.f32.mrf.mxu0
        %v3064 = vadd.f32 %v2951, %v3063
        %3065 = vmatmul.f32.gmra.mxu0 %v2625
        %v3066 = vpop.f32.mrf.mxu0
        %v3067 = vadd.f32 %v2954, %v3066
        %3068 = vmatmul.f32.gmra.mxu0 %v2628
        %v3069 = vpop.f32.mrf.mxu0
        %v3070 = vadd.f32 %v2957, %v3069
        %3071 = vmatmul.f32.gmra.mxu0 %v2631
        %v3072 = vpop.f32.mrf.mxu0
        %v3073 = vadd.f32 %v2960, %v3072
        %3074 = vmatmul.f32.gmra.mxu0 %v2634
        %v3075 = vpop.f32.mrf.mxu0
        %v3076 = vadd.f32 %v2963, %v3075
        %3077 = vmatmul.f32.gmra.mxu0 %v2637
        %v3078 = vpop.f32.mrf.mxu0
        %v3079 = vadd.f32 %v2966, %v3078
        %3080 = vmatmul.f32.gmra.mxu0 %v2640
        %v3081 = vpop.f32.mrf.mxu0
        %v3082 = vadd.f32 %v2969, %v3081
        %3083 = vdwg.mxu0
        %3084 = vmatpush.msra.mxu0 %v2663
        %3085 = vmatpush.msra.mxu0 %v2662
        %3086 = vmatpush.msra.mxu0 %v2661
        %3087 = vmatpush.msra.mxu0 %v2660
        %3088 = vmatpush.msra.mxu0 %v2659
        %3089 = vmatpush.msra.mxu0 %v2658
        %3090 = vmatpush.msra.mxu0 %v2657
        %3091 = vmatpush.msra.mxu0 %v2656
        %3092 = vmatpush.msra.mxu0 %v2655
        %3093 = vmatpush.msra.mxu0 %v2654
        %3094 = vmatpush.msra.mxu0 %v2653
        %3095 = vmatpush.msra.mxu0 %v2652
        %3096 = vmatpush.msra.mxu0 %v2651
        %3097 = vmatpush.msra.mxu0 %v2650
        %3098 = vmatpush.msra.mxu0 %v2649
        %3099 = vmatpush.msra.mxu0 %v2648
        %3100 = vmatmul.f32.gmra.mxu0 %v2291
        %v3101 = vpop.f32.mrf.mxu0
        %v3102 = vadd.f32 %v2989, %v3101
        %3103 = vmatmul.f32.gmra.mxu0 %v2294
        %v3104 = vpop.f32.mrf.mxu0
        %v3105 = vadd.f32 %v2992, %v3104
        %3106 = vmatmul.f32.gmra.mxu0 %v2297
        %v3107 = vpop.f32.mrf.mxu0
        %v3108 = vadd.f32 %v2995, %v3107
        %3109 = vmatmul.f32.gmra.mxu0 %v2300
        %v3110 = vpop.f32.mrf.mxu0
        %v3111 = vadd.f32 %v2998, %v3110
        %3112 = vmatmul.f32.gmra.mxu0 %v2303
        %v3113 = vpop.f32.mrf.mxu0
        %v3114 = vadd.f32 %v3001, %v3113
        %3115 = vmatmul.f32.gmra.mxu0 %v2306
        %v3116 = vpop.f32.mrf.mxu0
        %v3117 = vadd.f32 %v3004, %v3116
        %3118 = vmatmul.f32.gmra.mxu0 %v2309
        %v3119 = vpop.f32.mrf.mxu0
        %v3120 = vadd.f32 %v3007, %v3119
        %3121 = vmatmul.f32.gmra.mxu0 %v2312
        %v3122 = vpop.f32.mrf.mxu0
        %v3123 = vadd.f32 %v3010, %v3122
        %3124 = vmatmul.f32.gmra.mxu0 %v2315
        %v3125 = vpop.f32.mrf.mxu0
        %v3126 = vadd.f32 %v3013, %v3125
        %3127 = vmatmul.f32.gmra.mxu0 %v2318
        %v3128 = vpop.f32.mrf.mxu0
        %v3129 = vadd.f32 %v3016, %v3128
        %3130 = vmatmul.f32.gmra.mxu0 %v2321
        %v3131 = vpop.f32.mrf.mxu0
        %v3132 = vadd.f32 %v3019, %v3131
        %3133 = vmatmul.f32.gmra.mxu0 %v2324
        %v3134 = vpop.f32.mrf.mxu0
        %v3135 = vadd.f32 %v3022, %v3134
        %3136 = vmatmul.f32.gmra.mxu0 %v2327
        %v3137 = vpop.f32.mrf.mxu0
        %v3138 = vadd.f32 %v3025, %v3137
        %3139 = vmatmul.f32.gmra.mxu0 %v2330
        %v3140 = vpop.f32.mrf.mxu0
        %v3141 = vadd.f32 %v3028, %v3140
        %3142 = vmatmul.f32.gmra.mxu0 %v2333
        %v3143 = vpop.f32.mrf.mxu0
        %v3144 = vadd.f32 %v3031, %v3143
        %3145 = vmatmul.f32.gmra.mxu0 %v2336
        %v3146 = vpop.f32.mrf.mxu0
        %v3147 = vadd.f32 %v3034, %v3146
        %3148 = vmatmul.f32.gmra.mxu0 %v2339
        %v3149 = vpop.f32.mrf.mxu0
        %v3150 = vadd.f32 %v3037, %v3149
        %3151 = vmatmul.f32.gmra.mxu0 %v2342
        %v3152 = vpop.f32.mrf.mxu0
        %v3153 = vadd.f32 %v3040, %v3152
        %3154 = vmatmul.f32.gmra.mxu0 %v2345
        %v3155 = vpop.f32.mrf.mxu0
        %v3156 = vadd.f32 %v3043, %v3155
        %3157 = vmatmul.f32.gmra.mxu0 %v2348
        %v3158 = vpop.f32.mrf.mxu0
        %v3159 = vadd.f32 %v3046, %v3158
        %3160 = vmatmul.f32.gmra.mxu0 %v2351
        %v3161 = vpop.f32.mrf.mxu0
        %v3162 = vadd.f32 %v3049, %v3161
        %3163 = vmatmul.f32.gmra.mxu0 %v2354
        %v3164 = vpop.f32.mrf.mxu0
        %v3165 = vadd.f32 %v3052, %v3164
        %3166 = vmatmul.f32.gmra.mxu0 %v2357
        %v3167 = vpop.f32.mrf.mxu0
        %v3168 = vadd.f32 %v3055, %v3167
        %3169 = vmatmul.f32.gmra.mxu0 %v2360
        %v3170 = vpop.f32.mrf.mxu0
        %v3171 = vadd.f32 %v3058, %v3170
        %3172 = vmatmul.f32.gmra.mxu0 %v2363
        %v3173 = vpop.f32.mrf.mxu0
        %v3174 = vadd.f32 %v3061, %v3173
        %3175 = vmatmul.f32.gmra.mxu0 %v2366
        %v3176 = vpop.f32.mrf.mxu0
        %v3177 = vadd.f32 %v3064, %v3176
        %3178 = vmatmul.f32.gmra.mxu0 %v2369
        %v3179 = vpop.f32.mrf.mxu0
        %v3180 = vadd.f32 %v3067, %v3179
        %3181 = vmatmul.f32.gmra.mxu0 %v2372
        %v3182 = vpop.f32.mrf.mxu0
        %v3183 = vadd.f32 %v3070, %v3182
        %3184 = vmatmul.f32.gmra.mxu0 %v2375
        %v3185 = vpop.f32.mrf.mxu0
        %v3186 = vadd.f32 %v3073, %v3185
        %3187 = vmatmul.f32.gmra.mxu0 %v2378
        %v3188 = vpop.f32.mrf.mxu0
        %v3189 = vadd.f32 %v3076, %v3188
        %3190 = vmatmul.f32.gmra.mxu0 %v2381
        %v3191 = vpop.f32.mrf.mxu0
        %v3192 = vadd.f32 %v3079, %v3191
        %3193 = vmatmul.f32.gmra.mxu0 %v2384
        %v3194 = vpop.f32.mrf.mxu0
        %v3195 = vadd.f32 %v3082, %v3194
        %3196 = vdwg.mxu0
        %3197 = vmatpush.msra.mxu0 %v2679
        %3198 = vmatpush.msra.mxu0 %v2678
        %3199 = vmatpush.msra.mxu0 %v2677
        %3200 = vmatpush.msra.mxu0 %v2676
        %3201 = vmatpush.msra.mxu0 %v2675
        %3202 = vmatpush.msra.mxu0 %v2674
        %3203 = vmatpush.msra.mxu0 %v2673
        %3204 = vmatpush.msra.mxu0 %v2672
        %3205 = vmatpush.msra.mxu0 %v2671
        %3206 = vmatpush.msra.mxu0 %v2670
        %3207 = vmatpush.msra.mxu0 %v2669
        %3208 = vmatpush.msra.mxu0 %v2668
        %3209 = vmatpush.msra.mxu0 %v2667
        %3210 = vmatpush.msra.mxu0 %v2666
        %3211 = vmatpush.msra.mxu0 %v2665
        %3212 = vmatpush.msra.mxu0 %v2664
        %3213 = vmatmul.f32.gmra.mxu0 0.0
        %v3214 = vpop.f32.mrf.mxu0
        %v3215 = vadd.f32 %v3102, %v3214
        %3216 = vmatmul.f32.gmra.mxu0 0.0
        %v3217 = vpop.f32.mrf.mxu0
        %v3218 = vadd.f32 %v3105, %v3217
        %3219 = vmatmul.f32.gmra.mxu0 %v2115
        %v3220 = vpop.f32.mrf.mxu0
        %v3221 = vadd.f32 %v3108, %v3220
        %3222 = vmatmul.f32.gmra.mxu0 %v2116
        %v3223 = vpop.f32.mrf.mxu0
        %v3224 = vadd.f32 %v3111, %v3223
        %3225 = vmatmul.f32.gmra.mxu0 %v2117
        %v3226 = vpop.f32.mrf.mxu0
        %v3227 = vadd.f32 %v3114, %v3226
        %3228 = vmatmul.f32.gmra.mxu0 %v2118
        %v3229 = vpop.f32.mrf.mxu0
        %v3230 = vadd.f32 %v3117, %v3229
        %3231 = vmatmul.f32.gmra.mxu0 %v2119
        %v3232 = vpop.f32.mrf.mxu0
        %v3233 = vadd.f32 %v3120, %v3232
        %3234 = vmatmul.f32.gmra.mxu0 %v2120
        %v3235 = vpop.f32.mrf.mxu0
        %v3236 = vadd.f32 %v3123, %v3235
        %3237 = vmatmul.f32.gmra.mxu0 %v2121
        %v3238 = vpop.f32.mrf.mxu0
        %v3239 = vadd.f32 %v3126, %v3238
        %3240 = vmatmul.f32.gmra.mxu0 %v2122
        %v3241 = vpop.f32.mrf.mxu0
        %v3242 = vadd.f32 %v3129, %v3241
        %3243 = vmatmul.f32.gmra.mxu0 %v2123
        %v3244 = vpop.f32.mrf.mxu0
        %v3245 = vadd.f32 %v3132, %v3244
        %3246 = vmatmul.f32.gmra.mxu0 %v2124
        %v3247 = vpop.f32.mrf.mxu0
        %v3248 = vadd.f32 %v3135, %v3247
        %3249 = vmatmul.f32.gmra.mxu0 %v2125
        %v3250 = vpop.f32.mrf.mxu0
        %v3251 = vadd.f32 %v3138, %v3250
        %3252 = vmatmul.f32.gmra.mxu0 %v2126
        %v3253 = vpop.f32.mrf.mxu0
        %v3254 = vadd.f32 %v3141, %v3253
        %3255 = vmatmul.f32.gmra.mxu0 %v2127
        %v3256 = vpop.f32.mrf.mxu0
        %v3257 = vadd.f32 %v3144, %v3256
        %3258 = vmatmul.f32.gmra.mxu0 %v2128
        %v3259 = vpop.f32.mrf.mxu0
        %v3260 = vadd.f32 %v3147, %v3259
        %3261 = vmatmul.f32.gmra.mxu0 %v2129
        %v3262 = vpop.f32.mrf.mxu0
        %v3263 = vadd.f32 %v3150, %v3262
        %3264 = vmatmul.f32.gmra.mxu0 %v2130
        %v3265 = vpop.f32.mrf.mxu0
        %v3266 = vadd.f32 %v3153, %v3265
        %3267 = vmatmul.f32.gmra.mxu0 %v2131
        %v3268 = vpop.f32.mrf.mxu0
        %v3269 = vadd.f32 %v3156, %v3268
        %3270 = vmatmul.f32.gmra.mxu0 %v2132
        %v3271 = vpop.f32.mrf.mxu0
        %v3272 = vadd.f32 %v3159, %v3271
        %3273 = vmatmul.f32.gmra.mxu0 %v2133
        %v3274 = vpop.f32.mrf.mxu0
        %v3275 = vadd.f32 %v3162, %v3274
        %3276 = vmatmul.f32.gmra.mxu0 %v2134
        %v3277 = vpop.f32.mrf.mxu0
        %v3278 = vadd.f32 %v3165, %v3277
        %3279 = vmatmul.f32.gmra.mxu0 %v2135
        %v3280 = vpop.f32.mrf.mxu0
        %v3281 = vadd.f32 %v3168, %v3280
        %3282 = vmatmul.f32.gmra.mxu0 %v2136
        %v3283 = vpop.f32.mrf.mxu0
        %v3284 = vadd.f32 %v3171, %v3283
        %3285 = vmatmul.f32.gmra.mxu0 %v2137
        %v3286 = vpop.f32.mrf.mxu0
        %v3287 = vadd.f32 %v3174, %v3286
        %3288 = vmatmul.f32.gmra.mxu0 %v2138
        %v3289 = vpop.f32.mrf.mxu0
        %v3290 = vadd.f32 %v3177, %v3289
        %3291 = vmatmul.f32.gmra.mxu0 %v2139
        %v3292 = vpop.f32.mrf.mxu0
        %v3293 = vadd.f32 %v3180, %v3292
        %3294 = vmatmul.f32.gmra.mxu0 %v2140
        %v3295 = vpop.f32.mrf.mxu0
        %v3296 = vadd.f32 %v3183, %v3295
        %3297 = vmatmul.f32.gmra.mxu0 %v2141
        %v3298 = vpop.f32.mrf.mxu0
        %v3299 = vadd.f32 %v3186, %v3298
        %3300 = vmatmul.f32.gmra.mxu0 %v2142
        %v3301 = vpop.f32.mrf.mxu0
        %v3302 = vadd.f32 %v3189, %v3301
        %3303 = vmatmul.f32.gmra.mxu0 %v2143
        %v3304 = vpop.f32.mrf.mxu0
        %v3305 = vadd.f32 %v3192, %v3304
        %3306 = vmatmul.f32.gmra.mxu0 %v2144
        %v3307 = vpop.f32.mrf.mxu0
        %v3308 = vadd.f32 %v3195, %v3307
        %3309 = vdwg.mxu0
        %3310 = vmatpush.msra.mxu0 %v2695
        %3311 = vmatpush.msra.mxu0 %v2694
        %3312 = vmatpush.msra.mxu0 %v2693
        %3313 = vmatpush.msra.mxu0 %v2692
        %3314 = vmatpush.msra.mxu0 %v2691
        %3315 = vmatpush.msra.mxu0 %v2690
        %3316 = vmatpush.msra.mxu0 %v2689
        %3317 = vmatpush.msra.mxu0 %v2688
        %3318 = vmatpush.msra.mxu0 %v2687
        %3319 = vmatpush.msra.mxu0 %v2686
        %3320 = vmatpush.msra.mxu0 %v2685
        %3321 = vmatpush.msra.mxu0 %v2684
        %3322 = vmatpush.msra.mxu0 %v2683
        %3323 = vmatpush.msra.mxu0 %v2682
        %3324 = vmatpush.msra.mxu0 %v2681
        %3325 = vmatpush.msra.mxu0 %v2680
        %3326 = vmatmul.f32.gmra.mxu0 %v2541
        %v3327 = vpop.f32.mrf.mxu0
        %v3328 = vadd.f32 %v3215, %v3327
        %3329 = vmatmul.f32.gmra.mxu0 %v2544
        %v3330 = vpop.f32.mrf.mxu0
        %v3331 = vadd.f32 %v3218, %v3330
        %3332 = vmatmul.f32.gmra.mxu0 %v2547
        %v3333 = vpop.f32.mrf.mxu0
        %v3334 = vadd.f32 %v3221, %v3333
        %3335 = vmatmul.f32.gmra.mxu0 %v2550
        %v3336 = vpop.f32.mrf.mxu0
        %v3337 = vadd.f32 %v3224, %v3336
        %3338 = vmatmul.f32.gmra.mxu0 %v2553
        %v3339 = vpop.f32.mrf.mxu0
        %v3340 = vadd.f32 %v3227, %v3339
        %3341 = vmatmul.f32.gmra.mxu0 %v2556
        %v3342 = vpop.f32.mrf.mxu0
        %v3343 = vadd.f32 %v3230, %v3342
        %3344 = vmatmul.f32.gmra.mxu0 %v2559
        %v3345 = vpop.f32.mrf.mxu0
        %v3346 = vadd.f32 %v3233, %v3345
        %3347 = vmatmul.f32.gmra.mxu0 %v2562
        %v3348 = vpop.f32.mrf.mxu0
        %v3349 = vadd.f32 %v3236, %v3348
        %3350 = vmatmul.f32.gmra.mxu0 %v2565
        %v3351 = vpop.f32.mrf.mxu0
        %v3352 = vadd.f32 %v3239, %v3351
        %3353 = vmatmul.f32.gmra.mxu0 %v2568
        %v3354 = vpop.f32.mrf.mxu0
        %v3355 = vadd.f32 %v3242, %v3354
        %3356 = vmatmul.f32.gmra.mxu0 %v2571
        %v3357 = vpop.f32.mrf.mxu0
        %v3358 = vadd.f32 %v3245, %v3357
        %3359 = vmatmul.f32.gmra.mxu0 %v2574
        %v3360 = vpop.f32.mrf.mxu0
        %v3361 = vadd.f32 %v3248, %v3360
        %3362 = vmatmul.f32.gmra.mxu0 %v2577
        %v3363 = vpop.f32.mrf.mxu0
        %v3364 = vadd.f32 %v3251, %v3363
        %3365 = vmatmul.f32.gmra.mxu0 %v2580
        %v3366 = vpop.f32.mrf.mxu0
        %v3367 = vadd.f32 %v3254, %v3366
        %3368 = vmatmul.f32.gmra.mxu0 %v2583
        %v3369 = vpop.f32.mrf.mxu0
        %v3370 = vadd.f32 %v3257, %v3369
        %3371 = vmatmul.f32.gmra.mxu0 %v2586
        %v3372 = vpop.f32.mrf.mxu0
        %v3373 = vadd.f32 %v3260, %v3372
        %3374 = vmatmul.f32.gmra.mxu0 %v2589
        %v3375 = vpop.f32.mrf.mxu0
        %v3376 = vadd.f32 %v3263, %v3375
        %3377 = vmatmul.f32.gmra.mxu0 %v2592
        %v3378 = vpop.f32.mrf.mxu0
        %v3379 = vadd.f32 %v3266, %v3378
        %3380 = vmatmul.f32.gmra.mxu0 %v2595
        %v3381 = vpop.f32.mrf.mxu0
        %v3382 = vadd.f32 %v3269, %v3381
        %3383 = vmatmul.f32.gmra.mxu0 %v2598
        %v3384 = vpop.f32.mrf.mxu0
        %v3385 = vadd.f32 %v3272, %v3384
        %3386 = vmatmul.f32.gmra.mxu0 %v2601
        %v3387 = vpop.f32.mrf.mxu0
        %v3388 = vadd.f32 %v3275, %v3387
        %3389 = vmatmul.f32.gmra.mxu0 %v2604
        %v3390 = vpop.f32.mrf.mxu0
        %v3391 = vadd.f32 %v3278, %v3390
        %3392 = vmatmul.f32.gmra.mxu0 %v2607
        %v3393 = vpop.f32.mrf.mxu0
        %v3394 = vadd.f32 %v3281, %v3393
        %3395 = vmatmul.f32.gmra.mxu0 %v2610
        %v3396 = vpop.f32.mrf.mxu0
        %v3397 = vadd.f32 %v3284, %v3396
        %3398 = vmatmul.f32.gmra.mxu0 %v2613
        %v3399 = vpop.f32.mrf.mxu0
        %v3400 = vadd.f32 %v3287, %v3399
        %3401 = vmatmul.f32.gmra.mxu0 %v2616
        %v3402 = vpop.f32.mrf.mxu0
        %v3403 = vadd.f32 %v3290, %v3402
        %3404 = vmatmul.f32.gmra.mxu0 %v2619
        %v3405 = vpop.f32.mrf.mxu0
        %v3406 = vadd.f32 %v3293, %v3405
        %3407 = vmatmul.f32.gmra.mxu0 %v2622
        %v3408 = vpop.f32.mrf.mxu0
        %v3409 = vadd.f32 %v3296, %v3408
        %3410 = vmatmul.f32.gmra.mxu0 %v2625
        %v3411 = vpop.f32.mrf.mxu0
        %v3412 = vadd.f32 %v3299, %v3411
        %3413 = vmatmul.f32.gmra.mxu0 %v2628
        %v3414 = vpop.f32.mrf.mxu0
        %v3415 = vadd.f32 %v3302, %v3414
        %3416 = vmatmul.f32.gmra.mxu0 %v2631
        %v3417 = vpop.f32.mrf.mxu0
        %v3418 = vadd.f32 %v3305, %v3417
        %3419 = vmatmul.f32.gmra.mxu0 %v2634
        %v3420 = vpop.f32.mrf.mxu0
        %v3421 = vadd.f32 %v3308, %v3420
        %3422 = vdwg.mxu0
        %s3423 = scalar_lea.vmem [#allocation10], 768
        %v3424 = vld [vmem:[%s3423] sm:$0xff]
        %v3425 = vld [vmem:[%s3423 + $0x8] sm:$0xff]
        %v3426 = vld [vmem:[%s3423 + $0x10] sm:$0xff]
        %v3427 = vld [vmem:[%s3423 + $0x18] sm:$0xff]
        %v3428 = vld [vmem:[%s3423 + $0x20] sm:$0xff]
        %v3429 = vld [vmem:[%s3423 + $0x28] sm:$0xff]
        %v3430 = vld [vmem:[%s3423 + $0x30] sm:$0xff]
        %v3431 = vld [vmem:[%s3423 + $0x38] sm:$0xff]
        %v3432 = vld [vmem:[%s3423 + $0x40] sm:$0xff]
        %v3433 = vld [vmem:[%s3423 + $0x48] sm:$0xff]
        %v3434 = vld [vmem:[%s3423 + $0x50] sm:$0xff]
        %v3435 = vld [vmem:[%s3423 + $0x58] sm:$0xff]
        %v3436 = vld [vmem:[%s3423 + $0x60] sm:$0xff]
        %v3437 = vld [vmem:[%s3423 + $0x68] sm:$0xff]
        %v3438 = vld [vmem:[%s3423 + $0x70] sm:$0xff]
        %v3439 = vld [vmem:[%s3423 + $0x78] sm:$0xff]
        %v3440 = vld [vmem:[%s3423 + $0x80] sm:$0xff]
        %v3441 = vld [vmem:[%s3423 + $0x88] sm:$0xff]
        %v3442 = vld [vmem:[%s3423 + $0x90] sm:$0xff]
        %v3443 = vld [vmem:[%s3423 + $0x98] sm:$0xff]
        %v3444 = vld [vmem:[%s3423 + $0xa0] sm:$0xff]
        %v3445 = vld [vmem:[%s3423 + $0xa8] sm:$0xff]
        %v3446 = vld [vmem:[%s3423 + $0xb0] sm:$0xff]
        %v3447 = vld [vmem:[%s3423 + $0xb8] sm:$0xff]
        %v3448 = vld [vmem:[%s3423 + $0xc0] sm:$0xff]
        %v3449 = vld [vmem:[%s3423 + $0xc8] sm:$0xff]
        %v3450 = vld [vmem:[%s3423 + $0xd0] sm:$0xff]
        %v3451 = vld [vmem:[%s3423 + $0xd8] sm:$0xff]
        %v3452 = vld [vmem:[%s3423 + $0xe0] sm:$0xff]
        %v3453 = vld [vmem:[%s3423 + $0xe8] sm:$0xff]
        %v3454 = vld [vmem:[%s3423 + $0xf0] sm:$0xff]
        %v3455 = vld [vmem:[%s3423 + $0xf8] sm:$0xff]
        %v3456 = vld [vmem:[%s3423 + $0x100] sm:$0xff]
        %v3457 = vld [vmem:[%s3423 + $0x108] sm:$0xff]
        %v3458 = vld [vmem:[%s3423 + $0x110] sm:$0xff]
        %v3459 = vld [vmem:[%s3423 + $0x118] sm:$0xff]
        %v3460 = vld [vmem:[%s3423 + $0x120] sm:$0xff]
        %v3461 = vld [vmem:[%s3423 + $0x128] sm:$0xff]
        %v3462 = vld [vmem:[%s3423 + $0x130] sm:$0xff]
        %v3463 = vld [vmem:[%s3423 + $0x138] sm:$0xff]
        %v3464 = vld [vmem:[%s3423 + $0x140] sm:$0xff]
        %v3465 = vld [vmem:[%s3423 + $0x148] sm:$0xff]
        %v3466 = vld [vmem:[%s3423 + $0x150] sm:$0xff]
        %v3467 = vld [vmem:[%s3423 + $0x158] sm:$0xff]
        %v3468 = vld [vmem:[%s3423 + $0x160] sm:$0xff]
        %v3469 = vld [vmem:[%s3423 + $0x168] sm:$0xff]
        %v3470 = vld [vmem:[%s3423 + $0x170] sm:$0xff]
        %v3471 = vld [vmem:[%s3423 + $0x178] sm:$0xff]
        %3472 = vmatpush.msra.mxu0 %v3439
        %3473 = vmatpush.msra.mxu0 %v3438
        %3474 = vmatpush.msra.mxu0 %v3437
        %3475 = vmatpush.msra.mxu0 %v3436
        %3476 = vmatpush.msra.mxu0 %v3435
        %3477 = vmatpush.msra.mxu0 %v3434
        %3478 = vmatpush.msra.mxu0 %v3433
        %3479 = vmatpush.msra.mxu0 %v3432
        %3480 = vmatpush.msra.mxu0 %v3431
        %3481 = vmatpush.msra.mxu0 %v3430
        %3482 = vmatpush.msra.mxu0 %v3429
        %3483 = vmatpush.msra.mxu0 %v3428
        %3484 = vmatpush.msra.mxu0 %v3427
        %3485 = vmatpush.msra.mxu0 %v3426
        %3486 = vmatpush.msra.mxu0 %v3425
        %3487 = vmatpush.msra.mxu0 %v3424
        %3488 = vmatmul.f32.gmra.mxu0 %v2303
        %v3489 = vpop.f32.mrf.mxu0
        %v3490 = vadd.f32 0.0, %v3489
        %3491 = vmatmul.f32.gmra.mxu0 %v2306
        %v3492 = vpop.f32.mrf.mxu0
        %v3493 = vadd.f32 0.0, %v3492
        %3494 = vmatmul.f32.gmra.mxu0 %v2309
        %v3495 = vpop.f32.mrf.mxu0
        %v3496 = vadd.f32 0.0, %v3495
        %3497 = vmatmul.f32.gmra.mxu0 %v2312
        %v3498 = vpop.f32.mrf.mxu0
        %v3499 = vadd.f32 0.0, %v3498
        %3500 = vmatmul.f32.gmra.mxu0 %v2315
        %v3501 = vpop.f32.mrf.mxu0
        %v3502 = vadd.f32 0.0, %v3501
        %3503 = vmatmul.f32.gmra.mxu0 %v2318
        %v3504 = vpop.f32.mrf.mxu0
        %v3505 = vadd.f32 0.0, %v3504
        %3506 = vmatmul.f32.gmra.mxu0 %v2321
        %v3507 = vpop.f32.mrf.mxu0
        %v3508 = vadd.f32 0.0, %v3507
        %3509 = vmatmul.f32.gmra.mxu0 %v2324
        %v3510 = vpop.f32.mrf.mxu0
        %v3511 = vadd.f32 0.0, %v3510
        %3512 = vmatmul.f32.gmra.mxu0 %v2327
        %v3513 = vpop.f32.mrf.mxu0
        %v3514 = vadd.f32 0.0, %v3513
        %3515 = vmatmul.f32.gmra.mxu0 %v2330
        %v3516 = vpop.f32.mrf.mxu0
        %v3517 = vadd.f32 0.0, %v3516
        %3518 = vmatmul.f32.gmra.mxu0 %v2333
        %v3519 = vpop.f32.mrf.mxu0
        %v3520 = vadd.f32 0.0, %v3519
        %3521 = vmatmul.f32.gmra.mxu0 %v2336
        %v3522 = vpop.f32.mrf.mxu0
        %v3523 = vadd.f32 0.0, %v3522
        %3524 = vmatmul.f32.gmra.mxu0 %v2339
        %v3525 = vpop.f32.mrf.mxu0
        %v3526 = vadd.f32 0.0, %v3525
        %3527 = vmatmul.f32.gmra.mxu0 %v2342
        %v3528 = vpop.f32.mrf.mxu0
        %v3529 = vadd.f32 0.0, %v3528
        %3530 = vmatmul.f32.gmra.mxu0 %v2345
        %v3531 = vpop.f32.mrf.mxu0
        %v3532 = vadd.f32 0.0, %v3531
        %3533 = vmatmul.f32.gmra.mxu0 %v2348
        %v3534 = vpop.f32.mrf.mxu0
        %v3535 = vadd.f32 0.0, %v3534
        %3536 = vmatmul.f32.gmra.mxu0 %v2351
        %v3537 = vpop.f32.mrf.mxu0
        %v3538 = vadd.f32 0.0, %v3537
        %3539 = vmatmul.f32.gmra.mxu0 %v2354
        %v3540 = vpop.f32.mrf.mxu0
        %v3541 = vadd.f32 0.0, %v3540
        %3542 = vmatmul.f32.gmra.mxu0 %v2357
        %v3543 = vpop.f32.mrf.mxu0
        %v3544 = vadd.f32 0.0, %v3543
        %3545 = vmatmul.f32.gmra.mxu0 %v2360
        %v3546 = vpop.f32.mrf.mxu0
        %v3547 = vadd.f32 0.0, %v3546
        %3548 = vmatmul.f32.gmra.mxu0 %v2363
        %v3549 = vpop.f32.mrf.mxu0
        %v3550 = vadd.f32 0.0, %v3549
        %3551 = vmatmul.f32.gmra.mxu0 %v2366
        %v3552 = vpop.f32.mrf.mxu0
        %v3553 = vadd.f32 0.0, %v3552
        %3554 = vmatmul.f32.gmra.mxu0 %v2369
        %v3555 = vpop.f32.mrf.mxu0
        %v3556 = vadd.f32 0.0, %v3555
        %3557 = vmatmul.f32.gmra.mxu0 %v2372
        %v3558 = vpop.f32.mrf.mxu0
        %v3559 = vadd.f32 0.0, %v3558
        %3560 = vmatmul.f32.gmra.mxu0 %v2375
        %v3561 = vpop.f32.mrf.mxu0
        %v3562 = vadd.f32 0.0, %v3561
        %3563 = vmatmul.f32.gmra.mxu0 %v2378
        %v3564 = vpop.f32.mrf.mxu0
        %v3565 = vadd.f32 0.0, %v3564
        %3566 = vmatmul.f32.gmra.mxu0 %v2381
        %v3567 = vpop.f32.mrf.mxu0
        %v3568 = vadd.f32 0.0, %v3567
        %3569 = vmatmul.f32.gmra.mxu0 %v2384
        %v3570 = vpop.f32.mrf.mxu0
        %v3571 = vadd.f32 0.0, %v3570
        %3572 = vmatmul.f32.gmra.mxu0 %v2387
        %v3573 = vpop.f32.mrf.mxu0
        %v3574 = vadd.f32 0.0, %v3573
        %3575 = vmatmul.f32.gmra.mxu0 %v2390
        %v3576 = vpop.f32.mrf.mxu0
        %v3577 = vadd.f32 0.0, %v3576
        %3578 = vmatmul.f32.gmra.mxu0 %v2393
        %v3579 = vpop.f32.mrf.mxu0
        %v3580 = vadd.f32 0.0, %v3579
        %3581 = vmatmul.f32.gmra.mxu0 %v2396
        %v3582 = vpop.f32.mrf.mxu0
        %v3583 = vadd.f32 0.0, %v3582
        %3584 = vdwg.mxu0
        %3585 = vmatpush.msra.mxu0 %v3455
        %3586 = vmatpush.msra.mxu0 %v3454
        %3587 = vmatpush.msra.mxu0 %v3453
        %3588 = vmatpush.msra.mxu0 %v3452
        %3589 = vmatpush.msra.mxu0 %v3451
        %3590 = vmatpush.msra.mxu0 %v3450
        %3591 = vmatpush.msra.mxu0 %v3449
        %3592 = vmatpush.msra.mxu0 %v3448
        %3593 = vmatpush.msra.mxu0 %v3447
        %3594 = vmatpush.msra.mxu0 %v3446
        %3595 = vmatpush.msra.mxu0 %v3445
        %3596 = vmatpush.msra.mxu0 %v3444
        %3597 = vmatpush.msra.mxu0 %v3443
        %3598 = vmatpush.msra.mxu0 %v3442
        %3599 = vmatpush.msra.mxu0 %v3441
        %3600 = vmatpush.msra.mxu0 %v3440
        %3601 = vmatmul.f32.gmra.mxu0 %v2117
        %v3602 = vpop.f32.mrf.mxu0
        %v3603 = vadd.f32 %v3490, %v3602
        %3604 = vmatmul.f32.gmra.mxu0 %v2118
        %v3605 = vpop.f32.mrf.mxu0
        %v3606 = vadd.f32 %v3493, %v3605
        %3607 = vmatmul.f32.gmra.mxu0 %v2119
        %v3608 = vpop.f32.mrf.mxu0
        %v3609 = vadd.f32 %v3496, %v3608
        %3610 = vmatmul.f32.gmra.mxu0 %v2120
        %v3611 = vpop.f32.mrf.mxu0
        %v3612 = vadd.f32 %v3499, %v3611
        %3613 = vmatmul.f32.gmra.mxu0 %v2121
        %v3614 = vpop.f32.mrf.mxu0
        %v3615 = vadd.f32 %v3502, %v3614
        %3616 = vmatmul.f32.gmra.mxu0 %v2122
        %v3617 = vpop.f32.mrf.mxu0
        %v3618 = vadd.f32 %v3505, %v3617
        %3619 = vmatmul.f32.gmra.mxu0 %v2123
        %v3620 = vpop.f32.mrf.mxu0
        %v3621 = vadd.f32 %v3508, %v3620
        %3622 = vmatmul.f32.gmra.mxu0 %v2124
        %v3623 = vpop.f32.mrf.mxu0
        %v3624 = vadd.f32 %v3511, %v3623
        %3625 = vmatmul.f32.gmra.mxu0 %v2125
        %v3626 = vpop.f32.mrf.mxu0
        %v3627 = vadd.f32 %v3514, %v3626
        %3628 = vmatmul.f32.gmra.mxu0 %v2126
        %v3629 = vpop.f32.mrf.mxu0
        %v3630 = vadd.f32 %v3517, %v3629
        %3631 = vmatmul.f32.gmra.mxu0 %v2127
        %v3632 = vpop.f32.mrf.mxu0
        %v3633 = vadd.f32 %v3520, %v3632
        %3634 = vmatmul.f32.gmra.mxu0 %v2128
        %v3635 = vpop.f32.mrf.mxu0
        %v3636 = vadd.f32 %v3523, %v3635
        %3637 = vmatmul.f32.gmra.mxu0 %v2129
        %v3638 = vpop.f32.mrf.mxu0
        %v3639 = vadd.f32 %v3526, %v3638
        %3640 = vmatmul.f32.gmra.mxu0 %v2130
        %v3641 = vpop.f32.mrf.mxu0
        %v3642 = vadd.f32 %v3529, %v3641
        %3643 = vmatmul.f32.gmra.mxu0 %v2131
        %v3644 = vpop.f32.mrf.mxu0
        %v3645 = vadd.f32 %v3532, %v3644
        %3646 = vmatmul.f32.gmra.mxu0 %v2132
        %v3647 = vpop.f32.mrf.mxu0
        %v3648 = vadd.f32 %v3535, %v3647
        %3649 = vmatmul.f32.gmra.mxu0 %v2133
        %v3650 = vpop.f32.mrf.mxu0
        %v3651 = vadd.f32 %v3538, %v3650
        %3652 = vmatmul.f32.gmra.mxu0 %v2134
        %v3653 = vpop.f32.mrf.mxu0
        %v3654 = vadd.f32 %v3541, %v3653
        %3655 = vmatmul.f32.gmra.mxu0 %v2135
        %v3656 = vpop.f32.mrf.mxu0
        %v3657 = vadd.f32 %v3544, %v3656
        %3658 = vmatmul.f32.gmra.mxu0 %v2136
        %v3659 = vpop.f32.mrf.mxu0
        %v3660 = vadd.f32 %v3547, %v3659
        %3661 = vmatmul.f32.gmra.mxu0 %v2137
        %v3662 = vpop.f32.mrf.mxu0
        %v3663 = vadd.f32 %v3550, %v3662
        %3664 = vmatmul.f32.gmra.mxu0 %v2138
        %v3665 = vpop.f32.mrf.mxu0
        %v3666 = vadd.f32 %v3553, %v3665
        %3667 = vmatmul.f32.gmra.mxu0 %v2139
        %v3668 = vpop.f32.mrf.mxu0
        %v3669 = vadd.f32 %v3556, %v3668
        %3670 = vmatmul.f32.gmra.mxu0 %v2140
        %v3671 = vpop.f32.mrf.mxu0
        %v3672 = vadd.f32 %v3559, %v3671
        %3673 = vmatmul.f32.gmra.mxu0 %v2141
        %v3674 = vpop.f32.mrf.mxu0
        %v3675 = vadd.f32 %v3562, %v3674
        %3676 = vmatmul.f32.gmra.mxu0 %v2142
        %v3677 = vpop.f32.mrf.mxu0
        %v3678 = vadd.f32 %v3565, %v3677
        %3679 = vmatmul.f32.gmra.mxu0 %v2143
        %v3680 = vpop.f32.mrf.mxu0
        %v3681 = vadd.f32 %v3568, %v3680
        %3682 = vmatmul.f32.gmra.mxu0 %v2144
        %v3683 = vpop.f32.mrf.mxu0
        %v3684 = vadd.f32 %v3571, %v3683
        %3685 = vmatmul.f32.gmra.mxu0 %v2145
        %v3686 = vpop.f32.mrf.mxu0
        %v3687 = vadd.f32 %v3574, %v3686
        %3688 = vmatmul.f32.gmra.mxu0 %v2146
        %v3689 = vpop.f32.mrf.mxu0
        %v3690 = vadd.f32 %v3577, %v3689
        %3691 = vmatmul.f32.gmra.mxu0 0.0
        %v3692 = vpop.f32.mrf.mxu0
        %v3693 = vadd.f32 %v3580, %v3692
        %3694 = vmatmul.f32.gmra.mxu0 0.0
        %v3695 = vpop.f32.mrf.mxu0
        %v3696 = vadd.f32 %v3583, %v3695
        %3697 = vdwg.mxu0
        %3698 = vmatpush.msra.mxu0 %v3471
        %3699 = vmatpush.msra.mxu0 %v3470
        %3700 = vmatpush.msra.mxu0 %v3469
        %3701 = vmatpush.msra.mxu0 %v3468
        %3702 = vmatpush.msra.mxu0 %v3467
        %3703 = vmatpush.msra.mxu0 %v3466
        %3704 = vmatpush.msra.mxu0 %v3465
        %3705 = vmatpush.msra.mxu0 %v3464
        %3706 = vmatpush.msra.mxu0 %v3463
        %3707 = vmatpush.msra.mxu0 %v3462
        %3708 = vmatpush.msra.mxu0 %v3461
        %3709 = vmatpush.msra.mxu0 %v3460
        %3710 = vmatpush.msra.mxu0 %v3459
        %3711 = vmatpush.msra.mxu0 %v3458
        %3712 = vmatpush.msra.mxu0 %v3457
        %3713 = vmatpush.msra.mxu0 %v3456
        %3714 = vmatmul.f32.gmra.mxu0 %v2553
        %v3715 = vpop.f32.mrf.mxu0
        %v3716 = vadd.f32 %v3603, %v3715
        %3717 = vmatmul.f32.gmra.mxu0 %v2556
        %v3718 = vpop.f32.mrf.mxu0
        %v3719 = vadd.f32 %v3606, %v3718
        %3720 = vmatmul.f32.gmra.mxu0 %v2559
        %v3721 = vpop.f32.mrf.mxu0
        %v3722 = vadd.f32 %v3609, %v3721
        %3723 = vmatmul.f32.gmra.mxu0 %v2562
        %v3724 = vpop.f32.mrf.mxu0
        %v3725 = vadd.f32 %v3612, %v3724
        %3726 = vmatmul.f32.gmra.mxu0 %v2565
        %v3727 = vpop.f32.mrf.mxu0
        %v3728 = vadd.f32 %v3615, %v3727
        %3729 = vmatmul.f32.gmra.mxu0 %v2568
        %v3730 = vpop.f32.mrf.mxu0
        %v3731 = vadd.f32 %v3618, %v3730
        %3732 = vmatmul.f32.gmra.mxu0 %v2571
        %v3733 = vpop.f32.mrf.mxu0
        %v3734 = vadd.f32 %v3621, %v3733
        %3735 = vmatmul.f32.gmra.mxu0 %v2574
        %v3736 = vpop.f32.mrf.mxu0
        %v3737 = vadd.f32 %v3624, %v3736
        %3738 = vmatmul.f32.gmra.mxu0 %v2577
        %v3739 = vpop.f32.mrf.mxu0
        %v3740 = vadd.f32 %v3627, %v3739
        %3741 = vmatmul.f32.gmra.mxu0 %v2580
        %v3742 = vpop.f32.mrf.mxu0
        %v3743 = vadd.f32 %v3630, %v3742
        %3744 = vmatmul.f32.gmra.mxu0 %v2583
        %v3745 = vpop.f32.mrf.mxu0
        %v3746 = vadd.f32 %v3633, %v3745
        %3747 = vmatmul.f32.gmra.mxu0 %v2586
        %v3748 = vpop.f32.mrf.mxu0
        %v3749 = vadd.f32 %v3636, %v3748
        %3750 = vmatmul.f32.gmra.mxu0 %v2589
        %v3751 = vpop.f32.mrf.mxu0
        %v3752 = vadd.f32 %v3639, %v3751
        %3753 = vmatmul.f32.gmra.mxu0 %v2592
        %v3754 = vpop.f32.mrf.mxu0
        %v3755 = vadd.f32 %v3642, %v3754
        %3756 = vmatmul.f32.gmra.mxu0 %v2595
        %v3757 = vpop.f32.mrf.mxu0
        %v3758 = vadd.f32 %v3645, %v3757
        %3759 = vmatmul.f32.gmra.mxu0 %v2598
        %v3760 = vpop.f32.mrf.mxu0
        %v3761 = vadd.f32 %v3648, %v3760
        %3762 = vmatmul.f32.gmra.mxu0 %v2601
        %v3763 = vpop.f32.mrf.mxu0
        %v3764 = vadd.f32 %v3651, %v3763
        %3765 = vmatmul.f32.gmra.mxu0 %v2604
        %v3766 = vpop.f32.mrf.mxu0
        %v3767 = vadd.f32 %v3654, %v3766
        %3768 = vmatmul.f32.gmra.mxu0 %v2607
        %v3769 = vpop.f32.mrf.mxu0
        %v3770 = vadd.f32 %v3657, %v3769
        %3771 = vmatmul.f32.gmra.mxu0 %v2610
        %v3772 = vpop.f32.mrf.mxu0
        %v3773 = vadd.f32 %v3660, %v3772
        %3774 = vmatmul.f32.gmra.mxu0 %v2613
        %v3775 = vpop.f32.mrf.mxu0
        %v3776 = vadd.f32 %v3663, %v3775
        %3777 = vmatmul.f32.gmra.mxu0 %v2616
        %v3778 = vpop.f32.mrf.mxu0
        %v3779 = vadd.f32 %v3666, %v3778
        %3780 = vmatmul.f32.gmra.mxu0 %v2619
        %v3781 = vpop.f32.mrf.mxu0
        %v3782 = vadd.f32 %v3669, %v3781
        %3783 = vmatmul.f32.gmra.mxu0 %v2622
        %v3784 = vpop.f32.mrf.mxu0
        %v3785 = vadd.f32 %v3672, %v3784
        %3786 = vmatmul.f32.gmra.mxu0 %v2625
        %v3787 = vpop.f32.mrf.mxu0
        %v3788 = vadd.f32 %v3675, %v3787
        %3789 = vmatmul.f32.gmra.mxu0 %v2628
        %v3790 = vpop.f32.mrf.mxu0
        %v3791 = vadd.f32 %v3678, %v3790
        %3792 = vmatmul.f32.gmra.mxu0 %v2631
        %v3793 = vpop.f32.mrf.mxu0
        %v3794 = vadd.f32 %v3681, %v3793
        %3795 = vmatmul.f32.gmra.mxu0 %v2634
        %v3796 = vpop.f32.mrf.mxu0
        %v3797 = vadd.f32 %v3684, %v3796
        %3798 = vmatmul.f32.gmra.mxu0 %v2637
        %v3799 = vpop.f32.mrf.mxu0
        %v3800 = vadd.f32 %v3687, %v3799
        %3801 = vmatmul.f32.gmra.mxu0 %v2640
        %v3802 = vpop.f32.mrf.mxu0
        %v3803 = vadd.f32 %v3690, %v3802
        %3804 = vmatmul.f32.gmra.mxu0 %v2643
        %v3805 = vpop.f32.mrf.mxu0
        %v3806 = vadd.f32 %v3693, %v3805
        %3807 = vmatmul.f32.gmra.mxu0 %v2646
        %v3808 = vpop.f32.mrf.mxu0
        %v3809 = vadd.f32 %v3696, %v3808
        %3810 = vdwg.mxu0
        %v3811 = vadd.f32 %v3328, %v3716
        %v3812 = vadd.f32 %v3331, %v3719
        %v3813 = vadd.f32 %v3334, %v3722
        %v3814 = vadd.f32 %v3337, %v3725
        %v3815 = vadd.f32 %v3340, %v3728
        %v3816 = vadd.f32 %v3343, %v3731
        %v3817 = vadd.f32 %v3346, %v3734
        %v3818 = vadd.f32 %v3349, %v3737
        %v3819 = vadd.f32 %v3352, %v3740
        %v3820 = vadd.f32 %v3355, %v3743
        %v3821 = vadd.f32 %v3358, %v3746
        %v3822 = vadd.f32 %v3361, %v3749
        %v3823 = vadd.f32 %v3364, %v3752
        %v3824 = vadd.f32 %v3367, %v3755
        %v3825 = vadd.f32 %v3370, %v3758
        %v3826 = vadd.f32 %v3373, %v3761
        %v3827 = vadd.f32 %v3376, %v3764
        %v3828 = vadd.f32 %v3379, %v3767
        %v3829 = vadd.f32 %v3382, %v3770
        %v3830 = vadd.f32 %v3385, %v3773
        %v3831 = vadd.f32 %v3388, %v3776
        %v3832 = vadd.f32 %v3391, %v3779
        %v3833 = vadd.f32 %v3394, %v3782
        %v3834 = vadd.f32 %v3397, %v3785
        %v3835 = vadd.f32 %v3400, %v3788
        %v3836 = vadd.f32 %v3403, %v3791
        %v3837 = vadd.f32 %v3406, %v3794
        %v3838 = vadd.f32 %v3409, %v3797
        %v3839 = vadd.f32 %v3412, %v3800
        %v3840 = vadd.f32 %v3415, %v3803
        %v3841 = vadd.f32 %v3418, %v3806
        %v3842 = vadd.f32 %v3421, %v3809
        %v3844 = vperm.slane %v2147, 0
        %v3846 = vadd.f32 %v3811, %v3844
        %v3847 = vadd.f32 %v3812, %v3844
        %v3848 = vadd.f32 %v3813, %v3844
        %v3849 = vadd.f32 %v3814, %v3844
        %v3850 = vadd.f32 %v3815, %v3844
        %v3851 = vadd.f32 %v3816, %v3844
        %v3852 = vadd.f32 %v3817, %v3844
        %v3853 = vadd.f32 %v3818, %v3844
        %v3854 = vadd.f32 %v3819, %v3844
        %v3855 = vadd.f32 %v3820, %v3844
        %v3856 = vadd.f32 %v3821, %v3844
        %v3857 = vadd.f32 %v3822, %v3844
        %v3858 = vadd.f32 %v3823, %v3844
        %v3859 = vadd.f32 %v3824, %v3844
        %v3860 = vadd.f32 %v3825, %v3844
        %v3861 = vadd.f32 %v3826, %v3844
        %v3862 = vadd.f32 %v3827, %v3844
        %v3863 = vadd.f32 %v3828, %v3844
        %v3864 = vadd.f32 %v3829, %v3844
        %v3865 = vadd.f32 %v3830, %v3844
        %v3866 = vadd.f32 %v3831, %v3844
        %v3867 = vadd.f32 %v3832, %v3844
        %v3868 = vadd.f32 %v3833, %v3844
        %v3869 = vadd.f32 %v3834, %v3844
        %v3870 = vadd.f32 %v3835, %v3844
        %v3871 = vadd.f32 %v3836, %v3844
        %v3872 = vadd.f32 %v3837, %v3844
        %v3873 = vadd.f32 %v3838, %v3844
        %v3874 = vadd.f32 %v3839, %v3844
        %v3875 = vadd.f32 %v3840, %v3844
        %v3876 = vadd.f32 %v3841, %v3844
        %v3877 = vadd.f32 %v3842, %v3844
        %v3878 = vld [vmem:[%s882] sm:$0x1]
        %v3879 = vxor.u32 %v3878, 2147483648
        %v3880 = vmul.f32 %v3879, 1.442695
        %v3881 = vpow.pop %v3880
        %v3882 = vadd.f32 %v3881, 1.0
        %v3883 = vrcp.pop %v3882
        %v3884 = vmul.f32 %v3882, %v3883
        %v3885 = vsub.f32 1.0, %v3884
        %v3886 = vmul.f32 %v3883, %v3885
        %v3887 = vadd.f32 %v3883, %v3886
        %vm3888 = vweird.f32 %v3882
        %vm3889 = vweird.f32 %v3883
        %vm3890 = vmor %vm3888, %vm3889
        %v3891 = vsel %vm3890, %v3883, %v3887
        %v3892 = vand.u32 2147483647, %v3882
        %vm3893 = vcmp.eq.f32.partialorder %v3892, 8.507059e+37
        %v3894 = vand.u32 %v3882, 2147483648
        %v3895 = vor.u32 1.1754944e-38, %v3894
        %v3896 = vsel %vm3893, %v3895, %v3891
        %v3897 = vmul.f32 1.0, %v3896
        %v3898 = vmul.f32 %v3878, %v3897
        %v3899 = vld [vmem:[#allocation13] sm:$0xff]
        %v3900 = vld [vmem:[#allocation13 + $0x8] sm:$0xff]
        %v3901 = vld [vmem:[#allocation13 + $0x10] sm:$0xff]
        %v3902 = vld [vmem:[#allocation13 + $0x18] sm:$0xff]
        %v3903 = vld [vmem:[%s9] sm:$0x1]
        %vm3904 = vcmask 261120
        %v3906 = vsel %vm3904, %v3898, 0
        %3908 = vmatpush.msra.mxu0 0.0
        %3909 = vmatpush.msra.mxu0 0.0
        %3910 = vmatpush.msra.mxu0 0.0
        %3911 = vmatpush.msra.mxu0 0.0
        %3912 = vmatpush.msra.mxu0 0.0
        %3913 = vmatpush.msra.mxu0 0.0
        %3914 = vmatpush.msra.mxu0 0.0
        %3915 = vmatpush.msra.mxu0 0.0
        %3916 = vmatpush.msra.mxu0 0.0
        %3917 = vmatpush.msra.mxu0 0.0
        %3918 = vmatpush.msra.mxu0 0.0
        %3919 = vmatpush.msra.mxu0 0.0
        %3920 = vmatpush.msra.mxu0 %v3902
        %3921 = vmatpush.msra.mxu0 %v3901
        %3922 = vmatpush.msra.mxu0 %v3900
        %3923 = vmatpush.msra.mxu0 %v3899
        %3924 = vmatmul.f32.gmra.mxu0 %v3906
        %v3925 = vpop.f32.mrf.mxu0
        %v3926 = vadd.f32 %v3903, %v3925
        %3927 = vdwg.mxu0
        %v3928 = vperm.slane %v3926, 0
        %v3929 = vadd.f32 %v3846, %v3928
        %v3930 = vadd.f32 %v3847, %v3928
        %v3931 = vadd.f32 %v3848, %v3928
        %v3932 = vadd.f32 %v3849, %v3928
        %v3933 = vadd.f32 %v3850, %v3928
        %v3934 = vadd.f32 %v3851, %v3928
        %v3935 = vadd.f32 %v3852, %v3928
        %v3936 = vadd.f32 %v3853, %v3928
        %v3937 = vadd.f32 %v3854, %v3928
        %v3938 = vadd.f32 %v3855, %v3928
        %v3939 = vadd.f32 %v3856, %v3928
        %v3940 = vadd.f32 %v3857, %v3928
        %v3941 = vadd.f32 %v3858, %v3928
        %v3942 = vadd.f32 %v3859, %v3928
        %v3943 = vadd.f32 %v3860, %v3928
        %v3944 = vadd.f32 %v3861, %v3928
        %v3945 = vadd.f32 %v3862, %v3928
        %v3946 = vadd.f32 %v3863, %v3928
        %v3947 = vadd.f32 %v3864, %v3928
        %v3948 = vadd.f32 %v3865, %v3928
        %v3949 = vadd.f32 %v3866, %v3928
        %v3950 = vadd.f32 %v3867, %v3928
        %v3951 = vadd.f32 %v3868, %v3928
        %v3952 = vadd.f32 %v3869, %v3928
        %v3953 = vadd.f32 %v3870, %v3928
        %v3954 = vadd.f32 %v3871, %v3928
        %v3955 = vadd.f32 %v3872, %v3928
        %v3956 = vadd.f32 %v3873, %v3928
        %v3957 = vadd.f32 %v3874, %v3928
        %v3958 = vadd.f32 %v3875, %v3928
        %v3959 = vadd.f32 %v3876, %v3928
        %v3960 = vadd.f32 %v3877, %v3928
        %v3961 = vld [vmem:[%s10] sm:$0x1]
        %v3962 = vld [vmem:[%s11] sm:$0x1]
        %v3963 = vld [vmem:[%s12] sm:$0xff]
        %v3964 = vld [vmem:[%s12 + $0x8] sm:$0xff]
        %v3965 = vld [vmem:[%s12 + $0x10] sm:$0xff]
        %v3966 = vld [vmem:[%s12 + $0x18] sm:$0xff]
        %v3967 = vld [vmem:[%s12 + $0x20] sm:$0xff]
        %v3968 = vld [vmem:[%s12 + $0x28] sm:$0xff]
        %v3969 = vld [vmem:[%s12 + $0x30] sm:$0xff]
        %v3970 = vld [vmem:[%s12 + $0x38] sm:$0xff]
        %v3971 = vld [vmem:[%s12 + $0x40] sm:$0xff]
        %v3972 = vld [vmem:[%s12 + $0x48] sm:$0xff]
        %v3973 = vld [vmem:[%s12 + $0x50] sm:$0xff]
        %v3974 = vld [vmem:[%s12 + $0x58] sm:$0xff]
        %v3975 = vld [vmem:[%s12 + $0x60] sm:$0xff]
        %v3976 = vld [vmem:[%s12 + $0x68] sm:$0xff]
        %v3977 = vld [vmem:[%s12 + $0x70] sm:$0xff]
        %v3978 = vld [vmem:[%s12 + $0x78] sm:$0xff]
        %v3979 = vld [vmem:[#allocation14] sm:$0xff]
        %v3980 = vld [vmem:[#allocation14 + $0x8] sm:$0xff]
        %v3981 = vadd.f32 %v3929, %v3930
        %v3982 = vadd.f32 %v3981, %v3931
        %v3983 = vadd.f32 %v3982, %v3932
        %v3984 = vadd.f32 %v3983, %v3933
        %v3985 = vadd.f32 %v3984, %v3934
        %v3986 = vadd.f32 %v3985, %v3935
        %v3987 = vadd.f32 %v3986, %v3936
        %v3988 = vadd.f32 %v3987, %v3937
        %v3989 = vadd.f32 %v3988, %v3938
        %v3990 = vadd.f32 %v3989, %v3939
        %v3991 = vadd.f32 %v3990, %v3940
        %v3992 = vadd.f32 %v3991, %v3941
        %v3993 = vadd.f32 %v3992, %v3942
        %v3994 = vadd.f32 %v3993, %v3943
        %v3995 = vadd.f32 %v3994, %v3944
        %v3996 = vadd.f32 %v3995, %v3945
        %v3997 = vadd.f32 %v3996, %v3946
        %v3998 = vadd.f32 %v3997, %v3947
        %v3999 = vadd.f32 %v3998, %v3948
        %v4000 = vadd.f32 %v3999, %v3949
        %v4001 = vadd.f32 %v4000, %v3950
        %v4002 = vadd.f32 %v4001, %v3951
        %v4003 = vadd.f32 %v4002, %v3952
        %v4004 = vadd.f32 %v4003, %v3953
        %v4005 = vadd.f32 %v4004, %v3954
        %v4006 = vadd.f32 %v4005, %v3955
        %v4007 = vadd.f32 %v4006, %v3956
        %v4008 = vadd.f32 %v4007, %v3957
        %v4009 = vadd.f32 %v4008, %v3958
        %v4010 = vadd.f32 %v4009, %v3959
        %v4011 = vadd.f32 %v4010, %v3960
        %v4012 = vrot.slane %v4011, 4
        %v4013 = vadd.f32 %v4011, %v4012
        %v4014 = vrot.slane %v4013, 2
        %v4015 = vadd.f32 %v4013, %v4014
        %v4016 = vrot.slane %v4015, 1
        %v4017 = vadd.f32 %v4015, %v4016
        %4018 = vmatpush.msra.mxu0 %v3978
        %4019 = vmatpush.msra.mxu0 %v3977
        %4020 = vmatpush.msra.mxu0 %v3976
        %4021 = vmatpush.msra.mxu0 %v3975
        %4022 = vmatpush.msra.mxu0 %v3974
        %4023 = vmatpush.msra.mxu0 %v3973
        %4024 = vmatpush.msra.mxu0 %v3972
        %4025 = vmatpush.msra.mxu0 %v3971
        %4026 = vmatpush.msra.mxu0 %v3970
        %4027 = vmatpush.msra.mxu0 %v3969
        %4028 = vmatpush.msra.mxu0 %v3968
        %4029 = vmatpush.msra.mxu0 %v3967
        %4030 = vmatpush.msra.mxu0 %v3966
        %4031 = vmatpush.msra.mxu0 %v3965
        %4032 = vmatpush.msra.mxu0 %v3964
        %4033 = vmatpush.msra.mxu0 %v3963
        %4034 = vmatmul.f32.gmra.mxu0 %v4017
        %v4035 = vpop.f32.mrf.mxu0
        %v4036 = vadd.f32 0.0, %v4035
        %4037 = vdwg.mxu0
        %v4039 = vsel %vm1259, %v4036, 0
        %4041 = vmatpush.msra.mxu0 0.0
        %4042 = vmatpush.msra.mxu0 0.0
        %4043 = vmatpush.msra.mxu0 0.0
        %4044 = vmatpush.msra.mxu0 0.0
        %4045 = vmatpush.msra.mxu0 0.0
        %4046 = vmatpush.msra.mxu0 0.0
        %4047 = vmatpush.msra.mxu0 0.0
        %4048 = vmatpush.msra.mxu0 0.0
        %4049 = vmatpush.msra.mxu0 0.0
        %4050 = vmatpush.msra.mxu0 0.0
        %4051 = vmatpush.msra.mxu0 0.0
        %4052 = vmatpush.msra.mxu0 0.0
        %4053 = vmatpush.msra.mxu0 0.0
        %4054 = vmatpush.msra.mxu0 0.0
        %4055 = vmatpush.msra.mxu0 %v3980
        %4056 = vmatpush.msra.mxu0 %v3979
        %4057 = vmatmul.f32.gmra.mxu0 %v4039
        %v4058 = vpop.f32.mrf.mxu0
        %v4059 = vadd.f32 0.0, %v4058
        %4060 = vdwg.mxu0
        %v4061 = vperm.slane %v4059, 0
        %v4062 = vsub.f32 %v3929, %v4061
        %v4063 = vsub.f32 %v3930, %v4061
        %v4064 = vsub.f32 %v3931, %v4061
        %v4065 = vsub.f32 %v3932, %v4061
        %v4066 = vsub.f32 %v3933, %v4061
        %v4067 = vsub.f32 %v3934, %v4061
        %v4068 = vsub.f32 %v3935, %v4061
        %v4069 = vsub.f32 %v3936, %v4061
        %v4070 = vsub.f32 %v3937, %v4061
        %v4071 = vsub.f32 %v3938, %v4061
        %v4072 = vsub.f32 %v3939, %v4061
        %v4073 = vsub.f32 %v3940, %v4061
        %v4074 = vsub.f32 %v3941, %v4061
        %v4075 = vsub.f32 %v3942, %v4061
        %v4076 = vsub.f32 %v3943, %v4061
        %v4077 = vsub.f32 %v3944, %v4061
        %v4078 = vsub.f32 %v3945, %v4061
        %v4079 = vsub.f32 %v3946, %v4061
        %v4080 = vsub.f32 %v3947, %v4061
        %v4081 = vsub.f32 %v3948, %v4061
        %v4082 = vsub.f32 %v3949, %v4061
        %v4083 = vsub.f32 %v3950, %v4061
        %v4084 = vsub.f32 %v3951, %v4061
        %v4085 = vsub.f32 %v3952, %v4061
        %v4086 = vsub.f32 %v3953, %v4061
        %v4087 = vsub.f32 %v3954, %v4061
        %v4088 = vsub.f32 %v3955, %v4061
        %v4089 = vsub.f32 %v3956, %v4061
        %v4090 = vsub.f32 %v3957, %v4061
        %v4091 = vsub.f32 %v3958, %v4061
        %v4092 = vsub.f32 %v3959, %v4061
        %v4093 = vsub.f32 %v3960, %v4061
        %v4094 = vmul.f32 %v4062, %v4062
        %v4095 = vmul.f32 %v4063, %v4063
        %v4096 = vmul.f32 %v4064, %v4064
        %v4097 = vmul.f32 %v4065, %v4065
        %v4098 = vmul.f32 %v4066, %v4066
        %v4099 = vmul.f32 %v4067, %v4067
        %v4100 = vmul.f32 %v4068, %v4068
        %v4101 = vmul.f32 %v4069, %v4069
        %v4102 = vmul.f32 %v4070, %v4070
        %v4103 = vmul.f32 %v4071, %v4071
        %v4104 = vmul.f32 %v4072, %v4072
        %v4105 = vmul.f32 %v4073, %v4073
        %v4106 = vmul.f32 %v4074, %v4074
        %v4107 = vmul.f32 %v4075, %v4075
        %v4108 = vmul.f32 %v4076, %v4076
        %v4109 = vmul.f32 %v4077, %v4077
        %v4110 = vmul.f32 %v4078, %v4078
        %v4111 = vmul.f32 %v4079, %v4079
        %v4112 = vmul.f32 %v4080, %v4080
        %v4113 = vmul.f32 %v4081, %v4081
        %v4114 = vmul.f32 %v4082, %v4082
        %v4115 = vmul.f32 %v4083, %v4083
        %v4116 = vmul.f32 %v4084, %v4084
        %v4117 = vmul.f32 %v4085, %v4085
        %v4118 = vmul.f32 %v4086, %v4086
        %v4119 = vmul.f32 %v4087, %v4087
        %v4120 = vmul.f32 %v4088, %v4088
        %v4121 = vmul.f32 %v4089, %v4089
        %v4122 = vmul.f32 %v4090, %v4090
        %v4123 = vmul.f32 %v4091, %v4091
        %v4124 = vmul.f32 %v4092, %v4092
        %v4125 = vmul.f32 %v4093, %v4093
        %v4126 = vadd.f32 %v4094, %v4095
        %v4127 = vadd.f32 %v4126, %v4096
        %v4128 = vadd.f32 %v4127, %v4097
        %v4129 = vadd.f32 %v4128, %v4098
        %v4130 = vadd.f32 %v4129, %v4099
        %v4131 = vadd.f32 %v4130, %v4100
        %v4132 = vadd.f32 %v4131, %v4101
        %v4133 = vadd.f32 %v4132, %v4102
        %v4134 = vadd.f32 %v4133, %v4103
        %v4135 = vadd.f32 %v4134, %v4104
        %v4136 = vadd.f32 %v4135, %v4105
        %v4137 = vadd.f32 %v4136, %v4106
        %v4138 = vadd.f32 %v4137, %v4107
        %v4139 = vadd.f32 %v4138, %v4108
        %v4140 = vadd.f32 %v4139, %v4109
        %v4141 = vadd.f32 %v4140, %v4110
        %v4142 = vadd.f32 %v4141, %v4111
        %v4143 = vadd.f32 %v4142, %v4112
        %v4144 = vadd.f32 %v4143, %v4113
        %v4145 = vadd.f32 %v4144, %v4114
        %v4146 = vadd.f32 %v4145, %v4115
        %v4147 = vadd.f32 %v4146, %v4116
        %v4148 = vadd.f32 %v4147, %v4117
        %v4149 = vadd.f32 %v4148, %v4118
        %v4150 = vadd.f32 %v4149, %v4119
        %v4151 = vadd.f32 %v4150, %v4120
        %v4152 = vadd.f32 %v4151, %v4121
        %v4153 = vadd.f32 %v4152, %v4122
        %v4154 = vadd.f32 %v4153, %v4123
        %v4155 = vadd.f32 %v4154, %v4124
        %v4156 = vadd.f32 %v4155, %v4125
        %v4157 = vrot.slane %v4156, 4
        %v4158 = vadd.f32 %v4156, %v4157
        %v4159 = vrot.slane %v4158, 2
        %v4160 = vadd.f32 %v4158, %v4159
        %v4161 = vrot.slane %v4160, 1
        %v4162 = vadd.f32 %v4160, %v4161
        %4163 = vmatpush.msra.mxu0 %v3978
        %4164 = vmatpush.msra.mxu0 %v3977
        %4165 = vmatpush.msra.mxu0 %v3976
        %4166 = vmatpush.msra.mxu0 %v3975
        %4167 = vmatpush.msra.mxu0 %v3974
        %4168 = vmatpush.msra.mxu0 %v3973
        %4169 = vmatpush.msra.mxu0 %v3972
        %4170 = vmatpush.msra.mxu0 %v3971
        %4171 = vmatpush.msra.mxu0 %v3970
        %4172 = vmatpush.msra.mxu0 %v3969
        %4173 = vmatpush.msra.mxu0 %v3968
        %4174 = vmatpush.msra.mxu0 %v3967
        %4175 = vmatpush.msra.mxu0 %v3966
        %4176 = vmatpush.msra.mxu0 %v3965
        %4177 = vmatpush.msra.mxu0 %v3964
        %4178 = vmatpush.msra.mxu0 %v3963
        %4179 = vmatmul.f32.gmra.mxu0 %v4162
        %v4180 = vpop.f32.mrf.mxu0
        %v4181 = vadd.f32 0.0, %v4180
        %4182 = vdwg.mxu0
        %v4184 = vsel %vm1259, %v4181, 0
        %4186 = vmatpush.msra.mxu0 0.0
        %4187 = vmatpush.msra.mxu0 0.0
        %4188 = vmatpush.msra.mxu0 0.0
        %4189 = vmatpush.msra.mxu0 0.0
        %4190 = vmatpush.msra.mxu0 0.0
        %4191 = vmatpush.msra.mxu0 0.0
        %4192 = vmatpush.msra.mxu0 0.0
        %4193 = vmatpush.msra.mxu0 0.0
        %4194 = vmatpush.msra.mxu0 0.0
        %4195 = vmatpush.msra.mxu0 0.0
        %4196 = vmatpush.msra.mxu0 0.0
        %4197 = vmatpush.msra.mxu0 0.0
        %4198 = vmatpush.msra.mxu0 0.0
        %4199 = vmatpush.msra.mxu0 0.0
        %4200 = vmatpush.msra.mxu0 %v3980
        %4201 = vmatpush.msra.mxu0 %v3979
        %4202 = vmatmul.f32.gmra.mxu0 %v4184
        %v4203 = vpop.f32.mrf.mxu0
        %v4204 = vadd.f32 1e-06, %v4203
        %4205 = vdwg.mxu0
        %v4206 = vrsqrt.pop %v4204
        %v4207 = vmul.f32 %v4206, %v4204
        %v4208 = vmul.f32 %v4207, %v4206
        %v4209 = vmul.f32 0.5, %v4208
        %v4210 = vsub.f32 1.5, %v4209
        %v4211 = vmul.f32 %v4206, %v4210
        %vm4212 = vweird.f32 %v4204
        %vm4213 = vweird.f32 %v4206
        %vm4214 = vmor %vm4212, %vm4213
        %v4215 = vsel %vm4214, %v4206, %v4211
        %v4216 = vmul.f32 %v4215, %v3961
        %v4217 = vperm.slane %v4216, 0
        %v4218 = vmul.f32 %v4062, %v4217
        %v4219 = vmul.f32 %v4063, %v4217
        %v4220 = vmul.f32 %v4064, %v4217
        %v4221 = vmul.f32 %v4065, %v4217
        %v4222 = vmul.f32 %v4066, %v4217
        %v4223 = vmul.f32 %v4067, %v4217
        %v4224 = vmul.f32 %v4068, %v4217
        %v4225 = vmul.f32 %v4069, %v4217
        %v4226 = vmul.f32 %v4070, %v4217
        %v4227 = vmul.f32 %v4071, %v4217
        %v4228 = vmul.f32 %v4072, %v4217
        %v4229 = vmul.f32 %v4073, %v4217
        %v4230 = vmul.f32 %v4074, %v4217
        %v4231 = vmul.f32 %v4075, %v4217
        %v4232 = vmul.f32 %v4076, %v4217
        %v4233 = vmul.f32 %v4077, %v4217
        %v4234 = vmul.f32 %v4078, %v4217
        %v4235 = vmul.f32 %v4079, %v4217
        %v4236 = vmul.f32 %v4080, %v4217
        %v4237 = vmul.f32 %v4081, %v4217
        %v4238 = vmul.f32 %v4082, %v4217
        %v4239 = vmul.f32 %v4083, %v4217
        %v4240 = vmul.f32 %v4084, %v4217
        %v4241 = vmul.f32 %v4085, %v4217
        %v4242 = vmul.f32 %v4086, %v4217
        %v4243 = vmul.f32 %v4087, %v4217
        %v4244 = vmul.f32 %v4088, %v4217
        %v4245 = vmul.f32 %v4089, %v4217
        %v4246 = vmul.f32 %v4090, %v4217
        %v4247 = vmul.f32 %v4091, %v4217
        %v4248 = vmul.f32 %v4092, %v4217
        %v4249 = vmul.f32 %v4093, %v4217
        %v4251 = vperm.slane %v3962, 0
        %v4253 = vadd.f32 %v4218, %v4251
        %v4254 = vadd.f32 %v4219, %v4251
        %v4255 = vadd.f32 %v4220, %v4251
        %v4256 = vadd.f32 %v4221, %v4251
        %v4257 = vadd.f32 %v4222, %v4251
        %v4258 = vadd.f32 %v4223, %v4251
        %v4259 = vadd.f32 %v4224, %v4251
        %v4260 = vadd.f32 %v4225, %v4251
        %v4261 = vadd.f32 %v4226, %v4251
        %v4262 = vadd.f32 %v4227, %v4251
        %v4263 = vadd.f32 %v4228, %v4251
        %v4264 = vadd.f32 %v4229, %v4251
        %v4265 = vadd.f32 %v4230, %v4251
        %v4266 = vadd.f32 %v4231, %v4251
        %v4267 = vadd.f32 %v4232, %v4251
        %v4268 = vadd.f32 %v4233, %v4251
        %v4269 = vadd.f32 %v4234, %v4251
        %v4270 = vadd.f32 %v4235, %v4251
        %v4271 = vadd.f32 %v4236, %v4251
        %v4272 = vadd.f32 %v4237, %v4251
        %v4273 = vadd.f32 %v4238, %v4251
        %v4274 = vadd.f32 %v4239, %v4251
        %v4275 = vadd.f32 %v4240, %v4251
        %v4276 = vadd.f32 %v4241, %v4251
        %v4277 = vadd.f32 %v4242, %v4251
        %v4278 = vadd.f32 %v4243, %v4251
        %v4279 = vadd.f32 %v4244, %v4251
        %v4280 = vadd.f32 %v4245, %v4251
        %v4281 = vadd.f32 %v4246, %v4251
        %v4282 = vadd.f32 %v4247, %v4251
        %v4283 = vadd.f32 %v4248, %v4251
        %v4284 = vadd.f32 %v4249, %v4251
        %v4285 = vxor.u32 %v4253, 2147483648
        %v4286 = vxor.u32 %v4254, 2147483648
        %v4287 = vxor.u32 %v4255, 2147483648
        %v4288 = vxor.u32 %v4256, 2147483648
        %v4289 = vxor.u32 %v4257, 2147483648
        %v4290 = vxor.u32 %v4258, 2147483648
        %v4291 = vxor.u32 %v4259, 2147483648
        %v4292 = vxor.u32 %v4260, 2147483648
        %v4293 = vxor.u32 %v4261, 2147483648
        %v4294 = vxor.u32 %v4262, 2147483648
        %v4295 = vxor.u32 %v4263, 2147483648
        %v4296 = vxor.u32 %v4264, 2147483648
        %v4297 = vxor.u32 %v4265, 2147483648
        %v4298 = vxor.u32 %v4266, 2147483648
        %v4299 = vxor.u32 %v4267, 2147483648
        %v4300 = vxor.u32 %v4268, 2147483648
        %v4301 = vxor.u32 %v4269, 2147483648
        %v4302 = vxor.u32 %v4270, 2147483648
        %v4303 = vxor.u32 %v4271, 2147483648
        %v4304 = vxor.u32 %v4272, 2147483648
        %v4305 = vxor.u32 %v4273, 2147483648
        %v4306 = vxor.u32 %v4274, 2147483648
        %v4307 = vxor.u32 %v4275, 2147483648
        %v4308 = vxor.u32 %v4276, 2147483648
        %v4309 = vxor.u32 %v4277, 2147483648
        %v4310 = vxor.u32 %v4278, 2147483648
        %v4311 = vxor.u32 %v4279, 2147483648
        %v4312 = vxor.u32 %v4280, 2147483648
        %v4313 = vxor.u32 %v4281, 2147483648
        %v4314 = vxor.u32 %v4282, 2147483648
        %v4315 = vxor.u32 %v4283, 2147483648
        %v4316 = vxor.u32 %v4284, 2147483648
        %v4317 = vmul.f32 %v4285, 1.442695
        %v4318 = vpow.pop %v4317
        %v4319 = vmul.f32 %v4286, 1.442695
        %v4320 = vpow.pop %v4319
        %v4321 = vmul.f32 %v4287, 1.442695
        %v4322 = vpow.pop %v4321
        %v4323 = vmul.f32 %v4288, 1.442695
        %v4324 = vpow.pop %v4323
        %v4325 = vmul.f32 %v4289, 1.442695
        %v4326 = vpow.pop %v4325
        %v4327 = vmul.f32 %v4290, 1.442695
        %v4328 = vpow.pop %v4327
        %v4329 = vmul.f32 %v4291, 1.442695
        %v4330 = vpow.pop %v4329
        %v4331 = vmul.f32 %v4292, 1.442695
        %v4332 = vpow.pop %v4331
        %v4333 = vmul.f32 %v4293, 1.442695
        %v4334 = vpow.pop %v4333
        %v4335 = vmul.f32 %v4294, 1.442695
        %v4336 = vpow.pop %v4335
        %v4337 = vmul.f32 %v4295, 1.442695
        %v4338 = vpow.pop %v4337
        %v4339 = vmul.f32 %v4296, 1.442695
        %v4340 = vpow.pop %v4339
        %v4341 = vmul.f32 %v4297, 1.442695
        %v4342 = vpow.pop %v4341
        %v4343 = vmul.f32 %v4298, 1.442695
        %v4344 = vpow.pop %v4343
        %v4345 = vmul.f32 %v4299, 1.442695
        %v4346 = vpow.pop %v4345
        %v4347 = vmul.f32 %v4300, 1.442695
        %v4348 = vpow.pop %v4347
        %v4349 = vmul.f32 %v4301, 1.442695
        %v4350 = vpow.pop %v4349
        %v4351 = vmul.f32 %v4302, 1.442695
        %v4352 = vpow.pop %v4351
        %v4353 = vmul.f32 %v4303, 1.442695
        %v4354 = vpow.pop %v4353
        %v4355 = vmul.f32 %v4304, 1.442695
        %v4356 = vpow.pop %v4355
        %v4357 = vmul.f32 %v4305, 1.442695
        %v4358 = vpow.pop %v4357
        %v4359 = vmul.f32 %v4306, 1.442695
        %v4360 = vpow.pop %v4359
        %v4361 = vmul.f32 %v4307, 1.442695
        %v4362 = vpow.pop %v4361
        %v4363 = vmul.f32 %v4308, 1.442695
        %v4364 = vpow.pop %v4363
        %v4365 = vmul.f32 %v4309, 1.442695
        %v4366 = vpow.pop %v4365
        %v4367 = vmul.f32 %v4310, 1.442695
        %v4368 = vpow.pop %v4367
        %v4369 = vmul.f32 %v4311, 1.442695
        %v4370 = vpow.pop %v4369
        %v4371 = vmul.f32 %v4312, 1.442695
        %v4372 = vpow.pop %v4371
        %v4373 = vmul.f32 %v4313, 1.442695
        %v4374 = vpow.pop %v4373
        %v4375 = vmul.f32 %v4314, 1.442695
        %v4376 = vpow.pop %v4375
        %v4377 = vmul.f32 %v4315, 1.442695
        %v4378 = vpow.pop %v4377
        %v4379 = vmul.f32 %v4316, 1.442695
        %v4380 = vpow.pop %v4379
        %v4381 = vadd.f32 %v4318, 1.0
        %v4382 = vadd.f32 %v4320, 1.0
        %v4383 = vadd.f32 %v4322, 1.0
        %v4384 = vadd.f32 %v4324, 1.0
        %v4385 = vadd.f32 %v4326, 1.0
        %v4386 = vadd.f32 %v4328, 1.0
        %v4387 = vadd.f32 %v4330, 1.0
        %v4388 = vadd.f32 %v4332, 1.0
        %v4389 = vadd.f32 %v4334, 1.0
        %v4390 = vadd.f32 %v4336, 1.0
        %v4391 = vadd.f32 %v4338, 1.0
        %v4392 = vadd.f32 %v4340, 1.0
        %v4393 = vadd.f32 %v4342, 1.0
        %v4394 = vadd.f32 %v4344, 1.0
        %v4395 = vadd.f32 %v4346, 1.0
        %v4396 = vadd.f32 %v4348, 1.0
        %v4397 = vadd.f32 %v4350, 1.0
        %v4398 = vadd.f32 %v4352, 1.0
        %v4399 = vadd.f32 %v4354, 1.0
        %v4400 = vadd.f32 %v4356, 1.0
        %v4401 = vadd.f32 %v4358, 1.0
        %v4402 = vadd.f32 %v4360, 1.0
        %v4403 = vadd.f32 %v4362, 1.0
        %v4404 = vadd.f32 %v4364, 1.0
        %v4405 = vadd.f32 %v4366, 1.0
        %v4406 = vadd.f32 %v4368, 1.0
        %v4407 = vadd.f32 %v4370, 1.0
        %v4408 = vadd.f32 %v4372, 1.0
        %v4409 = vadd.f32 %v4374, 1.0
        %v4410 = vadd.f32 %v4376, 1.0
        %v4411 = vadd.f32 %v4378, 1.0
        %v4412 = vadd.f32 %v4380, 1.0
        %v4413 = vrcp.pop %v4381
        %v4414 = vmul.f32 %v4381, %v4413
        %v4415 = vsub.f32 1.0, %v4414
        %v4416 = vmul.f32 %v4413, %v4415
        %v4417 = vadd.f32 %v4413, %v4416
        %vm4418 = vweird.f32 %v4381
        %vm4419 = vweird.f32 %v4413
        %vm4420 = vmor %vm4418, %vm4419
        %v4421 = vsel %vm4420, %v4413, %v4417
        %v4422 = vand.u32 2147483647, %v4381
        %vm4423 = vcmp.eq.f32.partialorder %v4422, 8.507059e+37
        %v4424 = vand.u32 %v4381, 2147483648
        %v4425 = vor.u32 1.1754944e-38, %v4424
        %v4426 = vsel %vm4423, %v4425, %v4421
        %v4427 = vmul.f32 1.0, %v4426
        %v4428 = vrcp.pop %v4382
        %v4429 = vmul.f32 %v4382, %v4428
        %v4430 = vsub.f32 1.0, %v4429
        %v4431 = vmul.f32 %v4428, %v4430
        %v4432 = vadd.f32 %v4428, %v4431
        %vm4433 = vweird.f32 %v4382
        %vm4434 = vweird.f32 %v4428
        %vm4435 = vmor %vm4433, %vm4434
        %v4436 = vsel %vm4435, %v4428, %v4432
        %v4437 = vand.u32 2147483647, %v4382
        %vm4438 = vcmp.eq.f32.partialorder %v4437, 8.507059e+37
        %v4439 = vand.u32 %v4382, 2147483648
        %v4440 = vor.u32 1.1754944e-38, %v4439
        %v4441 = vsel %vm4438, %v4440, %v4436
        %v4442 = vmul.f32 1.0, %v4441
        %v4443 = vrcp.pop %v4383
        %v4444 = vmul.f32 %v4383, %v4443
        %v4445 = vsub.f32 1.0, %v4444
        %v4446 = vmul.f32 %v4443, %v4445
        %v4447 = vadd.f32 %v4443, %v4446
        %vm4448 = vweird.f32 %v4383
        %vm4449 = vweird.f32 %v4443
        %vm4450 = vmor %vm4448, %vm4449
        %v4451 = vsel %vm4450, %v4443, %v4447
        %v4452 = vand.u32 2147483647, %v4383
        %vm4453 = vcmp.eq.f32.partialorder %v4452, 8.507059e+37
        %v4454 = vand.u32 %v4383, 2147483648
        %v4455 = vor.u32 1.1754944e-38, %v4454
        %v4456 = vsel %vm4453, %v4455, %v4451
        %v4457 = vmul.f32 1.0, %v4456
        %v4458 = vrcp.pop %v4384
        %v4459 = vmul.f32 %v4384, %v4458
        %v4460 = vsub.f32 1.0, %v4459
        %v4461 = vmul.f32 %v4458, %v4460
        %v4462 = vadd.f32 %v4458, %v4461
        %vm4463 = vweird.f32 %v4384
        %vm4464 = vweird.f32 %v4458
        %vm4465 = vmor %vm4463, %vm4464
        %v4466 = vsel %vm4465, %v4458, %v4462
        %v4467 = vand.u32 2147483647, %v4384
        %vm4468 = vcmp.eq.f32.partialorder %v4467, 8.507059e+37
        %v4469 = vand.u32 %v4384, 2147483648
        %v4470 = vor.u32 1.1754944e-38, %v4469
        %v4471 = vsel %vm4468, %v4470, %v4466
        %v4472 = vmul.f32 1.0, %v4471
        %v4473 = vrcp.pop %v4385
        %v4474 = vmul.f32 %v4385, %v4473
        %v4475 = vsub.f32 1.0, %v4474
        %v4476 = vmul.f32 %v4473, %v4475
        %v4477 = vadd.f32 %v4473, %v4476
        %vm4478 = vweird.f32 %v4385
        %vm4479 = vweird.f32 %v4473
        %vm4480 = vmor %vm4478, %vm4479
        %v4481 = vsel %vm4480, %v4473, %v4477
        %v4482 = vand.u32 2147483647, %v4385
        %vm4483 = vcmp.eq.f32.partialorder %v4482, 8.507059e+37
        %v4484 = vand.u32 %v4385, 2147483648
        %v4485 = vor.u32 1.1754944e-38, %v4484
        %v4486 = vsel %vm4483, %v4485, %v4481
        %v4487 = vmul.f32 1.0, %v4486
        %v4488 = vrcp.pop %v4386
        %v4489 = vmul.f32 %v4386, %v4488
        %v4490 = vsub.f32 1.0, %v4489
        %v4491 = vmul.f32 %v4488, %v4490
        %v4492 = vadd.f32 %v4488, %v4491
        %vm4493 = vweird.f32 %v4386
        %vm4494 = vweird.f32 %v4488
        %vm4495 = vmor %vm4493, %vm4494
        %v4496 = vsel %vm4495, %v4488, %v4492
        %v4497 = vand.u32 2147483647, %v4386
        %vm4498 = vcmp.eq.f32.partialorder %v4497, 8.507059e+37
        %v4499 = vand.u32 %v4386, 2147483648
        %v4500 = vor.u32 1.1754944e-38, %v4499
        %v4501 = vsel %vm4498, %v4500, %v4496
        %v4502 = vmul.f32 1.0, %v4501
        %v4503 = vrcp.pop %v4387
        %v4504 = vmul.f32 %v4387, %v4503
        %v4505 = vsub.f32 1.0, %v4504
        %v4506 = vmul.f32 %v4503, %v4505
        %v4507 = vadd.f32 %v4503, %v4506
        %vm4508 = vweird.f32 %v4387
        %vm4509 = vweird.f32 %v4503
        %vm4510 = vmor %vm4508, %vm4509
        %v4511 = vsel %vm4510, %v4503, %v4507
        %v4512 = vand.u32 2147483647, %v4387
        %vm4513 = vcmp.eq.f32.partialorder %v4512, 8.507059e+37
        %v4514 = vand.u32 %v4387, 2147483648
        %v4515 = vor.u32 1.1754944e-38, %v4514
        %v4516 = vsel %vm4513, %v4515, %v4511
        %v4517 = vmul.f32 1.0, %v4516
        %v4518 = vrcp.pop %v4388
        %v4519 = vmul.f32 %v4388, %v4518
        %v4520 = vsub.f32 1.0, %v4519
        %v4521 = vmul.f32 %v4518, %v4520
        %v4522 = vadd.f32 %v4518, %v4521
        %vm4523 = vweird.f32 %v4388
        %vm4524 = vweird.f32 %v4518
        %vm4525 = vmor %vm4523, %vm4524
        %v4526 = vsel %vm4525, %v4518, %v4522
        %v4527 = vand.u32 2147483647, %v4388
        %vm4528 = vcmp.eq.f32.partialorder %v4527, 8.507059e+37
        %v4529 = vand.u32 %v4388, 2147483648
        %v4530 = vor.u32 1.1754944e-38, %v4529
        %v4531 = vsel %vm4528, %v4530, %v4526
        %v4532 = vmul.f32 1.0, %v4531
        %v4533 = vrcp.pop %v4389
        %v4534 = vmul.f32 %v4389, %v4533
        %v4535 = vsub.f32 1.0, %v4534
        %v4536 = vmul.f32 %v4533, %v4535
        %v4537 = vadd.f32 %v4533, %v4536
        %vm4538 = vweird.f32 %v4389
        %vm4539 = vweird.f32 %v4533
        %vm4540 = vmor %vm4538, %vm4539
        %v4541 = vsel %vm4540, %v4533, %v4537
        %v4542 = vand.u32 2147483647, %v4389
        %vm4543 = vcmp.eq.f32.partialorder %v4542, 8.507059e+37
        %v4544 = vand.u32 %v4389, 2147483648
        %v4545 = vor.u32 1.1754944e-38, %v4544
        %v4546 = vsel %vm4543, %v4545, %v4541
        %v4547 = vmul.f32 1.0, %v4546
        %v4548 = vrcp.pop %v4390
        %v4549 = vmul.f32 %v4390, %v4548
        %v4550 = vsub.f32 1.0, %v4549
        %v4551 = vmul.f32 %v4548, %v4550
        %v4552 = vadd.f32 %v4548, %v4551
        %vm4553 = vweird.f32 %v4390
        %vm4554 = vweird.f32 %v4548
        %vm4555 = vmor %vm4553, %vm4554
        %v4556 = vsel %vm4555, %v4548, %v4552
        %v4557 = vand.u32 2147483647, %v4390
        %vm4558 = vcmp.eq.f32.partialorder %v4557, 8.507059e+37
        %v4559 = vand.u32 %v4390, 2147483648
        %v4560 = vor.u32 1.1754944e-38, %v4559
        %v4561 = vsel %vm4558, %v4560, %v4556
        %v4562 = vmul.f32 1.0, %v4561
        %v4563 = vrcp.pop %v4391
        %v4564 = vmul.f32 %v4391, %v4563
        %v4565 = vsub.f32 1.0, %v4564
        %v4566 = vmul.f32 %v4563, %v4565
        %v4567 = vadd.f32 %v4563, %v4566
        %vm4568 = vweird.f32 %v4391
        %vm4569 = vweird.f32 %v4563
        %vm4570 = vmor %vm4568, %vm4569
        %v4571 = vsel %vm4570, %v4563, %v4567
        %v4572 = vand.u32 2147483647, %v4391
        %vm4573 = vcmp.eq.f32.partialorder %v4572, 8.507059e+37
        %v4574 = vand.u32 %v4391, 2147483648
        %v4575 = vor.u32 1.1754944e-38, %v4574
        %v4576 = vsel %vm4573, %v4575, %v4571
        %v4577 = vmul.f32 1.0, %v4576
        %v4578 = vrcp.pop %v4392
        %v4579 = vmul.f32 %v4392, %v4578
        %v4580 = vsub.f32 1.0, %v4579
        %v4581 = vmul.f32 %v4578, %v4580
        %v4582 = vadd.f32 %v4578, %v4581
        %vm4583 = vweird.f32 %v4392
        %vm4584 = vweird.f32 %v4578
        %vm4585 = vmor %vm4583, %vm4584
        %v4586 = vsel %vm4585, %v4578, %v4582
        %v4587 = vand.u32 2147483647, %v4392
        %vm4588 = vcmp.eq.f32.partialorder %v4587, 8.507059e+37
        %v4589 = vand.u32 %v4392, 2147483648
        %v4590 = vor.u32 1.1754944e-38, %v4589
        %v4591 = vsel %vm4588, %v4590, %v4586
        %v4592 = vmul.f32 1.0, %v4591
        %v4593 = vrcp.pop %v4393
        %v4594 = vmul.f32 %v4393, %v4593
        %v4595 = vsub.f32 1.0, %v4594
        %v4596 = vmul.f32 %v4593, %v4595
        %v4597 = vadd.f32 %v4593, %v4596
        %vm4598 = vweird.f32 %v4393
        %vm4599 = vweird.f32 %v4593
        %vm4600 = vmor %vm4598, %vm4599
        %v4601 = vsel %vm4600, %v4593, %v4597
        %v4602 = vand.u32 2147483647, %v4393
        %vm4603 = vcmp.eq.f32.partialorder %v4602, 8.507059e+37
        %v4604 = vand.u32 %v4393, 2147483648
        %v4605 = vor.u32 1.1754944e-38, %v4604
        %v4606 = vsel %vm4603, %v4605, %v4601
        %v4607 = vmul.f32 1.0, %v4606
        %v4608 = vrcp.pop %v4394
        %v4609 = vmul.f32 %v4394, %v4608
        %v4610 = vsub.f32 1.0, %v4609
        %v4611 = vmul.f32 %v4608, %v4610
        %v4612 = vadd.f32 %v4608, %v4611
        %vm4613 = vweird.f32 %v4394
        %vm4614 = vweird.f32 %v4608
        %vm4615 = vmor %vm4613, %vm4614
        %v4616 = vsel %vm4615, %v4608, %v4612
        %v4617 = vand.u32 2147483647, %v4394
        %vm4618 = vcmp.eq.f32.partialorder %v4617, 8.507059e+37
        %v4619 = vand.u32 %v4394, 2147483648
        %v4620 = vor.u32 1.1754944e-38, %v4619
        %v4621 = vsel %vm4618, %v4620, %v4616
        %v4622 = vmul.f32 1.0, %v4621
        %v4623 = vrcp.pop %v4395
        %v4624 = vmul.f32 %v4395, %v4623
        %v4625 = vsub.f32 1.0, %v4624
        %v4626 = vmul.f32 %v4623, %v4625
        %v4627 = vadd.f32 %v4623, %v4626
        %vm4628 = vweird.f32 %v4395
        %vm4629 = vweird.f32 %v4623
        %vm4630 = vmor %vm4628, %vm4629
        %v4631 = vsel %vm4630, %v4623, %v4627
        %v4632 = vand.u32 2147483647, %v4395
        %vm4633 = vcmp.eq.f32.partialorder %v4632, 8.507059e+37
        %v4634 = vand.u32 %v4395, 2147483648
        %v4635 = vor.u32 1.1754944e-38, %v4634
        %v4636 = vsel %vm4633, %v4635, %v4631
        %v4637 = vmul.f32 1.0, %v4636
        %v4638 = vrcp.pop %v4396
        %v4639 = vmul.f32 %v4396, %v4638
        %v4640 = vsub.f32 1.0, %v4639
        %v4641 = vmul.f32 %v4638, %v4640
        %v4642 = vadd.f32 %v4638, %v4641
        %vm4643 = vweird.f32 %v4396
        %vm4644 = vweird.f32 %v4638
        %vm4645 = vmor %vm4643, %vm4644
        %v4646 = vsel %vm4645, %v4638, %v4642
        %v4647 = vand.u32 2147483647, %v4396
        %vm4648 = vcmp.eq.f32.partialorder %v4647, 8.507059e+37
        %v4649 = vand.u32 %v4396, 2147483648
        %v4650 = vor.u32 1.1754944e-38, %v4649
        %v4651 = vsel %vm4648, %v4650, %v4646
        %v4652 = vmul.f32 1.0, %v4651
        %v4653 = vrcp.pop %v4397
        %v4654 = vmul.f32 %v4397, %v4653
        %v4655 = vsub.f32 1.0, %v4654
        %v4656 = vmul.f32 %v4653, %v4655
        %v4657 = vadd.f32 %v4653, %v4656
        %vm4658 = vweird.f32 %v4397
        %vm4659 = vweird.f32 %v4653
        %vm4660 = vmor %vm4658, %vm4659
        %v4661 = vsel %vm4660, %v4653, %v4657
        %v4662 = vand.u32 2147483647, %v4397
        %vm4663 = vcmp.eq.f32.partialorder %v4662, 8.507059e+37
        %v4664 = vand.u32 %v4397, 2147483648
        %v4665 = vor.u32 1.1754944e-38, %v4664
        %v4666 = vsel %vm4663, %v4665, %v4661
        %v4667 = vmul.f32 1.0, %v4666
        %v4668 = vrcp.pop %v4398
        %v4669 = vmul.f32 %v4398, %v4668
        %v4670 = vsub.f32 1.0, %v4669
        %v4671 = vmul.f32 %v4668, %v4670
        %v4672 = vadd.f32 %v4668, %v4671
        %vm4673 = vweird.f32 %v4398
        %vm4674 = vweird.f32 %v4668
        %vm4675 = vmor %vm4673, %vm4674
        %v4676 = vsel %vm4675, %v4668, %v4672
        %v4677 = vand.u32 2147483647, %v4398
        %vm4678 = vcmp.eq.f32.partialorder %v4677, 8.507059e+37
        %v4679 = vand.u32 %v4398, 2147483648
        %v4680 = vor.u32 1.1754944e-38, %v4679
        %v4681 = vsel %vm4678, %v4680, %v4676
        %v4682 = vmul.f32 1.0, %v4681
        %v4683 = vrcp.pop %v4399
        %v4684 = vmul.f32 %v4399, %v4683
        %v4685 = vsub.f32 1.0, %v4684
        %v4686 = vmul.f32 %v4683, %v4685
        %v4687 = vadd.f32 %v4683, %v4686
        %vm4688 = vweird.f32 %v4399
        %vm4689 = vweird.f32 %v4683
        %vm4690 = vmor %vm4688, %vm4689
        %v4691 = vsel %vm4690, %v4683, %v4687
        %v4692 = vand.u32 2147483647, %v4399
        %vm4693 = vcmp.eq.f32.partialorder %v4692, 8.507059e+37
        %v4694 = vand.u32 %v4399, 2147483648
        %v4695 = vor.u32 1.1754944e-38, %v4694
        %v4696 = vsel %vm4693, %v4695, %v4691
        %v4697 = vmul.f32 1.0, %v4696
        %v4698 = vrcp.pop %v4400
        %v4699 = vmul.f32 %v4400, %v4698
        %v4700 = vsub.f32 1.0, %v4699
        %v4701 = vmul.f32 %v4698, %v4700
        %v4702 = vadd.f32 %v4698, %v4701
        %vm4703 = vweird.f32 %v4400
        %vm4704 = vweird.f32 %v4698
        %vm4705 = vmor %vm4703, %vm4704
        %v4706 = vsel %vm4705, %v4698, %v4702
        %v4707 = vand.u32 2147483647, %v4400
        %vm4708 = vcmp.eq.f32.partialorder %v4707, 8.507059e+37
        %v4709 = vand.u32 %v4400, 2147483648
        %v4710 = vor.u32 1.1754944e-38, %v4709
        %v4711 = vsel %vm4708, %v4710, %v4706
        %v4712 = vmul.f32 1.0, %v4711
        %v4713 = vrcp.pop %v4401
        %v4714 = vmul.f32 %v4401, %v4713
        %v4715 = vsub.f32 1.0, %v4714
        %v4716 = vmul.f32 %v4713, %v4715
        %v4717 = vadd.f32 %v4713, %v4716
        %vm4718 = vweird.f32 %v4401
        %vm4719 = vweird.f32 %v4713
        %vm4720 = vmor %vm4718, %vm4719
        %v4721 = vsel %vm4720, %v4713, %v4717
        %v4722 = vand.u32 2147483647, %v4401
        %vm4723 = vcmp.eq.f32.partialorder %v4722, 8.507059e+37
        %v4724 = vand.u32 %v4401, 2147483648
        %v4725 = vor.u32 1.1754944e-38, %v4724
        %v4726 = vsel %vm4723, %v4725, %v4721
        %v4727 = vmul.f32 1.0, %v4726
        %v4728 = vrcp.pop %v4402
        %v4729 = vmul.f32 %v4402, %v4728
        %v4730 = vsub.f32 1.0, %v4729
        %v4731 = vmul.f32 %v4728, %v4730
        %v4732 = vadd.f32 %v4728, %v4731
        %vm4733 = vweird.f32 %v4402
        %vm4734 = vweird.f32 %v4728
        %vm4735 = vmor %vm4733, %vm4734
        %v4736 = vsel %vm4735, %v4728, %v4732
        %v4737 = vand.u32 2147483647, %v4402
        %vm4738 = vcmp.eq.f32.partialorder %v4737, 8.507059e+37
        %v4739 = vand.u32 %v4402, 2147483648
        %v4740 = vor.u32 1.1754944e-38, %v4739
        %v4741 = vsel %vm4738, %v4740, %v4736
        %v4742 = vmul.f32 1.0, %v4741
        %v4743 = vrcp.pop %v4403
        %v4744 = vmul.f32 %v4403, %v4743
        %v4745 = vsub.f32 1.0, %v4744
        %v4746 = vmul.f32 %v4743, %v4745
        %v4747 = vadd.f32 %v4743, %v4746
        %vm4748 = vweird.f32 %v4403
        %vm4749 = vweird.f32 %v4743
        %vm4750 = vmor %vm4748, %vm4749
        %v4751 = vsel %vm4750, %v4743, %v4747
        %v4752 = vand.u32 2147483647, %v4403
        %vm4753 = vcmp.eq.f32.partialorder %v4752, 8.507059e+37
        %v4754 = vand.u32 %v4403, 2147483648
        %v4755 = vor.u32 1.1754944e-38, %v4754
        %v4756 = vsel %vm4753, %v4755, %v4751
        %v4757 = vmul.f32 1.0, %v4756
        %v4758 = vrcp.pop %v4404
        %v4759 = vmul.f32 %v4404, %v4758
        %v4760 = vsub.f32 1.0, %v4759
        %v4761 = vmul.f32 %v4758, %v4760
        %v4762 = vadd.f32 %v4758, %v4761
        %vm4763 = vweird.f32 %v4404
        %vm4764 = vweird.f32 %v4758
        %vm4765 = vmor %vm4763, %vm4764
        %v4766 = vsel %vm4765, %v4758, %v4762
        %v4767 = vand.u32 2147483647, %v4404
        %vm4768 = vcmp.eq.f32.partialorder %v4767, 8.507059e+37
        %v4769 = vand.u32 %v4404, 2147483648
        %v4770 = vor.u32 1.1754944e-38, %v4769
        %v4771 = vsel %vm4768, %v4770, %v4766
        %v4772 = vmul.f32 1.0, %v4771
        %v4773 = vrcp.pop %v4405
        %v4774 = vmul.f32 %v4405, %v4773
        %v4775 = vsub.f32 1.0, %v4774
        %v4776 = vmul.f32 %v4773, %v4775
        %v4777 = vadd.f32 %v4773, %v4776
        %vm4778 = vweird.f32 %v4405
        %vm4779 = vweird.f32 %v4773
        %vm4780 = vmor %vm4778, %vm4779
        %v4781 = vsel %vm4780, %v4773, %v4777
        %v4782 = vand.u32 2147483647, %v4405
        %vm4783 = vcmp.eq.f32.partialorder %v4782, 8.507059e+37
        %v4784 = vand.u32 %v4405, 2147483648
        %v4785 = vor.u32 1.1754944e-38, %v4784
        %v4786 = vsel %vm4783, %v4785, %v4781
        %v4787 = vmul.f32 1.0, %v4786
        %v4788 = vrcp.pop %v4406
        %v4789 = vmul.f32 %v4406, %v4788
        %v4790 = vsub.f32 1.0, %v4789
        %v4791 = vmul.f32 %v4788, %v4790
        %v4792 = vadd.f32 %v4788, %v4791
        %vm4793 = vweird.f32 %v4406
        %vm4794 = vweird.f32 %v4788
        %vm4795 = vmor %vm4793, %vm4794
        %v4796 = vsel %vm4795, %v4788, %v4792
        %v4797 = vand.u32 2147483647, %v4406
        %vm4798 = vcmp.eq.f32.partialorder %v4797, 8.507059e+37
        %v4799 = vand.u32 %v4406, 2147483648
        %v4800 = vor.u32 1.1754944e-38, %v4799
        %v4801 = vsel %vm4798, %v4800, %v4796
        %v4802 = vmul.f32 1.0, %v4801
        %v4803 = vrcp.pop %v4407
        %v4804 = vmul.f32 %v4407, %v4803
        %v4805 = vsub.f32 1.0, %v4804
        %v4806 = vmul.f32 %v4803, %v4805
        %v4807 = vadd.f32 %v4803, %v4806
        %vm4808 = vweird.f32 %v4407
        %vm4809 = vweird.f32 %v4803
        %vm4810 = vmor %vm4808, %vm4809
        %v4811 = vsel %vm4810, %v4803, %v4807
        %v4812 = vand.u32 2147483647, %v4407
        %vm4813 = vcmp.eq.f32.partialorder %v4812, 8.507059e+37
        %v4814 = vand.u32 %v4407, 2147483648
        %v4815 = vor.u32 1.1754944e-38, %v4814
        %v4816 = vsel %vm4813, %v4815, %v4811
        %v4817 = vmul.f32 1.0, %v4816
        %v4818 = vrcp.pop %v4408
        %v4819 = vmul.f32 %v4408, %v4818
        %v4820 = vsub.f32 1.0, %v4819
        %v4821 = vmul.f32 %v4818, %v4820
        %v4822 = vadd.f32 %v4818, %v4821
        %vm4823 = vweird.f32 %v4408
        %vm4824 = vweird.f32 %v4818
        %vm4825 = vmor %vm4823, %vm4824
        %v4826 = vsel %vm4825, %v4818, %v4822
        %v4827 = vand.u32 2147483647, %v4408
        %vm4828 = vcmp.eq.f32.partialorder %v4827, 8.507059e+37
        %v4829 = vand.u32 %v4408, 2147483648
        %v4830 = vor.u32 1.1754944e-38, %v4829
        %v4831 = vsel %vm4828, %v4830, %v4826
        %v4832 = vmul.f32 1.0, %v4831
        %v4833 = vrcp.pop %v4409
        %v4834 = vmul.f32 %v4409, %v4833
        %v4835 = vsub.f32 1.0, %v4834
        %v4836 = vmul.f32 %v4833, %v4835
        %v4837 = vadd.f32 %v4833, %v4836
        %vm4838 = vweird.f32 %v4409
        %vm4839 = vweird.f32 %v4833
        %vm4840 = vmor %vm4838, %vm4839
        %v4841 = vsel %vm4840, %v4833, %v4837
        %v4842 = vand.u32 2147483647, %v4409
        %vm4843 = vcmp.eq.f32.partialorder %v4842, 8.507059e+37
        %v4844 = vand.u32 %v4409, 2147483648
        %v4845 = vor.u32 1.1754944e-38, %v4844
        %v4846 = vsel %vm4843, %v4845, %v4841
        %v4847 = vmul.f32 1.0, %v4846
        %v4848 = vrcp.pop %v4410
        %v4849 = vmul.f32 %v4410, %v4848
        %v4850 = vsub.f32 1.0, %v4849
        %v4851 = vmul.f32 %v4848, %v4850
        %v4852 = vadd.f32 %v4848, %v4851
        %vm4853 = vweird.f32 %v4410
        %vm4854 = vweird.f32 %v4848
        %vm4855 = vmor %vm4853, %vm4854
        %v4856 = vsel %vm4855, %v4848, %v4852
        %v4857 = vand.u32 2147483647, %v4410
        %vm4858 = vcmp.eq.f32.partialorder %v4857, 8.507059e+37
        %v4859 = vand.u32 %v4410, 2147483648
        %v4860 = vor.u32 1.1754944e-38, %v4859
        %v4861 = vsel %vm4858, %v4860, %v4856
        %v4862 = vmul.f32 1.0, %v4861
        %v4863 = vrcp.pop %v4411
        %v4864 = vmul.f32 %v4411, %v4863
        %v4865 = vsub.f32 1.0, %v4864
        %v4866 = vmul.f32 %v4863, %v4865
        %v4867 = vadd.f32 %v4863, %v4866
        %vm4868 = vweird.f32 %v4411
        %vm4869 = vweird.f32 %v4863
        %vm4870 = vmor %vm4868, %vm4869
        %v4871 = vsel %vm4870, %v4863, %v4867
        %v4872 = vand.u32 2147483647, %v4411
        %vm4873 = vcmp.eq.f32.partialorder %v4872, 8.507059e+37
        %v4874 = vand.u32 %v4411, 2147483648
        %v4875 = vor.u32 1.1754944e-38, %v4874
        %v4876 = vsel %vm4873, %v4875, %v4871
        %v4877 = vmul.f32 1.0, %v4876
        %v4878 = vrcp.pop %v4412
        %v4879 = vmul.f32 %v4412, %v4878
        %v4880 = vsub.f32 1.0, %v4879
        %v4881 = vmul.f32 %v4878, %v4880
        %v4882 = vadd.f32 %v4878, %v4881
        %vm4883 = vweird.f32 %v4412
        %vm4884 = vweird.f32 %v4878
        %vm4885 = vmor %vm4883, %vm4884
        %v4886 = vsel %vm4885, %v4878, %v4882
        %v4887 = vand.u32 2147483647, %v4412
        %vm4888 = vcmp.eq.f32.partialorder %v4887, 8.507059e+37
        %v4889 = vand.u32 %v4412, 2147483648
        %v4890 = vor.u32 1.1754944e-38, %v4889
        %v4891 = vsel %vm4888, %v4890, %v4886
        %v4892 = vmul.f32 1.0, %v4891
        %v4893 = vmul.f32 %v4253, %v4427
        %v4894 = vmul.f32 %v4254, %v4442
        %v4895 = vmul.f32 %v4255, %v4457
        %v4896 = vmul.f32 %v4256, %v4472
        %v4897 = vmul.f32 %v4257, %v4487
        %v4898 = vmul.f32 %v4258, %v4502
        %v4899 = vmul.f32 %v4259, %v4517
        %v4900 = vmul.f32 %v4260, %v4532
        %v4901 = vmul.f32 %v4261, %v4547
        %v4902 = vmul.f32 %v4262, %v4562
        %v4903 = vmul.f32 %v4263, %v4577
        %v4904 = vmul.f32 %v4264, %v4592
        %v4905 = vmul.f32 %v4265, %v4607
        %v4906 = vmul.f32 %v4266, %v4622
        %v4907 = vmul.f32 %v4267, %v4637
        %v4908 = vmul.f32 %v4268, %v4652
        %v4909 = vmul.f32 %v4269, %v4667
        %v4910 = vmul.f32 %v4270, %v4682
        %v4911 = vmul.f32 %v4271, %v4697
        %v4912 = vmul.f32 %v4272, %v4712
        %v4913 = vmul.f32 %v4273, %v4727
        %v4914 = vmul.f32 %v4274, %v4742
        %v4915 = vmul.f32 %v4275, %v4757
        %v4916 = vmul.f32 %v4276, %v4772
        %v4917 = vmul.f32 %v4277, %v4787
        %v4918 = vmul.f32 %v4278, %v4802
        %v4919 = vmul.f32 %v4279, %v4817
        %v4920 = vmul.f32 %v4280, %v4832
        %v4921 = vmul.f32 %v4281, %v4847
        %v4922 = vmul.f32 %v4282, %v4862
        %v4923 = vmul.f32 %v4283, %v4877
        %v4924 = vmul.f32 %v4284, %v4892
        %v4925 = vld [vmem:[%s15] sm:$0x1]
        %4926 = vmatpush.msra.mxu0 %v4908
        %4927 = vmatpush.msra.mxu0 %v4907
        %4928 = vmatpush.msra.mxu0 %v4906
        %4929 = vmatpush.msra.mxu0 %v4905
        %4930 = vmatpush.msra.mxu0 %v4904
        %4931 = vmatpush.msra.mxu0 %v4903
        %4932 = vmatpush.msra.mxu0 %v4902
        %4933 = vmatpush.msra.mxu0 %v4901
        %4934 = vmatpush.msra.mxu0 %v4900
        %4935 = vmatpush.msra.mxu0 %v4899
        %4936 = vmatpush.msra.mxu0 %v4898
        %4937 = vmatpush.msra.mxu0 %v4897
        %4938 = vmatpush.msra.mxu0 %v4896
        %4939 = vmatpush.msra.mxu0 %v4895
        %4940 = vmatpush.msra.mxu0 %v4894
        %4941 = vmatpush.msra.mxu0 %v4893
        %4942 = vmatmul.f32.gmra.mxu0 %v1006
        %v4943 = vpop.f32.mrf.mxu0
        %v4944 = vadd.f32 0.0, %v4943
        %4945 = vmatmul.f32.gmra.mxu0 %v1008
        %v4946 = vpop.f32.mrf.mxu0
        %v4947 = vadd.f32 0.0, %v4946
        %4948 = vmatmul.f32.gmra.mxu0 %v1010
        %v4949 = vpop.f32.mrf.mxu0
        %v4950 = vadd.f32 0.0, %v4949
        %4951 = vmatmul.f32.gmra.mxu0 %v1012
        %v4952 = vpop.f32.mrf.mxu0
        %v4953 = vadd.f32 0.0, %v4952
        %4954 = vmatmul.f32.gmra.mxu0 %v1014
        %v4955 = vpop.f32.mrf.mxu0
        %v4956 = vadd.f32 0.0, %v4955
        %4957 = vmatmul.f32.gmra.mxu0 %v1016
        %v4958 = vpop.f32.mrf.mxu0
        %v4959 = vadd.f32 0.0, %v4958
        %4960 = vmatmul.f32.gmra.mxu0 %v1018
        %v4961 = vpop.f32.mrf.mxu0
        %v4962 = vadd.f32 0.0, %v4961
        %4963 = vmatmul.f32.gmra.mxu0 %v1020
        %v4964 = vpop.f32.mrf.mxu0
        %v4965 = vadd.f32 0.0, %v4964
        %4966 = vmatmul.f32.gmra.mxu0 %v1022
        %v4967 = vpop.f32.mrf.mxu0
        %v4968 = vadd.f32 0.0, %v4967
        %4969 = vmatmul.f32.gmra.mxu0 %v1024
        %v4970 = vpop.f32.mrf.mxu0
        %v4971 = vadd.f32 0.0, %v4970
        %4972 = vmatmul.f32.gmra.mxu0 %v1026
        %v4973 = vpop.f32.mrf.mxu0
        %v4974 = vadd.f32 0.0, %v4973
        %4975 = vmatmul.f32.gmra.mxu0 %v1028
        %v4976 = vpop.f32.mrf.mxu0
        %v4977 = vadd.f32 0.0, %v4976
        %4978 = vmatmul.f32.gmra.mxu0 %v1030
        %v4979 = vpop.f32.mrf.mxu0
        %v4980 = vadd.f32 0.0, %v4979
        %4981 = vmatmul.f32.gmra.mxu0 %v1032
        %v4982 = vpop.f32.mrf.mxu0
        %v4983 = vadd.f32 0.0, %v4982
        %4984 = vmatmul.f32.gmra.mxu0 %v1034
        %v4985 = vpop.f32.mrf.mxu0
        %v4986 = vadd.f32 0.0, %v4985
        %4987 = vmatmul.f32.gmra.mxu0 %v1036
        %v4988 = vpop.f32.mrf.mxu0
        %v4989 = vadd.f32 0.0, %v4988
        %4990 = vmatmul.f32.gmra.mxu0 %v1038
        %v4991 = vpop.f32.mrf.mxu0
        %v4992 = vadd.f32 0.0, %v4991
        %4993 = vmatmul.f32.gmra.mxu0 %v1040
        %v4994 = vpop.f32.mrf.mxu0
        %v4995 = vadd.f32 0.0, %v4994
        %4996 = vmatmul.f32.gmra.mxu0 %v1042
        %v4997 = vpop.f32.mrf.mxu0
        %v4998 = vadd.f32 0.0, %v4997
        %4999 = vmatmul.f32.gmra.mxu0 %v1044
        %v5000 = vpop.f32.mrf.mxu0
        %v5001 = vadd.f32 0.0, %v5000
        %5002 = vmatmul.f32.gmra.mxu0 %v1046
        %v5003 = vpop.f32.mrf.mxu0
        %v5004 = vadd.f32 0.0, %v5003
        %5005 = vmatmul.f32.gmra.mxu0 %v1048
        %v5006 = vpop.f32.mrf.mxu0
        %v5007 = vadd.f32 0.0, %v5006
        %5008 = vmatmul.f32.gmra.mxu0 %v1050
        %v5009 = vpop.f32.mrf.mxu0
        %v5010 = vadd.f32 0.0, %v5009
        %5011 = vmatmul.f32.gmra.mxu0 %v1052
        %v5012 = vpop.f32.mrf.mxu0
        %v5013 = vadd.f32 0.0, %v5012
        %5014 = vmatmul.f32.gmra.mxu0 %v1054
        %v5015 = vpop.f32.mrf.mxu0
        %v5016 = vadd.f32 0.0, %v5015
        %5017 = vmatmul.f32.gmra.mxu0 %v1056
        %v5018 = vpop.f32.mrf.mxu0
        %v5019 = vadd.f32 0.0, %v5018
        %5020 = vmatmul.f32.gmra.mxu0 %v1058
        %v5021 = vpop.f32.mrf.mxu0
        %v5022 = vadd.f32 0.0, %v5021
        %5023 = vmatmul.f32.gmra.mxu0 %v1060
        %v5024 = vpop.f32.mrf.mxu0
        %v5025 = vadd.f32 0.0, %v5024
        %5026 = vmatmul.f32.gmra.mxu0 %v1062
        %v5027 = vpop.f32.mrf.mxu0
        %v5028 = vadd.f32 0.0, %v5027
        %5029 = vmatmul.f32.gmra.mxu0 %v1064
        %v5030 = vpop.f32.mrf.mxu0
        %v5031 = vadd.f32 0.0, %v5030
        %5032 = vmatmul.f32.gmra.mxu0 %v1066
        %v5033 = vpop.f32.mrf.mxu0
        %v5034 = vadd.f32 0.0, %v5033
        %5035 = vmatmul.f32.gmra.mxu0 %v1068
        %v5036 = vpop.f32.mrf.mxu0
        %v5037 = vadd.f32 0.0, %v5036
        %5038 = vmatmul.f32.gmra.mxu0 %v1070
        %v5039 = vpop.f32.mrf.mxu0
        %v5040 = vadd.f32 0.0, %v5039
        %5041 = vmatmul.f32.gmra.mxu0 %v1072
        %v5042 = vpop.f32.mrf.mxu0
        %v5043 = vadd.f32 0.0, %v5042
        %5044 = vmatmul.f32.gmra.mxu0 %v1074
        %v5045 = vpop.f32.mrf.mxu0
        %v5046 = vadd.f32 0.0, %v5045
        %5047 = vmatmul.f32.gmra.mxu0 %v1076
        %v5048 = vpop.f32.mrf.mxu0
        %v5049 = vadd.f32 0.0, %v5048
        %5050 = vdwg.mxu0
        %5051 = vmatpush.msra.mxu0 %v4924
        %5052 = vmatpush.msra.mxu0 %v4923
        %5053 = vmatpush.msra.mxu0 %v4922
        %5054 = vmatpush.msra.mxu0 %v4921
        %5055 = vmatpush.msra.mxu0 %v4920
        %5056 = vmatpush.msra.mxu0 %v4919
        %5057 = vmatpush.msra.mxu0 %v4918
        %5058 = vmatpush.msra.mxu0 %v4917
        %5059 = vmatpush.msra.mxu0 %v4916
        %5060 = vmatpush.msra.mxu0 %v4915
        %5061 = vmatpush.msra.mxu0 %v4914
        %5062 = vmatpush.msra.mxu0 %v4913
        %5063 = vmatpush.msra.mxu0 %v4912
        %5064 = vmatpush.msra.mxu0 %v4911
        %5065 = vmatpush.msra.mxu0 %v4910
        %5066 = vmatpush.msra.mxu0 %v4909
        %5067 = vmatmul.f32.gmra.mxu0 %v1007
        %v5068 = vpop.f32.mrf.mxu0
        %v5069 = vadd.f32 %v4944, %v5068
        %5070 = vmatmul.f32.gmra.mxu0 %v1009
        %v5071 = vpop.f32.mrf.mxu0
        %v5072 = vadd.f32 %v4947, %v5071
        %5073 = vmatmul.f32.gmra.mxu0 %v1011
        %v5074 = vpop.f32.mrf.mxu0
        %v5075 = vadd.f32 %v4950, %v5074
        %5076 = vmatmul.f32.gmra.mxu0 %v1013
        %v5077 = vpop.f32.mrf.mxu0
        %v5078 = vadd.f32 %v4953, %v5077
        %5079 = vmatmul.f32.gmra.mxu0 %v1015
        %v5080 = vpop.f32.mrf.mxu0
        %v5081 = vadd.f32 %v4956, %v5080
        %5082 = vmatmul.f32.gmra.mxu0 %v1017
        %v5083 = vpop.f32.mrf.mxu0
        %v5084 = vadd.f32 %v4959, %v5083
        %5085 = vmatmul.f32.gmra.mxu0 %v1019
        %v5086 = vpop.f32.mrf.mxu0
        %v5087 = vadd.f32 %v4962, %v5086
        %5088 = vmatmul.f32.gmra.mxu0 %v1021
        %v5089 = vpop.f32.mrf.mxu0
        %v5090 = vadd.f32 %v4965, %v5089
        %5091 = vmatmul.f32.gmra.mxu0 %v1023
        %v5092 = vpop.f32.mrf.mxu0
        %v5093 = vadd.f32 %v4968, %v5092
        %5094 = vmatmul.f32.gmra.mxu0 %v1025
        %v5095 = vpop.f32.mrf.mxu0
        %v5096 = vadd.f32 %v4971, %v5095
        %5097 = vmatmul.f32.gmra.mxu0 %v1027
        %v5098 = vpop.f32.mrf.mxu0
        %v5099 = vadd.f32 %v4974, %v5098
        %5100 = vmatmul.f32.gmra.mxu0 %v1029
        %v5101 = vpop.f32.mrf.mxu0
        %v5102 = vadd.f32 %v4977, %v5101
        %5103 = vmatmul.f32.gmra.mxu0 %v1031
        %v5104 = vpop.f32.mrf.mxu0
        %v5105 = vadd.f32 %v4980, %v5104
        %5106 = vmatmul.f32.gmra.mxu0 %v1033
        %v5107 = vpop.f32.mrf.mxu0
        %v5108 = vadd.f32 %v4983, %v5107
        %5109 = vmatmul.f32.gmra.mxu0 %v1035
        %v5110 = vpop.f32.mrf.mxu0
        %v5111 = vadd.f32 %v4986, %v5110
        %5112 = vmatmul.f32.gmra.mxu0 %v1037
        %v5113 = vpop.f32.mrf.mxu0
        %v5114 = vadd.f32 %v4989, %v5113
        %5115 = vmatmul.f32.gmra.mxu0 %v1039
        %v5116 = vpop.f32.mrf.mxu0
        %v5117 = vadd.f32 %v4992, %v5116
        %5118 = vmatmul.f32.gmra.mxu0 %v1041
        %v5119 = vpop.f32.mrf.mxu0
        %v5120 = vadd.f32 %v4995, %v5119
        %5121 = vmatmul.f32.gmra.mxu0 %v1043
        %v5122 = vpop.f32.mrf.mxu0
        %v5123 = vadd.f32 %v4998, %v5122
        %5124 = vmatmul.f32.gmra.mxu0 %v1045
        %v5125 = vpop.f32.mrf.mxu0
        %v5126 = vadd.f32 %v5001, %v5125
        %5127 = vmatmul.f32.gmra.mxu0 %v1047
        %v5128 = vpop.f32.mrf.mxu0
        %v5129 = vadd.f32 %v5004, %v5128
        %5130 = vmatmul.f32.gmra.mxu0 %v1049
        %v5131 = vpop.f32.mrf.mxu0
        %v5132 = vadd.f32 %v5007, %v5131
        %5133 = vmatmul.f32.gmra.mxu0 %v1051
        %v5134 = vpop.f32.mrf.mxu0
        %v5135 = vadd.f32 %v5010, %v5134
        %5136 = vmatmul.f32.gmra.mxu0 %v1053
        %v5137 = vpop.f32.mrf.mxu0
        %v5138 = vadd.f32 %v5013, %v5137
        %5139 = vmatmul.f32.gmra.mxu0 %v1055
        %v5140 = vpop.f32.mrf.mxu0
        %v5141 = vadd.f32 %v5016, %v5140
        %5142 = vmatmul.f32.gmra.mxu0 %v1057
        %v5143 = vpop.f32.mrf.mxu0
        %v5144 = vadd.f32 %v5019, %v5143
        %5145 = vmatmul.f32.gmra.mxu0 %v1059
        %v5146 = vpop.f32.mrf.mxu0
        %v5147 = vadd.f32 %v5022, %v5146
        %5148 = vmatmul.f32.gmra.mxu0 %v1061
        %v5149 = vpop.f32.mrf.mxu0
        %v5150 = vadd.f32 %v5025, %v5149
        %5151 = vmatmul.f32.gmra.mxu0 %v1063
        %v5152 = vpop.f32.mrf.mxu0
        %v5153 = vadd.f32 %v5028, %v5152
        %5154 = vmatmul.f32.gmra.mxu0 %v1065
        %v5155 = vpop.f32.mrf.mxu0
        %v5156 = vadd.f32 %v5031, %v5155
        %5157 = vmatmul.f32.gmra.mxu0 %v1067
        %v5158 = vpop.f32.mrf.mxu0
        %v5159 = vadd.f32 %v5034, %v5158
        %5160 = vmatmul.f32.gmra.mxu0 %v1069
        %v5161 = vpop.f32.mrf.mxu0
        %v5162 = vadd.f32 %v5037, %v5161
        %5163 = vmatmul.f32.gmra.mxu0 %v1071
        %v5164 = vpop.f32.mrf.mxu0
        %v5165 = vadd.f32 %v5040, %v5164
        %5166 = vmatmul.f32.gmra.mxu0 %v1073
        %v5167 = vpop.f32.mrf.mxu0
        %v5168 = vadd.f32 %v5043, %v5167
        %5169 = vmatmul.f32.gmra.mxu0 %v1075
        %v5170 = vpop.f32.mrf.mxu0
        %v5171 = vadd.f32 %v5046, %v5170
        %5172 = vmatmul.f32.gmra.mxu0 %v1077
        %v5173 = vpop.f32.mrf.mxu0
        %v5174 = vadd.f32 %v5049, %v5173
        %5175 = vdwg.mxu0
        %5176 = vmatpush.msra.mxu0 %v4908
        %5177 = vmatpush.msra.mxu0 %v4907
        %5178 = vmatpush.msra.mxu0 %v4906
        %5179 = vmatpush.msra.mxu0 %v4905
        %5180 = vmatpush.msra.mxu0 %v4904
        %5181 = vmatpush.msra.mxu0 %v4903
        %5182 = vmatpush.msra.mxu0 %v4902
        %5183 = vmatpush.msra.mxu0 %v4901
        %5184 = vmatpush.msra.mxu0 %v4900
        %5185 = vmatpush.msra.mxu0 %v4899
        %5186 = vmatpush.msra.mxu0 %v4898
        %5187 = vmatpush.msra.mxu0 %v4897
        %5188 = vmatpush.msra.mxu0 %v4896
        %5189 = vmatpush.msra.mxu0 %v4895
        %5190 = vmatpush.msra.mxu0 %v4894
        %5191 = vmatpush.msra.mxu0 %v4893
        %5192 = vmatmul.f32.gmra.mxu0 %v1078
        %v5193 = vpop.f32.mrf.mxu0
        %v5194 = vadd.f32 0.0, %v5193
        %5195 = vmatmul.f32.gmra.mxu0 %v1080
        %v5196 = vpop.f32.mrf.mxu0
        %v5197 = vadd.f32 0.0, %v5196
        %5198 = vmatmul.f32.gmra.mxu0 %v1082
        %v5199 = vpop.f32.mrf.mxu0
        %v5200 = vadd.f32 0.0, %v5199
        %5201 = vmatmul.f32.gmra.mxu0 %v1084
        %v5202 = vpop.f32.mrf.mxu0
        %v5203 = vadd.f32 0.0, %v5202
        %5204 = vmatmul.f32.gmra.mxu0 %v1086
        %v5205 = vpop.f32.mrf.mxu0
        %v5206 = vadd.f32 0.0, %v5205
        %5207 = vmatmul.f32.gmra.mxu0 %v1088
        %v5208 = vpop.f32.mrf.mxu0
        %v5209 = vadd.f32 0.0, %v5208
        %5210 = vmatmul.f32.gmra.mxu0 %v1090
        %v5211 = vpop.f32.mrf.mxu0
        %v5212 = vadd.f32 0.0, %v5211
        %5213 = vmatmul.f32.gmra.mxu0 %v1092
        %v5214 = vpop.f32.mrf.mxu0
        %v5215 = vadd.f32 0.0, %v5214
        %5216 = vmatmul.f32.gmra.mxu0 %v1094
        %v5217 = vpop.f32.mrf.mxu0
        %v5218 = vadd.f32 0.0, %v5217
        %5219 = vmatmul.f32.gmra.mxu0 %v1096
        %v5220 = vpop.f32.mrf.mxu0
        %v5221 = vadd.f32 0.0, %v5220
        %5222 = vmatmul.f32.gmra.mxu0 %v1098
        %v5223 = vpop.f32.mrf.mxu0
        %v5224 = vadd.f32 0.0, %v5223
        %5225 = vmatmul.f32.gmra.mxu0 %v1100
        %v5226 = vpop.f32.mrf.mxu0
        %v5227 = vadd.f32 0.0, %v5226
        %5228 = vmatmul.f32.gmra.mxu0 %v1102
        %v5229 = vpop.f32.mrf.mxu0
        %v5230 = vadd.f32 0.0, %v5229
        %5231 = vmatmul.f32.gmra.mxu0 %v1104
        %v5232 = vpop.f32.mrf.mxu0
        %v5233 = vadd.f32 0.0, %v5232
        %5234 = vmatmul.f32.gmra.mxu0 %v1106
        %v5235 = vpop.f32.mrf.mxu0
        %v5236 = vadd.f32 0.0, %v5235
        %5237 = vmatmul.f32.gmra.mxu0 %v1108
        %v5238 = vpop.f32.mrf.mxu0
        %v5239 = vadd.f32 0.0, %v5238
        %5240 = vmatmul.f32.gmra.mxu0 %v1110
        %v5241 = vpop.f32.mrf.mxu0
        %v5242 = vadd.f32 0.0, %v5241
        %5243 = vmatmul.f32.gmra.mxu0 %v1112
        %v5244 = vpop.f32.mrf.mxu0
        %v5245 = vadd.f32 0.0, %v5244
        %5246 = vmatmul.f32.gmra.mxu0 %v1114
        %v5247 = vpop.f32.mrf.mxu0
        %v5248 = vadd.f32 0.0, %v5247
        %5249 = vmatmul.f32.gmra.mxu0 %v1116
        %v5250 = vpop.f32.mrf.mxu0
        %v5251 = vadd.f32 0.0, %v5250
        %5252 = vmatmul.f32.gmra.mxu0 %v1118
        %v5253 = vpop.f32.mrf.mxu0
        %v5254 = vadd.f32 0.0, %v5253
        %5255 = vmatmul.f32.gmra.mxu0 %v1120
        %v5256 = vpop.f32.mrf.mxu0
        %v5257 = vadd.f32 0.0, %v5256
        %5258 = vmatmul.f32.gmra.mxu0 %v1122
        %v5259 = vpop.f32.mrf.mxu0
        %v5260 = vadd.f32 0.0, %v5259
        %5261 = vmatmul.f32.gmra.mxu0 %v1124
        %v5262 = vpop.f32.mrf.mxu0
        %v5263 = vadd.f32 0.0, %v5262
        %5264 = vmatmul.f32.gmra.mxu0 %v1126
        %v5265 = vpop.f32.mrf.mxu0
        %v5266 = vadd.f32 0.0, %v5265
        %5267 = vmatmul.f32.gmra.mxu0 %v1128
        %v5268 = vpop.f32.mrf.mxu0
        %v5269 = vadd.f32 0.0, %v5268
        %5270 = vmatmul.f32.gmra.mxu0 %v1130
        %v5271 = vpop.f32.mrf.mxu0
        %v5272 = vadd.f32 0.0, %v5271
        %5273 = vmatmul.f32.gmra.mxu0 %v1132
        %v5274 = vpop.f32.mrf.mxu0
        %v5275 = vadd.f32 0.0, %v5274
        %5276 = vmatmul.f32.gmra.mxu0 %v1134
        %v5277 = vpop.f32.mrf.mxu0
        %v5278 = vadd.f32 0.0, %v5277
        %5279 = vmatmul.f32.gmra.mxu0 %v1136
        %v5280 = vpop.f32.mrf.mxu0
        %v5281 = vadd.f32 0.0, %v5280
        %5282 = vmatmul.f32.gmra.mxu0 %v1138
        %v5283 = vpop.f32.mrf.mxu0
        %v5284 = vadd.f32 0.0, %v5283
        %5285 = vmatmul.f32.gmra.mxu0 %v1140
        %v5286 = vpop.f32.mrf.mxu0
        %v5287 = vadd.f32 0.0, %v5286
        %5288 = vmatmul.f32.gmra.mxu0 %v1142
        %v5289 = vpop.f32.mrf.mxu0
        %v5290 = vadd.f32 0.0, %v5289
        %5291 = vmatmul.f32.gmra.mxu0 %v1144
        %v5292 = vpop.f32.mrf.mxu0
        %v5293 = vadd.f32 0.0, %v5292
        %5294 = vmatmul.f32.gmra.mxu0 %v1146
        %v5295 = vpop.f32.mrf.mxu0
        %v5296 = vadd.f32 0.0, %v5295
        %5297 = vmatmul.f32.gmra.mxu0 %v1148
        %v5298 = vpop.f32.mrf.mxu0
        %v5299 = vadd.f32 0.0, %v5298
        %5300 = vdwg.mxu0
        %5301 = vmatpush.msra.mxu0 %v4924
        %5302 = vmatpush.msra.mxu0 %v4923
        %5303 = vmatpush.msra.mxu0 %v4922
        %5304 = vmatpush.msra.mxu0 %v4921
        %5305 = vmatpush.msra.mxu0 %v4920
        %5306 = vmatpush.msra.mxu0 %v4919
        %5307 = vmatpush.msra.mxu0 %v4918
        %5308 = vmatpush.msra.mxu0 %v4917
        %5309 = vmatpush.msra.mxu0 %v4916
        %5310 = vmatpush.msra.mxu0 %v4915
        %5311 = vmatpush.msra.mxu0 %v4914
        %5312 = vmatpush.msra.mxu0 %v4913
        %5313 = vmatpush.msra.mxu0 %v4912
        %5314 = vmatpush.msra.mxu0 %v4911
        %5315 = vmatpush.msra.mxu0 %v4910
        %5316 = vmatpush.msra.mxu0 %v4909
        %5317 = vmatmul.f32.gmra.mxu0 %v1079
        %v5318 = vpop.f32.mrf.mxu0
        %v5319 = vadd.f32 %v5194, %v5318
        %5320 = vmatmul.f32.gmra.mxu0 %v1081
        %v5321 = vpop.f32.mrf.mxu0
        %v5322 = vadd.f32 %v5197, %v5321
        %5323 = vmatmul.f32.gmra.mxu0 %v1083
        %v5324 = vpop.f32.mrf.mxu0
        %v5325 = vadd.f32 %v5200, %v5324
        %5326 = vmatmul.f32.gmra.mxu0 %v1085
        %v5327 = vpop.f32.mrf.mxu0
        %v5328 = vadd.f32 %v5203, %v5327
        %5329 = vmatmul.f32.gmra.mxu0 %v1087
        %v5330 = vpop.f32.mrf.mxu0
        %v5331 = vadd.f32 %v5206, %v5330
        %5332 = vmatmul.f32.gmra.mxu0 %v1089
        %v5333 = vpop.f32.mrf.mxu0
        %v5334 = vadd.f32 %v5209, %v5333
        %5335 = vmatmul.f32.gmra.mxu0 %v1091
        %v5336 = vpop.f32.mrf.mxu0
        %v5337 = vadd.f32 %v5212, %v5336
        %5338 = vmatmul.f32.gmra.mxu0 %v1093
        %v5339 = vpop.f32.mrf.mxu0
        %v5340 = vadd.f32 %v5215, %v5339
        %5341 = vmatmul.f32.gmra.mxu0 %v1095
        %v5342 = vpop.f32.mrf.mxu0
        %v5343 = vadd.f32 %v5218, %v5342
        %5344 = vmatmul.f32.gmra.mxu0 %v1097
        %v5345 = vpop.f32.mrf.mxu0
        %v5346 = vadd.f32 %v5221, %v5345
        %5347 = vmatmul.f32.gmra.mxu0 %v1099
        %v5348 = vpop.f32.mrf.mxu0
        %v5349 = vadd.f32 %v5224, %v5348
        %5350 = vmatmul.f32.gmra.mxu0 %v1101
        %v5351 = vpop.f32.mrf.mxu0
        %v5352 = vadd.f32 %v5227, %v5351
        %5353 = vmatmul.f32.gmra.mxu0 %v1103
        %v5354 = vpop.f32.mrf.mxu0
        %v5355 = vadd.f32 %v5230, %v5354
        %5356 = vmatmul.f32.gmra.mxu0 %v1105
        %v5357 = vpop.f32.mrf.mxu0
        %v5358 = vadd.f32 %v5233, %v5357
        %5359 = vmatmul.f32.gmra.mxu0 %v1107
        %v5360 = vpop.f32.mrf.mxu0
        %v5361 = vadd.f32 %v5236, %v5360
        %5362 = vmatmul.f32.gmra.mxu0 %v1109
        %v5363 = vpop.f32.mrf.mxu0
        %v5364 = vadd.f32 %v5239, %v5363
        %5365 = vmatmul.f32.gmra.mxu0 %v1111
        %v5366 = vpop.f32.mrf.mxu0
        %v5367 = vadd.f32 %v5242, %v5366
        %5368 = vmatmul.f32.gmra.mxu0 %v1113
        %v5369 = vpop.f32.mrf.mxu0
        %v5370 = vadd.f32 %v5245, %v5369
        %5371 = vmatmul.f32.gmra.mxu0 %v1115
        %v5372 = vpop.f32.mrf.mxu0
        %v5373 = vadd.f32 %v5248, %v5372
        %5374 = vmatmul.f32.gmra.mxu0 %v1117
        %v5375 = vpop.f32.mrf.mxu0
        %v5376 = vadd.f32 %v5251, %v5375
        %5377 = vmatmul.f32.gmra.mxu0 %v1119
        %v5378 = vpop.f32.mrf.mxu0
        %v5379 = vadd.f32 %v5254, %v5378
        %5380 = vmatmul.f32.gmra.mxu0 %v1121
        %v5381 = vpop.f32.mrf.mxu0
        %v5382 = vadd.f32 %v5257, %v5381
        %5383 = vmatmul.f32.gmra.mxu0 %v1123
        %v5384 = vpop.f32.mrf.mxu0
        %v5385 = vadd.f32 %v5260, %v5384
        %5386 = vmatmul.f32.gmra.mxu0 %v1125
        %v5387 = vpop.f32.mrf.mxu0
        %v5388 = vadd.f32 %v5263, %v5387
        %5389 = vmatmul.f32.gmra.mxu0 %v1127
        %v5390 = vpop.f32.mrf.mxu0
        %v5391 = vadd.f32 %v5266, %v5390
        %5392 = vmatmul.f32.gmra.mxu0 %v1129
        %v5393 = vpop.f32.mrf.mxu0
        %v5394 = vadd.f32 %v5269, %v5393
        %5395 = vmatmul.f32.gmra.mxu0 %v1131
        %v5396 = vpop.f32.mrf.mxu0
        %v5397 = vadd.f32 %v5272, %v5396
        %5398 = vmatmul.f32.gmra.mxu0 %v1133
        %v5399 = vpop.f32.mrf.mxu0
        %v5400 = vadd.f32 %v5275, %v5399
        %5401 = vmatmul.f32.gmra.mxu0 %v1135
        %v5402 = vpop.f32.mrf.mxu0
        %v5403 = vadd.f32 %v5278, %v5402
        %5404 = vmatmul.f32.gmra.mxu0 %v1137
        %v5405 = vpop.f32.mrf.mxu0
        %v5406 = vadd.f32 %v5281, %v5405
        %5407 = vmatmul.f32.gmra.mxu0 %v1139
        %v5408 = vpop.f32.mrf.mxu0
        %v5409 = vadd.f32 %v5284, %v5408
        %5410 = vmatmul.f32.gmra.mxu0 %v1141
        %v5411 = vpop.f32.mrf.mxu0
        %v5412 = vadd.f32 %v5287, %v5411
        %5413 = vmatmul.f32.gmra.mxu0 %v1143
        %v5414 = vpop.f32.mrf.mxu0
        %v5415 = vadd.f32 %v5290, %v5414
        %5416 = vmatmul.f32.gmra.mxu0 %v1145
        %v5417 = vpop.f32.mrf.mxu0
        %v5418 = vadd.f32 %v5293, %v5417
        %5419 = vmatmul.f32.gmra.mxu0 %v1147
        %v5420 = vpop.f32.mrf.mxu0
        %v5421 = vadd.f32 %v5296, %v5420
        %5422 = vmatmul.f32.gmra.mxu0 %v1149
        %v5423 = vpop.f32.mrf.mxu0
        %v5424 = vadd.f32 %v5299, %v5423
        %5425 = vdwg.mxu0
        %v5426 = vld [vmem:[#allocation16] sm:$0xff]
        %v5427 = vld [vmem:[#allocation16 + $0x8] sm:$0xff]
        %v5428 = vld [vmem:[#allocation16 + $0x10] sm:$0xff]
        %v5429 = vld [vmem:[#allocation16 + $0x18] sm:$0xff]
        %v5430 = vld [vmem:[#allocation16 + $0x20] sm:$0xff]
        %v5431 = vld [vmem:[#allocation16 + $0x28] sm:$0xff]
        %v5432 = vld [vmem:[#allocation16 + $0x30] sm:$0xff]
        %v5433 = vld [vmem:[#allocation16 + $0x38] sm:$0xff]
        %v5434 = vld [vmem:[#allocation16 + $0x40] sm:$0xff]
        %v5435 = vld [vmem:[#allocation16 + $0x48] sm:$0xff]
        %v5436 = vld [vmem:[#allocation16 + $0x50] sm:$0xff]
        %v5437 = vld [vmem:[#allocation16 + $0x58] sm:$0xff]
        %v5438 = vld [vmem:[#allocation16 + $0x60] sm:$0xff]
        %v5439 = vld [vmem:[#allocation16 + $0x68] sm:$0xff]
        %v5440 = vld [vmem:[#allocation16 + $0x70] sm:$0xff]
        %v5441 = vld [vmem:[#allocation16 + $0x78] sm:$0xff]
        %v5442 = vld [vmem:[#allocation16 + $0x80] sm:$0xff]
        %v5443 = vld [vmem:[#allocation16 + $0x88] sm:$0xff]
        %v5444 = vld [vmem:[#allocation16 + $0x90] sm:$0xff]
        %v5445 = vld [vmem:[#allocation16 + $0x98] sm:$0xff]
        %v5446 = vld [vmem:[#allocation16 + $0xa0] sm:$0xff]
        %v5447 = vld [vmem:[#allocation16 + $0xa8] sm:$0xff]
        %v5448 = vld [vmem:[#allocation16 + $0xb0] sm:$0xff]
        %v5449 = vld [vmem:[#allocation16 + $0xb8] sm:$0xff]
        %v5450 = vld [vmem:[#allocation16 + $0xc0] sm:$0xff]
        %v5451 = vld [vmem:[#allocation16 + $0xc8] sm:$0xff]
        %v5452 = vld [vmem:[#allocation16 + $0xd0] sm:$0xff]
        %v5453 = vld [vmem:[#allocation16 + $0xd8] sm:$0xff]
        %v5454 = vld [vmem:[#allocation16 + $0xe0] sm:$0xff]
        %v5455 = vld [vmem:[#allocation16 + $0xe8] sm:$0xff]
        %v5456 = vld [vmem:[#allocation16 + $0xf0] sm:$0xff]
        %v5457 = vld [vmem:[#allocation16 + $0xf8] sm:$0xff]
        %v5458 = vld [vmem:[#allocation16 + $0x100] sm:$0xff]
        %v5459 = vld [vmem:[#allocation16 + $0x108] sm:$0xff]
        %v5460 = vld [vmem:[#allocation16 + $0x110] sm:$0xff]
        %v5461 = vld [vmem:[#allocation16 + $0x118] sm:$0xff]
        %v5462 = vld [vmem:[#allocation16 + $0x120] sm:$0xff]
        %v5463 = vld [vmem:[#allocation16 + $0x128] sm:$0xff]
        %v5464 = vld [vmem:[#allocation16 + $0x130] sm:$0xff]
        %v5465 = vld [vmem:[#allocation16 + $0x138] sm:$0xff]
        %v5466 = vld [vmem:[#allocation16 + $0x140] sm:$0xff]
        %v5467 = vld [vmem:[#allocation16 + $0x148] sm:$0xff]
        %v5468 = vld [vmem:[#allocation16 + $0x150] sm:$0xff]
        %v5469 = vld [vmem:[#allocation16 + $0x158] sm:$0xff]
        %v5470 = vld [vmem:[#allocation16 + $0x160] sm:$0xff]
        %v5471 = vld [vmem:[#allocation16 + $0x168] sm:$0xff]
        %v5472 = vld [vmem:[#allocation16 + $0x170] sm:$0xff]
        %v5473 = vld [vmem:[#allocation16 + $0x178] sm:$0xff]
        %s5474 = scalar_lea.vmem [#allocation16], 384
        %v5475 = vld [vmem:[%s5474] sm:$0xff]
        %v5476 = vld [vmem:[%s5474 + $0x8] sm:$0xff]
        %v5477 = vld [vmem:[%s5474 + $0x10] sm:$0xff]
        %v5478 = vld [vmem:[%s5474 + $0x18] sm:$0xff]
        %v5479 = vld [vmem:[%s5474 + $0x20] sm:$0xff]
        %v5480 = vld [vmem:[%s5474 + $0x28] sm:$0xff]
        %v5481 = vld [vmem:[%s5474 + $0x30] sm:$0xff]
        %v5482 = vld [vmem:[%s5474 + $0x38] sm:$0xff]
        %v5483 = vld [vmem:[%s5474 + $0x40] sm:$0xff]
        %v5484 = vld [vmem:[%s5474 + $0x48] sm:$0xff]
        %v5485 = vld [vmem:[%s5474 + $0x50] sm:$0xff]
        %v5486 = vld [vmem:[%s5474 + $0x58] sm:$0xff]
        %v5487 = vld [vmem:[%s5474 + $0x60] sm:$0xff]
        %v5488 = vld [vmem:[%s5474 + $0x68] sm:$0xff]
        %v5489 = vld [vmem:[%s5474 + $0x70] sm:$0xff]
        %v5490 = vld [vmem:[%s5474 + $0x78] sm:$0xff]
        %v5491 = vld [vmem:[%s5474 + $0x80] sm:$0xff]
        %v5492 = vld [vmem:[%s5474 + $0x88] sm:$0xff]
        %v5493 = vld [vmem:[%s5474 + $0x90] sm:$0xff]
        %v5494 = vld [vmem:[%s5474 + $0x98] sm:$0xff]
        %v5495 = vld [vmem:[%s5474 + $0xa0] sm:$0xff]
        %v5496 = vld [vmem:[%s5474 + $0xa8] sm:$0xff]
        %v5497 = vld [vmem:[%s5474 + $0xb0] sm:$0xff]
        %v5498 = vld [vmem:[%s5474 + $0xb8] sm:$0xff]
        %v5499 = vld [vmem:[%s5474 + $0xc0] sm:$0xff]
        %v5500 = vld [vmem:[%s5474 + $0xc8] sm:$0xff]
        %v5501 = vld [vmem:[%s5474 + $0xd0] sm:$0xff]
        %v5502 = vld [vmem:[%s5474 + $0xd8] sm:$0xff]
        %v5503 = vld [vmem:[%s5474 + $0xe0] sm:$0xff]
        %v5504 = vld [vmem:[%s5474 + $0xe8] sm:$0xff]
        %v5505 = vld [vmem:[%s5474 + $0xf0] sm:$0xff]
        %v5506 = vld [vmem:[%s5474 + $0xf8] sm:$0xff]
        %v5507 = vld [vmem:[%s5474 + $0x100] sm:$0xff]
        %v5508 = vld [vmem:[%s5474 + $0x108] sm:$0xff]
        %v5509 = vld [vmem:[%s5474 + $0x110] sm:$0xff]
        %v5510 = vld [vmem:[%s5474 + $0x118] sm:$0xff]
        %v5511 = vld [vmem:[%s5474 + $0x120] sm:$0xff]
        %v5512 = vld [vmem:[%s5474 + $0x128] sm:$0xff]
        %v5513 = vld [vmem:[%s5474 + $0x130] sm:$0xff]
        %v5514 = vld [vmem:[%s5474 + $0x138] sm:$0xff]
        %v5515 = vld [vmem:[%s5474 + $0x140] sm:$0xff]
        %v5516 = vld [vmem:[%s5474 + $0x148] sm:$0xff]
        %v5517 = vld [vmem:[%s5474 + $0x150] sm:$0xff]
        %v5518 = vld [vmem:[%s5474 + $0x158] sm:$0xff]
        %v5519 = vld [vmem:[%s5474 + $0x160] sm:$0xff]
        %v5520 = vld [vmem:[%s5474 + $0x168] sm:$0xff]
        %v5521 = vld [vmem:[%s5474 + $0x170] sm:$0xff]
        %v5522 = vld [vmem:[%s5474 + $0x178] sm:$0xff]
        %5523 = vmatpush.msra.mxu0 %v5490
        %5524 = vmatpush.msra.mxu0 %v5489
        %5525 = vmatpush.msra.mxu0 %v5488
        %5526 = vmatpush.msra.mxu0 %v5487
        %5527 = vmatpush.msra.mxu0 %v5486
        %5528 = vmatpush.msra.mxu0 %v5485
        %5529 = vmatpush.msra.mxu0 %v5484
        %5530 = vmatpush.msra.mxu0 %v5483
        %5531 = vmatpush.msra.mxu0 %v5482
        %5532 = vmatpush.msra.mxu0 %v5481
        %5533 = vmatpush.msra.mxu0 %v5480
        %5534 = vmatpush.msra.mxu0 %v5479
        %5535 = vmatpush.msra.mxu0 %v5478
        %5536 = vmatpush.msra.mxu0 %v5477
        %5537 = vmatpush.msra.mxu0 %v5476
        %5538 = vmatpush.msra.mxu0 %v5475
        %5539 = vmatmul.f32.gmra.mxu0 %v5075
        %v5540 = vpop.f32.mrf.mxu0
        %v5541 = vadd.f32 0.0, %v5540
        %5542 = vmatmul.f32.gmra.mxu0 %v5078
        %v5543 = vpop.f32.mrf.mxu0
        %v5544 = vadd.f32 0.0, %v5543
        %5545 = vmatmul.f32.gmra.mxu0 %v5081
        %v5546 = vpop.f32.mrf.mxu0
        %v5547 = vadd.f32 0.0, %v5546
        %5548 = vmatmul.f32.gmra.mxu0 %v5084
        %v5549 = vpop.f32.mrf.mxu0
        %v5550 = vadd.f32 0.0, %v5549
        %5551 = vmatmul.f32.gmra.mxu0 %v5087
        %v5552 = vpop.f32.mrf.mxu0
        %v5553 = vadd.f32 0.0, %v5552
        %5554 = vmatmul.f32.gmra.mxu0 %v5090
        %v5555 = vpop.f32.mrf.mxu0
        %v5556 = vadd.f32 0.0, %v5555
        %5557 = vmatmul.f32.gmra.mxu0 %v5093
        %v5558 = vpop.f32.mrf.mxu0
        %v5559 = vadd.f32 0.0, %v5558
        %5560 = vmatmul.f32.gmra.mxu0 %v5096
        %v5561 = vpop.f32.mrf.mxu0
        %v5562 = vadd.f32 0.0, %v5561
        %5563 = vmatmul.f32.gmra.mxu0 %v5099
        %v5564 = vpop.f32.mrf.mxu0
        %v5565 = vadd.f32 0.0, %v5564
        %5566 = vmatmul.f32.gmra.mxu0 %v5102
        %v5567 = vpop.f32.mrf.mxu0
        %v5568 = vadd.f32 0.0, %v5567
        %5569 = vmatmul.f32.gmra.mxu0 %v5105
        %v5570 = vpop.f32.mrf.mxu0
        %v5571 = vadd.f32 0.0, %v5570
        %5572 = vmatmul.f32.gmra.mxu0 %v5108
        %v5573 = vpop.f32.mrf.mxu0
        %v5574 = vadd.f32 0.0, %v5573
        %5575 = vmatmul.f32.gmra.mxu0 %v5111
        %v5576 = vpop.f32.mrf.mxu0
        %v5577 = vadd.f32 0.0, %v5576
        %5578 = vmatmul.f32.gmra.mxu0 %v5114
        %v5579 = vpop.f32.mrf.mxu0
        %v5580 = vadd.f32 0.0, %v5579
        %5581 = vmatmul.f32.gmra.mxu0 %v5117
        %v5582 = vpop.f32.mrf.mxu0
        %v5583 = vadd.f32 0.0, %v5582
        %5584 = vmatmul.f32.gmra.mxu0 %v5120
        %v5585 = vpop.f32.mrf.mxu0
        %v5586 = vadd.f32 0.0, %v5585
        %5587 = vmatmul.f32.gmra.mxu0 %v5123
        %v5588 = vpop.f32.mrf.mxu0
        %v5589 = vadd.f32 0.0, %v5588
        %5590 = vmatmul.f32.gmra.mxu0 %v5126
        %v5591 = vpop.f32.mrf.mxu0
        %v5592 = vadd.f32 0.0, %v5591
        %5593 = vmatmul.f32.gmra.mxu0 %v5129
        %v5594 = vpop.f32.mrf.mxu0
        %v5595 = vadd.f32 0.0, %v5594
        %5596 = vmatmul.f32.gmra.mxu0 %v5132
        %v5597 = vpop.f32.mrf.mxu0
        %v5598 = vadd.f32 0.0, %v5597
        %5599 = vmatmul.f32.gmra.mxu0 %v5135
        %v5600 = vpop.f32.mrf.mxu0
        %v5601 = vadd.f32 0.0, %v5600
        %5602 = vmatmul.f32.gmra.mxu0 %v5138
        %v5603 = vpop.f32.mrf.mxu0
        %v5604 = vadd.f32 0.0, %v5603
        %5605 = vmatmul.f32.gmra.mxu0 %v5141
        %v5606 = vpop.f32.mrf.mxu0
        %v5607 = vadd.f32 0.0, %v5606
        %5608 = vmatmul.f32.gmra.mxu0 %v5144
        %v5609 = vpop.f32.mrf.mxu0
        %v5610 = vadd.f32 0.0, %v5609
        %5611 = vmatmul.f32.gmra.mxu0 %v5147
        %v5612 = vpop.f32.mrf.mxu0
        %v5613 = vadd.f32 0.0, %v5612
        %5614 = vmatmul.f32.gmra.mxu0 %v5150
        %v5615 = vpop.f32.mrf.mxu0
        %v5616 = vadd.f32 0.0, %v5615
        %5617 = vmatmul.f32.gmra.mxu0 %v5153
        %v5618 = vpop.f32.mrf.mxu0
        %v5619 = vadd.f32 0.0, %v5618
        %5620 = vmatmul.f32.gmra.mxu0 %v5156
        %v5621 = vpop.f32.mrf.mxu0
        %v5622 = vadd.f32 0.0, %v5621
        %5623 = vmatmul.f32.gmra.mxu0 %v5159
        %v5624 = vpop.f32.mrf.mxu0
        %v5625 = vadd.f32 0.0, %v5624
        %5626 = vmatmul.f32.gmra.mxu0 %v5162
        %v5627 = vpop.f32.mrf.mxu0
        %v5628 = vadd.f32 0.0, %v5627
        %5629 = vmatmul.f32.gmra.mxu0 %v5165
        %v5630 = vpop.f32.mrf.mxu0
        %v5631 = vadd.f32 0.0, %v5630
        %5632 = vmatmul.f32.gmra.mxu0 %v5168
        %v5633 = vpop.f32.mrf.mxu0
        %v5634 = vadd.f32 0.0, %v5633
        %5635 = vdwg.mxu0
        %5636 = vmatpush.msra.mxu0 %v5506
        %5637 = vmatpush.msra.mxu0 %v5505
        %5638 = vmatpush.msra.mxu0 %v5504
        %5639 = vmatpush.msra.mxu0 %v5503
        %5640 = vmatpush.msra.mxu0 %v5502
        %5641 = vmatpush.msra.mxu0 %v5501
        %5642 = vmatpush.msra.mxu0 %v5500
        %5643 = vmatpush.msra.mxu0 %v5499
        %5644 = vmatpush.msra.mxu0 %v5498
        %5645 = vmatpush.msra.mxu0 %v5497
        %5646 = vmatpush.msra.mxu0 %v5496
        %5647 = vmatpush.msra.mxu0 %v5495
        %5648 = vmatpush.msra.mxu0 %v5494
        %5649 = vmatpush.msra.mxu0 %v5493
        %5650 = vmatpush.msra.mxu0 %v5492
        %5651 = vmatpush.msra.mxu0 %v5491
        %5652 = vmatmul.f32.gmra.mxu0 %v4893
        %v5653 = vpop.f32.mrf.mxu0
        %v5654 = vadd.f32 %v5541, %v5653
        %5655 = vmatmul.f32.gmra.mxu0 %v4894
        %v5656 = vpop.f32.mrf.mxu0
        %v5657 = vadd.f32 %v5544, %v5656
        %5658 = vmatmul.f32.gmra.mxu0 %v4895
        %v5659 = vpop.f32.mrf.mxu0
        %v5660 = vadd.f32 %v5547, %v5659
        %5661 = vmatmul.f32.gmra.mxu0 %v4896
        %v5662 = vpop.f32.mrf.mxu0
        %v5663 = vadd.f32 %v5550, %v5662
        %5664 = vmatmul.f32.gmra.mxu0 %v4897
        %v5665 = vpop.f32.mrf.mxu0
        %v5666 = vadd.f32 %v5553, %v5665
        %5667 = vmatmul.f32.gmra.mxu0 %v4898
        %v5668 = vpop.f32.mrf.mxu0
        %v5669 = vadd.f32 %v5556, %v5668
        %5670 = vmatmul.f32.gmra.mxu0 %v4899
        %v5671 = vpop.f32.mrf.mxu0
        %v5672 = vadd.f32 %v5559, %v5671
        %5673 = vmatmul.f32.gmra.mxu0 %v4900
        %v5674 = vpop.f32.mrf.mxu0
        %v5675 = vadd.f32 %v5562, %v5674
        %5676 = vmatmul.f32.gmra.mxu0 %v4901
        %v5677 = vpop.f32.mrf.mxu0
        %v5678 = vadd.f32 %v5565, %v5677
        %5679 = vmatmul.f32.gmra.mxu0 %v4902
        %v5680 = vpop.f32.mrf.mxu0
        %v5681 = vadd.f32 %v5568, %v5680
        %5682 = vmatmul.f32.gmra.mxu0 %v4903
        %v5683 = vpop.f32.mrf.mxu0
        %v5684 = vadd.f32 %v5571, %v5683
        %5685 = vmatmul.f32.gmra.mxu0 %v4904
        %v5686 = vpop.f32.mrf.mxu0
        %v5687 = vadd.f32 %v5574, %v5686
        %5688 = vmatmul.f32.gmra.mxu0 %v4905
        %v5689 = vpop.f32.mrf.mxu0
        %v5690 = vadd.f32 %v5577, %v5689
        %5691 = vmatmul.f32.gmra.mxu0 %v4906
        %v5692 = vpop.f32.mrf.mxu0
        %v5693 = vadd.f32 %v5580, %v5692
        %5694 = vmatmul.f32.gmra.mxu0 %v4907
        %v5695 = vpop.f32.mrf.mxu0
        %v5696 = vadd.f32 %v5583, %v5695
        %5697 = vmatmul.f32.gmra.mxu0 %v4908
        %v5698 = vpop.f32.mrf.mxu0
        %v5699 = vadd.f32 %v5586, %v5698
        %5700 = vmatmul.f32.gmra.mxu0 %v4909
        %v5701 = vpop.f32.mrf.mxu0
        %v5702 = vadd.f32 %v5589, %v5701
        %5703 = vmatmul.f32.gmra.mxu0 %v4910
        %v5704 = vpop.f32.mrf.mxu0
        %v5705 = vadd.f32 %v5592, %v5704
        %5706 = vmatmul.f32.gmra.mxu0 %v4911
        %v5707 = vpop.f32.mrf.mxu0
        %v5708 = vadd.f32 %v5595, %v5707
        %5709 = vmatmul.f32.gmra.mxu0 %v4912
        %v5710 = vpop.f32.mrf.mxu0
        %v5711 = vadd.f32 %v5598, %v5710
        %5712 = vmatmul.f32.gmra.mxu0 %v4913
        %v5713 = vpop.f32.mrf.mxu0
        %v5714 = vadd.f32 %v5601, %v5713
        %5715 = vmatmul.f32.gmra.mxu0 %v4914
        %v5716 = vpop.f32.mrf.mxu0
        %v5717 = vadd.f32 %v5604, %v5716
        %5718 = vmatmul.f32.gmra.mxu0 %v4915
        %v5719 = vpop.f32.mrf.mxu0
        %v5720 = vadd.f32 %v5607, %v5719
        %5721 = vmatmul.f32.gmra.mxu0 %v4916
        %v5722 = vpop.f32.mrf.mxu0
        %v5723 = vadd.f32 %v5610, %v5722
        %5724 = vmatmul.f32.gmra.mxu0 %v4917
        %v5725 = vpop.f32.mrf.mxu0
        %v5726 = vadd.f32 %v5613, %v5725
        %5727 = vmatmul.f32.gmra.mxu0 %v4918
        %v5728 = vpop.f32.mrf.mxu0
        %v5729 = vadd.f32 %v5616, %v5728
        %5730 = vmatmul.f32.gmra.mxu0 %v4919
        %v5731 = vpop.f32.mrf.mxu0
        %v5732 = vadd.f32 %v5619, %v5731
        %5733 = vmatmul.f32.gmra.mxu0 %v4920
        %v5734 = vpop.f32.mrf.mxu0
        %v5735 = vadd.f32 %v5622, %v5734
        %5736 = vmatmul.f32.gmra.mxu0 %v4921
        %v5737 = vpop.f32.mrf.mxu0
        %v5738 = vadd.f32 %v5625, %v5737
        %5739 = vmatmul.f32.gmra.mxu0 %v4922
        %v5740 = vpop.f32.mrf.mxu0
        %v5741 = vadd.f32 %v5628, %v5740
        %5742 = vmatmul.f32.gmra.mxu0 %v4923
        %v5743 = vpop.f32.mrf.mxu0
        %v5744 = vadd.f32 %v5631, %v5743
        %5745 = vmatmul.f32.gmra.mxu0 %v4924
        %v5746 = vpop.f32.mrf.mxu0
        %v5747 = vadd.f32 %v5634, %v5746
        %5748 = vdwg.mxu0
        %5749 = vmatpush.msra.mxu0 %v5522
        %5750 = vmatpush.msra.mxu0 %v5521
        %5751 = vmatpush.msra.mxu0 %v5520
        %5752 = vmatpush.msra.mxu0 %v5519
        %5753 = vmatpush.msra.mxu0 %v5518
        %5754 = vmatpush.msra.mxu0 %v5517
        %5755 = vmatpush.msra.mxu0 %v5516
        %5756 = vmatpush.msra.mxu0 %v5515
        %5757 = vmatpush.msra.mxu0 %v5514
        %5758 = vmatpush.msra.mxu0 %v5513
        %5759 = vmatpush.msra.mxu0 %v5512
        %5760 = vmatpush.msra.mxu0 %v5511
        %5761 = vmatpush.msra.mxu0 %v5510
        %5762 = vmatpush.msra.mxu0 %v5509
        %5763 = vmatpush.msra.mxu0 %v5508
        %5764 = vmatpush.msra.mxu0 %v5507
        %5765 = vmatmul.f32.gmra.mxu0 %v5325
        %v5766 = vpop.f32.mrf.mxu0
        %v5767 = vadd.f32 %v5654, %v5766
        %5768 = vmatmul.f32.gmra.mxu0 %v5328
        %v5769 = vpop.f32.mrf.mxu0
        %v5770 = vadd.f32 %v5657, %v5769
        %5771 = vmatmul.f32.gmra.mxu0 %v5331
        %v5772 = vpop.f32.mrf.mxu0
        %v5773 = vadd.f32 %v5660, %v5772
        %5774 = vmatmul.f32.gmra.mxu0 %v5334
        %v5775 = vpop.f32.mrf.mxu0
        %v5776 = vadd.f32 %v5663, %v5775
        %5777 = vmatmul.f32.gmra.mxu0 %v5337
        %v5778 = vpop.f32.mrf.mxu0
        %v5779 = vadd.f32 %v5666, %v5778
        %5780 = vmatmul.f32.gmra.mxu0 %v5340
        %v5781 = vpop.f32.mrf.mxu0
        %v5782 = vadd.f32 %v5669, %v5781
        %5783 = vmatmul.f32.gmra.mxu0 %v5343
        %v5784 = vpop.f32.mrf.mxu0
        %v5785 = vadd.f32 %v5672, %v5784
        %5786 = vmatmul.f32.gmra.mxu0 %v5346
        %v5787 = vpop.f32.mrf.mxu0
        %v5788 = vadd.f32 %v5675, %v5787
        %5789 = vmatmul.f32.gmra.mxu0 %v5349
        %v5790 = vpop.f32.mrf.mxu0
        %v5791 = vadd.f32 %v5678, %v5790
        %5792 = vmatmul.f32.gmra.mxu0 %v5352
        %v5793 = vpop.f32.mrf.mxu0
        %v5794 = vadd.f32 %v5681, %v5793
        %5795 = vmatmul.f32.gmra.mxu0 %v5355
        %v5796 = vpop.f32.mrf.mxu0
        %v5797 = vadd.f32 %v5684, %v5796
        %5798 = vmatmul.f32.gmra.mxu0 %v5358
        %v5799 = vpop.f32.mrf.mxu0
        %v5800 = vadd.f32 %v5687, %v5799
        %5801 = vmatmul.f32.gmra.mxu0 %v5361
        %v5802 = vpop.f32.mrf.mxu0
        %v5803 = vadd.f32 %v5690, %v5802
        %5804 = vmatmul.f32.gmra.mxu0 %v5364
        %v5805 = vpop.f32.mrf.mxu0
        %v5806 = vadd.f32 %v5693, %v5805
        %5807 = vmatmul.f32.gmra.mxu0 %v5367
        %v5808 = vpop.f32.mrf.mxu0
        %v5809 = vadd.f32 %v5696, %v5808
        %5810 = vmatmul.f32.gmra.mxu0 %v5370
        %v5811 = vpop.f32.mrf.mxu0
        %v5812 = vadd.f32 %v5699, %v5811
        %5813 = vmatmul.f32.gmra.mxu0 %v5373
        %v5814 = vpop.f32.mrf.mxu0
        %v5815 = vadd.f32 %v5702, %v5814
        %5816 = vmatmul.f32.gmra.mxu0 %v5376
        %v5817 = vpop.f32.mrf.mxu0
        %v5818 = vadd.f32 %v5705, %v5817
        %5819 = vmatmul.f32.gmra.mxu0 %v5379
        %v5820 = vpop.f32.mrf.mxu0
        %v5821 = vadd.f32 %v5708, %v5820
        %5822 = vmatmul.f32.gmra.mxu0 %v5382
        %v5823 = vpop.f32.mrf.mxu0
        %v5824 = vadd.f32 %v5711, %v5823
        %5825 = vmatmul.f32.gmra.mxu0 %v5385
        %v5826 = vpop.f32.mrf.mxu0
        %v5827 = vadd.f32 %v5714, %v5826
        %5828 = vmatmul.f32.gmra.mxu0 %v5388
        %v5829 = vpop.f32.mrf.mxu0
        %v5830 = vadd.f32 %v5717, %v5829
        %5831 = vmatmul.f32.gmra.mxu0 %v5391
        %v5832 = vpop.f32.mrf.mxu0
        %v5833 = vadd.f32 %v5720, %v5832
        %5834 = vmatmul.f32.gmra.mxu0 %v5394
        %v5835 = vpop.f32.mrf.mxu0
        %v5836 = vadd.f32 %v5723, %v5835
        %5837 = vmatmul.f32.gmra.mxu0 %v5397
        %v5838 = vpop.f32.mrf.mxu0
        %v5839 = vadd.f32 %v5726, %v5838
        %5840 = vmatmul.f32.gmra.mxu0 %v5400
        %v5841 = vpop.f32.mrf.mxu0
        %v5842 = vadd.f32 %v5729, %v5841
        %5843 = vmatmul.f32.gmra.mxu0 %v5403
        %v5844 = vpop.f32.mrf.mxu0
        %v5845 = vadd.f32 %v5732, %v5844
        %5846 = vmatmul.f32.gmra.mxu0 %v5406
        %v5847 = vpop.f32.mrf.mxu0
        %v5848 = vadd.f32 %v5735, %v5847
        %5849 = vmatmul.f32.gmra.mxu0 %v5409
        %v5850 = vpop.f32.mrf.mxu0
        %v5851 = vadd.f32 %v5738, %v5850
        %5852 = vmatmul.f32.gmra.mxu0 %v5412
        %v5853 = vpop.f32.mrf.mxu0
        %v5854 = vadd.f32 %v5741, %v5853
        %5855 = vmatmul.f32.gmra.mxu0 %v5415
        %v5856 = vpop.f32.mrf.mxu0
        %v5857 = vadd.f32 %v5744, %v5856
        %5858 = vmatmul.f32.gmra.mxu0 %v5418
        %v5859 = vpop.f32.mrf.mxu0
        %v5860 = vadd.f32 %v5747, %v5859
        %5861 = vdwg.mxu0
        %5862 = vmatpush.msra.mxu0 %v5441
        %5863 = vmatpush.msra.mxu0 %v5440
        %5864 = vmatpush.msra.mxu0 %v5439
        %5865 = vmatpush.msra.mxu0 %v5438
        %5866 = vmatpush.msra.mxu0 %v5437
        %5867 = vmatpush.msra.mxu0 %v5436
        %5868 = vmatpush.msra.mxu0 %v5435
        %5869 = vmatpush.msra.mxu0 %v5434
        %5870 = vmatpush.msra.mxu0 %v5433
        %5871 = vmatpush.msra.mxu0 %v5432
        %5872 = vmatpush.msra.mxu0 %v5431
        %5873 = vmatpush.msra.mxu0 %v5430
        %5874 = vmatpush.msra.mxu0 %v5429
        %5875 = vmatpush.msra.mxu0 %v5428
        %5876 = vmatpush.msra.mxu0 %v5427
        %5877 = vmatpush.msra.mxu0 %v5426
        %5878 = vmatmul.f32.gmra.mxu0 %v5069
        %v5879 = vpop.f32.mrf.mxu0
        %v5880 = vadd.f32 %v5767, %v5879
        %5881 = vmatmul.f32.gmra.mxu0 %v5072
        %v5882 = vpop.f32.mrf.mxu0
        %v5883 = vadd.f32 %v5770, %v5882
        %5884 = vmatmul.f32.gmra.mxu0 %v5075
        %v5885 = vpop.f32.mrf.mxu0
        %v5886 = vadd.f32 %v5773, %v5885
        %5887 = vmatmul.f32.gmra.mxu0 %v5078
        %v5888 = vpop.f32.mrf.mxu0
        %v5889 = vadd.f32 %v5776, %v5888
        %5890 = vmatmul.f32.gmra.mxu0 %v5081
        %v5891 = vpop.f32.mrf.mxu0
        %v5892 = vadd.f32 %v5779, %v5891
        %5893 = vmatmul.f32.gmra.mxu0 %v5084
        %v5894 = vpop.f32.mrf.mxu0
        %v5895 = vadd.f32 %v5782, %v5894
        %5896 = vmatmul.f32.gmra.mxu0 %v5087
        %v5897 = vpop.f32.mrf.mxu0
        %v5898 = vadd.f32 %v5785, %v5897
        %5899 = vmatmul.f32.gmra.mxu0 %v5090
        %v5900 = vpop.f32.mrf.mxu0
        %v5901 = vadd.f32 %v5788, %v5900
        %5902 = vmatmul.f32.gmra.mxu0 %v5093
        %v5903 = vpop.f32.mrf.mxu0
        %v5904 = vadd.f32 %v5791, %v5903
        %5905 = vmatmul.f32.gmra.mxu0 %v5096
        %v5906 = vpop.f32.mrf.mxu0
        %v5907 = vadd.f32 %v5794, %v5906
        %5908 = vmatmul.f32.gmra.mxu0 %v5099
        %v5909 = vpop.f32.mrf.mxu0
        %v5910 = vadd.f32 %v5797, %v5909
        %5911 = vmatmul.f32.gmra.mxu0 %v5102
        %v5912 = vpop.f32.mrf.mxu0
        %v5913 = vadd.f32 %v5800, %v5912
        %5914 = vmatmul.f32.gmra.mxu0 %v5105
        %v5915 = vpop.f32.mrf.mxu0
        %v5916 = vadd.f32 %v5803, %v5915
        %5917 = vmatmul.f32.gmra.mxu0 %v5108
        %v5918 = vpop.f32.mrf.mxu0
        %v5919 = vadd.f32 %v5806, %v5918
        %5920 = vmatmul.f32.gmra.mxu0 %v5111
        %v5921 = vpop.f32.mrf.mxu0
        %v5922 = vadd.f32 %v5809, %v5921
        %5923 = vmatmul.f32.gmra.mxu0 %v5114
        %v5924 = vpop.f32.mrf.mxu0
        %v5925 = vadd.f32 %v5812, %v5924
        %5926 = vmatmul.f32.gmra.mxu0 %v5117
        %v5927 = vpop.f32.mrf.mxu0
        %v5928 = vadd.f32 %v5815, %v5927
        %5929 = vmatmul.f32.gmra.mxu0 %v5120
        %v5930 = vpop.f32.mrf.mxu0
        %v5931 = vadd.f32 %v5818, %v5930
        %5932 = vmatmul.f32.gmra.mxu0 %v5123
        %v5933 = vpop.f32.mrf.mxu0
        %v5934 = vadd.f32 %v5821, %v5933
        %5935 = vmatmul.f32.gmra.mxu0 %v5126
        %v5936 = vpop.f32.mrf.mxu0
        %v5937 = vadd.f32 %v5824, %v5936
        %5938 = vmatmul.f32.gmra.mxu0 %v5129
        %v5939 = vpop.f32.mrf.mxu0
        %v5940 = vadd.f32 %v5827, %v5939
        %5941 = vmatmul.f32.gmra.mxu0 %v5132
        %v5942 = vpop.f32.mrf.mxu0
        %v5943 = vadd.f32 %v5830, %v5942
        %5944 = vmatmul.f32.gmra.mxu0 %v5135
        %v5945 = vpop.f32.mrf.mxu0
        %v5946 = vadd.f32 %v5833, %v5945
        %5947 = vmatmul.f32.gmra.mxu0 %v5138
        %v5948 = vpop.f32.mrf.mxu0
        %v5949 = vadd.f32 %v5836, %v5948
        %5950 = vmatmul.f32.gmra.mxu0 %v5141
        %v5951 = vpop.f32.mrf.mxu0
        %v5952 = vadd.f32 %v5839, %v5951
        %5953 = vmatmul.f32.gmra.mxu0 %v5144
        %v5954 = vpop.f32.mrf.mxu0
        %v5955 = vadd.f32 %v5842, %v5954
        %5956 = vmatmul.f32.gmra.mxu0 %v5147
        %v5957 = vpop.f32.mrf.mxu0
        %v5958 = vadd.f32 %v5845, %v5957
        %5959 = vmatmul.f32.gmra.mxu0 %v5150
        %v5960 = vpop.f32.mrf.mxu0
        %v5961 = vadd.f32 %v5848, %v5960
        %5962 = vmatmul.f32.gmra.mxu0 %v5153
        %v5963 = vpop.f32.mrf.mxu0
        %v5964 = vadd.f32 %v5851, %v5963
        %5965 = vmatmul.f32.gmra.mxu0 %v5156
        %v5966 = vpop.f32.mrf.mxu0
        %v5967 = vadd.f32 %v5854, %v5966
        %5968 = vmatmul.f32.gmra.mxu0 %v5159
        %v5969 = vpop.f32.mrf.mxu0
        %v5970 = vadd.f32 %v5857, %v5969
        %5971 = vmatmul.f32.gmra.mxu0 %v5162
        %v5972 = vpop.f32.mrf.mxu0
        %v5973 = vadd.f32 %v5860, %v5972
        %5974 = vdwg.mxu0
        %5975 = vmatpush.msra.mxu0 %v5457
        %5976 = vmatpush.msra.mxu0 %v5456
        %5977 = vmatpush.msra.mxu0 %v5455
        %5978 = vmatpush.msra.mxu0 %v5454
        %5979 = vmatpush.msra.mxu0 %v5453
        %5980 = vmatpush.msra.mxu0 %v5452
        %5981 = vmatpush.msra.mxu0 %v5451
        %5982 = vmatpush.msra.mxu0 %v5450
        %5983 = vmatpush.msra.mxu0 %v5449
        %5984 = vmatpush.msra.mxu0 %v5448
        %5985 = vmatpush.msra.mxu0 %v5447
        %5986 = vmatpush.msra.mxu0 %v5446
        %5987 = vmatpush.msra.mxu0 %v5445
        %5988 = vmatpush.msra.mxu0 %v5444
        %5989 = vmatpush.msra.mxu0 %v5443
        %5990 = vmatpush.msra.mxu0 %v5442
        %5991 = vmatmul.f32.gmra.mxu0 0.0
        %v5992 = vpop.f32.mrf.mxu0
        %v5993 = vadd.f32 %v5880, %v5992
        %5994 = vmatmul.f32.gmra.mxu0 0.0
        %v5995 = vpop.f32.mrf.mxu0
        %v5996 = vadd.f32 %v5883, %v5995
        %5997 = vmatmul.f32.gmra.mxu0 %v4893
        %v5998 = vpop.f32.mrf.mxu0
        %v5999 = vadd.f32 %v5886, %v5998
        %6000 = vmatmul.f32.gmra.mxu0 %v4894
        %v6001 = vpop.f32.mrf.mxu0
        %v6002 = vadd.f32 %v5889, %v6001
        %6003 = vmatmul.f32.gmra.mxu0 %v4895
        %v6004 = vpop.f32.mrf.mxu0
        %v6005 = vadd.f32 %v5892, %v6004
        %6006 = vmatmul.f32.gmra.mxu0 %v4896
        %v6007 = vpop.f32.mrf.mxu0
        %v6008 = vadd.f32 %v5895, %v6007
        %6009 = vmatmul.f32.gmra.mxu0 %v4897
        %v6010 = vpop.f32.mrf.mxu0
        %v6011 = vadd.f32 %v5898, %v6010
        %6012 = vmatmul.f32.gmra.mxu0 %v4898
        %v6013 = vpop.f32.mrf.mxu0
        %v6014 = vadd.f32 %v5901, %v6013
        %6015 = vmatmul.f32.gmra.mxu0 %v4899
        %v6016 = vpop.f32.mrf.mxu0
        %v6017 = vadd.f32 %v5904, %v6016
        %6018 = vmatmul.f32.gmra.mxu0 %v4900
        %v6019 = vpop.f32.mrf.mxu0
        %v6020 = vadd.f32 %v5907, %v6019
        %6021 = vmatmul.f32.gmra.mxu0 %v4901
        %v6022 = vpop.f32.mrf.mxu0
        %v6023 = vadd.f32 %v5910, %v6022
        %6024 = vmatmul.f32.gmra.mxu0 %v4902
        %v6025 = vpop.f32.mrf.mxu0
        %v6026 = vadd.f32 %v5913, %v6025
        %6027 = vmatmul.f32.gmra.mxu0 %v4903
        %v6028 = vpop.f32.mrf.mxu0
        %v6029 = vadd.f32 %v5916, %v6028
        %6030 = vmatmul.f32.gmra.mxu0 %v4904
        %v6031 = vpop.f32.mrf.mxu0
        %v6032 = vadd.f32 %v5919, %v6031
        %6033 = vmatmul.f32.gmra.mxu0 %v4905
        %v6034 = vpop.f32.mrf.mxu0
        %v6035 = vadd.f32 %v5922, %v6034
        %6036 = vmatmul.f32.gmra.mxu0 %v4906
        %v6037 = vpop.f32.mrf.mxu0
        %v6038 = vadd.f32 %v5925, %v6037
        %6039 = vmatmul.f32.gmra.mxu0 %v4907
        %v6040 = vpop.f32.mrf.mxu0
        %v6041 = vadd.f32 %v5928, %v6040
        %6042 = vmatmul.f32.gmra.mxu0 %v4908
        %v6043 = vpop.f32.mrf.mxu0
        %v6044 = vadd.f32 %v5931, %v6043
        %6045 = vmatmul.f32.gmra.mxu0 %v4909
        %v6046 = vpop.f32.mrf.mxu0
        %v6047 = vadd.f32 %v5934, %v6046
        %6048 = vmatmul.f32.gmra.mxu0 %v4910
        %v6049 = vpop.f32.mrf.mxu0
        %v6050 = vadd.f32 %v5937, %v6049
        %6051 = vmatmul.f32.gmra.mxu0 %v4911
        %v6052 = vpop.f32.mrf.mxu0
        %v6053 = vadd.f32 %v5940, %v6052
        %6054 = vmatmul.f32.gmra.mxu0 %v4912
        %v6055 = vpop.f32.mrf.mxu0
        %v6056 = vadd.f32 %v5943, %v6055
        %6057 = vmatmul.f32.gmra.mxu0 %v4913
        %v6058 = vpop.f32.mrf.mxu0
        %v6059 = vadd.f32 %v5946, %v6058
        %6060 = vmatmul.f32.gmra.mxu0 %v4914
        %v6061 = vpop.f32.mrf.mxu0
        %v6062 = vadd.f32 %v5949, %v6061
        %6063 = vmatmul.f32.gmra.mxu0 %v4915
        %v6064 = vpop.f32.mrf.mxu0
        %v6065 = vadd.f32 %v5952, %v6064
        %6066 = vmatmul.f32.gmra.mxu0 %v4916
        %v6067 = vpop.f32.mrf.mxu0
        %v6068 = vadd.f32 %v5955, %v6067
        %6069 = vmatmul.f32.gmra.mxu0 %v4917
        %v6070 = vpop.f32.mrf.mxu0
        %v6071 = vadd.f32 %v5958, %v6070
        %6072 = vmatmul.f32.gmra.mxu0 %v4918
        %v6073 = vpop.f32.mrf.mxu0
        %v6074 = vadd.f32 %v5961, %v6073
        %6075 = vmatmul.f32.gmra.mxu0 %v4919
        %v6076 = vpop.f32.mrf.mxu0
        %v6077 = vadd.f32 %v5964, %v6076
        %6078 = vmatmul.f32.gmra.mxu0 %v4920
        %v6079 = vpop.f32.mrf.mxu0
        %v6080 = vadd.f32 %v5967, %v6079
        %6081 = vmatmul.f32.gmra.mxu0 %v4921
        %v6082 = vpop.f32.mrf.mxu0
        %v6083 = vadd.f32 %v5970, %v6082
        %6084 = vmatmul.f32.gmra.mxu0 %v4922
        %v6085 = vpop.f32.mrf.mxu0
        %v6086 = vadd.f32 %v5973, %v6085
        %6087 = vdwg.mxu0
        %6088 = vmatpush.msra.mxu0 %v5473
        %6089 = vmatpush.msra.mxu0 %v5472
        %6090 = vmatpush.msra.mxu0 %v5471
        %6091 = vmatpush.msra.mxu0 %v5470
        %6092 = vmatpush.msra.mxu0 %v5469
        %6093 = vmatpush.msra.mxu0 %v5468
        %6094 = vmatpush.msra.mxu0 %v5467
        %6095 = vmatpush.msra.mxu0 %v5466
        %6096 = vmatpush.msra.mxu0 %v5465
        %6097 = vmatpush.msra.mxu0 %v5464
        %6098 = vmatpush.msra.mxu0 %v5463
        %6099 = vmatpush.msra.mxu0 %v5462
        %6100 = vmatpush.msra.mxu0 %v5461
        %6101 = vmatpush.msra.mxu0 %v5460
        %6102 = vmatpush.msra.mxu0 %v5459
        %6103 = vmatpush.msra.mxu0 %v5458
        %6104 = vmatmul.f32.gmra.mxu0 %v5319
        %v6105 = vpop.f32.mrf.mxu0
        %v6106 = vadd.f32 %v5993, %v6105
        %6107 = vmatmul.f32.gmra.mxu0 %v5322
        %v6108 = vpop.f32.mrf.mxu0
        %v6109 = vadd.f32 %v5996, %v6108
        %6110 = vmatmul.f32.gmra.mxu0 %v5325
        %v6111 = vpop.f32.mrf.mxu0
        %v6112 = vadd.f32 %v5999, %v6111
        %6113 = vmatmul.f32.gmra.mxu0 %v5328
        %v6114 = vpop.f32.mrf.mxu0
        %v6115 = vadd.f32 %v6002, %v6114
        %6116 = vmatmul.f32.gmra.mxu0 %v5331
        %v6117 = vpop.f32.mrf.mxu0
        %v6118 = vadd.f32 %v6005, %v6117
        %6119 = vmatmul.f32.gmra.mxu0 %v5334
        %v6120 = vpop.f32.mrf.mxu0
        %v6121 = vadd.f32 %v6008, %v6120
        %6122 = vmatmul.f32.gmra.mxu0 %v5337
        %v6123 = vpop.f32.mrf.mxu0
        %v6124 = vadd.f32 %v6011, %v6123
        %6125 = vmatmul.f32.gmra.mxu0 %v5340
        %v6126 = vpop.f32.mrf.mxu0
        %v6127 = vadd.f32 %v6014, %v6126
        %6128 = vmatmul.f32.gmra.mxu0 %v5343
        %v6129 = vpop.f32.mrf.mxu0
        %v6130 = vadd.f32 %v6017, %v6129
        %6131 = vmatmul.f32.gmra.mxu0 %v5346
        %v6132 = vpop.f32.mrf.mxu0
        %v6133 = vadd.f32 %v6020, %v6132
        %6134 = vmatmul.f32.gmra.mxu0 %v5349
        %v6135 = vpop.f32.mrf.mxu0
        %v6136 = vadd.f32 %v6023, %v6135
        %6137 = vmatmul.f32.gmra.mxu0 %v5352
        %v6138 = vpop.f32.mrf.mxu0
        %v6139 = vadd.f32 %v6026, %v6138
        %6140 = vmatmul.f32.gmra.mxu0 %v5355
        %v6141 = vpop.f32.mrf.mxu0
        %v6142 = vadd.f32 %v6029, %v6141
        %6143 = vmatmul.f32.gmra.mxu0 %v5358
        %v6144 = vpop.f32.mrf.mxu0
        %v6145 = vadd.f32 %v6032, %v6144
        %6146 = vmatmul.f32.gmra.mxu0 %v5361
        %v6147 = vpop.f32.mrf.mxu0
        %v6148 = vadd.f32 %v6035, %v6147
        %6149 = vmatmul.f32.gmra.mxu0 %v5364
        %v6150 = vpop.f32.mrf.mxu0
        %v6151 = vadd.f32 %v6038, %v6150
        %6152 = vmatmul.f32.gmra.mxu0 %v5367
        %v6153 = vpop.f32.mrf.mxu0
        %v6154 = vadd.f32 %v6041, %v6153
        %6155 = vmatmul.f32.gmra.mxu0 %v5370
        %v6156 = vpop.f32.mrf.mxu0
        %v6157 = vadd.f32 %v6044, %v6156
        %6158 = vmatmul.f32.gmra.mxu0 %v5373
        %v6159 = vpop.f32.mrf.mxu0
        %v6160 = vadd.f32 %v6047, %v6159
        %6161 = vmatmul.f32.gmra.mxu0 %v5376
        %v6162 = vpop.f32.mrf.mxu0
        %v6163 = vadd.f32 %v6050, %v6162
        %6164 = vmatmul.f32.gmra.mxu0 %v5379
        %v6165 = vpop.f32.mrf.mxu0
        %v6166 = vadd.f32 %v6053, %v6165
        %6167 = vmatmul.f32.gmra.mxu0 %v5382
        %v6168 = vpop.f32.mrf.mxu0
        %v6169 = vadd.f32 %v6056, %v6168
        %6170 = vmatmul.f32.gmra.mxu0 %v5385
        %v6171 = vpop.f32.mrf.mxu0
        %v6172 = vadd.f32 %v6059, %v6171
        %6173 = vmatmul.f32.gmra.mxu0 %v5388
        %v6174 = vpop.f32.mrf.mxu0
        %v6175 = vadd.f32 %v6062, %v6174
        %6176 = vmatmul.f32.gmra.mxu0 %v5391
        %v6177 = vpop.f32.mrf.mxu0
        %v6178 = vadd.f32 %v6065, %v6177
        %6179 = vmatmul.f32.gmra.mxu0 %v5394
        %v6180 = vpop.f32.mrf.mxu0
        %v6181 = vadd.f32 %v6068, %v6180
        %6182 = vmatmul.f32.gmra.mxu0 %v5397
        %v6183 = vpop.f32.mrf.mxu0
        %v6184 = vadd.f32 %v6071, %v6183
        %6185 = vmatmul.f32.gmra.mxu0 %v5400
        %v6186 = vpop.f32.mrf.mxu0
        %v6187 = vadd.f32 %v6074, %v6186
        %6188 = vmatmul.f32.gmra.mxu0 %v5403
        %v6189 = vpop.f32.mrf.mxu0
        %v6190 = vadd.f32 %v6077, %v6189
        %6191 = vmatmul.f32.gmra.mxu0 %v5406
        %v6192 = vpop.f32.mrf.mxu0
        %v6193 = vadd.f32 %v6080, %v6192
        %6194 = vmatmul.f32.gmra.mxu0 %v5409
        %v6195 = vpop.f32.mrf.mxu0
        %v6196 = vadd.f32 %v6083, %v6195
        %6197 = vmatmul.f32.gmra.mxu0 %v5412
        %v6198 = vpop.f32.mrf.mxu0
        %v6199 = vadd.f32 %v6086, %v6198
        %6200 = vdwg.mxu0
        %s6201 = scalar_lea.vmem [#allocation16], 768
        %v6202 = vld [vmem:[%s6201] sm:$0xff]
        %v6203 = vld [vmem:[%s6201 + $0x8] sm:$0xff]
        %v6204 = vld [vmem:[%s6201 + $0x10] sm:$0xff]
        %v6205 = vld [vmem:[%s6201 + $0x18] sm:$0xff]
        %v6206 = vld [vmem:[%s6201 + $0x20] sm:$0xff]
        %v6207 = vld [vmem:[%s6201 + $0x28] sm:$0xff]
        %v6208 = vld [vmem:[%s6201 + $0x30] sm:$0xff]
        %v6209 = vld [vmem:[%s6201 + $0x38] sm:$0xff]
        %v6210 = vld [vmem:[%s6201 + $0x40] sm:$0xff]
        %v6211 = vld [vmem:[%s6201 + $0x48] sm:$0xff]
        %v6212 = vld [vmem:[%s6201 + $0x50] sm:$0xff]
        %v6213 = vld [vmem:[%s6201 + $0x58] sm:$0xff]
        %v6214 = vld [vmem:[%s6201 + $0x60] sm:$0xff]
        %v6215 = vld [vmem:[%s6201 + $0x68] sm:$0xff]
        %v6216 = vld [vmem:[%s6201 + $0x70] sm:$0xff]
        %v6217 = vld [vmem:[%s6201 + $0x78] sm:$0xff]
        %v6218 = vld [vmem:[%s6201 + $0x80] sm:$0xff]
        %v6219 = vld [vmem:[%s6201 + $0x88] sm:$0xff]
        %v6220 = vld [vmem:[%s6201 + $0x90] sm:$0xff]
        %v6221 = vld [vmem:[%s6201 + $0x98] sm:$0xff]
        %v6222 = vld [vmem:[%s6201 + $0xa0] sm:$0xff]
        %v6223 = vld [vmem:[%s6201 + $0xa8] sm:$0xff]
        %v6224 = vld [vmem:[%s6201 + $0xb0] sm:$0xff]
        %v6225 = vld [vmem:[%s6201 + $0xb8] sm:$0xff]
        %v6226 = vld [vmem:[%s6201 + $0xc0] sm:$0xff]
        %v6227 = vld [vmem:[%s6201 + $0xc8] sm:$0xff]
        %v6228 = vld [vmem:[%s6201 + $0xd0] sm:$0xff]
        %v6229 = vld [vmem:[%s6201 + $0xd8] sm:$0xff]
        %v6230 = vld [vmem:[%s6201 + $0xe0] sm:$0xff]
        %v6231 = vld [vmem:[%s6201 + $0xe8] sm:$0xff]
        %v6232 = vld [vmem:[%s6201 + $0xf0] sm:$0xff]
        %v6233 = vld [vmem:[%s6201 + $0xf8] sm:$0xff]
        %v6234 = vld [vmem:[%s6201 + $0x100] sm:$0xff]
        %v6235 = vld [vmem:[%s6201 + $0x108] sm:$0xff]
        %v6236 = vld [vmem:[%s6201 + $0x110] sm:$0xff]
        %v6237 = vld [vmem:[%s6201 + $0x118] sm:$0xff]
        %v6238 = vld [vmem:[%s6201 + $0x120] sm:$0xff]
        %v6239 = vld [vmem:[%s6201 + $0x128] sm:$0xff]
        %v6240 = vld [vmem:[%s6201 + $0x130] sm:$0xff]
        %v6241 = vld [vmem:[%s6201 + $0x138] sm:$0xff]
        %v6242 = vld [vmem:[%s6201 + $0x140] sm:$0xff]
        %v6243 = vld [vmem:[%s6201 + $0x148] sm:$0xff]
        %v6244 = vld [vmem:[%s6201 + $0x150] sm:$0xff]
        %v6245 = vld [vmem:[%s6201 + $0x158] sm:$0xff]
        %v6246 = vld [vmem:[%s6201 + $0x160] sm:$0xff]
        %v6247 = vld [vmem:[%s6201 + $0x168] sm:$0xff]
        %v6248 = vld [vmem:[%s6201 + $0x170] sm:$0xff]
        %v6249 = vld [vmem:[%s6201 + $0x178] sm:$0xff]
        %6250 = vmatpush.msra.mxu0 %v6217
        %6251 = vmatpush.msra.mxu0 %v6216
        %6252 = vmatpush.msra.mxu0 %v6215
        %6253 = vmatpush.msra.mxu0 %v6214
        %6254 = vmatpush.msra.mxu0 %v6213
        %6255 = vmatpush.msra.mxu0 %v6212
        %6256 = vmatpush.msra.mxu0 %v6211
        %6257 = vmatpush.msra.mxu0 %v6210
        %6258 = vmatpush.msra.mxu0 %v6209
        %6259 = vmatpush.msra.mxu0 %v6208
        %6260 = vmatpush.msra.mxu0 %v6207
        %6261 = vmatpush.msra.mxu0 %v6206
        %6262 = vmatpush.msra.mxu0 %v6205
        %6263 = vmatpush.msra.mxu0 %v6204
        %6264 = vmatpush.msra.mxu0 %v6203
        %6265 = vmatpush.msra.mxu0 %v6202
        %6266 = vmatmul.f32.gmra.mxu0 %v5081
        %v6267 = vpop.f32.mrf.mxu0
        %v6268 = vadd.f32 0.0, %v6267
        %6269 = vmatmul.f32.gmra.mxu0 %v5084
        %v6270 = vpop.f32.mrf.mxu0
        %v6271 = vadd.f32 0.0, %v6270
        %6272 = vmatmul.f32.gmra.mxu0 %v5087
        %v6273 = vpop.f32.mrf.mxu0
        %v6274 = vadd.f32 0.0, %v6273
        %6275 = vmatmul.f32.gmra.mxu0 %v5090
        %v6276 = vpop.f32.mrf.mxu0
        %v6277 = vadd.f32 0.0, %v6276
        %6278 = vmatmul.f32.gmra.mxu0 %v5093
        %v6279 = vpop.f32.mrf.mxu0
        %v6280 = vadd.f32 0.0, %v6279
        %6281 = vmatmul.f32.gmra.mxu0 %v5096
        %v6282 = vpop.f32.mrf.mxu0
        %v6283 = vadd.f32 0.0, %v6282
        %6284 = vmatmul.f32.gmra.mxu0 %v5099
        %v6285 = vpop.f32.mrf.mxu0
        %v6286 = vadd.f32 0.0, %v6285
        %6287 = vmatmul.f32.gmra.mxu0 %v5102
        %v6288 = vpop.f32.mrf.mxu0
        %v6289 = vadd.f32 0.0, %v6288
        %6290 = vmatmul.f32.gmra.mxu0 %v5105
        %v6291 = vpop.f32.mrf.mxu0
        %v6292 = vadd.f32 0.0, %v6291
        %6293 = vmatmul.f32.gmra.mxu0 %v5108
        %v6294 = vpop.f32.mrf.mxu0
        %v6295 = vadd.f32 0.0, %v6294
        %6296 = vmatmul.f32.gmra.mxu0 %v5111
        %v6297 = vpop.f32.mrf.mxu0
        %v6298 = vadd.f32 0.0, %v6297
        %6299 = vmatmul.f32.gmra.mxu0 %v5114
        %v6300 = vpop.f32.mrf.mxu0
        %v6301 = vadd.f32 0.0, %v6300
        %6302 = vmatmul.f32.gmra.mxu0 %v5117
        %v6303 = vpop.f32.mrf.mxu0
        %v6304 = vadd.f32 0.0, %v6303
        %6305 = vmatmul.f32.gmra.mxu0 %v5120
        %v6306 = vpop.f32.mrf.mxu0
        %v6307 = vadd.f32 0.0, %v6306
        %6308 = vmatmul.f32.gmra.mxu0 %v5123
        %v6309 = vpop.f32.mrf.mxu0
        %v6310 = vadd.f32 0.0, %v6309
        %6311 = vmatmul.f32.gmra.mxu0 %v5126
        %v6312 = vpop.f32.mrf.mxu0
        %v6313 = vadd.f32 0.0, %v6312
        %6314 = vmatmul.f32.gmra.mxu0 %v5129
        %v6315 = vpop.f32.mrf.mxu0
        %v6316 = vadd.f32 0.0, %v6315
        %6317 = vmatmul.f32.gmra.mxu0 %v5132
        %v6318 = vpop.f32.mrf.mxu0
        %v6319 = vadd.f32 0.0, %v6318
        %6320 = vmatmul.f32.gmra.mxu0 %v5135
        %v6321 = vpop.f32.mrf.mxu0
        %v6322 = vadd.f32 0.0, %v6321
        %6323 = vmatmul.f32.gmra.mxu0 %v5138
        %v6324 = vpop.f32.mrf.mxu0
        %v6325 = vadd.f32 0.0, %v6324
        %6326 = vmatmul.f32.gmra.mxu0 %v5141
        %v6327 = vpop.f32.mrf.mxu0
        %v6328 = vadd.f32 0.0, %v6327
        %6329 = vmatmul.f32.gmra.mxu0 %v5144
        %v6330 = vpop.f32.mrf.mxu0
        %v6331 = vadd.f32 0.0, %v6330
        %6332 = vmatmul.f32.gmra.mxu0 %v5147
        %v6333 = vpop.f32.mrf.mxu0
        %v6334 = vadd.f32 0.0, %v6333
        %6335 = vmatmul.f32.gmra.mxu0 %v5150
        %v6336 = vpop.f32.mrf.mxu0
        %v6337 = vadd.f32 0.0, %v6336
        %6338 = vmatmul.f32.gmra.mxu0 %v5153
        %v6339 = vpop.f32.mrf.mxu0
        %v6340 = vadd.f32 0.0, %v6339
        %6341 = vmatmul.f32.gmra.mxu0 %v5156
        %v6342 = vpop.f32.mrf.mxu0
        %v6343 = vadd.f32 0.0, %v6342
        %6344 = vmatmul.f32.gmra.mxu0 %v5159
        %v6345 = vpop.f32.mrf.mxu0
        %v6346 = vadd.f32 0.0, %v6345
        %6347 = vmatmul.f32.gmra.mxu0 %v5162
        %v6348 = vpop.f32.mrf.mxu0
        %v6349 = vadd.f32 0.0, %v6348
        %6350 = vmatmul.f32.gmra.mxu0 %v5165
        %v6351 = vpop.f32.mrf.mxu0
        %v6352 = vadd.f32 0.0, %v6351
        %6353 = vmatmul.f32.gmra.mxu0 %v5168
        %v6354 = vpop.f32.mrf.mxu0
        %v6355 = vadd.f32 0.0, %v6354
        %6356 = vmatmul.f32.gmra.mxu0 %v5171
        %v6357 = vpop.f32.mrf.mxu0
        %v6358 = vadd.f32 0.0, %v6357
        %6359 = vmatmul.f32.gmra.mxu0 %v5174
        %v6360 = vpop.f32.mrf.mxu0
        %v6361 = vadd.f32 0.0, %v6360
        %6362 = vdwg.mxu0
        %6363 = vmatpush.msra.mxu0 %v6233
        %6364 = vmatpush.msra.mxu0 %v6232
        %6365 = vmatpush.msra.mxu0 %v6231
        %6366 = vmatpush.msra.mxu0 %v6230
        %6367 = vmatpush.msra.mxu0 %v6229
        %6368 = vmatpush.msra.mxu0 %v6228
        %6369 = vmatpush.msra.mxu0 %v6227
        %6370 = vmatpush.msra.mxu0 %v6226
        %6371 = vmatpush.msra.mxu0 %v6225
        %6372 = vmatpush.msra.mxu0 %v6224
        %6373 = vmatpush.msra.mxu0 %v6223
        %6374 = vmatpush.msra.mxu0 %v6222
        %6375 = vmatpush.msra.mxu0 %v6221
        %6376 = vmatpush.msra.mxu0 %v6220
        %6377 = vmatpush.msra.mxu0 %v6219
        %6378 = vmatpush.msra.mxu0 %v6218
        %6379 = vmatmul.f32.gmra.mxu0 %v4895
        %v6380 = vpop.f32.mrf.mxu0
        %v6381 = vadd.f32 %v6268, %v6380
        %6382 = vmatmul.f32.gmra.mxu0 %v4896
        %v6383 = vpop.f32.mrf.mxu0
        %v6384 = vadd.f32 %v6271, %v6383
        %6385 = vmatmul.f32.gmra.mxu0 %v4897
        %v6386 = vpop.f32.mrf.mxu0
        %v6387 = vadd.f32 %v6274, %v6386
        %6388 = vmatmul.f32.gmra.mxu0 %v4898
        %v6389 = vpop.f32.mrf.mxu0
        %v6390 = vadd.f32 %v6277, %v6389
        %6391 = vmatmul.f32.gmra.mxu0 %v4899
        %v6392 = vpop.f32.mrf.mxu0
        %v6393 = vadd.f32 %v6280, %v6392
        %6394 = vmatmul.f32.gmra.mxu0 %v4900
        %v6395 = vpop.f32.mrf.mxu0
        %v6396 = vadd.f32 %v6283, %v6395
        %6397 = vmatmul.f32.gmra.mxu0 %v4901
        %v6398 = vpop.f32.mrf.mxu0
        %v6399 = vadd.f32 %v6286, %v6398
        %6400 = vmatmul.f32.gmra.mxu0 %v4902
        %v6401 = vpop.f32.mrf.mxu0
        %v6402 = vadd.f32 %v6289, %v6401
        %6403 = vmatmul.f32.gmra.mxu0 %v4903
        %v6404 = vpop.f32.mrf.mxu0
        %v6405 = vadd.f32 %v6292, %v6404
        %6406 = vmatmul.f32.gmra.mxu0 %v4904
        %v6407 = vpop.f32.mrf.mxu0
        %v6408 = vadd.f32 %v6295, %v6407
        %6409 = vmatmul.f32.gmra.mxu0 %v4905
        %v6410 = vpop.f32.mrf.mxu0
        %v6411 = vadd.f32 %v6298, %v6410
        %6412 = vmatmul.f32.gmra.mxu0 %v4906
        %v6413 = vpop.f32.mrf.mxu0
        %v6414 = vadd.f32 %v6301, %v6413
        %6415 = vmatmul.f32.gmra.mxu0 %v4907
        %v6416 = vpop.f32.mrf.mxu0
        %v6417 = vadd.f32 %v6304, %v6416
        %6418 = vmatmul.f32.gmra.mxu0 %v4908
        %v6419 = vpop.f32.mrf.mxu0
        %v6420 = vadd.f32 %v6307, %v6419
        %6421 = vmatmul.f32.gmra.mxu0 %v4909
        %v6422 = vpop.f32.mrf.mxu0
        %v6423 = vadd.f32 %v6310, %v6422
        %6424 = vmatmul.f32.gmra.mxu0 %v4910
        %v6425 = vpop.f32.mrf.mxu0
        %v6426 = vadd.f32 %v6313, %v6425
        %6427 = vmatmul.f32.gmra.mxu0 %v4911
        %v6428 = vpop.f32.mrf.mxu0
        %v6429 = vadd.f32 %v6316, %v6428
        %6430 = vmatmul.f32.gmra.mxu0 %v4912
        %v6431 = vpop.f32.mrf.mxu0
        %v6432 = vadd.f32 %v6319, %v6431
        %6433 = vmatmul.f32.gmra.mxu0 %v4913
        %v6434 = vpop.f32.mrf.mxu0
        %v6435 = vadd.f32 %v6322, %v6434
        %6436 = vmatmul.f32.gmra.mxu0 %v4914
        %v6437 = vpop.f32.mrf.mxu0
        %v6438 = vadd.f32 %v6325, %v6437
        %6439 = vmatmul.f32.gmra.mxu0 %v4915
        %v6440 = vpop.f32.mrf.mxu0
        %v6441 = vadd.f32 %v6328, %v6440
        %6442 = vmatmul.f32.gmra.mxu0 %v4916
        %v6443 = vpop.f32.mrf.mxu0
        %v6444 = vadd.f32 %v6331, %v6443
        %6445 = vmatmul.f32.gmra.mxu0 %v4917
        %v6446 = vpop.f32.mrf.mxu0
        %v6447 = vadd.f32 %v6334, %v6446
        %6448 = vmatmul.f32.gmra.mxu0 %v4918
        %v6449 = vpop.f32.mrf.mxu0
        %v6450 = vadd.f32 %v6337, %v6449
        %6451 = vmatmul.f32.gmra.mxu0 %v4919
        %v6452 = vpop.f32.mrf.mxu0
        %v6453 = vadd.f32 %v6340, %v6452
        %6454 = vmatmul.f32.gmra.mxu0 %v4920
        %v6455 = vpop.f32.mrf.mxu0
        %v6456 = vadd.f32 %v6343, %v6455
        %6457 = vmatmul.f32.gmra.mxu0 %v4921
        %v6458 = vpop.f32.mrf.mxu0
        %v6459 = vadd.f32 %v6346, %v6458
        %6460 = vmatmul.f32.gmra.mxu0 %v4922
        %v6461 = vpop.f32.mrf.mxu0
        %v6462 = vadd.f32 %v6349, %v6461
        %6463 = vmatmul.f32.gmra.mxu0 %v4923
        %v6464 = vpop.f32.mrf.mxu0
        %v6465 = vadd.f32 %v6352, %v6464
        %6466 = vmatmul.f32.gmra.mxu0 %v4924
        %v6467 = vpop.f32.mrf.mxu0
        %v6468 = vadd.f32 %v6355, %v6467
        %6469 = vmatmul.f32.gmra.mxu0 0.0
        %v6470 = vpop.f32.mrf.mxu0
        %v6471 = vadd.f32 %v6358, %v6470
        %6472 = vmatmul.f32.gmra.mxu0 0.0
        %v6473 = vpop.f32.mrf.mxu0
        %v6474 = vadd.f32 %v6361, %v6473
        %6475 = vdwg.mxu0
        %6476 = vmatpush.msra.mxu0 %v6249
        %6477 = vmatpush.msra.mxu0 %v6248
        %6478 = vmatpush.msra.mxu0 %v6247
        %6479 = vmatpush.msra.mxu0 %v6246
        %6480 = vmatpush.msra.mxu0 %v6245
        %6481 = vmatpush.msra.mxu0 %v6244
        %6482 = vmatpush.msra.mxu0 %v6243
        %6483 = vmatpush.msra.mxu0 %v6242
        %6484 = vmatpush.msra.mxu0 %v6241
        %6485 = vmatpush.msra.mxu0 %v6240
        %6486 = vmatpush.msra.mxu0 %v6239
        %6487 = vmatpush.msra.mxu0 %v6238
        %6488 = vmatpush.msra.mxu0 %v6237
        %6489 = vmatpush.msra.mxu0 %v6236
        %6490 = vmatpush.msra.mxu0 %v6235
        %6491 = vmatpush.msra.mxu0 %v6234
        %6492 = vmatmul.f32.gmra.mxu0 %v5331
        %v6493 = vpop.f32.mrf.mxu0
        %v6494 = vadd.f32 %v6381, %v6493
        %6495 = vmatmul.f32.gmra.mxu0 %v5334
        %v6496 = vpop.f32.mrf.mxu0
        %v6497 = vadd.f32 %v6384, %v6496
        %6498 = vmatmul.f32.gmra.mxu0 %v5337
        %v6499 = vpop.f32.mrf.mxu0
        %v6500 = vadd.f32 %v6387, %v6499
        %6501 = vmatmul.f32.gmra.mxu0 %v5340
        %v6502 = vpop.f32.mrf.mxu0
        %v6503 = vadd.f32 %v6390, %v6502
        %6504 = vmatmul.f32.gmra.mxu0 %v5343
        %v6505 = vpop.f32.mrf.mxu0
        %v6506 = vadd.f32 %v6393, %v6505
        %6507 = vmatmul.f32.gmra.mxu0 %v5346
        %v6508 = vpop.f32.mrf.mxu0
        %v6509 = vadd.f32 %v6396, %v6508
        %6510 = vmatmul.f32.gmra.mxu0 %v5349
        %v6511 = vpop.f32.mrf.mxu0
        %v6512 = vadd.f32 %v6399, %v6511
        %6513 = vmatmul.f32.gmra.mxu0 %v5352
        %v6514 = vpop.f32.mrf.mxu0
        %v6515 = vadd.f32 %v6402, %v6514
        %6516 = vmatmul.f32.gmra.mxu0 %v5355
        %v6517 = vpop.f32.mrf.mxu0
        %v6518 = vadd.f32 %v6405, %v6517
        %6519 = vmatmul.f32.gmra.mxu0 %v5358
        %v6520 = vpop.f32.mrf.mxu0
        %v6521 = vadd.f32 %v6408, %v6520
        %6522 = vmatmul.f32.gmra.mxu0 %v5361
        %v6523 = vpop.f32.mrf.mxu0
        %v6524 = vadd.f32 %v6411, %v6523
        %6525 = vmatmul.f32.gmra.mxu0 %v5364
        %v6526 = vpop.f32.mrf.mxu0
        %v6527 = vadd.f32 %v6414, %v6526
        %6528 = vmatmul.f32.gmra.mxu0 %v5367
        %v6529 = vpop.f32.mrf.mxu0
        %v6530 = vadd.f32 %v6417, %v6529
        %6531 = vmatmul.f32.gmra.mxu0 %v5370
        %v6532 = vpop.f32.mrf.mxu0
        %v6533 = vadd.f32 %v6420, %v6532
        %6534 = vmatmul.f32.gmra.mxu0 %v5373
        %v6535 = vpop.f32.mrf.mxu0
        %v6536 = vadd.f32 %v6423, %v6535
        %6537 = vmatmul.f32.gmra.mxu0 %v5376
        %v6538 = vpop.f32.mrf.mxu0
        %v6539 = vadd.f32 %v6426, %v6538
        %6540 = vmatmul.f32.gmra.mxu0 %v5379
        %v6541 = vpop.f32.mrf.mxu0
        %v6542 = vadd.f32 %v6429, %v6541
        %6543 = vmatmul.f32.gmra.mxu0 %v5382
        %v6544 = vpop.f32.mrf.mxu0
        %v6545 = vadd.f32 %v6432, %v6544
        %6546 = vmatmul.f32.gmra.mxu0 %v5385
        %v6547 = vpop.f32.mrf.mxu0
        %v6548 = vadd.f32 %v6435, %v6547
        %6549 = vmatmul.f32.gmra.mxu0 %v5388
        %v6550 = vpop.f32.mrf.mxu0
        %v6551 = vadd.f32 %v6438, %v6550
        %6552 = vmatmul.f32.gmra.mxu0 %v5391
        %v6553 = vpop.f32.mrf.mxu0
        %v6554 = vadd.f32 %v6441, %v6553
        %6555 = vmatmul.f32.gmra.mxu0 %v5394
        %v6556 = vpop.f32.mrf.mxu0
        %v6557 = vadd.f32 %v6444, %v6556
        %6558 = vmatmul.f32.gmra.mxu0 %v5397
        %v6559 = vpop.f32.mrf.mxu0
        %v6560 = vadd.f32 %v6447, %v6559
        %6561 = vmatmul.f32.gmra.mxu0 %v5400
        %v6562 = vpop.f32.mrf.mxu0
        %v6563 = vadd.f32 %v6450, %v6562
        %6564 = vmatmul.f32.gmra.mxu0 %v5403
        %v6565 = vpop.f32.mrf.mxu0
        %v6566 = vadd.f32 %v6453, %v6565
        %6567 = vmatmul.f32.gmra.mxu0 %v5406
        %v6568 = vpop.f32.mrf.mxu0
        %v6569 = vadd.f32 %v6456, %v6568
        %6570 = vmatmul.f32.gmra.mxu0 %v5409
        %v6571 = vpop.f32.mrf.mxu0
        %v6572 = vadd.f32 %v6459, %v6571
        %6573 = vmatmul.f32.gmra.mxu0 %v5412
        %v6574 = vpop.f32.mrf.mxu0
        %v6575 = vadd.f32 %v6462, %v6574
        %6576 = vmatmul.f32.gmra.mxu0 %v5415
        %v6577 = vpop.f32.mrf.mxu0
        %v6578 = vadd.f32 %v6465, %v6577
        %6579 = vmatmul.f32.gmra.mxu0 %v5418
        %v6580 = vpop.f32.mrf.mxu0
        %v6581 = vadd.f32 %v6468, %v6580
        %6582 = vmatmul.f32.gmra.mxu0 %v5421
        %v6583 = vpop.f32.mrf.mxu0
        %v6584 = vadd.f32 %v6471, %v6583
        %6585 = vmatmul.f32.gmra.mxu0 %v5424
        %v6586 = vpop.f32.mrf.mxu0
        %v6587 = vadd.f32 %v6474, %v6586
        %6588 = vdwg.mxu0
        %v6589 = vadd.f32 %v6106, %v6494
        %v6590 = vadd.f32 %v6109, %v6497
        %v6591 = vadd.f32 %v6112, %v6500
        %v6592 = vadd.f32 %v6115, %v6503
        %v6593 = vadd.f32 %v6118, %v6506
        %v6594 = vadd.f32 %v6121, %v6509
        %v6595 = vadd.f32 %v6124, %v6512
        %v6596 = vadd.f32 %v6127, %v6515
        %v6597 = vadd.f32 %v6130, %v6518
        %v6598 = vadd.f32 %v6133, %v6521
        %v6599 = vadd.f32 %v6136, %v6524
        %v6600 = vadd.f32 %v6139, %v6527
        %v6601 = vadd.f32 %v6142, %v6530
        %v6602 = vadd.f32 %v6145, %v6533
        %v6603 = vadd.f32 %v6148, %v6536
        %v6604 = vadd.f32 %v6151, %v6539
        %v6605 = vadd.f32 %v6154, %v6542
        %v6606 = vadd.f32 %v6157, %v6545
        %v6607 = vadd.f32 %v6160, %v6548
        %v6608 = vadd.f32 %v6163, %v6551
        %v6609 = vadd.f32 %v6166, %v6554
        %v6610 = vadd.f32 %v6169, %v6557
        %v6611 = vadd.f32 %v6172, %v6560
        %v6612 = vadd.f32 %v6175, %v6563
        %v6613 = vadd.f32 %v6178, %v6566
        %v6614 = vadd.f32 %v6181, %v6569
        %v6615 = vadd.f32 %v6184, %v6572
        %v6616 = vadd.f32 %v6187, %v6575
        %v6617 = vadd.f32 %v6190, %v6578
        %v6618 = vadd.f32 %v6193, %v6581
        %v6619 = vadd.f32 %v6196, %v6584
        %v6620 = vadd.f32 %v6199, %v6587
        %v6622 = vperm.slane %v4925, 0
        %v6624 = vadd.f32 %v6589, %v6622
        %v6625 = vadd.f32 %v6590, %v6622
        %v6626 = vadd.f32 %v6591, %v6622
        %v6627 = vadd.f32 %v6592, %v6622
        %v6628 = vadd.f32 %v6593, %v6622
        %v6629 = vadd.f32 %v6594, %v6622
        %v6630 = vadd.f32 %v6595, %v6622
        %v6631 = vadd.f32 %v6596, %v6622
        %v6632 = vadd.f32 %v6597, %v6622
        %v6633 = vadd.f32 %v6598, %v6622
        %v6634 = vadd.f32 %v6599, %v6622
        %v6635 = vadd.f32 %v6600, %v6622
        %v6636 = vadd.f32 %v6601, %v6622
        %v6637 = vadd.f32 %v6602, %v6622
        %v6638 = vadd.f32 %v6603, %v6622
        %v6639 = vadd.f32 %v6604, %v6622
        %v6640 = vadd.f32 %v6605, %v6622
        %v6641 = vadd.f32 %v6606, %v6622
        %v6642 = vadd.f32 %v6607, %v6622
        %v6643 = vadd.f32 %v6608, %v6622
        %v6644 = vadd.f32 %v6609, %v6622
        %v6645 = vadd.f32 %v6610, %v6622
        %v6646 = vadd.f32 %v6611, %v6622
        %v6647 = vadd.f32 %v6612, %v6622
        %v6648 = vadd.f32 %v6613, %v6622
        %v6649 = vadd.f32 %v6614, %v6622
        %v6650 = vadd.f32 %v6615, %v6622
        %v6651 = vadd.f32 %v6616, %v6622
        %v6652 = vadd.f32 %v6617, %v6622
        %v6653 = vadd.f32 %v6618, %v6622
        %v6654 = vadd.f32 %v6619, %v6622
        %v6655 = vadd.f32 %v6620, %v6622
        %v6656 = vld [vmem:[%s16] sm:$0xff]
        %v6657 = vld [vmem:[%s16 + $0x8] sm:$0xff]
        %v6658 = vld [vmem:[%s16 + $0x10] sm:$0xff]
        %v6659 = vld [vmem:[%s16 + $0x18] sm:$0xff]
        %v6660 = vld [vmem:[%s16 + $0x20] sm:$0xff]
        %v6661 = vld [vmem:[%s16 + $0x28] sm:$0xff]
        %v6662 = vld [vmem:[%s16 + $0x30] sm:$0xff]
        %v6663 = vld [vmem:[%s16 + $0x38] sm:$0xff]
        %v6664 = vld [vmem:[%s16 + $0x40] sm:$0xff]
        %v6665 = vld [vmem:[%s16 + $0x48] sm:$0xff]
        %v6666 = vld [vmem:[%s16 + $0x50] sm:$0xff]
        %v6667 = vld [vmem:[%s16 + $0x58] sm:$0xff]
        %v6668 = vld [vmem:[%s16 + $0x60] sm:$0xff]
        %v6669 = vld [vmem:[%s16 + $0x68] sm:$0xff]
        %v6670 = vld [vmem:[%s16 + $0x70] sm:$0xff]
        %v6671 = vld [vmem:[%s16 + $0x78] sm:$0xff]
        %6672 = vmatpush.msra.mxu0 %v6671
        %6673 = vmatpush.msra.mxu0 %v6670
        %6674 = vmatpush.msra.mxu0 %v6669
        %6675 = vmatpush.msra.mxu0 %v6668
        %6676 = vmatpush.msra.mxu0 %v6667
        %6677 = vmatpush.msra.mxu0 %v6666
        %6678 = vmatpush.msra.mxu0 %v6665
        %6679 = vmatpush.msra.mxu0 %v6664
        %6680 = vmatpush.msra.mxu0 %v6663
        %6681 = vmatpush.msra.mxu0 %v6662
        %6682 = vmatpush.msra.mxu0 %v6661
        %6683 = vmatpush.msra.mxu0 %v6660
        %6684 = vmatpush.msra.mxu0 %v6659
        %6685 = vmatpush.msra.mxu0 %v6658
        %6686 = vmatpush.msra.mxu0 %v6657
        %6687 = vmatpush.msra.mxu0 %v6656
        %6688 = vmatmul.f32.gmra.mxu0 %v1150
        %v6689 = vpop.f32.mrf.mxu0
        %v6690 = vadd.f32 0.0, %v6689
        %6691 = vmatmul.f32.gmra.mxu0 %v1151
        %v6692 = vpop.f32.mrf.mxu0
        %v6693 = vadd.f32 0.0, %v6692
        %6694 = vmatmul.f32.gmra.mxu0 %v1152
        %v6695 = vpop.f32.mrf.mxu0
        %v6696 = vadd.f32 0.0, %v6695
        %6697 = vmatmul.f32.gmra.mxu0 %v1153
        %v6698 = vpop.f32.mrf.mxu0
        %v6699 = vadd.f32 0.0, %v6698
        %6700 = vmatmul.f32.gmra.mxu0 %v1154
        %v6701 = vpop.f32.mrf.mxu0
        %v6702 = vadd.f32 0.0, %v6701
        %6703 = vmatmul.f32.gmra.mxu0 %v1155
        %v6704 = vpop.f32.mrf.mxu0
        %v6705 = vadd.f32 0.0, %v6704
        %6706 = vmatmul.f32.gmra.mxu0 %v1156
        %v6707 = vpop.f32.mrf.mxu0
        %v6708 = vadd.f32 0.0, %v6707
        %6709 = vmatmul.f32.gmra.mxu0 %v1157
        %v6710 = vpop.f32.mrf.mxu0
        %v6711 = vadd.f32 0.0, %v6710
        %6712 = vmatmul.f32.gmra.mxu0 %v1158
        %v6713 = vpop.f32.mrf.mxu0
        %v6714 = vadd.f32 0.0, %v6713
        %6715 = vmatmul.f32.gmra.mxu0 %v1159
        %v6716 = vpop.f32.mrf.mxu0
        %v6717 = vadd.f32 0.0, %v6716
        %6718 = vmatmul.f32.gmra.mxu0 %v1160
        %v6719 = vpop.f32.mrf.mxu0
        %v6720 = vadd.f32 0.0, %v6719
        %6721 = vmatmul.f32.gmra.mxu0 %v1161
        %v6722 = vpop.f32.mrf.mxu0
        %v6723 = vadd.f32 0.0, %v6722
        %6724 = vmatmul.f32.gmra.mxu0 %v1162
        %v6725 = vpop.f32.mrf.mxu0
        %v6726 = vadd.f32 0.0, %v6725
        %6727 = vmatmul.f32.gmra.mxu0 %v1163
        %v6728 = vpop.f32.mrf.mxu0
        %v6729 = vadd.f32 0.0, %v6728
        %6730 = vmatmul.f32.gmra.mxu0 %v1164
        %v6731 = vpop.f32.mrf.mxu0
        %v6732 = vadd.f32 0.0, %v6731
        %6733 = vmatmul.f32.gmra.mxu0 %v1165
        %v6734 = vpop.f32.mrf.mxu0
        %v6735 = vadd.f32 0.0, %v6734
        %6736 = vmatmul.f32.gmra.mxu0 %v1166
        %v6737 = vpop.f32.mrf.mxu0
        %v6738 = vadd.f32 0.0, %v6737
        %6739 = vmatmul.f32.gmra.mxu0 %v1167
        %v6740 = vpop.f32.mrf.mxu0
        %v6741 = vadd.f32 0.0, %v6740
        %6742 = vmatmul.f32.gmra.mxu0 %v1168
        %v6743 = vpop.f32.mrf.mxu0
        %v6744 = vadd.f32 0.0, %v6743
        %6745 = vmatmul.f32.gmra.mxu0 %v1169
        %v6746 = vpop.f32.mrf.mxu0
        %v6747 = vadd.f32 0.0, %v6746
        %6748 = vmatmul.f32.gmra.mxu0 %v1170
        %v6749 = vpop.f32.mrf.mxu0
        %v6750 = vadd.f32 0.0, %v6749
        %6751 = vmatmul.f32.gmra.mxu0 %v1171
        %v6752 = vpop.f32.mrf.mxu0
        %v6753 = vadd.f32 0.0, %v6752
        %6754 = vmatmul.f32.gmra.mxu0 %v1172
        %v6755 = vpop.f32.mrf.mxu0
        %v6756 = vadd.f32 0.0, %v6755
        %6757 = vmatmul.f32.gmra.mxu0 %v1173
        %v6758 = vpop.f32.mrf.mxu0
        %v6759 = vadd.f32 0.0, %v6758
        %6760 = vmatmul.f32.gmra.mxu0 %v1174
        %v6761 = vpop.f32.mrf.mxu0
        %v6762 = vadd.f32 0.0, %v6761
        %6763 = vmatmul.f32.gmra.mxu0 %v1175
        %v6764 = vpop.f32.mrf.mxu0
        %v6765 = vadd.f32 0.0, %v6764
        %6766 = vmatmul.f32.gmra.mxu0 %v1176
        %v6767 = vpop.f32.mrf.mxu0
        %v6768 = vadd.f32 0.0, %v6767
        %6769 = vmatmul.f32.gmra.mxu0 %v1177
        %v6770 = vpop.f32.mrf.mxu0
        %v6771 = vadd.f32 0.0, %v6770
        %6772 = vmatmul.f32.gmra.mxu0 %v1178
        %v6773 = vpop.f32.mrf.mxu0
        %v6774 = vadd.f32 0.0, %v6773
        %6775 = vmatmul.f32.gmra.mxu0 %v1179
        %v6776 = vpop.f32.mrf.mxu0
        %v6777 = vadd.f32 0.0, %v6776
        %6778 = vmatmul.f32.gmra.mxu0 %v1180
        %v6779 = vpop.f32.mrf.mxu0
        %v6780 = vadd.f32 0.0, %v6779
        %6781 = vmatmul.f32.gmra.mxu0 %v1181
        %v6782 = vpop.f32.mrf.mxu0
        %v6783 = vadd.f32 0.0, %v6782
        %6784 = vdwg.mxu0
        %v6785 = vadd.f32 %v6624, %v6690
        %v6786 = vadd.f32 %v6625, %v6693
        %v6787 = vadd.f32 %v6626, %v6696
        %v6788 = vadd.f32 %v6627, %v6699
        %v6789 = vadd.f32 %v6628, %v6702
        %v6790 = vadd.f32 %v6629, %v6705
        %v6791 = vadd.f32 %v6630, %v6708
        %v6792 = vadd.f32 %v6631, %v6711
        %v6793 = vadd.f32 %v6632, %v6714
        %v6794 = vadd.f32 %v6633, %v6717
        %v6795 = vadd.f32 %v6634, %v6720
        %v6796 = vadd.f32 %v6635, %v6723
        %v6797 = vadd.f32 %v6636, %v6726
        %v6798 = vadd.f32 %v6637, %v6729
        %v6799 = vadd.f32 %v6638, %v6732
        %v6800 = vadd.f32 %v6639, %v6735
        %v6801 = vadd.f32 %v6640, %v6738
        %v6802 = vadd.f32 %v6641, %v6741
        %v6803 = vadd.f32 %v6642, %v6744
        %v6804 = vadd.f32 %v6643, %v6747
        %v6805 = vadd.f32 %v6644, %v6750
        %v6806 = vadd.f32 %v6645, %v6753
        %v6807 = vadd.f32 %v6646, %v6756
        %v6808 = vadd.f32 %v6647, %v6759
        %v6809 = vadd.f32 %v6648, %v6762
        %v6810 = vadd.f32 %v6649, %v6765
        %v6811 = vadd.f32 %v6650, %v6768
        %v6812 = vadd.f32 %v6651, %v6771
        %v6813 = vadd.f32 %v6652, %v6774
        %v6814 = vadd.f32 %v6653, %v6777
        %v6815 = vadd.f32 %v6654, %v6780
        %v6816 = vadd.f32 %v6655, %v6783
        %v6817 = vld [vmem:[%s17] sm:$0x1]
        %v6819 = vperm.slane %v6817, 0
        %v6821 = vadd.f32 %v6785, %v6819
        %v6822 = vadd.f32 %v6786, %v6819
        %v6823 = vadd.f32 %v6787, %v6819
        %v6824 = vadd.f32 %v6788, %v6819
        %v6825 = vadd.f32 %v6789, %v6819
        %v6826 = vadd.f32 %v6790, %v6819
        %v6827 = vadd.f32 %v6791, %v6819
        %v6828 = vadd.f32 %v6792, %v6819
        %v6829 = vadd.f32 %v6793, %v6819
        %v6830 = vadd.f32 %v6794, %v6819
        %v6831 = vadd.f32 %v6795, %v6819
        %v6832 = vadd.f32 %v6796, %v6819
        %v6833 = vadd.f32 %v6797, %v6819
        %v6834 = vadd.f32 %v6798, %v6819
        %v6835 = vadd.f32 %v6799, %v6819
        %v6836 = vadd.f32 %v6800, %v6819
        %v6837 = vadd.f32 %v6801, %v6819
        %v6838 = vadd.f32 %v6802, %v6819
        %v6839 = vadd.f32 %v6803, %v6819
        %v6840 = vadd.f32 %v6804, %v6819
        %v6841 = vadd.f32 %v6805, %v6819
        %v6842 = vadd.f32 %v6806, %v6819
        %v6843 = vadd.f32 %v6807, %v6819
        %v6844 = vadd.f32 %v6808, %v6819
        %v6845 = vadd.f32 %v6809, %v6819
        %v6846 = vadd.f32 %v6810, %v6819
        %v6847 = vadd.f32 %v6811, %v6819
        %v6848 = vadd.f32 %v6812, %v6819
        %v6849 = vadd.f32 %v6813, %v6819
        %v6850 = vadd.f32 %v6814, %v6819
        %v6851 = vadd.f32 %v6815, %v6819
        %v6852 = vadd.f32 %v6816, %v6819
        %v6853 = vld [vmem:[%s18] sm:$0x1]
        %v6854 = vld [vmem:[%s19] sm:$0x1]
        %v6855 = vadd.f32 %v6821, %v6822
        %v6856 = vadd.f32 %v6855, %v6823
        %v6857 = vadd.f32 %v6856, %v6824
        %v6858 = vadd.f32 %v6857, %v6825
        %v6859 = vadd.f32 %v6858, %v6826
        %v6860 = vadd.f32 %v6859, %v6827
        %v6861 = vadd.f32 %v6860, %v6828
        %v6862 = vadd.f32 %v6861, %v6829
        %v6863 = vadd.f32 %v6862, %v6830
        %v6864 = vadd.f32 %v6863, %v6831
        %v6865 = vadd.f32 %v6864, %v6832
        %v6866 = vadd.f32 %v6865, %v6833
        %v6867 = vadd.f32 %v6866, %v6834
        %v6868 = vadd.f32 %v6867, %v6835
        %v6869 = vadd.f32 %v6868, %v6836
        %v6870 = vadd.f32 %v6869, %v6837
        %v6871 = vadd.f32 %v6870, %v6838
        %v6872 = vadd.f32 %v6871, %v6839
        %v6873 = vadd.f32 %v6872, %v6840
        %v6874 = vadd.f32 %v6873, %v6841
        %v6875 = vadd.f32 %v6874, %v6842
        %v6876 = vadd.f32 %v6875, %v6843
        %v6877 = vadd.f32 %v6876, %v6844
        %v6878 = vadd.f32 %v6877, %v6845
        %v6879 = vadd.f32 %v6878, %v6846
        %v6880 = vadd.f32 %v6879, %v6847
        %v6881 = vadd.f32 %v6880, %v6848
        %v6882 = vadd.f32 %v6881, %v6849
        %v6883 = vadd.f32 %v6882, %v6850
        %v6884 = vadd.f32 %v6883, %v6851
        %v6885 = vadd.f32 %v6884, %v6852
        %v6886 = vrot.slane %v6885, 4
        %v6887 = vadd.f32 %v6885, %v6886
        %v6888 = vrot.slane %v6887, 2
        %v6889 = vadd.f32 %v6887, %v6888
        %v6890 = vrot.slane %v6889, 1
        %v6891 = vadd.f32 %v6889, %v6890
        %6892 = vmatpush.msra.mxu0 %v3978
        %6893 = vmatpush.msra.mxu0 %v3977
        %6894 = vmatpush.msra.mxu0 %v3976
        %6895 = vmatpush.msra.mxu0 %v3975
        %6896 = vmatpush.msra.mxu0 %v3974
        %6897 = vmatpush.msra.mxu0 %v3973
        %6898 = vmatpush.msra.mxu0 %v3972
        %6899 = vmatpush.msra.mxu0 %v3971
        %6900 = vmatpush.msra.mxu0 %v3970
        %6901 = vmatpush.msra.mxu0 %v3969
        %6902 = vmatpush.msra.mxu0 %v3968
        %6903 = vmatpush.msra.mxu0 %v3967
        %6904 = vmatpush.msra.mxu0 %v3966
        %6905 = vmatpush.msra.mxu0 %v3965
        %6906 = vmatpush.msra.mxu0 %v3964
        %6907 = vmatpush.msra.mxu0 %v3963
        %6908 = vmatmul.f32.gmra.mxu0 %v6891
        %v6909 = vpop.f32.mrf.mxu0
        %v6910 = vadd.f32 0.0, %v6909
        %6911 = vdwg.mxu0
        %v6913 = vsel %vm1259, %v6910, 0
        %6915 = vmatpush.msra.mxu0 0.0
        %6916 = vmatpush.msra.mxu0 0.0
        %6917 = vmatpush.msra.mxu0 0.0
        %6918 = vmatpush.msra.mxu0 0.0
        %6919 = vmatpush.msra.mxu0 0.0
        %6920 = vmatpush.msra.mxu0 0.0
        %6921 = vmatpush.msra.mxu0 0.0
        %6922 = vmatpush.msra.mxu0 0.0
        %6923 = vmatpush.msra.mxu0 0.0
        %6924 = vmatpush.msra.mxu0 0.0
        %6925 = vmatpush.msra.mxu0 0.0
        %6926 = vmatpush.msra.mxu0 0.0
        %6927 = vmatpush.msra.mxu0 0.0
        %6928 = vmatpush.msra.mxu0 0.0
        %6929 = vmatpush.msra.mxu0 %v3980
        %6930 = vmatpush.msra.mxu0 %v3979
        %6931 = vmatmul.f32.gmra.mxu0 %v6913
        %v6932 = vpop.f32.mrf.mxu0
        %v6933 = vadd.f32 0.0, %v6932
        %6934 = vdwg.mxu0
        %v6935 = vperm.slane %v6933, 0
        %v6936 = vsub.f32 %v6821, %v6935
        %v6937 = vsub.f32 %v6822, %v6935
        %v6938 = vsub.f32 %v6823, %v6935
        %v6939 = vsub.f32 %v6824, %v6935
        %v6940 = vsub.f32 %v6825, %v6935
        %v6941 = vsub.f32 %v6826, %v6935
        %v6942 = vsub.f32 %v6827, %v6935
        %v6943 = vsub.f32 %v6828, %v6935
        %v6944 = vsub.f32 %v6829, %v6935
        %v6945 = vsub.f32 %v6830, %v6935
        %v6946 = vsub.f32 %v6831, %v6935
        %v6947 = vsub.f32 %v6832, %v6935
        %v6948 = vsub.f32 %v6833, %v6935
        %v6949 = vsub.f32 %v6834, %v6935
        %v6950 = vsub.f32 %v6835, %v6935
        %v6951 = vsub.f32 %v6836, %v6935
        %v6952 = vsub.f32 %v6837, %v6935
        %v6953 = vsub.f32 %v6838, %v6935
        %v6954 = vsub.f32 %v6839, %v6935
        %v6955 = vsub.f32 %v6840, %v6935
        %v6956 = vsub.f32 %v6841, %v6935
        %v6957 = vsub.f32 %v6842, %v6935
        %v6958 = vsub.f32 %v6843, %v6935
        %v6959 = vsub.f32 %v6844, %v6935
        %v6960 = vsub.f32 %v6845, %v6935
        %v6961 = vsub.f32 %v6846, %v6935
        %v6962 = vsub.f32 %v6847, %v6935
        %v6963 = vsub.f32 %v6848, %v6935
        %v6964 = vsub.f32 %v6849, %v6935
        %v6965 = vsub.f32 %v6850, %v6935
        %v6966 = vsub.f32 %v6851, %v6935
        %v6967 = vsub.f32 %v6852, %v6935
        %v6968 = vmul.f32 %v6936, %v6936
        %v6969 = vmul.f32 %v6937, %v6937
        %v6970 = vmul.f32 %v6938, %v6938
        %v6971 = vmul.f32 %v6939, %v6939
        %v6972 = vmul.f32 %v6940, %v6940
        %v6973 = vmul.f32 %v6941, %v6941
        %v6974 = vmul.f32 %v6942, %v6942
        %v6975 = vmul.f32 %v6943, %v6943
        %v6976 = vmul.f32 %v6944, %v6944
        %v6977 = vmul.f32 %v6945, %v6945
        %v6978 = vmul.f32 %v6946, %v6946
        %v6979 = vmul.f32 %v6947, %v6947
        %v6980 = vmul.f32 %v6948, %v6948
        %v6981 = vmul.f32 %v6949, %v6949
        %v6982 = vmul.f32 %v6950, %v6950
        %v6983 = vmul.f32 %v6951, %v6951
        %v6984 = vmul.f32 %v6952, %v6952
        %v6985 = vmul.f32 %v6953, %v6953
        %v6986 = vmul.f32 %v6954, %v6954
        %v6987 = vmul.f32 %v6955, %v6955
        %v6988 = vmul.f32 %v6956, %v6956
        %v6989 = vmul.f32 %v6957, %v6957
        %v6990 = vmul.f32 %v6958, %v6958
        %v6991 = vmul.f32 %v6959, %v6959
        %v6992 = vmul.f32 %v6960, %v6960
        %v6993 = vmul.f32 %v6961, %v6961
        %v6994 = vmul.f32 %v6962, %v6962
        %v6995 = vmul.f32 %v6963, %v6963
        %v6996 = vmul.f32 %v6964, %v6964
        %v6997 = vmul.f32 %v6965, %v6965
        %v6998 = vmul.f32 %v6966, %v6966
        %v6999 = vmul.f32 %v6967, %v6967
        %v7000 = vadd.f32 %v6968, %v6969
        %v7001 = vadd.f32 %v7000, %v6970
        %v7002 = vadd.f32 %v7001, %v6971
        %v7003 = vadd.f32 %v7002, %v6972
        %v7004 = vadd.f32 %v7003, %v6973
        %v7005 = vadd.f32 %v7004, %v6974
        %v7006 = vadd.f32 %v7005, %v6975
        %v7007 = vadd.f32 %v7006, %v6976
        %v7008 = vadd.f32 %v7007, %v6977
        %v7009 = vadd.f32 %v7008, %v6978
        %v7010 = vadd.f32 %v7009, %v6979
        %v7011 = vadd.f32 %v7010, %v6980
        %v7012 = vadd.f32 %v7011, %v6981
        %v7013 = vadd.f32 %v7012, %v6982
        %v7014 = vadd.f32 %v7013, %v6983
        %v7015 = vadd.f32 %v7014, %v6984
        %v7016 = vadd.f32 %v7015, %v6985
        %v7017 = vadd.f32 %v7016, %v6986
        %v7018 = vadd.f32 %v7017, %v6987
        %v7019 = vadd.f32 %v7018, %v6988
        %v7020 = vadd.f32 %v7019, %v6989
        %v7021 = vadd.f32 %v7020, %v6990
        %v7022 = vadd.f32 %v7021, %v6991
        %v7023 = vadd.f32 %v7022, %v6992
        %v7024 = vadd.f32 %v7023, %v6993
        %v7025 = vadd.f32 %v7024, %v6994
        %v7026 = vadd.f32 %v7025, %v6995
        %v7027 = vadd.f32 %v7026, %v6996
        %v7028 = vadd.f32 %v7027, %v6997
        %v7029 = vadd.f32 %v7028, %v6998
        %v7030 = vadd.f32 %v7029, %v6999
        %v7031 = vrot.slane %v7030, 4
        %v7032 = vadd.f32 %v7030, %v7031
        %v7033 = vrot.slane %v7032, 2
        %v7034 = vadd.f32 %v7032, %v7033
        %v7035 = vrot.slane %v7034, 1
        %v7036 = vadd.f32 %v7034, %v7035
        %7037 = vmatpush.msra.mxu0 %v3978
        %7038 = vmatpush.msra.mxu0 %v3977
        %7039 = vmatpush.msra.mxu0 %v3976
        %7040 = vmatpush.msra.mxu0 %v3975
        %7041 = vmatpush.msra.mxu0 %v3974
        %7042 = vmatpush.msra.mxu0 %v3973
        %7043 = vmatpush.msra.mxu0 %v3972
        %7044 = vmatpush.msra.mxu0 %v3971
        %7045 = vmatpush.msra.mxu0 %v3970
        %7046 = vmatpush.msra.mxu0 %v3969
        %7047 = vmatpush.msra.mxu0 %v3968
        %7048 = vmatpush.msra.mxu0 %v3967
        %7049 = vmatpush.msra.mxu0 %v3966
        %7050 = vmatpush.msra.mxu0 %v3965
        %7051 = vmatpush.msra.mxu0 %v3964
        %7052 = vmatpush.msra.mxu0 %v3963
        %7053 = vmatmul.f32.gmra.mxu0 %v7036
        %v7054 = vpop.f32.mrf.mxu0
        %v7055 = vadd.f32 0.0, %v7054
        %7056 = vdwg.mxu0
        %v7058 = vsel %vm1259, %v7055, 0
        %7060 = vmatpush.msra.mxu0 0.0
        %7061 = vmatpush.msra.mxu0 0.0
        %7062 = vmatpush.msra.mxu0 0.0
        %7063 = vmatpush.msra.mxu0 0.0
        %7064 = vmatpush.msra.mxu0 0.0
        %7065 = vmatpush.msra.mxu0 0.0
        %7066 = vmatpush.msra.mxu0 0.0
        %7067 = vmatpush.msra.mxu0 0.0
        %7068 = vmatpush.msra.mxu0 0.0
        %7069 = vmatpush.msra.mxu0 0.0
        %7070 = vmatpush.msra.mxu0 0.0
        %7071 = vmatpush.msra.mxu0 0.0
        %7072 = vmatpush.msra.mxu0 0.0
        %7073 = vmatpush.msra.mxu0 0.0
        %7074 = vmatpush.msra.mxu0 %v3980
        %7075 = vmatpush.msra.mxu0 %v3979
        %7076 = vmatmul.f32.gmra.mxu0 %v7058
        %v7077 = vpop.f32.mrf.mxu0
        %v7078 = vadd.f32 1e-06, %v7077
        %7079 = vdwg.mxu0
        %v7080 = vrsqrt.pop %v7078
        %v7081 = vmul.f32 %v7080, %v7078
        %v7082 = vmul.f32 %v7081, %v7080
        %v7083 = vmul.f32 0.5, %v7082
        %v7084 = vsub.f32 1.5, %v7083
        %v7085 = vmul.f32 %v7080, %v7084
        %vm7086 = vweird.f32 %v7078
        %vm7087 = vweird.f32 %v7080
        %vm7088 = vmor %vm7086, %vm7087
        %v7089 = vsel %vm7088, %v7080, %v7085
        %v7090 = vmul.f32 %v7089, %v6853
        %v7091 = vperm.slane %v7090, 0
        %v7092 = vmul.f32 %v6936, %v7091
        %v7093 = vmul.f32 %v6937, %v7091
        %v7094 = vmul.f32 %v6938, %v7091
        %v7095 = vmul.f32 %v6939, %v7091
        %v7096 = vmul.f32 %v6940, %v7091
        %v7097 = vmul.f32 %v6941, %v7091
        %v7098 = vmul.f32 %v6942, %v7091
        %v7099 = vmul.f32 %v6943, %v7091
        %v7100 = vmul.f32 %v6944, %v7091
        %v7101 = vmul.f32 %v6945, %v7091
        %v7102 = vmul.f32 %v6946, %v7091
        %v7103 = vmul.f32 %v6947, %v7091
        %v7104 = vmul.f32 %v6948, %v7091
        %v7105 = vmul.f32 %v6949, %v7091
        %v7106 = vmul.f32 %v6950, %v7091
        %v7107 = vmul.f32 %v6951, %v7091
        %v7108 = vmul.f32 %v6952, %v7091
        %v7109 = vmul.f32 %v6953, %v7091
        %v7110 = vmul.f32 %v6954, %v7091
        %v7111 = vmul.f32 %v6955, %v7091
        %v7112 = vmul.f32 %v6956, %v7091
        %v7113 = vmul.f32 %v6957, %v7091
        %v7114 = vmul.f32 %v6958, %v7091
        %v7115 = vmul.f32 %v6959, %v7091
        %v7116 = vmul.f32 %v6960, %v7091
        %v7117 = vmul.f32 %v6961, %v7091
        %v7118 = vmul.f32 %v6962, %v7091
        %v7119 = vmul.f32 %v6963, %v7091
        %v7120 = vmul.f32 %v6964, %v7091
        %v7121 = vmul.f32 %v6965, %v7091
        %v7122 = vmul.f32 %v6966, %v7091
        %v7123 = vmul.f32 %v6967, %v7091
        %v7125 = vperm.slane %v6854, 0
        %v7127 = vadd.f32 %v7092, %v7125
        %v7128 = vadd.f32 %v7093, %v7125
        %v7129 = vadd.f32 %v7094, %v7125
        %v7130 = vadd.f32 %v7095, %v7125
        %v7131 = vadd.f32 %v7096, %v7125
        %v7132 = vadd.f32 %v7097, %v7125
        %v7133 = vadd.f32 %v7098, %v7125
        %v7134 = vadd.f32 %v7099, %v7125
        %v7135 = vadd.f32 %v7100, %v7125
        %v7136 = vadd.f32 %v7101, %v7125
        %v7137 = vadd.f32 %v7102, %v7125
        %v7138 = vadd.f32 %v7103, %v7125
        %v7139 = vadd.f32 %v7104, %v7125
        %v7140 = vadd.f32 %v7105, %v7125
        %v7141 = vadd.f32 %v7106, %v7125
        %v7142 = vadd.f32 %v7107, %v7125
        %v7143 = vadd.f32 %v7108, %v7125
        %v7144 = vadd.f32 %v7109, %v7125
        %v7145 = vadd.f32 %v7110, %v7125
        %v7146 = vadd.f32 %v7111, %v7125
        %v7147 = vadd.f32 %v7112, %v7125
        %v7148 = vadd.f32 %v7113, %v7125
        %v7149 = vadd.f32 %v7114, %v7125
        %v7150 = vadd.f32 %v7115, %v7125
        %v7151 = vadd.f32 %v7116, %v7125
        %v7152 = vadd.f32 %v7117, %v7125
        %v7153 = vadd.f32 %v7118, %v7125
        %v7154 = vadd.f32 %v7119, %v7125
        %v7155 = vadd.f32 %v7120, %v7125
        %v7156 = vadd.f32 %v7121, %v7125
        %v7157 = vadd.f32 %v7122, %v7125
        %v7158 = vadd.f32 %v7123, %v7125
        %v7159 = vld [vmem:[#allocation17] sm:$0xff]
        %v7160 = vld [vmem:[#allocation17 + $0x8] sm:$0xff]
        %v7161 = vld [vmem:[#allocation17 + $0x10] sm:$0xff]
        %v7162 = vld [vmem:[#allocation17 + $0x18] sm:$0xff]
        %v7163 = vld [vmem:[#allocation17 + $0x20] sm:$0xff]
        %v7164 = vld [vmem:[#allocation17 + $0x28] sm:$0xff]
        %v7165 = vld [vmem:[#allocation17 + $0x30] sm:$0xff]
        %v7166 = vld [vmem:[#allocation17 + $0x38] sm:$0xff]
        %v7167 = vld [vmem:[#allocation17 + $0x40] sm:$0xff]
        %v7168 = vld [vmem:[#allocation17 + $0x48] sm:$0xff]
        %v7169 = vld [vmem:[#allocation17 + $0x50] sm:$0xff]
        %v7170 = vld [vmem:[#allocation17 + $0x58] sm:$0xff]
        %v7171 = vld [vmem:[#allocation17 + $0x60] sm:$0xff]
        %v7172 = vld [vmem:[#allocation17 + $0x68] sm:$0xff]
        %v7173 = vld [vmem:[#allocation17 + $0x70] sm:$0xff]
        %v7174 = vld [vmem:[#allocation17 + $0x78] sm:$0xff]
        %v7175 = vld [vmem:[#allocation17 + $0x80] sm:$0xff]
        %v7176 = vld [vmem:[#allocation17 + $0x88] sm:$0xff]
        %v7177 = vld [vmem:[#allocation17 + $0x90] sm:$0xff]
        %v7178 = vld [vmem:[#allocation17 + $0x98] sm:$0xff]
        %v7179 = vld [vmem:[#allocation17 + $0xa0] sm:$0xff]
        %v7180 = vld [vmem:[#allocation17 + $0xa8] sm:$0xff]
        %v7181 = vld [vmem:[#allocation17 + $0xb0] sm:$0xff]
        %v7182 = vld [vmem:[#allocation17 + $0xb8] sm:$0xff]
        %v7183 = vld [vmem:[#allocation17 + $0xc0] sm:$0xff]
        %v7184 = vld [vmem:[#allocation17 + $0xc8] sm:$0xff]
        %v7185 = vld [vmem:[#allocation17 + $0xd0] sm:$0xff]
        %v7186 = vld [vmem:[#allocation17 + $0xd8] sm:$0xff]
        %v7187 = vld [vmem:[#allocation17 + $0xe0] sm:$0xff]
        %v7188 = vld [vmem:[#allocation17 + $0xe8] sm:$0xff]
        %v7189 = vld [vmem:[#allocation17 + $0xf0] sm:$0xff]
        %v7190 = vld [vmem:[#allocation17 + $0xf8] sm:$0xff]
        %v7191 = vld [vmem:[#allocation17 + $0x100] sm:$0xff]
        %v7192 = vld [vmem:[#allocation17 + $0x108] sm:$0xff]
        %v7193 = vld [vmem:[#allocation17 + $0x110] sm:$0xff]
        %v7194 = vld [vmem:[#allocation17 + $0x118] sm:$0xff]
        %v7195 = vld [vmem:[#allocation17 + $0x120] sm:$0xff]
        %v7196 = vld [vmem:[#allocation17 + $0x128] sm:$0xff]
        %v7197 = vld [vmem:[#allocation17 + $0x130] sm:$0xff]
        %v7198 = vld [vmem:[#allocation17 + $0x138] sm:$0xff]
        %v7199 = vld [vmem:[#allocation17 + $0x140] sm:$0xff]
        %v7200 = vld [vmem:[#allocation17 + $0x148] sm:$0xff]
        %v7201 = vld [vmem:[#allocation17 + $0x150] sm:$0xff]
        %v7202 = vld [vmem:[#allocation17 + $0x158] sm:$0xff]
        %v7203 = vld [vmem:[#allocation17 + $0x160] sm:$0xff]
        %v7204 = vld [vmem:[#allocation17 + $0x168] sm:$0xff]
        %v7205 = vld [vmem:[#allocation17 + $0x170] sm:$0xff]
        %v7206 = vld [vmem:[#allocation17 + $0x178] sm:$0xff]
        %v7207 = vld [vmem:[%s21] sm:$0x7]
        %v7209 = vperm.slane %v7207, 0
        %v7210 = vperm.slane %v7207, 1
        %v7211 = vperm.slane %v7207, 2
        %7215 = vmatpush.msra.mxu0 %v7204
        %7216 = vmatpush.msra.mxu0 %v7201
        %7217 = vmatpush.msra.mxu0 %v7198
        %7218 = vmatpush.msra.mxu0 %v7195
        %7219 = vmatpush.msra.mxu0 %v7192
        %7220 = vmatpush.msra.mxu0 %v7189
        %7221 = vmatpush.msra.mxu0 %v7186
        %7222 = vmatpush.msra.mxu0 %v7183
        %7223 = vmatpush.msra.mxu0 %v7180
        %7224 = vmatpush.msra.mxu0 %v7177
        %7225 = vmatpush.msra.mxu0 %v7174
        %7226 = vmatpush.msra.mxu0 %v7171
        %7227 = vmatpush.msra.mxu0 %v7168
        %7228 = vmatpush.msra.mxu0 %v7165
        %7229 = vmatpush.msra.mxu0 %v7162
        %7230 = vmatpush.msra.mxu0 %v7159
        %7231 = vmatmul.f32.gmra.mxu0 %v7127
        %v7232 = vpop.f32.mrf.mxu0
        %v7233 = vadd.f32 %v7209, %v7232
        %7234 = vmatmul.f32.gmra.mxu0 %v7128
        %v7235 = vpop.f32.mrf.mxu0
        %v7236 = vadd.f32 %v7209, %v7235
        %7237 = vmatmul.f32.gmra.mxu0 %v7129
        %v7238 = vpop.f32.mrf.mxu0
        %v7239 = vadd.f32 %v7209, %v7238
        %7240 = vmatmul.f32.gmra.mxu0 %v7130
        %v7241 = vpop.f32.mrf.mxu0
        %v7242 = vadd.f32 %v7209, %v7241
        %7243 = vmatmul.f32.gmra.mxu0 %v7131
        %v7244 = vpop.f32.mrf.mxu0
        %v7245 = vadd.f32 %v7209, %v7244
        %7246 = vmatmul.f32.gmra.mxu0 %v7132
        %v7247 = vpop.f32.mrf.mxu0
        %v7248 = vadd.f32 %v7209, %v7247
        %7249 = vmatmul.f32.gmra.mxu0 %v7133
        %v7250 = vpop.f32.mrf.mxu0
        %v7251 = vadd.f32 %v7209, %v7250
        %7252 = vmatmul.f32.gmra.mxu0 %v7134
        %v7253 = vpop.f32.mrf.mxu0
        %v7254 = vadd.f32 %v7209, %v7253
        %7255 = vmatmul.f32.gmra.mxu0 %v7135
        %v7256 = vpop.f32.mrf.mxu0
        %v7257 = vadd.f32 %v7209, %v7256
        %7258 = vmatmul.f32.gmra.mxu0 %v7136
        %v7259 = vpop.f32.mrf.mxu0
        %v7260 = vadd.f32 %v7209, %v7259
        %7261 = vmatmul.f32.gmra.mxu0 %v7137
        %v7262 = vpop.f32.mrf.mxu0
        %v7263 = vadd.f32 %v7209, %v7262
        %7264 = vmatmul.f32.gmra.mxu0 %v7138
        %v7265 = vpop.f32.mrf.mxu0
        %v7266 = vadd.f32 %v7209, %v7265
        %7267 = vmatmul.f32.gmra.mxu0 %v7139
        %v7268 = vpop.f32.mrf.mxu0
        %v7269 = vadd.f32 %v7209, %v7268
        %7270 = vmatmul.f32.gmra.mxu0 %v7140
        %v7271 = vpop.f32.mrf.mxu0
        %v7272 = vadd.f32 %v7209, %v7271
        %7273 = vmatmul.f32.gmra.mxu0 %v7141
        %v7274 = vpop.f32.mrf.mxu0
        %v7275 = vadd.f32 %v7209, %v7274
        %7276 = vmatmul.f32.gmra.mxu0 %v7142
        %v7277 = vpop.f32.mrf.mxu0
        %v7278 = vadd.f32 %v7209, %v7277
        %7279 = vmatmul.f32.gmra.mxu0 %v7143
        %v7280 = vpop.f32.mrf.mxu0
        %v7281 = vadd.f32 %v7209, %v7280
        %7282 = vmatmul.f32.gmra.mxu0 %v7144
        %v7283 = vpop.f32.mrf.mxu0
        %v7284 = vadd.f32 %v7209, %v7283
        %7285 = vmatmul.f32.gmra.mxu0 %v7145
        %v7286 = vpop.f32.mrf.mxu0
        %v7287 = vadd.f32 %v7209, %v7286
        %7288 = vmatmul.f32.gmra.mxu0 %v7146
        %v7289 = vpop.f32.mrf.mxu0
        %v7290 = vadd.f32 %v7209, %v7289
        %7291 = vmatmul.f32.gmra.mxu0 %v7147
        %v7292 = vpop.f32.mrf.mxu0
        %v7293 = vadd.f32 %v7209, %v7292
        %7294 = vmatmul.f32.gmra.mxu0 %v7148
        %v7295 = vpop.f32.mrf.mxu0
        %v7296 = vadd.f32 %v7209, %v7295
        %7297 = vmatmul.f32.gmra.mxu0 %v7149
        %v7298 = vpop.f32.mrf.mxu0
        %v7299 = vadd.f32 %v7209, %v7298
        %7300 = vmatmul.f32.gmra.mxu0 %v7150
        %v7301 = vpop.f32.mrf.mxu0
        %v7302 = vadd.f32 %v7209, %v7301
        %7303 = vmatmul.f32.gmra.mxu0 %v7151
        %v7304 = vpop.f32.mrf.mxu0
        %v7305 = vadd.f32 %v7209, %v7304
        %7306 = vmatmul.f32.gmra.mxu0 %v7152
        %v7307 = vpop.f32.mrf.mxu0
        %v7308 = vadd.f32 %v7209, %v7307
        %7309 = vmatmul.f32.gmra.mxu0 %v7153
        %v7310 = vpop.f32.mrf.mxu0
        %v7311 = vadd.f32 %v7209, %v7310
        %7312 = vmatmul.f32.gmra.mxu0 %v7154
        %v7313 = vpop.f32.mrf.mxu0
        %v7314 = vadd.f32 %v7209, %v7313
        %7315 = vmatmul.f32.gmra.mxu0 %v7155
        %v7316 = vpop.f32.mrf.mxu0
        %v7317 = vadd.f32 %v7209, %v7316
        %7318 = vmatmul.f32.gmra.mxu0 %v7156
        %v7319 = vpop.f32.mrf.mxu0
        %v7320 = vadd.f32 %v7209, %v7319
        %7321 = vmatmul.f32.gmra.mxu0 %v7157
        %v7322 = vpop.f32.mrf.mxu0
        %v7323 = vadd.f32 %v7209, %v7322
        %7324 = vmatmul.f32.gmra.mxu0 %v7158
        %v7325 = vpop.f32.mrf.mxu0
        %v7326 = vadd.f32 %v7209, %v7325
        %7327 = vdwg.mxu0
        %7328 = vmatpush.msra.mxu0 %v7205
        %7329 = vmatpush.msra.mxu0 %v7202
        %7330 = vmatpush.msra.mxu0 %v7199
        %7331 = vmatpush.msra.mxu0 %v7196
        %7332 = vmatpush.msra.mxu0 %v7193
        %7333 = vmatpush.msra.mxu0 %v7190
        %7334 = vmatpush.msra.mxu0 %v7187
        %7335 = vmatpush.msra.mxu0 %v7184
        %7336 = vmatpush.msra.mxu0 %v7181
        %7337 = vmatpush.msra.mxu0 %v7178
        %7338 = vmatpush.msra.mxu0 %v7175
        %7339 = vmatpush.msra.mxu0 %v7172
        %7340 = vmatpush.msra.mxu0 %v7169
        %7341 = vmatpush.msra.mxu0 %v7166
        %7342 = vmatpush.msra.mxu0 %v7163
        %7343 = vmatpush.msra.mxu0 %v7160
        %7344 = vmatmul.f32.gmra.mxu0 %v7127
        %v7345 = vpop.f32.mrf.mxu0
        %v7346 = vadd.f32 %v7210, %v7345
        %7347 = vmatmul.f32.gmra.mxu0 %v7128
        %v7348 = vpop.f32.mrf.mxu0
        %v7349 = vadd.f32 %v7210, %v7348
        %7350 = vmatmul.f32.gmra.mxu0 %v7129
        %v7351 = vpop.f32.mrf.mxu0
        %v7352 = vadd.f32 %v7210, %v7351
        %7353 = vmatmul.f32.gmra.mxu0 %v7130
        %v7354 = vpop.f32.mrf.mxu0
        %v7355 = vadd.f32 %v7210, %v7354
        %7356 = vmatmul.f32.gmra.mxu0 %v7131
        %v7357 = vpop.f32.mrf.mxu0
        %v7358 = vadd.f32 %v7210, %v7357
        %7359 = vmatmul.f32.gmra.mxu0 %v7132
        %v7360 = vpop.f32.mrf.mxu0
        %v7361 = vadd.f32 %v7210, %v7360
        %7362 = vmatmul.f32.gmra.mxu0 %v7133
        %v7363 = vpop.f32.mrf.mxu0
        %v7364 = vadd.f32 %v7210, %v7363
        %7365 = vmatmul.f32.gmra.mxu0 %v7134
        %v7366 = vpop.f32.mrf.mxu0
        %v7367 = vadd.f32 %v7210, %v7366
        %7368 = vmatmul.f32.gmra.mxu0 %v7135
        %v7369 = vpop.f32.mrf.mxu0
        %v7370 = vadd.f32 %v7210, %v7369
        %7371 = vmatmul.f32.gmra.mxu0 %v7136
        %v7372 = vpop.f32.mrf.mxu0
        %v7373 = vadd.f32 %v7210, %v7372
        %7374 = vmatmul.f32.gmra.mxu0 %v7137
        %v7375 = vpop.f32.mrf.mxu0
        %v7376 = vadd.f32 %v7210, %v7375
        %7377 = vmatmul.f32.gmra.mxu0 %v7138
        %v7378 = vpop.f32.mrf.mxu0
        %v7379 = vadd.f32 %v7210, %v7378
        %7380 = vmatmul.f32.gmra.mxu0 %v7139
        %v7381 = vpop.f32.mrf.mxu0
        %v7382 = vadd.f32 %v7210, %v7381
        %7383 = vmatmul.f32.gmra.mxu0 %v7140
        %v7384 = vpop.f32.mrf.mxu0
        %v7385 = vadd.f32 %v7210, %v7384
        %7386 = vmatmul.f32.gmra.mxu0 %v7141
        %v7387 = vpop.f32.mrf.mxu0
        %v7388 = vadd.f32 %v7210, %v7387
        %7389 = vmatmul.f32.gmra.mxu0 %v7142
        %v7390 = vpop.f32.mrf.mxu0
        %v7391 = vadd.f32 %v7210, %v7390
        %7392 = vmatmul.f32.gmra.mxu0 %v7143
        %v7393 = vpop.f32.mrf.mxu0
        %v7394 = vadd.f32 %v7210, %v7393
        %7395 = vmatmul.f32.gmra.mxu0 %v7144
        %v7396 = vpop.f32.mrf.mxu0
        %v7397 = vadd.f32 %v7210, %v7396
        %7398 = vmatmul.f32.gmra.mxu0 %v7145
        %v7399 = vpop.f32.mrf.mxu0
        %v7400 = vadd.f32 %v7210, %v7399
        %7401 = vmatmul.f32.gmra.mxu0 %v7146
        %v7402 = vpop.f32.mrf.mxu0
        %v7403 = vadd.f32 %v7210, %v7402
        %7404 = vmatmul.f32.gmra.mxu0 %v7147
        %v7405 = vpop.f32.mrf.mxu0
        %v7406 = vadd.f32 %v7210, %v7405
        %7407 = vmatmul.f32.gmra.mxu0 %v7148
        %v7408 = vpop.f32.mrf.mxu0
        %v7409 = vadd.f32 %v7210, %v7408
        %7410 = vmatmul.f32.gmra.mxu0 %v7149
        %v7411 = vpop.f32.mrf.mxu0
        %v7412 = vadd.f32 %v7210, %v7411
        %7413 = vmatmul.f32.gmra.mxu0 %v7150
        %v7414 = vpop.f32.mrf.mxu0
        %v7415 = vadd.f32 %v7210, %v7414
        %7416 = vmatmul.f32.gmra.mxu0 %v7151
        %v7417 = vpop.f32.mrf.mxu0
        %v7418 = vadd.f32 %v7210, %v7417
        %7419 = vmatmul.f32.gmra.mxu0 %v7152
        %v7420 = vpop.f32.mrf.mxu0
        %v7421 = vadd.f32 %v7210, %v7420
        %7422 = vmatmul.f32.gmra.mxu0 %v7153
        %v7423 = vpop.f32.mrf.mxu0
        %v7424 = vadd.f32 %v7210, %v7423
        %7425 = vmatmul.f32.gmra.mxu0 %v7154
        %v7426 = vpop.f32.mrf.mxu0
        %v7427 = vadd.f32 %v7210, %v7426
        %7428 = vmatmul.f32.gmra.mxu0 %v7155
        %v7429 = vpop.f32.mrf.mxu0
        %v7430 = vadd.f32 %v7210, %v7429
        %7431 = vmatmul.f32.gmra.mxu0 %v7156
        %v7432 = vpop.f32.mrf.mxu0
        %v7433 = vadd.f32 %v7210, %v7432
        %7434 = vmatmul.f32.gmra.mxu0 %v7157
        %v7435 = vpop.f32.mrf.mxu0
        %v7436 = vadd.f32 %v7210, %v7435
        %7437 = vmatmul.f32.gmra.mxu0 %v7158
        %v7438 = vpop.f32.mrf.mxu0
        %v7439 = vadd.f32 %v7210, %v7438
        %7440 = vdwg.mxu0
        %7441 = vmatpush.msra.mxu0 %v7206
        %7442 = vmatpush.msra.mxu0 %v7203
        %7443 = vmatpush.msra.mxu0 %v7200
        %7444 = vmatpush.msra.mxu0 %v7197
        %7445 = vmatpush.msra.mxu0 %v7194
        %7446 = vmatpush.msra.mxu0 %v7191
        %7447 = vmatpush.msra.mxu0 %v7188
        %7448 = vmatpush.msra.mxu0 %v7185
        %7449 = vmatpush.msra.mxu0 %v7182
        %7450 = vmatpush.msra.mxu0 %v7179
        %7451 = vmatpush.msra.mxu0 %v7176
        %7452 = vmatpush.msra.mxu0 %v7173
        %7453 = vmatpush.msra.mxu0 %v7170
        %7454 = vmatpush.msra.mxu0 %v7167
        %7455 = vmatpush.msra.mxu0 %v7164
        %7456 = vmatpush.msra.mxu0 %v7161
        %7457 = vmatmul.f32.gmra.mxu0 %v7127
        %v7458 = vpop.f32.mrf.mxu0
        %v7459 = vadd.f32 %v7211, %v7458
        %7460 = vmatmul.f32.gmra.mxu0 %v7128
        %v7461 = vpop.f32.mrf.mxu0
        %v7462 = vadd.f32 %v7211, %v7461
        %7463 = vmatmul.f32.gmra.mxu0 %v7129
        %v7464 = vpop.f32.mrf.mxu0
        %v7465 = vadd.f32 %v7211, %v7464
        %7466 = vmatmul.f32.gmra.mxu0 %v7130
        %v7467 = vpop.f32.mrf.mxu0
        %v7468 = vadd.f32 %v7211, %v7467
        %7469 = vmatmul.f32.gmra.mxu0 %v7131
        %v7470 = vpop.f32.mrf.mxu0
        %v7471 = vadd.f32 %v7211, %v7470
        %7472 = vmatmul.f32.gmra.mxu0 %v7132
        %v7473 = vpop.f32.mrf.mxu0
        %v7474 = vadd.f32 %v7211, %v7473
        %7475 = vmatmul.f32.gmra.mxu0 %v7133
        %v7476 = vpop.f32.mrf.mxu0
        %v7477 = vadd.f32 %v7211, %v7476
        %7478 = vmatmul.f32.gmra.mxu0 %v7134
        %v7479 = vpop.f32.mrf.mxu0
        %v7480 = vadd.f32 %v7211, %v7479
        %7481 = vmatmul.f32.gmra.mxu0 %v7135
        %v7482 = vpop.f32.mrf.mxu0
        %v7483 = vadd.f32 %v7211, %v7482
        %7484 = vmatmul.f32.gmra.mxu0 %v7136
        %v7485 = vpop.f32.mrf.mxu0
        %v7486 = vadd.f32 %v7211, %v7485
        %7487 = vmatmul.f32.gmra.mxu0 %v7137
        %v7488 = vpop.f32.mrf.mxu0
        %v7489 = vadd.f32 %v7211, %v7488
        %7490 = vmatmul.f32.gmra.mxu0 %v7138
        %v7491 = vpop.f32.mrf.mxu0
        %v7492 = vadd.f32 %v7211, %v7491
        %7493 = vmatmul.f32.gmra.mxu0 %v7139
        %v7494 = vpop.f32.mrf.mxu0
        %v7495 = vadd.f32 %v7211, %v7494
        %7496 = vmatmul.f32.gmra.mxu0 %v7140
        %v7497 = vpop.f32.mrf.mxu0
        %v7498 = vadd.f32 %v7211, %v7497
        %7499 = vmatmul.f32.gmra.mxu0 %v7141
        %v7500 = vpop.f32.mrf.mxu0
        %v7501 = vadd.f32 %v7211, %v7500
        %7502 = vmatmul.f32.gmra.mxu0 %v7142
        %v7503 = vpop.f32.mrf.mxu0
        %v7504 = vadd.f32 %v7211, %v7503
        %7505 = vmatmul.f32.gmra.mxu0 %v7143
        %v7506 = vpop.f32.mrf.mxu0
        %v7507 = vadd.f32 %v7211, %v7506
        %7508 = vmatmul.f32.gmra.mxu0 %v7144
        %v7509 = vpop.f32.mrf.mxu0
        %v7510 = vadd.f32 %v7211, %v7509
        %7511 = vmatmul.f32.gmra.mxu0 %v7145
        %v7512 = vpop.f32.mrf.mxu0
        %v7513 = vadd.f32 %v7211, %v7512
        %7514 = vmatmul.f32.gmra.mxu0 %v7146
        %v7515 = vpop.f32.mrf.mxu0
        %v7516 = vadd.f32 %v7211, %v7515
        %7517 = vmatmul.f32.gmra.mxu0 %v7147
        %v7518 = vpop.f32.mrf.mxu0
        %v7519 = vadd.f32 %v7211, %v7518
        %7520 = vmatmul.f32.gmra.mxu0 %v7148
        %v7521 = vpop.f32.mrf.mxu0
        %v7522 = vadd.f32 %v7211, %v7521
        %7523 = vmatmul.f32.gmra.mxu0 %v7149
        %v7524 = vpop.f32.mrf.mxu0
        %v7525 = vadd.f32 %v7211, %v7524
        %7526 = vmatmul.f32.gmra.mxu0 %v7150
        %v7527 = vpop.f32.mrf.mxu0
        %v7528 = vadd.f32 %v7211, %v7527
        %7529 = vmatmul.f32.gmra.mxu0 %v7151
        %v7530 = vpop.f32.mrf.mxu0
        %v7531 = vadd.f32 %v7211, %v7530
        %7532 = vmatmul.f32.gmra.mxu0 %v7152
        %v7533 = vpop.f32.mrf.mxu0
        %v7534 = vadd.f32 %v7211, %v7533
        %7535 = vmatmul.f32.gmra.mxu0 %v7153
        %v7536 = vpop.f32.mrf.mxu0
        %v7537 = vadd.f32 %v7211, %v7536
        %7538 = vmatmul.f32.gmra.mxu0 %v7154
        %v7539 = vpop.f32.mrf.mxu0
        %v7540 = vadd.f32 %v7211, %v7539
        %7541 = vmatmul.f32.gmra.mxu0 %v7155
        %v7542 = vpop.f32.mrf.mxu0
        %v7543 = vadd.f32 %v7211, %v7542
        %7544 = vmatmul.f32.gmra.mxu0 %v7156
        %v7545 = vpop.f32.mrf.mxu0
        %v7546 = vadd.f32 %v7211, %v7545
        %7547 = vmatmul.f32.gmra.mxu0 %v7157
        %v7548 = vpop.f32.mrf.mxu0
        %v7549 = vadd.f32 %v7211, %v7548
        %7550 = vmatmul.f32.gmra.mxu0 %v7158
        %v7551 = vpop.f32.mrf.mxu0
        %v7552 = vadd.f32 %v7211, %v7551
        %7553 = vdwg.mxu0
        %7554 = vmatpush.xpose.msra.mxu0 %v7391
        %7555 = vmatpush.xpose.msra.mxu0 %v7388
        %7556 = vmatpush.xpose.msra.mxu0 %v7385
        %7557 = vmatpush.xpose.msra.mxu0 %v7382
        %7558 = vmatpush.xpose.msra.mxu0 %v7379
        %7559 = vmatpush.xpose.msra.mxu0 %v7376
        %7560 = vmatpush.xpose.msra.mxu0 %v7373
        %7561 = vmatpush.xpose.msra.mxu0 %v7370
        %7562 = vmatpush.xpose.msra.mxu0 %v7367
        %7563 = vmatpush.xpose.msra.mxu0 %v7364
        %7564 = vmatpush.xpose.msra.mxu0 %v7361
        %7565 = vmatpush.xpose.msra.mxu0 %v7358
        %7566 = vmatpush.xpose.msra.mxu0 %v7355
        %7567 = vmatpush.xpose.msra.mxu0 %v7352
        %7568 = vmatpush.xpose.msra.mxu0 %v7349
        %7569 = vmatpush.xpose.msra.mxu0 %v7346
        %7570 = vmatmul.f32.gmra.mxu0 %v7233
        %v7571 = vpop.f32.mrf.mxu0
        %v7572 = vadd.f32 0.0, %v7571
        %7573 = vmatmul.f32.gmra.mxu0 %v7236
        %v7574 = vpop.f32.mrf.mxu0
        %v7575 = vadd.f32 0.0, %v7574
        %7576 = vmatmul.f32.gmra.mxu0 %v7239
        %v7577 = vpop.f32.mrf.mxu0
        %v7578 = vadd.f32 0.0, %v7577
        %7579 = vmatmul.f32.gmra.mxu0 %v7242
        %v7580 = vpop.f32.mrf.mxu0
        %v7581 = vadd.f32 0.0, %v7580
        %7582 = vmatmul.f32.gmra.mxu0 %v7245
        %v7583 = vpop.f32.mrf.mxu0
        %v7584 = vadd.f32 0.0, %v7583
        %7585 = vmatmul.f32.gmra.mxu0 %v7248
        %v7586 = vpop.f32.mrf.mxu0
        %v7587 = vadd.f32 0.0, %v7586
        %7588 = vmatmul.f32.gmra.mxu0 %v7251
        %v7589 = vpop.f32.mrf.mxu0
        %v7590 = vadd.f32 0.0, %v7589
        %7591 = vmatmul.f32.gmra.mxu0 %v7254
        %v7592 = vpop.f32.mrf.mxu0
        %v7593 = vadd.f32 0.0, %v7592
        %7594 = vmatmul.f32.gmra.mxu0 %v7257
        %v7595 = vpop.f32.mrf.mxu0
        %v7596 = vadd.f32 0.0, %v7595
        %7597 = vmatmul.f32.gmra.mxu0 %v7260
        %v7598 = vpop.f32.mrf.mxu0
        %v7599 = vadd.f32 0.0, %v7598
        %7600 = vmatmul.f32.gmra.mxu0 %v7263
        %v7601 = vpop.f32.mrf.mxu0
        %v7602 = vadd.f32 0.0, %v7601
        %7603 = vmatmul.f32.gmra.mxu0 %v7266
        %v7604 = vpop.f32.mrf.mxu0
        %v7605 = vadd.f32 0.0, %v7604
        %7606 = vmatmul.f32.gmra.mxu0 %v7269
        %v7607 = vpop.f32.mrf.mxu0
        %v7608 = vadd.f32 0.0, %v7607
        %7609 = vmatmul.f32.gmra.mxu0 %v7272
        %v7610 = vpop.f32.mrf.mxu0
        %v7611 = vadd.f32 0.0, %v7610
        %7612 = vmatmul.f32.gmra.mxu0 %v7275
        %v7613 = vpop.f32.mrf.mxu0
        %v7614 = vadd.f32 0.0, %v7613
        %7615 = vmatmul.f32.gmra.mxu0 %v7278
        %v7616 = vpop.f32.mrf.mxu0
        %v7617 = vadd.f32 0.0, %v7616
        %7618 = vmatmul.f32.gmra.mxu0 %v7281
        %v7619 = vpop.f32.mrf.mxu0
        %v7620 = vadd.f32 0.0, %v7619
        %7621 = vmatmul.f32.gmra.mxu0 %v7284
        %v7622 = vpop.f32.mrf.mxu0
        %v7623 = vadd.f32 0.0, %v7622
        %7624 = vmatmul.f32.gmra.mxu0 %v7287
        %v7625 = vpop.f32.mrf.mxu0
        %v7626 = vadd.f32 0.0, %v7625
        %7627 = vmatmul.f32.gmra.mxu0 %v7290
        %v7628 = vpop.f32.mrf.mxu0
        %v7629 = vadd.f32 0.0, %v7628
        %7630 = vmatmul.f32.gmra.mxu0 %v7293
        %v7631 = vpop.f32.mrf.mxu0
        %v7632 = vadd.f32 0.0, %v7631
        %7633 = vmatmul.f32.gmra.mxu0 %v7296
        %v7634 = vpop.f32.mrf.mxu0
        %v7635 = vadd.f32 0.0, %v7634
        %7636 = vmatmul.f32.gmra.mxu0 %v7299
        %v7637 = vpop.f32.mrf.mxu0
        %v7638 = vadd.f32 0.0, %v7637
        %7639 = vmatmul.f32.gmra.mxu0 %v7302
        %v7640 = vpop.f32.mrf.mxu0
        %v7641 = vadd.f32 0.0, %v7640
        %7642 = vmatmul.f32.gmra.mxu0 %v7305
        %v7643 = vpop.f32.mrf.mxu0
        %v7644 = vadd.f32 0.0, %v7643
        %7645 = vmatmul.f32.gmra.mxu0 %v7308
        %v7646 = vpop.f32.mrf.mxu0
        %v7647 = vadd.f32 0.0, %v7646
        %7648 = vmatmul.f32.gmra.mxu0 %v7311
        %v7649 = vpop.f32.mrf.mxu0
        %v7650 = vadd.f32 0.0, %v7649
        %7651 = vmatmul.f32.gmra.mxu0 %v7314
        %v7652 = vpop.f32.mrf.mxu0
        %v7653 = vadd.f32 0.0, %v7652
        %7654 = vmatmul.f32.gmra.mxu0 %v7317
        %v7655 = vpop.f32.mrf.mxu0
        %v7656 = vadd.f32 0.0, %v7655
        %7657 = vmatmul.f32.gmra.mxu0 %v7320
        %v7658 = vpop.f32.mrf.mxu0
        %v7659 = vadd.f32 0.0, %v7658
        %7660 = vmatmul.f32.gmra.mxu0 %v7323
        %v7661 = vpop.f32.mrf.mxu0
        %v7662 = vadd.f32 0.0, %v7661
        %7663 = vmatmul.f32.gmra.mxu0 %v7326
        %v7664 = vpop.f32.mrf.mxu0
        %v7665 = vadd.f32 0.0, %v7664
        %7666 = vdwg.mxu0
        %7667 = vmatpush.xpose.msra.mxu0 %v7439
        %7668 = vmatpush.xpose.msra.mxu0 %v7436
        %7669 = vmatpush.xpose.msra.mxu0 %v7433
        %7670 = vmatpush.xpose.msra.mxu0 %v7430
        %7671 = vmatpush.xpose.msra.mxu0 %v7427
        %7672 = vmatpush.xpose.msra.mxu0 %v7424
        %7673 = vmatpush.xpose.msra.mxu0 %v7421
        %7674 = vmatpush.xpose.msra.mxu0 %v7418
        %7675 = vmatpush.xpose.msra.mxu0 %v7415
        %7676 = vmatpush.xpose.msra.mxu0 %v7412
        %7677 = vmatpush.xpose.msra.mxu0 %v7409
        %7678 = vmatpush.xpose.msra.mxu0 %v7406
        %7679 = vmatpush.xpose.msra.mxu0 %v7403
        %7680 = vmatpush.xpose.msra.mxu0 %v7400
        %7681 = vmatpush.xpose.msra.mxu0 %v7397
        %7682 = vmatpush.xpose.msra.mxu0 %v7394
        %7683 = vmatmul.f32.gmra.mxu0 %v7233
        %v7684 = vpop.f32.mrf.mxu0
        %v7685 = vadd.f32 0.0, %v7684
        %7686 = vmatmul.f32.gmra.mxu0 %v7236
        %v7687 = vpop.f32.mrf.mxu0
        %v7688 = vadd.f32 0.0, %v7687
        %7689 = vmatmul.f32.gmra.mxu0 %v7239
        %v7690 = vpop.f32.mrf.mxu0
        %v7691 = vadd.f32 0.0, %v7690
        %7692 = vmatmul.f32.gmra.mxu0 %v7242
        %v7693 = vpop.f32.mrf.mxu0
        %v7694 = vadd.f32 0.0, %v7693
        %7695 = vmatmul.f32.gmra.mxu0 %v7245
        %v7696 = vpop.f32.mrf.mxu0
        %v7697 = vadd.f32 0.0, %v7696
        %7698 = vmatmul.f32.gmra.mxu0 %v7248
        %v7699 = vpop.f32.mrf.mxu0
        %v7700 = vadd.f32 0.0, %v7699
        %7701 = vmatmul.f32.gmra.mxu0 %v7251
        %v7702 = vpop.f32.mrf.mxu0
        %v7703 = vadd.f32 0.0, %v7702
        %7704 = vmatmul.f32.gmra.mxu0 %v7254
        %v7705 = vpop.f32.mrf.mxu0
        %v7706 = vadd.f32 0.0, %v7705
        %7707 = vmatmul.f32.gmra.mxu0 %v7257
        %v7708 = vpop.f32.mrf.mxu0
        %v7709 = vadd.f32 0.0, %v7708
        %7710 = vmatmul.f32.gmra.mxu0 %v7260
        %v7711 = vpop.f32.mrf.mxu0
        %v7712 = vadd.f32 0.0, %v7711
        %7713 = vmatmul.f32.gmra.mxu0 %v7263
        %v7714 = vpop.f32.mrf.mxu0
        %v7715 = vadd.f32 0.0, %v7714
        %7716 = vmatmul.f32.gmra.mxu0 %v7266
        %v7717 = vpop.f32.mrf.mxu0
        %v7718 = vadd.f32 0.0, %v7717
        %7719 = vmatmul.f32.gmra.mxu0 %v7269
        %v7720 = vpop.f32.mrf.mxu0
        %v7721 = vadd.f32 0.0, %v7720
        %7722 = vmatmul.f32.gmra.mxu0 %v7272
        %v7723 = vpop.f32.mrf.mxu0
        %v7724 = vadd.f32 0.0, %v7723
        %7725 = vmatmul.f32.gmra.mxu0 %v7275
        %v7726 = vpop.f32.mrf.mxu0
        %v7727 = vadd.f32 0.0, %v7726
        %7728 = vmatmul.f32.gmra.mxu0 %v7278
        %v7729 = vpop.f32.mrf.mxu0
        %v7730 = vadd.f32 0.0, %v7729
        %7731 = vmatmul.f32.gmra.mxu0 %v7281
        %v7732 = vpop.f32.mrf.mxu0
        %v7733 = vadd.f32 0.0, %v7732
        %7734 = vmatmul.f32.gmra.mxu0 %v7284
        %v7735 = vpop.f32.mrf.mxu0
        %v7736 = vadd.f32 0.0, %v7735
        %7737 = vmatmul.f32.gmra.mxu0 %v7287
        %v7738 = vpop.f32.mrf.mxu0
        %v7739 = vadd.f32 0.0, %v7738
        %7740 = vmatmul.f32.gmra.mxu0 %v7290
        %v7741 = vpop.f32.mrf.mxu0
        %v7742 = vadd.f32 0.0, %v7741
        %7743 = vmatmul.f32.gmra.mxu0 %v7293
        %v7744 = vpop.f32.mrf.mxu0
        %v7745 = vadd.f32 0.0, %v7744
        %7746 = vmatmul.f32.gmra.mxu0 %v7296
        %v7747 = vpop.f32.mrf.mxu0
        %v7748 = vadd.f32 0.0, %v7747
        %7749 = vmatmul.f32.gmra.mxu0 %v7299
        %v7750 = vpop.f32.mrf.mxu0
        %v7751 = vadd.f32 0.0, %v7750
        %7752 = vmatmul.f32.gmra.mxu0 %v7302
        %v7753 = vpop.f32.mrf.mxu0
        %v7754 = vadd.f32 0.0, %v7753
        %7755 = vmatmul.f32.gmra.mxu0 %v7305
        %v7756 = vpop.f32.mrf.mxu0
        %v7757 = vadd.f32 0.0, %v7756
        %7758 = vmatmul.f32.gmra.mxu0 %v7308
        %v7759 = vpop.f32.mrf.mxu0
        %v7760 = vadd.f32 0.0, %v7759
        %7761 = vmatmul.f32.gmra.mxu0 %v7311
        %v7762 = vpop.f32.mrf.mxu0
        %v7763 = vadd.f32 0.0, %v7762
        %7764 = vmatmul.f32.gmra.mxu0 %v7314
        %v7765 = vpop.f32.mrf.mxu0
        %v7766 = vadd.f32 0.0, %v7765
        %7767 = vmatmul.f32.gmra.mxu0 %v7317
        %v7768 = vpop.f32.mrf.mxu0
        %v7769 = vadd.f32 0.0, %v7768
        %7770 = vmatmul.f32.gmra.mxu0 %v7320
        %v7771 = vpop.f32.mrf.mxu0
        %v7772 = vadd.f32 0.0, %v7771
        %7773 = vmatmul.f32.gmra.mxu0 %v7323
        %v7774 = vpop.f32.mrf.mxu0
        %v7775 = vadd.f32 0.0, %v7774
        %7776 = vmatmul.f32.gmra.mxu0 %v7326
        %v7777 = vpop.f32.mrf.mxu0
        %v7778 = vadd.f32 0.0, %v7777
        %7779 = vdwg.mxu0
        %v7780 = vmul.f32 %v7572, 0.125
        %v7781 = vmul.f32 %v7685, 0.125
        %v7782 = vmul.f32 %v7575, 0.125
        %v7783 = vmul.f32 %v7688, 0.125
        %v7784 = vmul.f32 %v7578, 0.125
        %v7785 = vmul.f32 %v7691, 0.125
        %v7786 = vmul.f32 %v7581, 0.125
        %v7787 = vmul.f32 %v7694, 0.125
        %v7788 = vmul.f32 %v7584, 0.125
        %v7789 = vmul.f32 %v7697, 0.125
        %v7790 = vmul.f32 %v7587, 0.125
        %v7791 = vmul.f32 %v7700, 0.125
        %v7792 = vmul.f32 %v7590, 0.125
        %v7793 = vmul.f32 %v7703, 0.125
        %v7794 = vmul.f32 %v7593, 0.125
        %v7795 = vmul.f32 %v7706, 0.125
        %v7796 = vmul.f32 %v7596, 0.125
        %v7797 = vmul.f32 %v7709, 0.125
        %v7798 = vmul.f32 %v7599, 0.125
        %v7799 = vmul.f32 %v7712, 0.125
        %v7800 = vmul.f32 %v7602, 0.125
        %v7801 = vmul.f32 %v7715, 0.125
        %v7802 = vmul.f32 %v7605, 0.125
        %v7803 = vmul.f32 %v7718, 0.125
        %v7804 = vmul.f32 %v7608, 0.125
        %v7805 = vmul.f32 %v7721, 0.125
        %v7806 = vmul.f32 %v7611, 0.125
        %v7807 = vmul.f32 %v7724, 0.125
        %v7808 = vmul.f32 %v7614, 0.125
        %v7809 = vmul.f32 %v7727, 0.125
        %v7810 = vmul.f32 %v7617, 0.125
        %v7811 = vmul.f32 %v7730, 0.125
        %v7812 = vmul.f32 %v7620, 0.125
        %v7813 = vmul.f32 %v7733, 0.125
        %v7814 = vmul.f32 %v7623, 0.125
        %v7815 = vmul.f32 %v7736, 0.125
        %v7816 = vmul.f32 %v7626, 0.125
        %v7817 = vmul.f32 %v7739, 0.125
        %v7818 = vmul.f32 %v7629, 0.125
        %v7819 = vmul.f32 %v7742, 0.125
        %v7820 = vmul.f32 %v7632, 0.125
        %v7821 = vmul.f32 %v7745, 0.125
        %v7822 = vmul.f32 %v7635, 0.125
        %v7823 = vmul.f32 %v7748, 0.125
        %v7824 = vmul.f32 %v7638, 0.125
        %v7825 = vmul.f32 %v7751, 0.125
        %v7826 = vmul.f32 %v7641, 0.125
        %v7827 = vmul.f32 %v7754, 0.125
        %v7828 = vmul.f32 %v7644, 0.125
        %v7829 = vmul.f32 %v7757, 0.125
        %v7830 = vmul.f32 %v7647, 0.125
        %v7831 = vmul.f32 %v7760, 0.125
        %v7832 = vmul.f32 %v7650, 0.125
        %v7833 = vmul.f32 %v7763, 0.125
        %v7834 = vmul.f32 %v7653, 0.125
        %v7835 = vmul.f32 %v7766, 0.125
        %v7836 = vmul.f32 %v7656, 0.125
        %v7837 = vmul.f32 %v7769, 0.125
        %v7838 = vmul.f32 %v7659, 0.125
        %v7839 = vmul.f32 %v7772, 0.125
        %v7840 = vmul.f32 %v7662, 0.125
        %v7841 = vmul.f32 %v7775, 0.125
        %v7842 = vmul.f32 %v7665, 0.125
        %v7843 = vmul.f32 %v7778, 0.125
        %v7844 = vmax.f32 %v7780, %v7781
        %7845 = vmax.xlane.f32.xlu0 %v7844
        %v7846 = vpop.xlane.xlu0 %7845
        %v7847 = vmax.f32 %v7782, %v7783
        %7848 = vmax.xlane.f32.xlu0 %v7847
        %v7849 = vpop.xlane.xlu0 %7848
        %v7850 = vmax.f32 %v7784, %v7785
        %7851 = vmax.xlane.f32.xlu0 %v7850
        %v7852 = vpop.xlane.xlu0 %7851
        %v7853 = vmax.f32 %v7786, %v7787
        %7854 = vmax.xlane.f32.xlu0 %v7853
        %v7855 = vpop.xlane.xlu0 %7854
        %v7856 = vmax.f32 %v7788, %v7789
        %7857 = vmax.xlane.f32.xlu0 %v7856
        %v7858 = vpop.xlane.xlu0 %7857
        %v7859 = vmax.f32 %v7790, %v7791
        %7860 = vmax.xlane.f32.xlu0 %v7859
        %v7861 = vpop.xlane.xlu0 %7860
        %v7862 = vmax.f32 %v7792, %v7793
        %7863 = vmax.xlane.f32.xlu0 %v7862
        %v7864 = vpop.xlane.xlu0 %7863
        %v7865 = vmax.f32 %v7794, %v7795
        %7866 = vmax.xlane.f32.xlu0 %v7865
        %v7867 = vpop.xlane.xlu0 %7866
        %v7868 = vmax.f32 %v7796, %v7797
        %7869 = vmax.xlane.f32.xlu0 %v7868
        %v7870 = vpop.xlane.xlu0 %7869
        %v7871 = vmax.f32 %v7798, %v7799
        %7872 = vmax.xlane.f32.xlu0 %v7871
        %v7873 = vpop.xlane.xlu0 %7872
        %v7874 = vmax.f32 %v7800, %v7801
        %7875 = vmax.xlane.f32.xlu0 %v7874
        %v7876 = vpop.xlane.xlu0 %7875
        %v7877 = vmax.f32 %v7802, %v7803
        %7878 = vmax.xlane.f32.xlu0 %v7877
        %v7879 = vpop.xlane.xlu0 %7878
        %v7880 = vmax.f32 %v7804, %v7805
        %7881 = vmax.xlane.f32.xlu0 %v7880
        %v7882 = vpop.xlane.xlu0 %7881
        %v7883 = vmax.f32 %v7806, %v7807
        %7884 = vmax.xlane.f32.xlu0 %v7883
        %v7885 = vpop.xlane.xlu0 %7884
        %v7886 = vmax.f32 %v7808, %v7809
        %7887 = vmax.xlane.f32.xlu0 %v7886
        %v7888 = vpop.xlane.xlu0 %7887
        %v7889 = vmax.f32 %v7810, %v7811
        %7890 = vmax.xlane.f32.xlu0 %v7889
        %v7891 = vpop.xlane.xlu0 %7890
        %v7892 = vmax.f32 %v7812, %v7813
        %7893 = vmax.xlane.f32.xlu0 %v7892
        %v7894 = vpop.xlane.xlu0 %7893
        %v7895 = vmax.f32 %v7814, %v7815
        %7896 = vmax.xlane.f32.xlu0 %v7895
        %v7897 = vpop.xlane.xlu0 %7896
        %v7898 = vmax.f32 %v7816, %v7817
        %7899 = vmax.xlane.f32.xlu0 %v7898
        %v7900 = vpop.xlane.xlu0 %7899
        %v7901 = vmax.f32 %v7818, %v7819
        %7902 = vmax.xlane.f32.xlu0 %v7901
        %v7903 = vpop.xlane.xlu0 %7902
        %v7904 = vmax.f32 %v7820, %v7821
        %7905 = vmax.xlane.f32.xlu0 %v7904
        %v7906 = vpop.xlane.xlu0 %7905
        %v7907 = vmax.f32 %v7822, %v7823
        %7908 = vmax.xlane.f32.xlu0 %v7907
        %v7909 = vpop.xlane.xlu0 %7908
        %v7910 = vmax.f32 %v7824, %v7825
        %7911 = vmax.xlane.f32.xlu0 %v7910
        %v7912 = vpop.xlane.xlu0 %7911
        %v7913 = vmax.f32 %v7826, %v7827
        %7914 = vmax.xlane.f32.xlu0 %v7913
        %v7915 = vpop.xlane.xlu0 %7914
        %v7916 = vmax.f32 %v7828, %v7829
        %7917 = vmax.xlane.f32.xlu0 %v7916
        %v7918 = vpop.xlane.xlu0 %7917
        %v7919 = vmax.f32 %v7830, %v7831
        %7920 = vmax.xlane.f32.xlu0 %v7919
        %v7921 = vpop.xlane.xlu0 %7920
        %v7922 = vmax.f32 %v7832, %v7833
        %7923 = vmax.xlane.f32.xlu0 %v7922
        %v7924 = vpop.xlane.xlu0 %7923
        %v7925 = vmax.f32 %v7834, %v7835
        %7926 = vmax.xlane.f32.xlu0 %v7925
        %v7927 = vpop.xlane.xlu0 %7926
        %v7928 = vmax.f32 %v7836, %v7837
        %7929 = vmax.xlane.f32.xlu0 %v7928
        %v7930 = vpop.xlane.xlu0 %7929
        %v7931 = vmax.f32 %v7838, %v7839
        %7932 = vmax.xlane.f32.xlu0 %v7931
        %v7933 = vpop.xlane.xlu0 %7932
        %v7934 = vmax.f32 %v7840, %v7841
        %7935 = vmax.xlane.f32.xlu0 %v7934
        %v7936 = vpop.xlane.xlu0 %7935
        %v7937 = vmax.f32 %v7842, %v7843
        %7938 = vmax.xlane.f32.xlu0 %v7937
        %v7939 = vpop.xlane.xlu0 %7938
        %v7940 = vsub.f32 %v7780, %v7846
        %v7941 = vsub.f32 %v7781, %v7846
        %v7942 = vsub.f32 %v7782, %v7849
        %v7943 = vsub.f32 %v7783, %v7849
        %v7944 = vsub.f32 %v7784, %v7852
        %v7945 = vsub.f32 %v7785, %v7852
        %v7946 = vsub.f32 %v7786, %v7855
        %v7947 = vsub.f32 %v7787, %v7855
        %v7948 = vsub.f32 %v7788, %v7858
        %v7949 = vsub.f32 %v7789, %v7858
        %v7950 = vsub.f32 %v7790, %v7861
        %v7951 = vsub.f32 %v7791, %v7861
        %v7952 = vsub.f32 %v7792, %v7864
        %v7953 = vsub.f32 %v7793, %v7864
        %v7954 = vsub.f32 %v7794, %v7867
        %v7955 = vsub.f32 %v7795, %v7867
        %v7956 = vsub.f32 %v7796, %v7870
        %v7957 = vsub.f32 %v7797, %v7870
        %v7958 = vsub.f32 %v7798, %v7873
        %v7959 = vsub.f32 %v7799, %v7873
        %v7960 = vsub.f32 %v7800, %v7876
        %v7961 = vsub.f32 %v7801, %v7876
        %v7962 = vsub.f32 %v7802, %v7879
        %v7963 = vsub.f32 %v7803, %v7879
        %v7964 = vsub.f32 %v7804, %v7882
        %v7965 = vsub.f32 %v7805, %v7882
        %v7966 = vsub.f32 %v7806, %v7885
        %v7967 = vsub.f32 %v7807, %v7885
        %v7968 = vsub.f32 %v7808, %v7888
        %v7969 = vsub.f32 %v7809, %v7888
        %v7970 = vsub.f32 %v7810, %v7891
        %v7971 = vsub.f32 %v7811, %v7891
        %v7972 = vsub.f32 %v7812, %v7894
        %v7973 = vsub.f32 %v7813, %v7894
        %v7974 = vsub.f32 %v7814, %v7897
        %v7975 = vsub.f32 %v7815, %v7897
        %v7976 = vsub.f32 %v7816, %v7900
        %v7977 = vsub.f32 %v7817, %v7900
        %v7978 = vsub.f32 %v7818, %v7903
        %v7979 = vsub.f32 %v7819, %v7903
        %v7980 = vsub.f32 %v7820, %v7906
        %v7981 = vsub.f32 %v7821, %v7906
        %v7982 = vsub.f32 %v7822, %v7909
        %v7983 = vsub.f32 %v7823, %v7909
        %v7984 = vsub.f32 %v7824, %v7912
        %v7985 = vsub.f32 %v7825, %v7912
        %v7986 = vsub.f32 %v7826, %v7915
        %v7987 = vsub.f32 %v7827, %v7915
        %v7988 = vsub.f32 %v7828, %v7918
        %v7989 = vsub.f32 %v7829, %v7918
        %v7990 = vsub.f32 %v7830, %v7921
        %v7991 = vsub.f32 %v7831, %v7921
        %v7992 = vsub.f32 %v7832, %v7924
        %v7993 = vsub.f32 %v7833, %v7924
        %v7994 = vsub.f32 %v7834, %v7927
        %v7995 = vsub.f32 %v7835, %v7927
        %v7996 = vsub.f32 %v7836, %v7930
        %v7997 = vsub.f32 %v7837, %v7930
        %v7998 = vsub.f32 %v7838, %v7933
        %v7999 = vsub.f32 %v7839, %v7933
        %v8000 = vsub.f32 %v7840, %v7936
        %v8001 = vsub.f32 %v7841, %v7936
        %v8002 = vsub.f32 %v7842, %v7939
        %v8003 = vsub.f32 %v7843, %v7939
        %v8004 = vmul.f32 %v7940, 1.442695
        %v8005 = vpow.pop %v8004
        %v8006 = vmul.f32 %v7941, 1.442695
        %v8007 = vpow.pop %v8006
        %v8008 = vmul.f32 %v7942, 1.442695
        %v8009 = vpow.pop %v8008
        %v8010 = vmul.f32 %v7943, 1.442695
        %v8011 = vpow.pop %v8010
        %v8012 = vmul.f32 %v7944, 1.442695
        %v8013 = vpow.pop %v8012
        %v8014 = vmul.f32 %v7945, 1.442695
        %v8015 = vpow.pop %v8014
        %v8016 = vmul.f32 %v7946, 1.442695
        %v8017 = vpow.pop %v8016
        %v8018 = vmul.f32 %v7947, 1.442695
        %v8019 = vpow.pop %v8018
        %v8020 = vmul.f32 %v7948, 1.442695
        %v8021 = vpow.pop %v8020
        %v8022 = vmul.f32 %v7949, 1.442695
        %v8023 = vpow.pop %v8022
        %v8024 = vmul.f32 %v7950, 1.442695
        %v8025 = vpow.pop %v8024
        %v8026 = vmul.f32 %v7951, 1.442695
        %v8027 = vpow.pop %v8026
        %v8028 = vmul.f32 %v7952, 1.442695
        %v8029 = vpow.pop %v8028
        %v8030 = vmul.f32 %v7953, 1.442695
        %v8031 = vpow.pop %v8030
        %v8032 = vmul.f32 %v7954, 1.442695
        %v8033 = vpow.pop %v8032
        %v8034 = vmul.f32 %v7955, 1.442695
        %v8035 = vpow.pop %v8034
        %v8036 = vmul.f32 %v7956, 1.442695
        %v8037 = vpow.pop %v8036
        %v8038 = vmul.f32 %v7957, 1.442695
        %v8039 = vpow.pop %v8038
        %v8040 = vmul.f32 %v7958, 1.442695
        %v8041 = vpow.pop %v8040
        %v8042 = vmul.f32 %v7959, 1.442695
        %v8043 = vpow.pop %v8042
        %v8044 = vmul.f32 %v7960, 1.442695
        %v8045 = vpow.pop %v8044
        %v8046 = vmul.f32 %v7961, 1.442695
        %v8047 = vpow.pop %v8046
        %v8048 = vmul.f32 %v7962, 1.442695
        %v8049 = vpow.pop %v8048
        %v8050 = vmul.f32 %v7963, 1.442695
        %v8051 = vpow.pop %v8050
        %v8052 = vmul.f32 %v7964, 1.442695
        %v8053 = vpow.pop %v8052
        %v8054 = vmul.f32 %v7965, 1.442695
        %v8055 = vpow.pop %v8054
        %v8056 = vmul.f32 %v7966, 1.442695
        %v8057 = vpow.pop %v8056
        %v8058 = vmul.f32 %v7967, 1.442695
        %v8059 = vpow.pop %v8058
        %v8060 = vmul.f32 %v7968, 1.442695
        %v8061 = vpow.pop %v8060
        %v8062 = vmul.f32 %v7969, 1.442695
        %v8063 = vpow.pop %v8062
        %v8064 = vmul.f32 %v7970, 1.442695
        %v8065 = vpow.pop %v8064
        %v8066 = vmul.f32 %v7971, 1.442695
        %v8067 = vpow.pop %v8066
        %v8068 = vmul.f32 %v7972, 1.442695
        %v8069 = vpow.pop %v8068
        %v8070 = vmul.f32 %v7973, 1.442695
        %v8071 = vpow.pop %v8070
        %v8072 = vmul.f32 %v7974, 1.442695
        %v8073 = vpow.pop %v8072
        %v8074 = vmul.f32 %v7975, 1.442695
        %v8075 = vpow.pop %v8074
        %v8076 = vmul.f32 %v7976, 1.442695
        %v8077 = vpow.pop %v8076
        %v8078 = vmul.f32 %v7977, 1.442695
        %v8079 = vpow.pop %v8078
        %v8080 = vmul.f32 %v7978, 1.442695
        %v8081 = vpow.pop %v8080
        %v8082 = vmul.f32 %v7979, 1.442695
        %v8083 = vpow.pop %v8082
        %v8084 = vmul.f32 %v7980, 1.442695
        %v8085 = vpow.pop %v8084
        %v8086 = vmul.f32 %v7981, 1.442695
        %v8087 = vpow.pop %v8086
        %v8088 = vmul.f32 %v7982, 1.442695
        %v8089 = vpow.pop %v8088
        %v8090 = vmul.f32 %v7983, 1.442695
        %v8091 = vpow.pop %v8090
        %v8092 = vmul.f32 %v7984, 1.442695
        %v8093 = vpow.pop %v8092
        %v8094 = vmul.f32 %v7985, 1.442695
        %v8095 = vpow.pop %v8094
        %v8096 = vmul.f32 %v7986, 1.442695
        %v8097 = vpow.pop %v8096
        %v8098 = vmul.f32 %v7987, 1.442695
        %v8099 = vpow.pop %v8098
        %v8100 = vmul.f32 %v7988, 1.442695
        %v8101 = vpow.pop %v8100
        %v8102 = vmul.f32 %v7989, 1.442695
        %v8103 = vpow.pop %v8102
        %v8104 = vmul.f32 %v7990, 1.442695
        %v8105 = vpow.pop %v8104
        %v8106 = vmul.f32 %v7991, 1.442695
        %v8107 = vpow.pop %v8106
        %v8108 = vmul.f32 %v7992, 1.442695
        %v8109 = vpow.pop %v8108
        %v8110 = vmul.f32 %v7993, 1.442695
        %v8111 = vpow.pop %v8110
        %v8112 = vmul.f32 %v7994, 1.442695
        %v8113 = vpow.pop %v8112
        %v8114 = vmul.f32 %v7995, 1.442695
        %v8115 = vpow.pop %v8114
        %v8116 = vmul.f32 %v7996, 1.442695
        %v8117 = vpow.pop %v8116
        %v8118 = vmul.f32 %v7997, 1.442695
        %v8119 = vpow.pop %v8118
        %v8120 = vmul.f32 %v7998, 1.442695
        %v8121 = vpow.pop %v8120
        %v8122 = vmul.f32 %v7999, 1.442695
        %v8123 = vpow.pop %v8122
        %v8124 = vmul.f32 %v8000, 1.442695
        %v8125 = vpow.pop %v8124
        %v8126 = vmul.f32 %v8001, 1.442695
        %v8127 = vpow.pop %v8126
        %v8128 = vmul.f32 %v8002, 1.442695
        %v8129 = vpow.pop %v8128
        %v8130 = vmul.f32 %v8003, 1.442695
        %v8131 = vpow.pop %v8130
        %v8132 = vadd.f32 %v8005, %v8007
        %8133 = vadd.xlane.f32.xlu0 %v8132
        %v8134 = vpop.xlane.xlu0 %8133
        %v8135 = vadd.f32 %v8009, %v8011
        %8136 = vadd.xlane.f32.xlu0 %v8135
        %v8137 = vpop.xlane.xlu0 %8136
        %v8138 = vadd.f32 %v8013, %v8015
        %8139 = vadd.xlane.f32.xlu0 %v8138
        %v8140 = vpop.xlane.xlu0 %8139
        %v8141 = vadd.f32 %v8017, %v8019
        %8142 = vadd.xlane.f32.xlu0 %v8141
        %v8143 = vpop.xlane.xlu0 %8142
        %v8144 = vadd.f32 %v8021, %v8023
        %8145 = vadd.xlane.f32.xlu0 %v8144
        %v8146 = vpop.xlane.xlu0 %8145
        %v8147 = vadd.f32 %v8025, %v8027
        %8148 = vadd.xlane.f32.xlu0 %v8147
        %v8149 = vpop.xlane.xlu0 %8148
        %v8150 = vadd.f32 %v8029, %v8031
        %8151 = vadd.xlane.f32.xlu0 %v8150
        %v8152 = vpop.xlane.xlu0 %8151
        %v8153 = vadd.f32 %v8033, %v8035
        %8154 = vadd.xlane.f32.xlu0 %v8153
        %v8155 = vpop.xlane.xlu0 %8154
        %v8156 = vadd.f32 %v8037, %v8039
        %8157 = vadd.xlane.f32.xlu0 %v8156
        %v8158 = vpop.xlane.xlu0 %8157
        %v8159 = vadd.f32 %v8041, %v8043
        %8160 = vadd.xlane.f32.xlu0 %v8159
        %v8161 = vpop.xlane.xlu0 %8160
        %v8162 = vadd.f32 %v8045, %v8047
        %8163 = vadd.xlane.f32.xlu0 %v8162
        %v8164 = vpop.xlane.xlu0 %8163
        %v8165 = vadd.f32 %v8049, %v8051
        %8166 = vadd.xlane.f32.xlu0 %v8165
        %v8167 = vpop.xlane.xlu0 %8166
        %v8168 = vadd.f32 %v8053, %v8055
        %8169 = vadd.xlane.f32.xlu0 %v8168
        %v8170 = vpop.xlane.xlu0 %8169
        %v8171 = vadd.f32 %v8057, %v8059
        %8172 = vadd.xlane.f32.xlu0 %v8171
        %v8173 = vpop.xlane.xlu0 %8172
        %v8174 = vadd.f32 %v8061, %v8063
        %8175 = vadd.xlane.f32.xlu0 %v8174
        %v8176 = vpop.xlane.xlu0 %8175
        %v8177 = vadd.f32 %v8065, %v8067
        %8178 = vadd.xlane.f32.xlu0 %v8177
        %v8179 = vpop.xlane.xlu0 %8178
        %v8180 = vadd.f32 %v8069, %v8071
        %8181 = vadd.xlane.f32.xlu0 %v8180
        %v8182 = vpop.xlane.xlu0 %8181
        %v8183 = vadd.f32 %v8073, %v8075
        %8184 = vadd.xlane.f32.xlu0 %v8183
        %v8185 = vpop.xlane.xlu0 %8184
        %v8186 = vadd.f32 %v8077, %v8079
        %8187 = vadd.xlane.f32.xlu0 %v8186
        %v8188 = vpop.xlane.xlu0 %8187
        %v8189 = vadd.f32 %v8081, %v8083
        %8190 = vadd.xlane.f32.xlu0 %v8189
        %v8191 = vpop.xlane.xlu0 %8190
        %v8192 = vadd.f32 %v8085, %v8087
        %8193 = vadd.xlane.f32.xlu0 %v8192
        %v8194 = vpop.xlane.xlu0 %8193
        %v8195 = vadd.f32 %v8089, %v8091
        %8196 = vadd.xlane.f32.xlu0 %v8195
        %v8197 = vpop.xlane.xlu0 %8196
        %v8198 = vadd.f32 %v8093, %v8095
        %8199 = vadd.xlane.f32.xlu0 %v8198
        %v8200 = vpop.xlane.xlu0 %8199
        %v8201 = vadd.f32 %v8097, %v8099
        %8202 = vadd.xlane.f32.xlu0 %v8201
        %v8203 = vpop.xlane.xlu0 %8202
        %v8204 = vadd.f32 %v8101, %v8103
        %8205 = vadd.xlane.f32.xlu0 %v8204
        %v8206 = vpop.xlane.xlu0 %8205
        %v8207 = vadd.f32 %v8105, %v8107
        %8208 = vadd.xlane.f32.xlu0 %v8207
        %v8209 = vpop.xlane.xlu0 %8208
        %v8210 = vadd.f32 %v8109, %v8111
        %8211 = vadd.xlane.f32.xlu0 %v8210
        %v8212 = vpop.xlane.xlu0 %8211
        %v8213 = vadd.f32 %v8113, %v8115
        %8214 = vadd.xlane.f32.xlu0 %v8213
        %v8215 = vpop.xlane.xlu0 %8214
        %v8216 = vadd.f32 %v8117, %v8119
        %8217 = vadd.xlane.f32.xlu0 %v8216
        %v8218 = vpop.xlane.xlu0 %8217
        %v8219 = vadd.f32 %v8121, %v8123
        %8220 = vadd.xlane.f32.xlu0 %v8219
        %v8221 = vpop.xlane.xlu0 %8220
        %v8222 = vadd.f32 %v8125, %v8127
        %8223 = vadd.xlane.f32.xlu0 %v8222
        %v8224 = vpop.xlane.xlu0 %8223
        %v8225 = vadd.f32 %v8129, %v8131
        %8226 = vadd.xlane.f32.xlu0 %v8225
        %v8227 = vpop.xlane.xlu0 %8226
        %v8228 = vrcp.pop %v8134
        %v8229 = vrcp.pop %v8137
        %v8230 = vrcp.pop %v8140
        %v8231 = vrcp.pop %v8143
        %v8232 = vrcp.pop %v8146
        %v8233 = vrcp.pop %v8149
        %v8234 = vrcp.pop %v8152
        %v8235 = vrcp.pop %v8155
        %v8236 = vrcp.pop %v8158
        %v8237 = vrcp.pop %v8161
        %v8238 = vrcp.pop %v8164
        %v8239 = vrcp.pop %v8167
        %v8240 = vrcp.pop %v8170
        %v8241 = vrcp.pop %v8173
        %v8242 = vrcp.pop %v8176
        %v8243 = vrcp.pop %v8179
        %v8244 = vrcp.pop %v8182
        %v8245 = vrcp.pop %v8185
        %v8246 = vrcp.pop %v8188
        %v8247 = vrcp.pop %v8191
        %v8248 = vrcp.pop %v8194
        %v8249 = vrcp.pop %v8197
        %v8250 = vrcp.pop %v8200
        %v8251 = vrcp.pop %v8203
        %v8252 = vrcp.pop %v8206
        %v8253 = vrcp.pop %v8209
        %v8254 = vrcp.pop %v8212
        %v8255 = vrcp.pop %v8215
        %v8256 = vrcp.pop %v8218
        %v8257 = vrcp.pop %v8221
        %v8258 = vrcp.pop %v8224
        %v8259 = vrcp.pop %v8227
        %v8260 = vmul.f32 %v8005, %v8228
        %v8261 = vmul.f32 %v8007, %v8228
        %v8262 = vmul.f32 %v8009, %v8229
        %v8263 = vmul.f32 %v8011, %v8229
        %v8264 = vmul.f32 %v8013, %v8230
        %v8265 = vmul.f32 %v8015, %v8230
        %v8266 = vmul.f32 %v8017, %v8231
        %v8267 = vmul.f32 %v8019, %v8231
        %v8268 = vmul.f32 %v8021, %v8232
        %v8269 = vmul.f32 %v8023, %v8232
        %v8270 = vmul.f32 %v8025, %v8233
        %v8271 = vmul.f32 %v8027, %v8233
        %v8272 = vmul.f32 %v8029, %v8234
        %v8273 = vmul.f32 %v8031, %v8234
        %v8274 = vmul.f32 %v8033, %v8235
        %v8275 = vmul.f32 %v8035, %v8235
        %v8276 = vmul.f32 %v8037, %v8236
        %v8277 = vmul.f32 %v8039, %v8236
        %v8278 = vmul.f32 %v8041, %v8237
        %v8279 = vmul.f32 %v8043, %v8237
        %v8280 = vmul.f32 %v8045, %v8238
        %v8281 = vmul.f32 %v8047, %v8238
        %v8282 = vmul.f32 %v8049, %v8239
        %v8283 = vmul.f32 %v8051, %v8239
        %v8284 = vmul.f32 %v8053, %v8240
        %v8285 = vmul.f32 %v8055, %v8240
        %v8286 = vmul.f32 %v8057, %v8241
        %v8287 = vmul.f32 %v8059, %v8241
        %v8288 = vmul.f32 %v8061, %v8242
        %v8289 = vmul.f32 %v8063, %v8242
        %v8290 = vmul.f32 %v8065, %v8243
        %v8291 = vmul.f32 %v8067, %v8243
        %v8292 = vmul.f32 %v8069, %v8244
        %v8293 = vmul.f32 %v8071, %v8244
        %v8294 = vmul.f32 %v8073, %v8245
        %v8295 = vmul.f32 %v8075, %v8245
        %v8296 = vmul.f32 %v8077, %v8246
        %v8297 = vmul.f32 %v8079, %v8246
        %v8298 = vmul.f32 %v8081, %v8247
        %v8299 = vmul.f32 %v8083, %v8247
        %v8300 = vmul.f32 %v8085, %v8248
        %v8301 = vmul.f32 %v8087, %v8248
        %v8302 = vmul.f32 %v8089, %v8249
        %v8303 = vmul.f32 %v8091, %v8249
        %v8304 = vmul.f32 %v8093, %v8250
        %v8305 = vmul.f32 %v8095, %v8250
        %v8306 = vmul.f32 %v8097, %v8251
        %v8307 = vmul.f32 %v8099, %v8251
        %v8308 = vmul.f32 %v8101, %v8252
        %v8309 = vmul.f32 %v8103, %v8252
        %v8310 = vmul.f32 %v8105, %v8253
        %v8311 = vmul.f32 %v8107, %v8253
        %v8312 = vmul.f32 %v8109, %v8254
        %v8313 = vmul.f32 %v8111, %v8254
        %v8314 = vmul.f32 %v8113, %v8255
        %v8315 = vmul.f32 %v8115, %v8255
        %v8316 = vmul.f32 %v8117, %v8256
        %v8317 = vmul.f32 %v8119, %v8256
        %v8318 = vmul.f32 %v8121, %v8257
        %v8319 = vmul.f32 %v8123, %v8257
        %v8320 = vmul.f32 %v8125, %v8258
        %v8321 = vmul.f32 %v8127, %v8258
        %v8322 = vmul.f32 %v8129, %v8259
        %v8323 = vmul.f32 %v8131, %v8259
        %8324 = vmatpush.msra.mxu0 %v7504
        %8325 = vmatpush.msra.mxu0 %v7501
        %8326 = vmatpush.msra.mxu0 %v7498
        %8327 = vmatpush.msra.mxu0 %v7495
        %8328 = vmatpush.msra.mxu0 %v7492
        %8329 = vmatpush.msra.mxu0 %v7489
        %8330 = vmatpush.msra.mxu0 %v7486
        %8331 = vmatpush.msra.mxu0 %v7483
        %8332 = vmatpush.msra.mxu0 %v7480
        %8333 = vmatpush.msra.mxu0 %v7477
        %8334 = vmatpush.msra.mxu0 %v7474
        %8335 = vmatpush.msra.mxu0 %v7471
        %8336 = vmatpush.msra.mxu0 %v7468
        %8337 = vmatpush.msra.mxu0 %v7465
        %8338 = vmatpush.msra.mxu0 %v7462
        %8339 = vmatpush.msra.mxu0 %v7459
        %8340 = vmatmul.f32.gmra.mxu0 %v8260
        %v8341 = vpop.f32.mrf.mxu0
        %v8342 = vadd.f32 0.0, %v8341
        %8343 = vmatmul.f32.gmra.mxu0 %v8262
        %v8344 = vpop.f32.mrf.mxu0
        %v8345 = vadd.f32 0.0, %v8344
        %8346 = vmatmul.f32.gmra.mxu0 %v8264
        %v8347 = vpop.f32.mrf.mxu0
        %v8348 = vadd.f32 0.0, %v8347
        %8349 = vmatmul.f32.gmra.mxu0 %v8266
        %v8350 = vpop.f32.mrf.mxu0
        %v8351 = vadd.f32 0.0, %v8350
        %8352 = vmatmul.f32.gmra.mxu0 %v8268
        %v8353 = vpop.f32.mrf.mxu0
        %v8354 = vadd.f32 0.0, %v8353
        %8355 = vmatmul.f32.gmra.mxu0 %v8270
        %v8356 = vpop.f32.mrf.mxu0
        %v8357 = vadd.f32 0.0, %v8356
        %8358 = vmatmul.f32.gmra.mxu0 %v8272
        %v8359 = vpop.f32.mrf.mxu0
        %v8360 = vadd.f32 0.0, %v8359
        %8361 = vmatmul.f32.gmra.mxu0 %v8274
        %v8362 = vpop.f32.mrf.mxu0
        %v8363 = vadd.f32 0.0, %v8362
        %8364 = vmatmul.f32.gmra.mxu0 %v8276
        %v8365 = vpop.f32.mrf.mxu0
        %v8366 = vadd.f32 0.0, %v8365
        %8367 = vmatmul.f32.gmra.mxu0 %v8278
        %v8368 = vpop.f32.mrf.mxu0
        %v8369 = vadd.f32 0.0, %v8368
        %8370 = vmatmul.f32.gmra.mxu0 %v8280
        %v8371 = vpop.f32.mrf.mxu0
        %v8372 = vadd.f32 0.0, %v8371
        %8373 = vmatmul.f32.gmra.mxu0 %v8282
        %v8374 = vpop.f32.mrf.mxu0
        %v8375 = vadd.f32 0.0, %v8374
        %8376 = vmatmul.f32.gmra.mxu0 %v8284
        %v8377 = vpop.f32.mrf.mxu0
        %v8378 = vadd.f32 0.0, %v8377
        %8379 = vmatmul.f32.gmra.mxu0 %v8286
        %v8380 = vpop.f32.mrf.mxu0
        %v8381 = vadd.f32 0.0, %v8380
        %8382 = vmatmul.f32.gmra.mxu0 %v8288
        %v8383 = vpop.f32.mrf.mxu0
        %v8384 = vadd.f32 0.0, %v8383
        %8385 = vmatmul.f32.gmra.mxu0 %v8290
        %v8386 = vpop.f32.mrf.mxu0
        %v8387 = vadd.f32 0.0, %v8386
        %8388 = vmatmul.f32.gmra.mxu0 %v8292
        %v8389 = vpop.f32.mrf.mxu0
        %v8390 = vadd.f32 0.0, %v8389
        %8391 = vmatmul.f32.gmra.mxu0 %v8294
        %v8392 = vpop.f32.mrf.mxu0
        %v8393 = vadd.f32 0.0, %v8392
        %8394 = vmatmul.f32.gmra.mxu0 %v8296
        %v8395 = vpop.f32.mrf.mxu0
        %v8396 = vadd.f32 0.0, %v8395
        %8397 = vmatmul.f32.gmra.mxu0 %v8298
        %v8398 = vpop.f32.mrf.mxu0
        %v8399 = vadd.f32 0.0, %v8398
        %8400 = vmatmul.f32.gmra.mxu0 %v8300
        %v8401 = vpop.f32.mrf.mxu0
        %v8402 = vadd.f32 0.0, %v8401
        %8403 = vmatmul.f32.gmra.mxu0 %v8302
        %v8404 = vpop.f32.mrf.mxu0
        %v8405 = vadd.f32 0.0, %v8404
        %8406 = vmatmul.f32.gmra.mxu0 %v8304
        %v8407 = vpop.f32.mrf.mxu0
        %v8408 = vadd.f32 0.0, %v8407
        %8409 = vmatmul.f32.gmra.mxu0 %v8306
        %v8410 = vpop.f32.mrf.mxu0
        %v8411 = vadd.f32 0.0, %v8410
        %8412 = vmatmul.f32.gmra.mxu0 %v8308
        %v8413 = vpop.f32.mrf.mxu0
        %v8414 = vadd.f32 0.0, %v8413
        %8415 = vmatmul.f32.gmra.mxu0 %v8310
        %v8416 = vpop.f32.mrf.mxu0
        %v8417 = vadd.f32 0.0, %v8416
        %8418 = vmatmul.f32.gmra.mxu0 %v8312
        %v8419 = vpop.f32.mrf.mxu0
        %v8420 = vadd.f32 0.0, %v8419
        %8421 = vmatmul.f32.gmra.mxu0 %v8314
        %v8422 = vpop.f32.mrf.mxu0
        %v8423 = vadd.f32 0.0, %v8422
        %8424 = vmatmul.f32.gmra.mxu0 %v8316
        %v8425 = vpop.f32.mrf.mxu0
        %v8426 = vadd.f32 0.0, %v8425
        %8427 = vmatmul.f32.gmra.mxu0 %v8318
        %v8428 = vpop.f32.mrf.mxu0
        %v8429 = vadd.f32 0.0, %v8428
        %8430 = vmatmul.f32.gmra.mxu0 %v8320
        %v8431 = vpop.f32.mrf.mxu0
        %v8432 = vadd.f32 0.0, %v8431
        %8433 = vmatmul.f32.gmra.mxu0 %v8322
        %v8434 = vpop.f32.mrf.mxu0
        %v8435 = vadd.f32 0.0, %v8434
        %8436 = vdwg.mxu0
        %8437 = vmatpush.msra.mxu0 %v7552
        %8438 = vmatpush.msra.mxu0 %v7549
        %8439 = vmatpush.msra.mxu0 %v7546
        %8440 = vmatpush.msra.mxu0 %v7543
        %8441 = vmatpush.msra.mxu0 %v7540
        %8442 = vmatpush.msra.mxu0 %v7537
        %8443 = vmatpush.msra.mxu0 %v7534
        %8444 = vmatpush.msra.mxu0 %v7531
        %8445 = vmatpush.msra.mxu0 %v7528
        %8446 = vmatpush.msra.mxu0 %v7525
        %8447 = vmatpush.msra.mxu0 %v7522
        %8448 = vmatpush.msra.mxu0 %v7519
        %8449 = vmatpush.msra.mxu0 %v7516
        %8450 = vmatpush.msra.mxu0 %v7513
        %8451 = vmatpush.msra.mxu0 %v7510
        %8452 = vmatpush.msra.mxu0 %v7507
        %8453 = vmatmul.f32.gmra.mxu0 %v8261
        %v8454 = vpop.f32.mrf.mxu0
        %v8455 = vadd.f32 %v8342, %v8454
        %8456 = vmatmul.f32.gmra.mxu0 %v8263
        %v8457 = vpop.f32.mrf.mxu0
        %v8458 = vadd.f32 %v8345, %v8457
        %8459 = vmatmul.f32.gmra.mxu0 %v8265
        %v8460 = vpop.f32.mrf.mxu0
        %v8461 = vadd.f32 %v8348, %v8460
        %8462 = vmatmul.f32.gmra.mxu0 %v8267
        %v8463 = vpop.f32.mrf.mxu0
        %v8464 = vadd.f32 %v8351, %v8463
        %8465 = vmatmul.f32.gmra.mxu0 %v8269
        %v8466 = vpop.f32.mrf.mxu0
        %v8467 = vadd.f32 %v8354, %v8466
        %8468 = vmatmul.f32.gmra.mxu0 %v8271
        %v8469 = vpop.f32.mrf.mxu0
        %v8470 = vadd.f32 %v8357, %v8469
        %8471 = vmatmul.f32.gmra.mxu0 %v8273
        %v8472 = vpop.f32.mrf.mxu0
        %v8473 = vadd.f32 %v8360, %v8472
        %8474 = vmatmul.f32.gmra.mxu0 %v8275
        %v8475 = vpop.f32.mrf.mxu0
        %v8476 = vadd.f32 %v8363, %v8475
        %8477 = vmatmul.f32.gmra.mxu0 %v8277
        %v8478 = vpop.f32.mrf.mxu0
        %v8479 = vadd.f32 %v8366, %v8478
        %8480 = vmatmul.f32.gmra.mxu0 %v8279
        %v8481 = vpop.f32.mrf.mxu0
        %v8482 = vadd.f32 %v8369, %v8481
        %8483 = vmatmul.f32.gmra.mxu0 %v8281
        %v8484 = vpop.f32.mrf.mxu0
        %v8485 = vadd.f32 %v8372, %v8484
        %8486 = vmatmul.f32.gmra.mxu0 %v8283
        %v8487 = vpop.f32.mrf.mxu0
        %v8488 = vadd.f32 %v8375, %v8487
        %8489 = vmatmul.f32.gmra.mxu0 %v8285
        %v8490 = vpop.f32.mrf.mxu0
        %v8491 = vadd.f32 %v8378, %v8490
        %8492 = vmatmul.f32.gmra.mxu0 %v8287
        %v8493 = vpop.f32.mrf.mxu0
        %v8494 = vadd.f32 %v8381, %v8493
        %8495 = vmatmul.f32.gmra.mxu0 %v8289
        %v8496 = vpop.f32.mrf.mxu0
        %v8497 = vadd.f32 %v8384, %v8496
        %8498 = vmatmul.f32.gmra.mxu0 %v8291
        %v8499 = vpop.f32.mrf.mxu0
        %v8500 = vadd.f32 %v8387, %v8499
        %8501 = vmatmul.f32.gmra.mxu0 %v8293
        %v8502 = vpop.f32.mrf.mxu0
        %v8503 = vadd.f32 %v8390, %v8502
        %8504 = vmatmul.f32.gmra.mxu0 %v8295
        %v8505 = vpop.f32.mrf.mxu0
        %v8506 = vadd.f32 %v8393, %v8505
        %8507 = vmatmul.f32.gmra.mxu0 %v8297
        %v8508 = vpop.f32.mrf.mxu0
        %v8509 = vadd.f32 %v8396, %v8508
        %8510 = vmatmul.f32.gmra.mxu0 %v8299
        %v8511 = vpop.f32.mrf.mxu0
        %v8512 = vadd.f32 %v8399, %v8511
        %8513 = vmatmul.f32.gmra.mxu0 %v8301
        %v8514 = vpop.f32.mrf.mxu0
        %v8515 = vadd.f32 %v8402, %v8514
        %8516 = vmatmul.f32.gmra.mxu0 %v8303
        %v8517 = vpop.f32.mrf.mxu0
        %v8518 = vadd.f32 %v8405, %v8517
        %8519 = vmatmul.f32.gmra.mxu0 %v8305
        %v8520 = vpop.f32.mrf.mxu0
        %v8521 = vadd.f32 %v8408, %v8520
        %8522 = vmatmul.f32.gmra.mxu0 %v8307
        %v8523 = vpop.f32.mrf.mxu0
        %v8524 = vadd.f32 %v8411, %v8523
        %8525 = vmatmul.f32.gmra.mxu0 %v8309
        %v8526 = vpop.f32.mrf.mxu0
        %v8527 = vadd.f32 %v8414, %v8526
        %8528 = vmatmul.f32.gmra.mxu0 %v8311
        %v8529 = vpop.f32.mrf.mxu0
        %v8530 = vadd.f32 %v8417, %v8529
        %8531 = vmatmul.f32.gmra.mxu0 %v8313
        %v8532 = vpop.f32.mrf.mxu0
        %v8533 = vadd.f32 %v8420, %v8532
        %8534 = vmatmul.f32.gmra.mxu0 %v8315
        %v8535 = vpop.f32.mrf.mxu0
        %v8536 = vadd.f32 %v8423, %v8535
        %8537 = vmatmul.f32.gmra.mxu0 %v8317
        %v8538 = vpop.f32.mrf.mxu0
        %v8539 = vadd.f32 %v8426, %v8538
        %8540 = vmatmul.f32.gmra.mxu0 %v8319
        %v8541 = vpop.f32.mrf.mxu0
        %v8542 = vadd.f32 %v8429, %v8541
        %8543 = vmatmul.f32.gmra.mxu0 %v8321
        %v8544 = vpop.f32.mrf.mxu0
        %v8545 = vadd.f32 %v8432, %v8544
        %8546 = vmatmul.f32.gmra.mxu0 %v8323
        %v8547 = vpop.f32.mrf.mxu0
        %v8548 = vadd.f32 %v8435, %v8547
        %8549 = vdwg.mxu0
        %v8550 = vld [vmem:[%s22] sm:$0xff]
        %v8551 = vld [vmem:[%s22 + $0x8] sm:$0xff]
        %v8552 = vld [vmem:[%s22 + $0x10] sm:$0xff]
        %v8553 = vld [vmem:[%s22 + $0x18] sm:$0xff]
        %v8554 = vld [vmem:[%s22 + $0x20] sm:$0xff]
        %v8555 = vld [vmem:[%s22 + $0x28] sm:$0xff]
        %v8556 = vld [vmem:[%s22 + $0x30] sm:$0xff]
        %v8557 = vld [vmem:[%s22 + $0x38] sm:$0xff]
        %v8558 = vld [vmem:[%s22 + $0x40] sm:$0xff]
        %v8559 = vld [vmem:[%s22 + $0x48] sm:$0xff]
        %v8560 = vld [vmem:[%s22 + $0x50] sm:$0xff]
        %v8561 = vld [vmem:[%s22 + $0x58] sm:$0xff]
        %v8562 = vld [vmem:[%s22 + $0x60] sm:$0xff]
        %v8563 = vld [vmem:[%s22 + $0x68] sm:$0xff]
        %v8564 = vld [vmem:[%s22 + $0x70] sm:$0xff]
        %v8565 = vld [vmem:[%s22 + $0x78] sm:$0xff]
        %v8566 = vld [vmem:[%s23] sm:$0x1]
        %v8568 = vperm.slane %v8566, 0
        %8570 = vmatpush.msra.mxu0 %v8565
        %8571 = vmatpush.msra.mxu0 %v8564
        %8572 = vmatpush.msra.mxu0 %v8563
        %8573 = vmatpush.msra.mxu0 %v8562
        %8574 = vmatpush.msra.mxu0 %v8561
        %8575 = vmatpush.msra.mxu0 %v8560
        %8576 = vmatpush.msra.mxu0 %v8559
        %8577 = vmatpush.msra.mxu0 %v8558
        %8578 = vmatpush.msra.mxu0 %v8557
        %8579 = vmatpush.msra.mxu0 %v8556
        %8580 = vmatpush.msra.mxu0 %v8555
        %8581 = vmatpush.msra.mxu0 %v8554
        %8582 = vmatpush.msra.mxu0 %v8553
        %8583 = vmatpush.msra.mxu0 %v8552
        %8584 = vmatpush.msra.mxu0 %v8551
        %8585 = vmatpush.msra.mxu0 %v8550
        %8586 = vmatmul.f32.gmra.mxu0 %v8455
        %v8587 = vpop.f32.mrf.mxu0
        %v8588 = vadd.f32 %v8568, %v8587
        %8589 = vmatmul.f32.gmra.mxu0 %v8458
        %v8590 = vpop.f32.mrf.mxu0
        %v8591 = vadd.f32 %v8568, %v8590
        %8592 = vmatmul.f32.gmra.mxu0 %v8461
        %v8593 = vpop.f32.mrf.mxu0
        %v8594 = vadd.f32 %v8568, %v8593
        %8595 = vmatmul.f32.gmra.mxu0 %v8464
        %v8596 = vpop.f32.mrf.mxu0
        %v8597 = vadd.f32 %v8568, %v8596
        %8598 = vmatmul.f32.gmra.mxu0 %v8467
        %v8599 = vpop.f32.mrf.mxu0
        %v8600 = vadd.f32 %v8568, %v8599
        %8601 = vmatmul.f32.gmra.mxu0 %v8470
        %v8602 = vpop.f32.mrf.mxu0
        %v8603 = vadd.f32 %v8568, %v8602
        %8604 = vmatmul.f32.gmra.mxu0 %v8473
        %v8605 = vpop.f32.mrf.mxu0
        %v8606 = vadd.f32 %v8568, %v8605
        %8607 = vmatmul.f32.gmra.mxu0 %v8476
        %v8608 = vpop.f32.mrf.mxu0
        %v8609 = vadd.f32 %v8568, %v8608
        %8610 = vmatmul.f32.gmra.mxu0 %v8479
        %v8611 = vpop.f32.mrf.mxu0
        %v8612 = vadd.f32 %v8568, %v8611
        %8613 = vmatmul.f32.gmra.mxu0 %v8482
        %v8614 = vpop.f32.mrf.mxu0
        %v8615 = vadd.f32 %v8568, %v8614
        %8616 = vmatmul.f32.gmra.mxu0 %v8485
        %v8617 = vpop.f32.mrf.mxu0
        %v8618 = vadd.f32 %v8568, %v8617
        %8619 = vmatmul.f32.gmra.mxu0 %v8488
        %v8620 = vpop.f32.mrf.mxu0
        %v8621 = vadd.f32 %v8568, %v8620
        %8622 = vmatmul.f32.gmra.mxu0 %v8491
        %v8623 = vpop.f32.mrf.mxu0
        %v8624 = vadd.f32 %v8568, %v8623
        %8625 = vmatmul.f32.gmra.mxu0 %v8494
        %v8626 = vpop.f32.mrf.mxu0
        %v8627 = vadd.f32 %v8568, %v8626
        %8628 = vmatmul.f32.gmra.mxu0 %v8497
        %v8629 = vpop.f32.mrf.mxu0
        %v8630 = vadd.f32 %v8568, %v8629
        %8631 = vmatmul.f32.gmra.mxu0 %v8500
        %v8632 = vpop.f32.mrf.mxu0
        %v8633 = vadd.f32 %v8568, %v8632
        %8634 = vmatmul.f32.gmra.mxu0 %v8503
        %v8635 = vpop.f32.mrf.mxu0
        %v8636 = vadd.f32 %v8568, %v8635
        %8637 = vmatmul.f32.gmra.mxu0 %v8506
        %v8638 = vpop.f32.mrf.mxu0
        %v8639 = vadd.f32 %v8568, %v8638
        %8640 = vmatmul.f32.gmra.mxu0 %v8509
        %v8641 = vpop.f32.mrf.mxu0
        %v8642 = vadd.f32 %v8568, %v8641
        %8643 = vmatmul.f32.gmra.mxu0 %v8512
        %v8644 = vpop.f32.mrf.mxu0
        %v8645 = vadd.f32 %v8568, %v8644
        %8646 = vmatmul.f32.gmra.mxu0 %v8515
        %v8647 = vpop.f32.mrf.mxu0
        %v8648 = vadd.f32 %v8568, %v8647
        %8649 = vmatmul.f32.gmra.mxu0 %v8518
        %v8650 = vpop.f32.mrf.mxu0
        %v8651 = vadd.f32 %v8568, %v8650
        %8652 = vmatmul.f32.gmra.mxu0 %v8521
        %v8653 = vpop.f32.mrf.mxu0
        %v8654 = vadd.f32 %v8568, %v8653
        %8655 = vmatmul.f32.gmra.mxu0 %v8524
        %v8656 = vpop.f32.mrf.mxu0
        %v8657 = vadd.f32 %v8568, %v8656
        %8658 = vmatmul.f32.gmra.mxu0 %v8527
        %v8659 = vpop.f32.mrf.mxu0
        %v8660 = vadd.f32 %v8568, %v8659
        %8661 = vmatmul.f32.gmra.mxu0 %v8530
        %v8662 = vpop.f32.mrf.mxu0
        %v8663 = vadd.f32 %v8568, %v8662
        %8664 = vmatmul.f32.gmra.mxu0 %v8533
        %v8665 = vpop.f32.mrf.mxu0
        %v8666 = vadd.f32 %v8568, %v8665
        %8667 = vmatmul.f32.gmra.mxu0 %v8536
        %v8668 = vpop.f32.mrf.mxu0
        %v8669 = vadd.f32 %v8568, %v8668
        %8670 = vmatmul.f32.gmra.mxu0 %v8539
        %v8671 = vpop.f32.mrf.mxu0
        %v8672 = vadd.f32 %v8568, %v8671
        %8673 = vmatmul.f32.gmra.mxu0 %v8542
        %v8674 = vpop.f32.mrf.mxu0
        %v8675 = vadd.f32 %v8568, %v8674
        %8676 = vmatmul.f32.gmra.mxu0 %v8545
        %v8677 = vpop.f32.mrf.mxu0
        %v8678 = vadd.f32 %v8568, %v8677
        %8679 = vmatmul.f32.gmra.mxu0 %v8548
        %v8680 = vpop.f32.mrf.mxu0
        %v8681 = vadd.f32 %v8568, %v8680
        %8682 = vdwg.mxu0
        %v8683 = vadd.f32 %v8588, %v6821
        %v8684 = vadd.f32 %v8591, %v6822
        %v8685 = vadd.f32 %v8594, %v6823
        %v8686 = vadd.f32 %v8597, %v6824
        %v8687 = vadd.f32 %v8600, %v6825
        %v8688 = vadd.f32 %v8603, %v6826
        %v8689 = vadd.f32 %v8606, %v6827
        %v8690 = vadd.f32 %v8609, %v6828
        %v8691 = vadd.f32 %v8612, %v6829
        %v8692 = vadd.f32 %v8615, %v6830
        %v8693 = vadd.f32 %v8618, %v6831
        %v8694 = vadd.f32 %v8621, %v6832
        %v8695 = vadd.f32 %v8624, %v6833
        %v8696 = vadd.f32 %v8627, %v6834
        %v8697 = vadd.f32 %v8630, %v6835
        %v8698 = vadd.f32 %v8633, %v6836
        %v8699 = vadd.f32 %v8636, %v6837
        %v8700 = vadd.f32 %v8639, %v6838
        %v8701 = vadd.f32 %v8642, %v6839
        %v8702 = vadd.f32 %v8645, %v6840
        %v8703 = vadd.f32 %v8648, %v6841
        %v8704 = vadd.f32 %v8651, %v6842
        %v8705 = vadd.f32 %v8654, %v6843
        %v8706 = vadd.f32 %v8657, %v6844
        %v8707 = vadd.f32 %v8660, %v6845
        %v8708 = vadd.f32 %v8663, %v6846
        %v8709 = vadd.f32 %v8666, %v6847
        %v8710 = vadd.f32 %v8669, %v6848
        %v8711 = vadd.f32 %v8672, %v6849
        %v8712 = vadd.f32 %v8675, %v6850
        %v8713 = vadd.f32 %v8678, %v6851
        %v8714 = vadd.f32 %v8681, %v6852
        %8715 = vst [vmem:[%s1005] sm:$0xff] %v8683
        %8716 = vst [vmem:[%s1005 + $0x8] sm:$0xff] %v8684
        %8717 = vst [vmem:[%s1005 + $0x10] sm:$0xff] %v8685
        %8718 = vst [vmem:[%s1005 + $0x18] sm:$0xff] %v8686
        %8719 = vst [vmem:[%s1005 + $0x20] sm:$0xff] %v8687
        %8720 = vst [vmem:[%s1005 + $0x28] sm:$0xff] %v8688
        %8721 = vst [vmem:[%s1005 + $0x30] sm:$0xff] %v8689
        %8722 = vst [vmem:[%s1005 + $0x38] sm:$0xff] %v8690
        %8723 = vst [vmem:[%s1005 + $0x40] sm:$0xff] %v8691
        %8724 = vst [vmem:[%s1005 + $0x48] sm:$0xff] %v8692
        %8725 = vst [vmem:[%s1005 + $0x50] sm:$0xff] %v8693
        %8726 = vst [vmem:[%s1005 + $0x58] sm:$0xff] %v8694
        %8727 = vst [vmem:[%s1005 + $0x60] sm:$0xff] %v8695
        %8728 = vst [vmem:[%s1005 + $0x68] sm:$0xff] %v8696
        %8729 = vst [vmem:[%s1005 + $0x70] sm:$0xff] %v8697
        %8730 = vst [vmem:[%s1005 + $0x78] sm:$0xff] %v8698
        %8731 = vst [vmem:[%s1005 + $0x80] sm:$0xff] %v8699
        %8732 = vst [vmem:[%s1005 + $0x88] sm:$0xff] %v8700
        %8733 = vst [vmem:[%s1005 + $0x90] sm:$0xff] %v8701
        %8734 = vst [vmem:[%s1005 + $0x98] sm:$0xff] %v8702
        %8735 = vst [vmem:[%s1005 + $0xa0] sm:$0xff] %v8703
        %8736 = vst [vmem:[%s1005 + $0xa8] sm:$0xff] %v8704
        %8737 = vst [vmem:[%s1005 + $0xb0] sm:$0xff] %v8705
        %8738 = vst [vmem:[%s1005 + $0xb8] sm:$0xff] %v8706
        %8739 = vst [vmem:[%s1005 + $0xc0] sm:$0xff] %v8707
        %8740 = vst [vmem:[%s1005 + $0xc8] sm:$0xff] %v8708
        %8741 = vst [vmem:[%s1005 + $0xd0] sm:$0xff] %v8709
        %8742 = vst [vmem:[%s1005 + $0xd8] sm:$0xff] %v8710
        %8743 = vst [vmem:[%s1005 + $0xe0] sm:$0xff] %v8711
        %8744 = vst [vmem:[%s1005 + $0xe8] sm:$0xff] %v8712
        %8745 = vst [vmem:[%s1005 + $0xf0] sm:$0xff] %v8713
        %8746 = vst [vmem:[%s1005 + $0xf8] sm:$0xff] %v8714
        %s8747 = sand.u32 %s615, 1
        %s8748 = scalar_lea.sflag [#allocation4], %s8747
        %s8749 = sand.u32 %s615, 1
        %s8750 = smul.addr %s8749, 256
        %s8751 = scalar_lea.vmem [#allocation22], %s8750
        // Predicated region
        $region173: #{tpu_custom_call.1} parent=123 // pred_check
          %p8752 = pneg %p625
        $region174: #{tpu_custom_call.1} parent=123 // pred_check_branch
          %8754 = sbr.rel (%p8752) target = $region176
        $region175: #{tpu_custom_call.1} parent=123 // pred_region
          %8756 = vsyncadd %s8748, 0
          %s8757 = smul.addr %s51, 32
          %s8758 = smul.addr %s8757, 8
          %s8759 = scalar_lea.hbm %s26, %s8758
          %s8760 = sshll.u32 %s8751, 4
          %s8761 = int_to_ptr.vmem [resolvable:$true] %s8760
          %s8762 = sshll.u32 %s8759, 4
          %s8763 = int_to_ptr.hbm [resolvable:$true] %s8762
          %8768 = dma.vmem_to_hbm [thread:$0]  %s8761, 4096, %s8763, %s8748, 128, 128, 8
        $region176: #{tpu_custom_call.1} parent=123 // pred_fallthru
          _
      $region124: #{tpu_custom_call.1} parent=5 // pred_fallthru
        _
      %p8769 = scmp.le.s32.totalorder 2, %s46
      // Predicated region
      $region177: #{tpu_custom_call.1} parent=5 // pred_check
        %p8770 = pneg %p8769
      $region178: #{tpu_custom_call.1} parent=5 // pred_check_branch
        %8772 = sbr.rel (%p8770) target = $region180
      $region179: #{tpu_custom_call.1} parent=5 // pred_region
        %s8773 = ssub.s32 %s46, 2
        // Predicated region
        $region181: #{tpu_custom_call.1} parent=179 // pred_check
          %p8774 = pneg %p631
        $region182: #{tpu_custom_call.1} parent=179 // pred_check_branch
          %8776 = sbr.rel (%p8774) target = $region184
        $region183: #{tpu_custom_call.1} parent=179 // pred_region
          %s8777 = sand.u32 %s616, 1
          %s8778 = scalar_lea.sflag [#allocation4], %s8777
          %s8779 = sand.u32 %s616, 1
          %s8780 = smul.addr %s8779, 256
          %s8781 = scalar_lea.vmem [#allocation22], %s8780
          %8783 = dma.done %s8778, 4096
        $region184: #{tpu_custom_call.1} parent=179 // pred_fallthru
          _
      $region180: #{tpu_custom_call.1} parent=5 // pred_fallthru
        _
    $region6: #{tpu_custom_call.1} parent=1 // loop_footer
      %s50 = sadd.s32 1, %s46
    $region7: #{tpu_custom_call.1} parent=1 // loop_footer_branch
      %45 = sbr.rel target = $region3
    $region8: #{tpu_custom_call.1} parent=1 // loop_exit
      _
    %8784 = vsyncpa [#allocation3], 1
    %s8785 = scalar_lea.sflag [#allocation3], 1
    %8786 = vsyncpa %s8785, 1
    %8787 = vsyncpa [#allocation6], 1
    %s8788 = scalar_lea.sflag [#allocation6], 1
    %8789 = vsyncpa %s8788, 1
    %8790 = vsyncpa [#allocation9], 1
    %8791 = vsyncpa [#allocation12], 1
    %8792 = vsyncpa [#allocation15], 1
    %8793 = vsyncpa [#allocation18], 1
    %8794 = vsyncpa [#allocation21], 1
    %8795 = vsyncpa [#allocation4], 1
    %s8796 = scalar_lea.sflag [#allocation4], 1
    %8797 = vsyncpa %s8796, 1

</llo_original>
